<compile_context>
chip_gen: v7x
topology: tpu7x:2x2x1
jax: 0.10.0
libtpu: 0.0.40
codegen_flags: <defaults>
</compile_context>

<pallas_src>
import jax
import jax.numpy as jnp
from jax import lax
from jax.experimental import pallas as pl
from jax.experimental.pallas import tpu as pltpu

BN_EPS = 1e-5


def _pick_tile(m, row_bytes, pref=4096, budget=8 * 1024 * 1024):
    for t in (pref, 2048, 1024, 512, 256, 128, 64, 32, 16, 8):
        if t <= m and m % t == 0 and t * row_bytes <= budget:
            return t
    return m


def _pick_strip(H, W, C12, mid, co, nc, budget=6 * 1024 * 1024):
    def est(t):
        b12 = (t + 2) * (W + 2) * C12 * 2 * 2            # scratch + padded value copy (bf16)
        s5 = (t + 2) * (W + 2) * mid * (4 + 2)            # f32 strip + bf16 copy
        slab = t * W * 3 * (C12 + mid) * 2                # im2col slab (bf16)
        accs = t * W * (co + nc + 8) * 4 * 2              # accumulators / transposed outputs
        return b12 + s5 + slab + accs

    cands = [t for t in (128, 64, 32, 16, 8) if t <= H and H % t == 0]
    if not cands:
        return H
    for t in cands:
        if est(t) <= budget:
            return t
    return cands[-1]


def _interp_matrix(out_len, in_len):
    # align_corners=True bilinear interpolation matrix (out_len, in_len), f32.
    if out_len == 1:
        src = jnp.zeros((1,), jnp.float32)
    else:
        src = jnp.arange(out_len, dtype=jnp.float32) * (in_len - 1) / (out_len - 1)
    i0 = jnp.clip(jnp.floor(src).astype(jnp.int32), 0, in_len - 1)
    i1 = jnp.minimum(i0 + 1, in_len - 1)
    w1 = src - i0.astype(jnp.float32)
    w0 = 1.0 - w1
    A = (w0[:, None] * jax.nn.one_hot(i0, in_len, dtype=jnp.float32)
         + w1[:, None] * jax.nn.one_hot(i1, in_len, dtype=jnp.float32))
    return A


# -------- kernel 1: fused (l1, l2) 1x1 conv + folded BN + ReLU -> [l1_b | l2_b] --------
def pw2_kernel(x1_ref, x2_ref, w1_ref, w2_ref, s1_ref, b1_ref, s2_ref, b2_ref, o_ref):
    y1 = jnp.dot(x1_ref[...], w1_ref[...], preferred_element_type=jnp.float32)
    y1 = jnp.maximum(y1 * s1_ref[...] + b1_ref[...], 0.0)
    y2 = jnp.dot(x2_ref[...], w2_ref[...], preferred_element_type=jnp.float32)
    y2 = jnp.maximum(y2 * s2_ref[...] + b2_ref[...], 0.0)
    o_ref[...] = jnp.concatenate([y1, y2], axis=-1).astype(o_ref.dtype)


def fused_pw2(x1, x2, w1, w2, s1, b1, s2, b2):
    M, C1 = x1.shape
    C2 = x2.shape[1]
    mid = w1.shape[1]
    row_bytes = (C1 + C2 + 2 * mid) * 2 * 2
    TM = _pick_tile(M, row_bytes)
    return pl.pallas_call(
        pw2_kernel,
        out_shape=jax.ShapeDtypeStruct((M, 2 * mid), jnp.bfloat16),
        grid=(M // TM,),
        in_specs=[
            pl.BlockSpec((TM, C1), lambda i: (i, 0)),
            pl.BlockSpec((TM, C2), lambda i: (i, 0)),
            pl.BlockSpec((C1, mid), lambda i: (0, 0)),
            pl.BlockSpec((C2, mid), lambda i: (0, 0)),
            pl.BlockSpec((1, mid), lambda i: (0, 0)),
            pl.BlockSpec((1, mid), lambda i: (0, 0)),
            pl.BlockSpec((1, mid), lambda i: (0, 0)),
            pl.BlockSpec((1, mid), lambda i: (0, 0)),
        ],
        out_specs=pl.BlockSpec((TM, 2 * mid), lambda i: (i, 0)),
        compiler_params=pltpu.CompilerParams(dimension_semantics=("parallel",)),
    )(x1, x2, w1, w2, s1, b1, s2, b2)


# -------- kernel 2: per-batch l5 1x1 conv + BN + ReLU + W-interp (column padded) --------
def l5prep_kernel(x_ref, w_ref, s_ref, b_ref, aw_ref, o_ref):
    h5, w5, c5 = x_ref.shape[1], x_ref.shape[2], x_ref.shape[3]
    mid = w_ref.shape[1]
    x = x_ref[0].reshape(h5 * w5, c5)
    y = jnp.dot(x, w_ref[...], preferred_element_type=jnp.float32)
    y = jnp.maximum(y * s_ref[...] + b_ref[...], 0.0)
    y = y.reshape(h5, w5, mid).astype(jnp.bfloat16)
    aw = aw_ref[...]                                     # (W+2, W5), rows 0 / W+1 are zero
    for p in range(h5):
        o_ref[0, p] = jnp.dot(aw, y[p],
                              preferred_element_type=jnp.float32).astype(o_ref.dtype)


def l5_prep(l5n, w5, s5, b5, aw_pad):
    N, H5, W5, C5 = l5n.shape
    mid = w5.shape[1]
    Wp2 = aw_pad.shape[0]
    return pl.pallas_call(
        l5prep_kernel,
        out_shape=jax.ShapeDtypeStruct((N, H5, Wp2, mid), jnp.bfloat16),
        grid=(N,),
        in_specs=[
            pl.BlockSpec((1, H5, W5, C5), lambda n: (n, 0, 0, 0)),
            pl.BlockSpec((C5, mid), lambda n: (0, 0)),
            pl.BlockSpec((1, mid), lambda n: (0, 0)),
            pl.BlockSpec((1, mid), lambda n: (0, 0)),
            pl.BlockSpec((Wp2, W5), lambda n: (0, 0)),
        ],
        out_specs=pl.BlockSpec((1, H5, Wp2, mid), lambda n: (n, 0, 0, 0)),
        compiler_params=pltpu.CompilerParams(dimension_semantics=("parallel",)),
    )(l5n, w5, s5, b5, aw_pad)


# ---- kernel 3: fused H-interp + boundary-loss head + concat + 3x3 conv + BN + ReLU ----
def tail_kernel(x12_hbm, l5w_ref, ah_ref, wt_ref, wl_ref, sb_ref, bb_ref,
                bout_ref, closs_ref, buf12, sem):
    n = pl.program_id(0)
    i = pl.program_id(1)
    n_i = pl.num_programs(1)
    co = bout_ref.shape[1]
    th = bout_ref.shape[2]
    w = bout_ref.shape[3]
    nc = closs_ref.shape[1]
    c12 = buf12.shape[2]
    h5 = l5w_ref.shape[1]
    mid = l5w_ref.shape[3]
    h_total = x12_hbm.shape[1]

    # Halo DMAs for l12 (unpadded in HBM): middle th rows + 1-row top/bottom halo
    # with clamped sources; image-edge halo rows are zeroed after the wait.
    r0 = i * th
    top = jnp.maximum(r0 - 1, 0)
    bot = jnp.minimum(r0 + th, h_total - 1)
    cp_mid = pltpu.make_async_copy(x12_hbm.at[n, pl.ds(r0, th)],
                                   buf12.at[pl.ds(1, th)], sem.at[0])
    cp_top = pltpu.make_async_copy(x12_hbm.at[n, pl.ds(top, 1)],
                                   buf12.at[pl.ds(0, 1)], sem.at[1])
    cp_bot = pltpu.make_async_copy(x12_hbm.at[n, pl.ds(bot, 1)],
                                   buf12.at[pl.ds(th + 1, 1)], sem.at[2])
    cp_mid.start()
    cp_top.start()
    cp_bot.start()

    # l5 strip: H-interpolation of the (already W-interpolated, column-padded)
    # low-res slab; Ah_strips rows include the zero padding rows at image edges.
    ah = ah_ref[0]                                            # (th+2, H5) bf16
    l5w2d = l5w_ref[0].reshape(h5, (w + 2) * mid)             # (H5, (W+2)*mid) bf16
    strip5 = jnp.dot(ah, l5w2d, preferred_element_type=jnp.float32)
    strip5 = strip5.reshape(th + 2, w + 2, mid)               # f32, row/col padded
    strip5_b = strip5.astype(jnp.bfloat16)

    cp_mid.wait()
    cp_top.wait()
    cp_bot.wait()

    @pl.when(i == 0)
    def _():
        buf12[0] = jnp.zeros((w, c12), buf12.dtype)

    @pl.when(i == n_i - 1)
    def _():
        buf12[th + 1] = jnp.zeros((w, c12), buf12.dtype)

    v12 = buf12[...]                                          # (th+2, W, C12) bf16
    zc = jnp.zeros((th + 2, 1, c12), v12.dtype)
    v12p = jnp.concatenate([zc, v12, zc], axis=1)             # (th+2, W+2, C12)

    # 3x3 conv over the virtual concat [l1_b | l2_b | l5_b]: per-dy im2col slab
    # (3 dx shifts of each channel group) -> 3 matmuls with K = 3*(C12+mid).
    acc = jnp.zeros((th * w, co), jnp.float32)
    for dy in range(3):
        pieces = []
        for dx in range(3):
            pieces.append(v12p[dy:dy + th, dx:dx + w, :].reshape(th * w, c12))
        for dx in range(3):
            pieces.append(strip5_b[dy:dy + th, dx:dx + w, :].reshape(th * w, mid))
        slab = jnp.concatenate(pieces, axis=-1)               # (th*w, 3*(C12+mid)) bf16
        acc = acc + jnp.dot(slab, wt_ref[dy], preferred_element_type=jnp.float32)
    yb = jnp.maximum(acc * sb_ref[...] + bb_ref[...], 0.0)    # (th*w, Co) f32

    # Boundary-loss head: (l1_b + l2_b + l5_b) @ wl on the un-padded centre window.
    c12c = v12[1:1 + th, :, :]
    s5c = strip5[1:1 + th, 1:1 + w, :]
    ssum = (c12c[:, :, 0:mid].astype(jnp.float32)
            + c12c[:, :, mid:2 * mid].astype(jnp.float32) + s5c)
    cl = jnp.dot(ssum.reshape(th * w, mid).astype(jnp.bfloat16), wl_ref[...],
                 preferred_element_type=jnp.float32)          # (th*w, nc) f32

    # Lane-dense NCHW outputs: single padded transpose, then split channel rows.
    both = jnp.concatenate([yb, cl], axis=-1)                 # (th*w, Co+nc)
    padw = (-(co + nc)) % 8
    if padw:
        both = jnp.concatenate([both, jnp.zeros((th * w, padw), jnp.float32)], axis=-1)
    both_t = jnp.transpose(both)                              # (Co+nc+pad, th*w)
    bout_ref[0] = both_t[0:co].reshape(co, th, w).astype(bout_ref.dtype)
    closs_ref[0] = both_t[co:co + nc].reshape(nc, th, w).astype(closs_ref.dtype)


def fused_tail(l12, l5w, ah_strips, w_tail, wl, sb, bb, th):
    N, H, W, C12 = l12.shape
    H5 = l5w.shape[1]
    mid = l5w.shape[3]
    K = w_tail.shape[1]
    Co = w_tail.shape[2]
    nc = wl.shape[1]
    nI = H // th
    return pl.pallas_call(
        tail_kernel,
        out_shape=(jax.ShapeDtypeStruct((N, Co, H, W), jnp.float32),
                   jax.ShapeDtypeStruct((N, nc, H, W), jnp.float32)),
        grid=(N, nI),
        in_specs=[
            pl.BlockSpec(memory_space=pl.ANY),                       # l12 (N,H,W,C12) bf16, HBM
            pl.BlockSpec((1, H5, W + 2, mid), lambda n, i: (n, 0, 0, 0)),
            pl.BlockSpec((1, th + 2, H5), lambda n, i: (i, 0, 0)),
            pl.BlockSpec((3, K, Co), lambda n, i: (0, 0, 0)),
            pl.BlockSpec((mid, nc), lambda n, i: (0, 0)),
            pl.BlockSpec((1, Co), lambda n, i: (0, 0)),
            pl.BlockSpec((1, Co), lambda n, i: (0, 0)),
        ],
        out_specs=(pl.BlockSpec((1, Co, th, W), lambda n, i: (n, 0, i, 0)),
                   pl.BlockSpec((1, nc, th, W), lambda n, i: (n, 0, i, 0))),
        scratch_shapes=[
            pltpu.VMEM((th + 2, W, C12), jnp.bfloat16),
            pltpu.SemaphoreType.DMA((3,)),
        ],
        compiler_params=pltpu.CompilerParams(
            dimension_semantics=("parallel", "parallel"),
            vmem_limit_bytes=32 * 1024 * 1024),
    )(l12, l5w, ah_strips, w_tail, wl, sb, bb)


# ---------------- BE_Module forward (wrapper, NCHW in / NCHW out) ----------------
def be_module_forward(params, l1, l2, l5):
    bf = lambda a: a.astype(jnp.bfloat16)
    l1n = bf(jnp.transpose(l1, (0, 2, 3, 1)))
    l2n = bf(jnp.transpose(l2, (0, 2, 3, 1)))
    l5n = bf(jnp.transpose(l5, (0, 2, 3, 1)))
    N, H, W, C1 = l1n.shape
    C2 = l2n.shape[3]
    H5, W5, C5 = l5n.shape[1:]
    mid = params['w1'].shape[1]
    C12 = 2 * mid
    Co = params['wb'].shape[3]
    nc = params['wl'].shape[1]

    # fused l1/l2 1x1 conv + BN + ReLU -> (N*H*W, 2*mid) bf16 = [l1_b | l2_b]
    l12 = fused_pw2(l1n.reshape(N * H * W, C1), l2n.reshape(N * H * W, C2),
                    bf(params['w1']), bf(params['w2']),
                    params['s1'], params['b1'], params['s2'], params['b2'])
    l12 = l12.reshape(N, H, W, C12)

    # l5: 1x1 conv + BN + ReLU + W-interpolation (with zero column padding) per batch.
    Aw = _interp_matrix(W, W5)
    Aw_pad = jnp.concatenate([jnp.zeros((1, W5), jnp.float32), Aw,
                              jnp.zeros((1, W5), jnp.float32)], axis=0)
    l5w = l5_prep(l5n, bf(params['w5']), params['s5'], params['b5'], bf(Aw_pad))

    # per-strip H-interp rows (including zero padding rows at the image edges)
    th = _pick_strip(H, W, C12, mid, Co, nc)
    nI = H // th
    Ah = _interp_matrix(H, H5)
    Ah_pad = jnp.concatenate([jnp.zeros((1, H5), jnp.float32), Ah,
                              jnp.zeros((1, H5), jnp.float32)], axis=0)
    Ah_strips = jnp.stack([Ah_pad[i * th:i * th + th + 2] for i in range(nI)], axis=0)

    # boundary conv weights reorganized for the per-dy im2col slab:
    # K order = [dx0|dx1|dx2 of the C12 group, dx0|dx1|dx2 of the mid group]
    wb = params['wb']
    w12 = wb[:, :, :C12, :]
    w5t = wb[:, :, C12:, :]
    w_tail = jnp.stack([jnp.concatenate([w12[dy, 0], w12[dy, 1], w12[dy, 2],
                                         w5t[dy, 0], w5t[dy, 1], w5t[dy, 2]], axis=0)
                        for dy in range(3)], axis=0)

    b, closs = fused_tail(l12, l5w, bf(Ah_strips), bf(w_tail), bf(params['wl']),
                          params['sb'], params['bb'], th)
    return b, closs


# ---------------- deterministic parameter init (matches module shapes) ----------------
def init_params(key, in_ch1, in_ch2, in_ch5, mid_ch, out_ch, n_class):
    ks = jax.random.split(key, 5)

    def kaiming(k, kh, kw, cin, cout):      # kaiming_normal_, mode='fan_out'
        fan_out = cout * kh * kw
        std = (2.0 / fan_out) ** 0.5
        return jax.random.normal(k, (kh, kw, cin, cout), dtype=jnp.float32) * std

    def bn_fold(ch):                        # gamma=1, beta=0, mean=0, var=1
        gamma = jnp.ones((ch,), jnp.float32)
        beta = jnp.zeros((ch,), jnp.float32)
        mean = jnp.zeros((ch,), jnp.float32)
        var = jnp.ones((ch,), jnp.float32)
        scale = gamma / jnp.sqrt(var + BN_EPS)
        bias = beta - mean * scale
        return scale.reshape(1, ch), bias.reshape(1, ch)

    s1, b1 = bn_fold(mid_ch)
    s2, b2 = bn_fold(mid_ch)
    s5, b5 = bn_fold(mid_ch)
    sb, bb = bn_fold(out_ch)
    return {
        'w1': kaiming(ks[0], 1, 1, in_ch1, mid_ch).reshape(in_ch1, mid_ch),
        's1': s1, 'b1': b1,
        'w2': kaiming(ks[1], 1, 1, in_ch2, mid_ch).reshape(in_ch2, mid_ch),
        's2': s2, 'b2': b2,
        'w5': kaiming(ks[2], 1, 1, in_ch5, mid_ch).reshape(in_ch5, mid_ch),
        's5': s5, 'b5': b5,
        'wl': kaiming(ks[3], 1, 1, mid_ch, n_class).reshape(mid_ch, n_class),
        'wb': kaiming(ks[4], 3, 3, 3 * mid_ch, out_ch),
        'sb': sb, 'bb': bb,
    }


# ---------------- pure-JAX f32 reference (for correctness check) ----------------
def reference_forward(params, l1, l2, l5):
    l1n = jnp.transpose(l1, (0, 2, 3, 1))
    l2n = jnp.transpose(l2, (0, 2, 3, 1))
    l5n = jnp.transpose(l5, (0, 2, 3, 1))
    N, H, W, _ = l1n.shape
    H5, W5 = l5n.shape[1:3]

    def pw(x, w, s, b, relu=True):
        y = jnp.einsum('nhwc,cd->nhwd', x, w)
        y = y * s.reshape(1, 1, 1, -1) + b.reshape(1, 1, 1, -1)
        return jnp.maximum(y, 0.0) if relu else y

    l1_b = pw(l1n, params['w1'], params['s1'], params['b1'])
    l2_b = pw(l2n, params['w2'], params['s2'], params['b2'])
    l5_low = pw(l5n, params['w5'], params['s5'], params['b5'])
    Ah = _interp_matrix(H, H5)
    Aw = _interp_matrix(W, W5)
    l5_b = jnp.einsum('hp,wq,npqc->nhwc', Ah, Aw, l5_low)
    wl = params['wl']
    closs = (jnp.einsum('nhwc,cd->nhwd', l1_b, wl)
             + jnp.einsum('nhwc,cd->nhwd', l2_b, wl)
             + jnp.einsum('nhwc,cd->nhwd', l5_b, wl))
    cat = jnp.concatenate([l1_b, l2_b, l5_b], axis=-1)
    y = lax.conv_general_dilated(cat, params['wb'], (1, 1), 'SAME',
                                 dimension_numbers=('NHWC', 'HWIO', 'NHWC'))
    y = y * params['sb'].reshape(1, 1, 1, -1) + params['bb'].reshape(1, 1, 1, -1)
    y = jnp.maximum(y, 0.0)
    return jnp.transpose(y, (0, 3, 1, 2)), jnp.transpose(closs, (0, 3, 1, 2))


if __name__ == "__main__":
    key = jax.random.PRNGKey(0)
    k1, k2, k5, kp = jax.random.split(key, 4)

    N = 2
    in_ch1, in_ch2, in_ch5 = 4, 6, 8
    mid_ch, out_ch, n_class = 8, 16, 2
    H = W = 16
    H5 = W5 = 8

    l1 = jax.random.normal(k1, (N, in_ch1, H, W), dtype=jnp.float32)
    l2 = jax.random.normal(k2, (N, in_ch2, H, W), dtype=jnp.float32)
    l5 = jax.random.normal(k5, (N, in_ch5, H5, W5), dtype=jnp.float32)
    params = init_params(kp, in_ch1, in_ch2, in_ch5, mid_ch, out_ch, n_class)

    b, closs = jax.jit(be_module_forward)(params, l1, l2, l5)
    jax.block_until_ready((b, closs))

    b_ref, closs_ref = reference_forward(params, l1, l2, l5)
    assert b.shape == (N, out_ch, H, W)
    assert closs.shape == (N, n_class, H, W)
    # bf16 operands / intermediates -> relaxed parity vs. the f32 reference.
    assert jnp.allclose(b, b_ref, atol=1e-1, rtol=5e-2)
    assert jnp.allclose(closs, closs_ref, atol=1e-1, rtol=5e-2)

    print("KERNEL_OK")
</pallas_src>

<mosaic_0001>
module attributes {stable_mosaic.version = 11 : i64} {
  func.func @l5prep_kernel(%arg0: i32, %arg1: memref<1x8x8x8xbf16, #tpu.memory_space<vmem>>, %arg2: memref<8x8xbf16, #tpu.memory_space<vmem>>, %arg3: memref<1x8xf32, #tpu.memory_space<vmem>>, %arg4: memref<1x8xf32, #tpu.memory_space<vmem>>, %arg5: memref<18x8xbf16, #tpu.memory_space<vmem>>, %arg6: memref<1x8x18x8xbf16, #tpu.memory_space<vmem>>) attributes {dimension_semantics = [#tpu.dimension_semantics<parallel>], iteration_bounds = array<i64: 2>, scalar_prefetch = 0 : i64, scratch_operands = 0 : i64, tpu.core_type = #tpu.core_type<tc>, window_params = [{transform_indices = @transform_0, window_bounds = array<i64: 1, 8, 8, 8>}, {pipeline_mode = #tpu.pipeline_mode<synchronous>, transform_indices = @transform_1, window_bounds = array<i64: 8, 8>}, {pipeline_mode = #tpu.pipeline_mode<synchronous>, transform_indices = @transform_2, window_bounds = array<i64: 1, 8>}, {pipeline_mode = #tpu.pipeline_mode<synchronous>, transform_indices = @transform_3, window_bounds = array<i64: 1, 8>}, {pipeline_mode = #tpu.pipeline_mode<synchronous>, transform_indices = @transform_4, window_bounds = array<i64: 18, 8>}, {transform_indices = @transform_5, window_bounds = array<i64: 1, 8, 18, 8>}]} {
    %c0 = arith.constant 0 : index
    %c0_0 = arith.constant 0 : index
    %c0_1 = arith.constant 0 : index
    %c0_2 = arith.constant 0 : index
    %0 = vector.load %arg1[%c0, %c0_0, %c0_1, %c0_2] : memref<1x8x8x8xbf16, #tpu.memory_space<vmem>>, vector<1x8x8x8xbf16>
    %1 = vector.shape_cast %0 : vector<1x8x8x8xbf16> to vector<8x8x8xbf16>
    %2 = vector.shape_cast %1 : vector<8x8x8xbf16> to vector<64x8xbf16>
    %c0_3 = arith.constant 0 : index
    %c0_4 = arith.constant 0 : index
    %3 = vector.load %arg2[%c0_3, %c0_4] : memref<8x8xbf16, #tpu.memory_space<vmem>>, vector<8x8xbf16>
    %cst = arith.constant dense<0.000000e+00> : vector<64x8xf32>
    %4 = tpu.matmul %2, %3, %cst {dimension_numbers = #tpu.dot_dimension_numbers<[1], [0], [0], [1], [0, 0, 1, 1], [], []>} : vector<64x8xbf16>, vector<8x8xbf16>, vector<64x8xf32> -> vector<64x8xf32>
    %c0_5 = arith.constant 0 : index
    %c0_6 = arith.constant 0 : index
    %5 = vector.load %arg3[%c0_5, %c0_6] : memref<1x8xf32, #tpu.memory_space<vmem>>, vector<1x8xf32>
    %6 = vector.broadcast %5 : vector<1x8xf32> to vector<64x8xf32>
    %7 = arith.mulf %4, %6 : vector<64x8xf32>
    %c0_7 = arith.constant 0 : index
    %c0_8 = arith.constant 0 : index
    %8 = vector.load %arg4[%c0_7, %c0_8] : memref<1x8xf32, #tpu.memory_space<vmem>>, vector<1x8xf32>
    %9 = vector.broadcast %8 : vector<1x8xf32> to vector<64x8xf32>
    %10 = arith.addf %7, %9 : vector<64x8xf32>
    %cst_9 = arith.constant 0.000000e+00 : f32
    %11 = vector.broadcast %cst_9 : f32 to vector<64x8xf32>
    %12 = arith.maximumf %10, %11 : vector<64x8xf32>
    %13 = vector.shape_cast %12 : vector<64x8xf32> to vector<8x8x8xf32>
    %14 = arith.truncf %13 : vector<8x8x8xf32> to vector<8x8x8xbf16>
    %c0_10 = arith.constant 0 : index
    %c0_11 = arith.constant 0 : index
    %15 = vector.load %arg5[%c0_10, %c0_11] : memref<18x8xbf16, #tpu.memory_space<vmem>>, vector<18x8xbf16>
    %16 = vector.extract_strided_slice %14 {offsets = [0, 0, 0], sizes = [1, 8, 8], strides = [1, 1, 1]} : vector<8x8x8xbf16> to vector<1x8x8xbf16>
    %17 = vector.shape_cast %16 : vector<1x8x8xbf16> to vector<8x8xbf16>
    %cst_12 = arith.constant dense<0.000000e+00> : vector<18x8xf32>
    %18 = tpu.matmul %15, %17, %cst_12 {dimension_numbers = #tpu.dot_dimension_numbers<[1], [0], [0], [1], [0, 0, 1, 1], [], []>} : vector<18x8xbf16>, vector<8x8xbf16>, vector<18x8xf32> -> vector<18x8xf32>
    %19 = arith.truncf %18 : vector<18x8xf32> to vector<18x8xbf16>
    %c0_13 = arith.constant 0 : index
    %c0_14 = arith.constant 0 : index
    %c0_15 = arith.constant 0 : index
    %c0_16 = arith.constant 0 : index
    %20 = vector.load %arg6[%c0_13, %c0_14, %c0_15, %c0_16] : memref<1x8x18x8xbf16, #tpu.memory_space<vmem>>, vector<1x1x18x8xbf16>
    %21 = vector.shape_cast %20 : vector<1x1x18x8xbf16> to vector<18x8xbf16>
    %22 = vector.shape_cast %19 : vector<18x8xbf16> to vector<1x1x18x8xbf16>
    tpu.vector_store %arg6[%c0_13, %c0_14, %c0_15, %c0_16], %22 {strides = array<i32>} : memref<1x8x18x8xbf16, #tpu.memory_space<vmem>>, vector<1x1x18x8xbf16>,
    %23 = vector.extract_strided_slice %14 {offsets = [1, 0, 0], sizes = [1, 8, 8], strides = [1, 1, 1]} : vector<8x8x8xbf16> to vector<1x8x8xbf16>
    %24 = vector.shape_cast %23 : vector<1x8x8xbf16> to vector<8x8xbf16>
    %cst_17 = arith.constant dense<0.000000e+00> : vector<18x8xf32>
    %25 = tpu.matmul %15, %24, %cst_17 {dimension_numbers = #tpu.dot_dimension_numbers<[1], [0], [0], [1], [0, 0, 1, 1], [], []>} : vector<18x8xbf16>, vector<8x8xbf16>, vector<18x8xf32> -> vector<18x8xf32>
    %26 = arith.truncf %25 : vector<18x8xf32> to vector<18x8xbf16>
    %c0_18 = arith.constant 0 : index
    %c1 = arith.constant 1 : index
    %c0_19 = arith.constant 0 : index
    %c0_20 = arith.constant 0 : index
    %27 = vector.load %arg6[%c0_18, %c1, %c0_19, %c0_20] : memref<1x8x18x8xbf16, #tpu.memory_space<vmem>>, vector<1x1x18x8xbf16>
    %28 = vector.shape_cast %27 : vector<1x1x18x8xbf16> to vector<18x8xbf16>
    %29 = vector.shape_cast %26 : vector<18x8xbf16> to vector<1x1x18x8xbf16>
    tpu.vector_store %arg6[%c0_18, %c1, %c0_19, %c0_20], %29 {strides = array<i32>} : memref<1x8x18x8xbf16, #tpu.memory_space<vmem>>, vector<1x1x18x8xbf16>,
    %30 = vector.extract_strided_slice %14 {offsets = [2, 0, 0], sizes = [1, 8, 8], strides = [1, 1, 1]} : vector<8x8x8xbf16> to vector<1x8x8xbf16>
    %31 = vector.shape_cast %30 : vector<1x8x8xbf16> to vector<8x8xbf16>
    %cst_21 = arith.constant dense<0.000000e+00> : vector<18x8xf32>
    %32 = tpu.matmul %15, %31, %cst_21 {dimension_numbers = #tpu.dot_dimension_numbers<[1], [0], [0], [1], [0, 0, 1, 1], [], []>} : vector<18x8xbf16>, vector<8x8xbf16>, vector<18x8xf32> -> vector<18x8xf32>
    %33 = arith.truncf %32 : vector<18x8xf32> to vector<18x8xbf16>
    %c0_22 = arith.constant 0 : index
    %c2 = arith.constant 2 : index
    %c0_23 = arith.constant 0 : index
    %c0_24 = arith.constant 0 : index
    %34 = vector.load %arg6[%c0_22, %c2, %c0_23, %c0_24] : memref<1x8x18x8xbf16, #tpu.memory_space<vmem>>, vector<1x1x18x8xbf16>
    %35 = vector.shape_cast %34 : vector<1x1x18x8xbf16> to vector<18x8xbf16>
    %36 = vector.shape_cast %33 : vector<18x8xbf16> to vector<1x1x18x8xbf16>
    tpu.vector_store %arg6[%c0_22, %c2, %c0_23, %c0_24], %36 {strides = array<i32>} : memref<1x8x18x8xbf16, #tpu.memory_space<vmem>>, vector<1x1x18x8xbf16>,
    %37 = vector.extract_strided_slice %14 {offsets = [3, 0, 0], sizes = [1, 8, 8], strides = [1, 1, 1]} : vector<8x8x8xbf16> to vector<1x8x8xbf16>
    %38 = vector.shape_cast %37 : vector<1x8x8xbf16> to vector<8x8xbf16>
    %cst_25 = arith.constant dense<0.000000e+00> : vector<18x8xf32>
    %39 = tpu.matmul %15, %38, %cst_25 {dimension_numbers = #tpu.dot_dimension_numbers<[1], [0], [0], [1], [0, 0, 1, 1], [], []>} : vector<18x8xbf16>, vector<8x8xbf16>, vector<18x8xf32> -> vector<18x8xf32>
    %40 = arith.truncf %39 : vector<18x8xf32> to vector<18x8xbf16>
    %c0_26 = arith.constant 0 : index
    %c3 = arith.constant 3 : index
    %c0_27 = arith.constant 0 : index
    %c0_28 = arith.constant 0 : index
    %41 = vector.load %arg6[%c0_26, %c3, %c0_27, %c0_28] : memref<1x8x18x8xbf16, #tpu.memory_space<vmem>>, vector<1x1x18x8xbf16>
    %42 = vector.shape_cast %41 : vector<1x1x18x8xbf16> to vector<18x8xbf16>
    %43 = vector.shape_cast %40 : vector<18x8xbf16> to vector<1x1x18x8xbf16>
    tpu.vector_store %arg6[%c0_26, %c3, %c0_27, %c0_28], %43 {strides = array<i32>} : memref<1x8x18x8xbf16, #tpu.memory_space<vmem>>, vector<1x1x18x8xbf16>,
    %44 = vector.extract_strided_slice %14 {offsets = [4, 0, 0], sizes = [1, 8, 8], strides = [1, 1, 1]} : vector<8x8x8xbf16> to vector<1x8x8xbf16>
    %45 = vector.shape_cast %44 : vector<1x8x8xbf16> to vector<8x8xbf16>
    %cst_29 = arith.constant dense<0.000000e+00> : vector<18x8xf32>
    %46 = tpu.matmul %15, %45, %cst_29 {dimension_numbers = #tpu.dot_dimension_numbers<[1], [0], [0], [1], [0, 0, 1, 1], [], []>} : vector<18x8xbf16>, vector<8x8xbf16>, vector<18x8xf32> -> vector<18x8xf32>
    %47 = arith.truncf %46 : vector<18x8xf32> to vector<18x8xbf16>
    %c0_30 = arith.constant 0 : index
    %c4 = arith.constant 4 : index
    %c0_31 = arith.constant 0 : index
    %c0_32 = arith.constant 0 : index
    %48 = vector.load %arg6[%c0_30, %c4, %c0_31, %c0_32] : memref<1x8x18x8xbf16, #tpu.memory_space<vmem>>, vector<1x1x18x8xbf16>
    %49 = vector.shape_cast %48 : vector<1x1x18x8xbf16> to vector<18x8xbf16>
    %50 = vector.shape_cast %47 : vector<18x8xbf16> to vector<1x1x18x8xbf16>
    tpu.vector_store %arg6[%c0_30, %c4, %c0_31, %c0_32], %50 {strides = array<i32>} : memref<1x8x18x8xbf16, #tpu.memory_space<vmem>>, vector<1x1x18x8xbf16>,
    %51 = vector.extract_strided_slice %14 {offsets = [5, 0, 0], sizes = [1, 8, 8], strides = [1, 1, 1]} : vector<8x8x8xbf16> to vector<1x8x8xbf16>
    %52 = vector.shape_cast %51 : vector<1x8x8xbf16> to vector<8x8xbf16>
    %cst_33 = arith.constant dense<0.000000e+00> : vector<18x8xf32>
    %53 = tpu.matmul %15, %52, %cst_33 {dimension_numbers = #tpu.dot_dimension_numbers<[1], [0], [0], [1], [0, 0, 1, 1], [], []>} : vector<18x8xbf16>, vector<8x8xbf16>, vector<18x8xf32> -> vector<18x8xf32>
    %54 = arith.truncf %53 : vector<18x8xf32> to vector<18x8xbf16>
    %c0_34 = arith.constant 0 : index
    %c5 = arith.constant 5 : index
    %c0_35 = arith.constant 0 : index
    %c0_36 = arith.constant 0 : index
    %55 = vector.load %arg6[%c0_34, %c5, %c0_35, %c0_36] : memref<1x8x18x8xbf16, #tpu.memory_space<vmem>>, vector<1x1x18x8xbf16>
    %56 = vector.shape_cast %55 : vector<1x1x18x8xbf16> to vector<18x8xbf16>
    %57 = vector.shape_cast %54 : vector<18x8xbf16> to vector<1x1x18x8xbf16>
    tpu.vector_store %arg6[%c0_34, %c5, %c0_35, %c0_36], %57 {strides = array<i32>} : memref<1x8x18x8xbf16, #tpu.memory_space<vmem>>, vector<1x1x18x8xbf16>,
    %58 = vector.extract_strided_slice %14 {offsets = [6, 0, 0], sizes = [1, 8, 8], strides = [1, 1, 1]} : vector<8x8x8xbf16> to vector<1x8x8xbf16>
    %59 = vector.shape_cast %58 : vector<1x8x8xbf16> to vector<8x8xbf16>
    %cst_37 = arith.constant dense<0.000000e+00> : vector<18x8xf32>
    %60 = tpu.matmul %15, %59, %cst_37 {dimension_numbers = #tpu.dot_dimension_numbers<[1], [0], [0], [1], [0, 0, 1, 1], [], []>} : vector<18x8xbf16>, vector<8x8xbf16>, vector<18x8xf32> -> vector<18x8xf32>
    %61 = arith.truncf %60 : vector<18x8xf32> to vector<18x8xbf16>
    %c0_38 = arith.constant 0 : index
    %c6 = arith.constant 6 : index
    %c0_39 = arith.constant 0 : index
    %c0_40 = arith.constant 0 : index
    %62 = vector.load %arg6[%c0_38, %c6, %c0_39, %c0_40] : memref<1x8x18x8xbf16, #tpu.memory_space<vmem>>, vector<1x1x18x8xbf16>
    %63 = vector.shape_cast %62 : vector<1x1x18x8xbf16> to vector<18x8xbf16>
    %64 = vector.shape_cast %61 : vector<18x8xbf16> to vector<1x1x18x8xbf16>
    tpu.vector_store %arg6[%c0_38, %c6, %c0_39, %c0_40], %64 {strides = array<i32>} : memref<1x8x18x8xbf16, #tpu.memory_space<vmem>>, vector<1x1x18x8xbf16>,
    %65 = vector.extract_strided_slice %14 {offsets = [7, 0, 0], sizes = [1, 8, 8], strides = [1, 1, 1]} : vector<8x8x8xbf16> to vector<1x8x8xbf16>
    %66 = vector.shape_cast %65 : vector<1x8x8xbf16> to vector<8x8xbf16>
    %cst_41 = arith.constant dense<0.000000e+00> : vector<18x8xf32>
    %67 = tpu.matmul %15, %66, %cst_41 {dimension_numbers = #tpu.dot_dimension_numbers<[1], [0], [0], [1], [0, 0, 1, 1], [], []>} : vector<18x8xbf16>, vector<8x8xbf16>, vector<18x8xf32> -> vector<18x8xf32>
    %68 = arith.truncf %67 : vector<18x8xf32> to vector<18x8xbf16>
    %c0_42 = arith.constant 0 : index
    %c7 = arith.constant 7 : index
    %c0_43 = arith.constant 0 : index
    %c0_44 = arith.constant 0 : index
    %69 = vector.load %arg6[%c0_42, %c7, %c0_43, %c0_44] : memref<1x8x18x8xbf16, #tpu.memory_space<vmem>>, vector<1x1x18x8xbf16>
    %70 = vector.shape_cast %69 : vector<1x1x18x8xbf16> to vector<18x8xbf16>
    %71 = vector.shape_cast %68 : vector<18x8xbf16> to vector<1x1x18x8xbf16>
    tpu.vector_store %arg6[%c0_42, %c7, %c0_43, %c0_44], %71 {strides = array<i32>} : memref<1x8x18x8xbf16, #tpu.memory_space<vmem>>, vector<1x1x18x8xbf16>,
    return
  }
  func.func @transform_0(%arg0: i32) -> (i32, i32, i32, i32) {
    %c0_i32 = arith.constant 0 : i32
    %c0_i32_0 = arith.constant 0 : i32
    %c0_i32_1 = arith.constant 0 : i32
    %c0_i32_2 = arith.constant 0 : i32
    return %arg0, %c0_i32, %c0_i32_0, %c0_i32_1 : i32, i32, i32, i32
  }
  func.func @transform_1(%arg0: i32) -> (i32, i32) {
    %c0_i32 = arith.constant 0 : i32
    %c0_i32_0 = arith.constant 0 : i32
    %c0_i32_1 = arith.constant 0 : i32
    return %c0_i32, %c0_i32_0 : i32, i32
  }
  func.func @transform_2(%arg0: i32) -> (i32, i32) {
    %c0_i32 = arith.constant 0 : i32
    %c0_i32_0 = arith.constant 0 : i32
    %c0_i32_1 = arith.constant 0 : i32
    return %c0_i32, %c0_i32_0 : i32, i32
  }
  func.func @transform_3(%arg0: i32) -> (i32, i32) {
    %c0_i32 = arith.constant 0 : i32
    %c0_i32_0 = arith.constant 0 : i32
    %c0_i32_1 = arith.constant 0 : i32
    return %c0_i32, %c0_i32_0 : i32, i32
  }
  func.func @transform_4(%arg0: i32) -> (i32, i32) {
    %c0_i32 = arith.constant 0 : i32
    %c0_i32_0 = arith.constant 0 : i32
    %c0_i32_1 = arith.constant 0 : i32
    return %c0_i32, %c0_i32_0 : i32, i32
  }
  func.func @transform_5(%arg0: i32) -> (i32, i32, i32, i32) {
    %c0_i32 = arith.constant 0 : i32
    %c0_i32_0 = arith.constant 0 : i32
    %c0_i32_1 = arith.constant 0 : i32
    %c0_i32_2 = arith.constant 0 : i32
    return %arg0, %c0_i32, %c0_i32_0, %c0_i32_1 : i32, i32, i32, i32
  }
}

module attributes {stable_mosaic.version = 11 : i64} {
  func.func @pw2_kernel(%arg0: i32, %arg1: memref<512x4xbf16, #tpu.memory_space<vmem>>, %arg2: memref<512x6xbf16, #tpu.memory_space<vmem>>, %arg3: memref<4x8xbf16, #tpu.memory_space<vmem>>, %arg4: memref<6x8xbf16, #tpu.memory_space<vmem>>, %arg5: memref<1x8xf32, #tpu.memory_space<vmem>>, %arg6: memref<1x8xf32, #tpu.memory_space<vmem>>, %arg7: memref<1x8xf32, #tpu.memory_space<vmem>>, %arg8: memref<1x8xf32, #tpu.memory_space<vmem>>, %arg9: memref<512x16xbf16, #tpu.memory_space<vmem>>) attributes {dimension_semantics = [#tpu.dimension_semantics<parallel>], iteration_bounds = array<i64: 1>, scalar_prefetch = 0 : i64, scratch_operands = 0 : i64, tpu.core_type = #tpu.core_type<tc>, window_params = [{transform_indices = @transform_0, window_bounds = array<i64: 512, 4>}, {transform_indices = @transform_1, window_bounds = array<i64: 512, 6>}, {pipeline_mode = #tpu.pipeline_mode<synchronous>, transform_indices = @transform_2, window_bounds = array<i64: 4, 8>}, {pipeline_mode = #tpu.pipeline_mode<synchronous>, transform_indices = @transform_3, window_bounds = array<i64: 6, 8>}, {pipeline_mode = #tpu.pipeline_mode<synchronous>, transform_indices = @transform_4, window_bounds = array<i64: 1, 8>}, {pipeline_mode = #tpu.pipeline_mode<synchronous>, transform_indices = @transform_5, window_bounds = array<i64: 1, 8>}, {pipeline_mode = #tpu.pipeline_mode<synchronous>, transform_indices = @transform_6, window_bounds = array<i64: 1, 8>}, {pipeline_mode = #tpu.pipeline_mode<synchronous>, transform_indices = @transform_7, window_bounds = array<i64: 1, 8>}, {transform_indices = @transform_8, window_bounds = array<i64: 512, 16>}]} {
    %c0 = arith.constant 0 : index
    %c0_0 = arith.constant 0 : index
    %0 = vector.load %arg1[%c0, %c0_0] : memref<512x4xbf16, #tpu.memory_space<vmem>>, vector<512x4xbf16>
    %c0_1 = arith.constant 0 : index
    %c0_2 = arith.constant 0 : index
    %1 = vector.load %arg3[%c0_1, %c0_2] : memref<4x8xbf16, #tpu.memory_space<vmem>>, vector<4x8xbf16>
    %cst = arith.constant dense<0.000000e+00> : vector<512x8xf32>
    %2 = tpu.matmul %0, %1, %cst {dimension_numbers = #tpu.dot_dimension_numbers<[1], [0], [0], [1], [0, 0, 1, 1], [], []>} : vector<512x4xbf16>, vector<4x8xbf16>, vector<512x8xf32> -> vector<512x8xf32>
    %c0_3 = arith.constant 0 : index
    %c0_4 = arith.constant 0 : index
    %3 = vector.load %arg5[%c0_3, %c0_4] : memref<1x8xf32, #tpu.memory_space<vmem>>, vector<1x8xf32>
    %4 = vector.broadcast %3 : vector<1x8xf32> to vector<512x8xf32>
    %5 = arith.mulf %2, %4 : vector<512x8xf32>
    %c0_5 = arith.constant 0 : index
    %c0_6 = arith.constant 0 : index
    %6 = vector.load %arg6[%c0_5, %c0_6] : memref<1x8xf32, #tpu.memory_space<vmem>>, vector<1x8xf32>
    %7 = vector.broadcast %6 : vector<1x8xf32> to vector<512x8xf32>
    %8 = arith.addf %5, %7 : vector<512x8xf32>
    %cst_7 = arith.constant 0.000000e+00 : f32
    %9 = vector.broadcast %cst_7 : f32 to vector<512x8xf32>
    %10 = arith.maximumf %8, %9 : vector<512x8xf32>
    %c0_8 = arith.constant 0 : index
    %c0_9 = arith.constant 0 : index
    %11 = vector.load %arg2[%c0_8, %c0_9] : memref<512x6xbf16, #tpu.memory_space<vmem>>, vector<512x6xbf16>
    %c0_10 = arith.constant 0 : index
    %c0_11 = arith.constant 0 : index
    %12 = vector.load %arg4[%c0_10, %c0_11] : memref<6x8xbf16, #tpu.memory_space<vmem>>, vector<6x8xbf16>
    %cst_12 = arith.constant dense<0.000000e+00> : vector<512x8xf32>
    %13 = tpu.matmul %11, %12, %cst_12 {dimension_numbers = #tpu.dot_dimension_numbers<[1], [0], [0], [1], [0, 0, 1, 1], [], []>} : vector<512x6xbf16>, vector<6x8xbf16>, vector<512x8xf32> -> vector<512x8xf32>
    %c0_13 = arith.constant 0 : index
    %c0_14 = arith.constant 0 : index
    %14 = vector.load %arg7[%c0_13, %c0_14] : memref<1x8xf32, #tpu.memory_space<vmem>>, vector<1x8xf32>
    %15 = vector.broadcast %14 : vector<1x8xf32> to vector<512x8xf32>
    %16 = arith.mulf %13, %15 : vector<512x8xf32>
    %c0_15 = arith.constant 0 : index
    %c0_16 = arith.constant 0 : index
    %17 = vector.load %arg8[%c0_15, %c0_16] : memref<1x8xf32, #tpu.memory_space<vmem>>, vector<1x8xf32>
    %18 = vector.broadcast %17 : vector<1x8xf32> to vector<512x8xf32>
    %19 = arith.addf %16, %18 : vector<512x8xf32>
    %cst_17 = arith.constant 0.000000e+00 : f32
    %20 = vector.broadcast %cst_17 : f32 to vector<512x8xf32>
    %21 = arith.maximumf %19, %20 : vector<512x8xf32>
    %22 = tpu.concatenate %10, %21 in 1 : vector<512x8xf32>, vector<512x8xf32> -> vector<512x16xf32>
    %23 = arith.truncf %22 : vector<512x16xf32> to vector<512x16xbf16>
    %c0_18 = arith.constant 0 : index
    %c0_19 = arith.constant 0 : index
    %24 = vector.load %arg9[%c0_18, %c0_19] : memref<512x16xbf16, #tpu.memory_space<vmem>>, vector<512x16xbf16>
    tpu.vector_store %arg9[%c0_18, %c0_19], %23 {strides = array<i32>} : memref<512x16xbf16, #tpu.memory_space<vmem>>, vector<512x16xbf16>,
    return
  }
  func.func @transform_0(%arg0: i32) -> (i32, i32) {
    %c0_i32 = arith.constant 0 : i32
    %c0_i32_0 = arith.constant 0 : i32
    return %arg0, %c0_i32 : i32, i32
  }
  func.func @transform_1(%arg0: i32) -> (i32, i32) {
    %c0_i32 = arith.constant 0 : i32
    %c0_i32_0 = arith.constant 0 : i32
    return %arg0, %c0_i32 : i32, i32
  }
  func.func @transform_2(%arg0: i32) -> (i32, i32) {
    %c0_i32 = arith.constant 0 : i32
    %c0_i32_0 = arith.constant 0 : i32
    %c0_i32_1 = arith.constant 0 : i32
    return %c0_i32, %c0_i32_0 : i32, i32
  }
  func.func @transform_3(%arg0: i32) -> (i32, i32) {
    %c0_i32 = arith.constant 0 : i32
    %c0_i32_0 = arith.constant 0 : i32
    %c0_i32_1 = arith.constant 0 : i32
    return %c0_i32, %c0_i32_0 : i32, i32
  }
  func.func @transform_4(%arg0: i32) -> (i32, i32) {
    %c0_i32 = arith.constant 0 : i32
    %c0_i32_0 = arith.constant 0 : i32
    %c0_i32_1 = arith.constant 0 : i32
    return %c0_i32, %c0_i32_0 : i32, i32
  }
  func.func @transform_5(%arg0: i32) -> (i32, i32) {
    %c0_i32 = arith.constant 0 : i32
    %c0_i32_0 = arith.constant 0 : i32
    %c0_i32_1 = arith.constant 0 : i32
    return %c0_i32, %c0_i32_0 : i32, i32
  }
  func.func @transform_6(%arg0: i32) -> (i32, i32) {
    %c0_i32 = arith.constant 0 : i32
    %c0_i32_0 = arith.constant 0 : i32
    %c0_i32_1 = arith.constant 0 : i32
    return %c0_i32, %c0_i32_0 : i32, i32
  }
  func.func @transform_7(%arg0: i32) -> (i32, i32) {
    %c0_i32 = arith.constant 0 : i32
    %c0_i32_0 = arith.constant 0 : i32
    %c0_i32_1 = arith.constant 0 : i32
    return %c0_i32, %c0_i32_0 : i32, i32
  }
  func.func @transform_8(%arg0: i32) -> (i32, i32) {
    %c0_i32 = arith.constant 0 : i32
    %c0_i32_0 = arith.constant 0 : i32
    return %arg0, %c0_i32 : i32, i32
  }
}

module attributes {stable_mosaic.version = 11 : i64} {
  func.func @tail_kernel(%arg0: i32, %arg1: i32, %arg2: memref<2x16x16x16xbf16, #tpu.memory_space<any>>, %arg3: memref<1x8x18x8xbf16, #tpu.memory_space<vmem>>, %arg4: memref<1x18x8xbf16, #tpu.memory_space<vmem>>, %arg5: memref<3x72x16xbf16, #tpu.memory_space<vmem>>, %arg6: memref<8x2xbf16, #tpu.memory_space<vmem>>, %arg7: memref<1x16xf32, #tpu.memory_space<vmem>>, %arg8: memref<1x16xf32, #tpu.memory_space<vmem>>, %arg9: memref<1x16x16x16xf32, #tpu.memory_space<vmem>>, %arg10: memref<1x2x16x16xf32, #tpu.memory_space<vmem>>, %arg11: memref<18x16x16xbf16, #tpu.memory_space<vmem>>, %arg12: memref<3x!tpu.dma_semaphore, #tpu.memory_space<semaphore_mem>>) attributes {dimension_semantics = [#tpu.dimension_semantics<parallel>, #tpu.dimension_semantics<parallel>], iteration_bounds = array<i64: 2, 1>, scalar_prefetch = 0 : i64, scratch_operands = 2 : i64, tpu.core_type = #tpu.core_type<tc>, window_params = [{}, {transform_indices = @transform_1, window_bounds = array<i64: 1, 8, 18, 8>}, {transform_indices = @transform_2, window_bounds = array<i64: 1, 18, 8>}, {pipeline_mode = #tpu.pipeline_mode<synchronous>, transform_indices = @transform_3, window_bounds = array<i64: 3, 72, 16>}, {pipeline_mode = #tpu.pipeline_mode<synchronous>, transform_indices = @transform_4, window_bounds = array<i64: 8, 2>}, {pipeline_mode = #tpu.pipeline_mode<synchronous>, transform_indices = @transform_5, window_bounds = array<i64: 1, 16>}, {pipeline_mode = #tpu.pipeline_mode<synchronous>, transform_indices = @transform_6, window_bounds = array<i64: 1, 16>}, {transform_indices = @transform_7, window_bounds = array<i64: 1, 16, 16, 16>}, {transform_indices = @transform_8, window_bounds = array<i64: 1, 2, 16, 16>}]} {
    %c16_i32 = arith.constant 16 : i32
    %0 = arith.muli %arg1, %c16_i32 : i32
    %c1_i32 = arith.constant 1 : i32
    %1 = arith.subi %0, %c1_i32 : i32
    %c0_i32 = arith.constant 0 : i32
    %2 = arith.maxsi %1, %c0_i32 : i32
    %c16_i32_0 = arith.constant 16 : i32
    %3 = arith.addi %0, %c16_i32_0 : i32
    %c15_i32 = arith.constant 15 : i32
    %4 = arith.minsi %3, %c15_i32 : i32
    %c0_i32_1 = arith.constant 0 : i32
    %c0_i32_2 = arith.constant 0 : i32
    %c0_i32_3 = arith.constant 0 : i32
    %5 = tpu.memref_slice %arg2[%arg0, %0, %c0_i32_2, %c0_i32_3] : memref<2x16x16x16xbf16, #tpu.memory_space<any>> -> memref<1x16x16x16xbf16, #tpu.memory_space<any>>
    %6 = tpu.memref_squeeze %5 : memref<1x16x16x16xbf16, #tpu.memory_space<any>> -> memref<16x16x16xbf16, #tpu.memory_space<any>>
    %c1_i32_4 = arith.constant 1 : i32
    %c0_i32_5 = arith.constant 0 : i32
    %c0_i32_6 = arith.constant 0 : i32
    %7 = tpu.memref_slice %arg11[%c1_i32_4, %c0_i32_5, %c0_i32_6] : memref<18x16x16xbf16, #tpu.memory_space<vmem>> -> memref<16x16x16xbf16, #tpu.memory_space<vmem>>
    %8 = tpu.memref_slice %arg12[%c0_i32_1] : memref<3x!tpu.dma_semaphore, #tpu.memory_space<semaphore_mem>> -> memref<1x!tpu.dma_semaphore, #tpu.memory_space<semaphore_mem>>
    %9 = tpu.memref_squeeze %8 : memref<1x!tpu.dma_semaphore, #tpu.memory_space<semaphore_mem>> -> memref<!tpu.dma_semaphore, #tpu.memory_space<semaphore_mem>>
    tpu.enqueue_dma source(%6 : memref<16x16x16xbf16, #tpu.memory_space<any>>) target(%7 : memref<16x16x16xbf16, #tpu.memory_space<vmem>>) target_semaphore(%9 : memref<!tpu.dma_semaphore, #tpu.memory_space<semaphore_mem>>)
    %c1_i32_7 = arith.constant 1 : i32
    %c0_i32_8 = arith.constant 0 : i32
    %c0_i32_9 = arith.constant 0 : i32
    %10 = tpu.memref_slice %arg2[%arg0, %2, %c0_i32_8, %c0_i32_9] : memref<2x16x16x16xbf16, #tpu.memory_space<any>> -> memref<1x1x16x16xbf16, #tpu.memory_space<any>>
    %11 = tpu.memref_squeeze %10 : memref<1x1x16x16xbf16, #tpu.memory_space<any>> -> memref<1x16x16xbf16, #tpu.memory_space<any>>
    %c0_i32_10 = arith.constant 0 : i32
    %c0_i32_11 = arith.constant 0 : i32
    %c0_i32_12 = arith.constant 0 : i32
    %12 = tpu.memref_slice %arg11[%c0_i32_10, %c0_i32_11, %c0_i32_12] : memref<18x16x16xbf16, #tpu.memory_space<vmem>> -> memref<1x16x16xbf16, #tpu.memory_space<vmem>>
    %13 = tpu.memref_slice %arg12[%c1_i32_7] : memref<3x!tpu.dma_semaphore, #tpu.memory_space<semaphore_mem>> -> memref<1x!tpu.dma_semaphore, #tpu.memory_space<semaphore_mem>>
    %14 = tpu.memref_squeeze %13 : memref<1x!tpu.dma_semaphore, #tpu.memory_space<semaphore_mem>> -> memref<!tpu.dma_semaphore, #tpu.memory_space<semaphore_mem>>
    tpu.enqueue_dma source(%11 : memref<1x16x16xbf16, #tpu.memory_space<any>>) target(%12 : memref<1x16x16xbf16, #tpu.memory_space<vmem>>) target_semaphore(%14 : memref<!tpu.dma_semaphore, #tpu.memory_space<semaphore_mem>>)
    %c2_i32 = arith.constant 2 : i32
    %c0_i32_13 = arith.constant 0 : i32
    %c0_i32_14 = arith.constant 0 : i32
    %15 = tpu.memref_slice %arg2[%arg0, %4, %c0_i32_13, %c0_i32_14] : memref<2x16x16x16xbf16, #tpu.memory_space<any>> -> memref<1x1x16x16xbf16, #tpu.memory_space<any>>
    %16 = tpu.memref_squeeze %15 : memref<1x1x16x16xbf16, #tpu.memory_space<any>> -> memref<1x16x16xbf16, #tpu.memory_space<any>>
    %c17_i32 = arith.constant 17 : i32
    %c0_i32_15 = arith.constant 0 : i32
    %c0_i32_16 = arith.constant 0 : i32
    %17 = tpu.memref_slice %arg11[%c17_i32, %c0_i32_15, %c0_i32_16] : memref<18x16x16xbf16, #tpu.memory_space<vmem>> -> memref<1x16x16xbf16, #tpu.memory_space<vmem>>
    %18 = tpu.memref_slice %arg12[%c2_i32] : memref<3x!tpu.dma_semaphore, #tpu.memory_space<semaphore_mem>> -> memref<1x!tpu.dma_semaphore, #tpu.memory_space<semaphore_mem>>
    %19 = tpu.memref_squeeze %18 : memref<1x!tpu.dma_semaphore, #tpu.memory_space<semaphore_mem>> -> memref<!tpu.dma_semaphore, #tpu.memory_space<semaphore_mem>>
    tpu.enqueue_dma source(%16 : memref<1x16x16xbf16, #tpu.memory_space<any>>) target(%17 : memref<1x16x16xbf16, #tpu.memory_space<vmem>>) target_semaphore(%19 : memref<!tpu.dma_semaphore, #tpu.memory_space<semaphore_mem>>)
    %c0 = arith.constant 0 : index
    %c0_17 = arith.constant 0 : index
    %c0_18 = arith.constant 0 : index
    %20 = vector.load %arg4[%c0, %c0_17, %c0_18] : memref<1x18x8xbf16, #tpu.memory_space<vmem>>, vector<1x18x8xbf16>
    %21 = vector.shape_cast %20 : vector<1x18x8xbf16> to vector<18x8xbf16>
    %c0_19 = arith.constant 0 : index
    %c0_20 = arith.constant 0 : index
    %c0_21 = arith.constant 0 : index
    %c0_22 = arith.constant 0 : index
    %22 = vector.load %arg3[%c0_19, %c0_20, %c0_21, %c0_22] : memref<1x8x18x8xbf16, #tpu.memory_space<vmem>>, vector<1x8x18x8xbf16>
    %23 = vector.shape_cast %22 : vector<1x8x18x8xbf16> to vector<8x18x8xbf16>
    %24 = vector.shape_cast %23 : vector<8x18x8xbf16> to vector<8x144xbf16>
    %cst = arith.constant dense<0.000000e+00> : vector<18x144xf32>
    %25 = tpu.matmul %21, %24, %cst {dimension_numbers = #tpu.dot_dimension_numbers<[1], [0], [0], [1], [0, 0, 1, 1], [], []>} : vector<18x8xbf16>, vector<8x144xbf16>, vector<18x144xf32> -> vector<18x144xf32>
    %26 = vector.shape_cast %25 : vector<18x144xf32> to vector<18x18x8xf32>
    %27 = arith.truncf %26 : vector<18x18x8xf32> to vector<18x18x8xbf16>
    %c0_i32_23 = arith.constant 0 : i32
    %c0_i32_24 = arith.constant 0 : i32
    %c0_i32_25 = arith.constant 0 : i32
    %28 = tpu.memref_slice %arg2[%arg0, %0, %c0_i32_24, %c0_i32_25] : memref<2x16x16x16xbf16, #tpu.memory_space<any>> -> memref<1x16x16x16xbf16, #tpu.memory_space<any>>
    %29 = tpu.memref_squeeze %28 : memref<1x16x16x16xbf16, #tpu.memory_space<any>> -> memref<16x16x16xbf16, #tpu.memory_space<any>>
    %c1_i32_26 = arith.constant 1 : i32
    %c0_i32_27 = arith.constant 0 : i32
    %c0_i32_28 = arith.constant 0 : i32
    %30 = tpu.memref_slice %arg11[%c1_i32_26, %c0_i32_27, %c0_i32_28] : memref<18x16x16xbf16, #tpu.memory_space<vmem>> -> memref<16x16x16xbf16, #tpu.memory_space<vmem>>
    %31 = tpu.memref_slice %arg12[%c0_i32_23] : memref<3x!tpu.dma_semaphore, #tpu.memory_space<semaphore_mem>> -> memref<1x!tpu.dma_semaphore, #tpu.memory_space<semaphore_mem>>
    %32 = tpu.memref_squeeze %31 : memref<1x!tpu.dma_semaphore, #tpu.memory_space<semaphore_mem>> -> memref<!tpu.dma_semaphore, #tpu.memory_space<semaphore_mem>>
    tpu.wait_dma2 semaphore(%32 : memref<!tpu.dma_semaphore, #tpu.memory_space<semaphore_mem>>) src(%29 : memref<16x16x16xbf16, #tpu.memory_space<any>>) dst(%30 : memref<16x16x16xbf16, #tpu.memory_space<vmem>>)
    %c1_i32_29 = arith.constant 1 : i32
    %c0_i32_30 = arith.constant 0 : i32
    %c0_i32_31 = arith.constant 0 : i32
    %33 = tpu.memref_slice %arg2[%arg0, %2, %c0_i32_30, %c0_i32_31] : memref<2x16x16x16xbf16, #tpu.memory_space<any>> -> memref<1x1x16x16xbf16, #tpu.memory_space<any>>
    %34 = tpu.memref_squeeze %33 : memref<1x1x16x16xbf16, #tpu.memory_space<any>> -> memref<1x16x16xbf16, #tpu.memory_space<any>>
    %c0_i32_32 = arith.constant 0 : i32
    %c0_i32_33 = arith.constant 0 : i32
    %c0_i32_34 = arith.constant 0 : i32
    %35 = tpu.memref_slice %arg11[%c0_i32_32, %c0_i32_33, %c0_i32_34] : memref<18x16x16xbf16, #tpu.memory_space<vmem>> -> memref<1x16x16xbf16, #tpu.memory_space<vmem>>
    %36 = tpu.memref_slice %arg12[%c1_i32_29] : memref<3x!tpu.dma_semaphore, #tpu.memory_space<semaphore_mem>> -> memref<1x!tpu.dma_semaphore, #tpu.memory_space<semaphore_mem>>
    %37 = tpu.memref_squeeze %36 : memref<1x!tpu.dma_semaphore, #tpu.memory_space<semaphore_mem>> -> memref<!tpu.dma_semaphore, #tpu.memory_space<semaphore_mem>>
    tpu.wait_dma2 semaphore(%37 : memref<!tpu.dma_semaphore, #tpu.memory_space<semaphore_mem>>) src(%34 : memref<1x16x16xbf16, #tpu.memory_space<any>>) dst(%35 : memref<1x16x16xbf16, #tpu.memory_space<vmem>>)
    %c2_i32_35 = arith.constant 2 : i32
    %c0_i32_36 = arith.constant 0 : i32
    %c0_i32_37 = arith.constant 0 : i32
    %38 = tpu.memref_slice %arg2[%arg0, %4, %c0_i32_36, %c0_i32_37] : memref<2x16x16x16xbf16, #tpu.memory_space<any>> -> memref<1x1x16x16xbf16, #tpu.memory_space<any>>
    %39 = tpu.memref_squeeze %38 : memref<1x1x16x16xbf16, #tpu.memory_space<any>> -> memref<1x16x16xbf16, #tpu.memory_space<any>>
    %c17_i32_38 = arith.constant 17 : i32
    %c0_i32_39 = arith.constant 0 : i32
    %c0_i32_40 = arith.constant 0 : i32
    %40 = tpu.memref_slice %arg11[%c17_i32_38, %c0_i32_39, %c0_i32_40] : memref<18x16x16xbf16, #tpu.memory_space<vmem>> -> memref<1x16x16xbf16, #tpu.memory_space<vmem>>
    %41 = tpu.memref_slice %arg12[%c2_i32_35] : memref<3x!tpu.dma_semaphore, #tpu.memory_space<semaphore_mem>> -> memref<1x!tpu.dma_semaphore, #tpu.memory_space<semaphore_mem>>
    %42 = tpu.memref_squeeze %41 : memref<1x!tpu.dma_semaphore, #tpu.memory_space<semaphore_mem>> -> memref<!tpu.dma_semaphore, #tpu.memory_space<semaphore_mem>>
    tpu.wait_dma2 semaphore(%42 : memref<!tpu.dma_semaphore, #tpu.memory_space<semaphore_mem>>) src(%39 : memref<1x16x16xbf16, #tpu.memory_space<any>>) dst(%40 : memref<1x16x16xbf16, #tpu.memory_space<vmem>>)
    %c0_i32_41 = arith.constant 0 : i32
    %43 = arith.cmpi eq, %arg1, %c0_i32_41 : i32
    %44 = arith.extui %43 : i1 to i32
    %c0_i32_42 = arith.constant 0 : i32
    %45 = arith.cmpi ne, %44, %c0_i32_42 : i32
    scf.if %45 {
      %cst_77 = arith.constant 0.000000e+00 : bf16
      %138 = vector.broadcast %cst_77 : bf16 to vector<16x16xbf16>
      %c0_78 = arith.constant 0 : index
      %c0_79 = arith.constant 0 : index
      %c0_80 = arith.constant 0 : index
      %139 = vector.load %arg11[%c0_78, %c0_79, %c0_80] : memref<18x16x16xbf16, #tpu.memory_space<vmem>>, vector<1x16x16xbf16>
      %140 = vector.shape_cast %139 : vector<1x16x16xbf16> to vector<16x16xbf16>
      %141 = vector.shape_cast %138 : vector<16x16xbf16> to vector<1x16x16xbf16>
      tpu.vector_store %arg11[%c0_78, %c0_79, %c0_80], %141 {strides = array<i32>} : memref<18x16x16xbf16, #tpu.memory_space<vmem>>, vector<1x16x16xbf16>,
    } else {
    }
    %c0_i32_43 = arith.constant 0 : i32
    %46 = arith.cmpi eq, %arg1, %c0_i32_43 : i32
    %47 = arith.extui %46 : i1 to i32
    %c0_i32_44 = arith.constant 0 : i32
    %48 = arith.cmpi ne, %47, %c0_i32_44 : i32
    scf.if %48 {
      %cst_77 = arith.constant 0.000000e+00 : bf16
      %138 = vector.broadcast %cst_77 : bf16 to vector<16x16xbf16>
      %c17 = arith.constant 17 : index
      %c0_78 = arith.constant 0 : index
      %c0_79 = arith.constant 0 : index
      %139 = vector.load %arg11[%c17, %c0_78, %c0_79] : memref<18x16x16xbf16, #tpu.memory_space<vmem>>, vector<1x16x16xbf16>
      %140 = vector.shape_cast %139 : vector<1x16x16xbf16> to vector<16x16xbf16>
      %141 = vector.shape_cast %138 : vector<16x16xbf16> to vector<1x16x16xbf16>
      tpu.vector_store %arg11[%c17, %c0_78, %c0_79], %141 {strides = array<i32>} : memref<18x16x16xbf16, #tpu.memory_space<vmem>>, vector<1x16x16xbf16>,
    } else {
    }
    %c0_45 = arith.constant 0 : index
    %c0_46 = arith.constant 0 : index
    %c0_47 = arith.constant 0 : index
    %49 = vector.load %arg11[%c0_45, %c0_46, %c0_47] : memref<18x16x16xbf16, #tpu.memory_space<vmem>>, vector<18x16x16xbf16>
    %cst_48 = arith.constant 0.000000e+00 : bf16
    %50 = vector.broadcast %cst_48 : bf16 to vector<18x1x16xbf16>
    %51 = tpu.concatenate %50, %49, %50 in 1 : vector<18x1x16xbf16>, vector<18x16x16xbf16>, vector<18x1x16xbf16> -> vector<18x18x16xbf16>
    %cst_49 = arith.constant 0.000000e+00 : f32
    %52 = vector.broadcast %cst_49 : f32 to vector<256x16xf32>
    %53 = vector.extract_strided_slice %51 {offsets = [0, 0, 0], sizes = [16, 16, 16], strides = [1, 1, 1]} : vector<18x18x16xbf16> to vector<16x16x16xbf16>
    %54 = vector.shape_cast %53 : vector<16x16x16xbf16> to vector<256x16xbf16>
    %55 = vector.extract_strided_slice %51 {offsets = [0, 1, 0], sizes = [16, 16, 16], strides = [1, 1, 1]} : vector<18x18x16xbf16> to vector<16x16x16xbf16>
    %56 = vector.shape_cast %55 : vector<16x16x16xbf16> to vector<256x16xbf16>
    %57 = vector.extract_strided_slice %51 {offsets = [0, 2, 0], sizes = [16, 16, 16], strides = [1, 1, 1]} : vector<18x18x16xbf16> to vector<16x16x16xbf16>
    %58 = vector.shape_cast %57 : vector<16x16x16xbf16> to vector<256x16xbf16>
    %59 = vector.extract_strided_slice %27 {offsets = [0, 0, 0], sizes = [16, 16, 8], strides = [1, 1, 1]} : vector<18x18x8xbf16> to vector<16x16x8xbf16>
    %60 = vector.shape_cast %59 : vector<16x16x8xbf16> to vector<256x8xbf16>
    %61 = vector.extract_strided_slice %27 {offsets = [0, 1, 0], sizes = [16, 16, 8], strides = [1, 1, 1]} : vector<18x18x8xbf16> to vector<16x16x8xbf16>
    %62 = vector.shape_cast %61 : vector<16x16x8xbf16> to vector<256x8xbf16>
    %63 = vector.extract_strided_slice %27 {offsets = [0, 2, 0], sizes = [16, 16, 8], strides = [1, 1, 1]} : vector<18x18x8xbf16> to vector<16x16x8xbf16>
    %64 = vector.shape_cast %63 : vector<16x16x8xbf16> to vector<256x8xbf16>
    %65 = tpu.concatenate %54, %56, %58, %60, %62, %64 in 1 : vector<256x16xbf16>, vector<256x16xbf16>, vector<256x16xbf16>, vector<256x8xbf16>, vector<256x8xbf16>, vector<256x8xbf16> -> vector<256x72xbf16>
    %c0_50 = arith.constant 0 : index
    %c0_51 = arith.constant 0 : index
    %c0_52 = arith.constant 0 : index
    %66 = vector.load %arg5[%c0_50, %c0_51, %c0_52] : memref<3x72x16xbf16, #tpu.memory_space<vmem>>, vector<1x72x16xbf16>
    %67 = vector.shape_cast %66 : vector<1x72x16xbf16> to vector<72x16xbf16>
    %cst_53 = arith.constant dense<0.000000e+00> : vector<256x16xf32>
    %68 = tpu.matmul %65, %67, %cst_53 {dimension_numbers = #tpu.dot_dimension_numbers<[1], [0], [0], [1], [0, 0, 1, 1], [], []>} : vector<256x72xbf16>, vector<72x16xbf16>, vector<256x16xf32> -> vector<256x16xf32>
    %69 = arith.addf %52, %68 : vector<256x16xf32>
    %70 = vector.extract_strided_slice %51 {offsets = [1, 0, 0], sizes = [16, 16, 16], strides = [1, 1, 1]} : vector<18x18x16xbf16> to vector<16x16x16xbf16>
    %71 = vector.shape_cast %70 : vector<16x16x16xbf16> to vector<256x16xbf16>
    %72 = vector.extract_strided_slice %51 {offsets = [1, 1, 0], sizes = [16, 16, 16], strides = [1, 1, 1]} : vector<18x18x16xbf16> to vector<16x16x16xbf16>
    %73 = vector.shape_cast %72 : vector<16x16x16xbf16> to vector<256x16xbf16>
    %74 = vector.extract_strided_slice %51 {offsets = [1, 2, 0], sizes = [16, 16, 16], strides = [1, 1, 1]} : vector<18x18x16xbf16> to vector<16x16x16xbf16>
    %75 = vector.shape_cast %74 : vector<16x16x16xbf16> to vector<256x16xbf16>
    %76 = vector.extract_strided_slice %27 {offsets = [1, 0, 0], sizes = [16, 16, 8], strides = [1, 1, 1]} : vector<18x18x8xbf16> to vector<16x16x8xbf16>
    %77 = vector.shape_cast %76 : vector<16x16x8xbf16> to vector<256x8xbf16>
    %78 = vector.extract_strided_slice %27 {offsets = [1, 1, 0], sizes = [16, 16, 8], strides = [1, 1, 1]} : vector<18x18x8xbf16> to vector<16x16x8xbf16>
    %79 = vector.shape_cast %78 : vector<16x16x8xbf16> to vector<256x8xbf16>
    %80 = vector.extract_strided_slice %27 {offsets = [1, 2, 0], sizes = [16, 16, 8], strides = [1, 1, 1]} : vector<18x18x8xbf16> to vector<16x16x8xbf16>
    %81 = vector.shape_cast %80 : vector<16x16x8xbf16> to vector<256x8xbf16>
    %82 = tpu.concatenate %71, %73, %75, %77, %79, %81 in 1 : vector<256x16xbf16>, vector<256x16xbf16>, vector<256x16xbf16>, vector<256x8xbf16>, vector<256x8xbf16>, vector<256x8xbf16> -> vector<256x72xbf16>
    %c1 = arith.constant 1 : index
    %c0_54 = arith.constant 0 : index
    %c0_55 = arith.constant 0 : index
    %83 = vector.load %arg5[%c1, %c0_54, %c0_55] : memref<3x72x16xbf16, #tpu.memory_space<vmem>>, vector<1x72x16xbf16>
    %84 = vector.shape_cast %83 : vector<1x72x16xbf16> to vector<72x16xbf16>
    %cst_56 = arith.constant dense<0.000000e+00> : vector<256x16xf32>
    %85 = tpu.matmul %82, %84, %cst_56 {dimension_numbers = #tpu.dot_dimension_numbers<[1], [0], [0], [1], [0, 0, 1, 1], [], []>} : vector<256x72xbf16>, vector<72x16xbf16>, vector<256x16xf32> -> vector<256x16xf32>
    %86 = arith.addf %69, %85 : vector<256x16xf32>
    %87 = vector.extract_strided_slice %51 {offsets = [2, 0, 0], sizes = [16, 16, 16], strides = [1, 1, 1]} : vector<18x18x16xbf16> to vector<16x16x16xbf16>
    %88 = vector.shape_cast %87 : vector<16x16x16xbf16> to vector<256x16xbf16>
    %89 = vector.extract_strided_slice %51 {offsets = [2, 1, 0], sizes = [16, 16, 16], strides = [1, 1, 1]} : vector<18x18x16xbf16> to vector<16x16x16xbf16>
    %90 = vector.shape_cast %89 : vector<16x16x16xbf16> to vector<256x16xbf16>
    %91 = vector.extract_strided_slice %51 {offsets = [2, 2, 0], sizes = [16, 16, 16], strides = [1, 1, 1]} : vector<18x18x16xbf16> to vector<16x16x16xbf16>
    %92 = vector.shape_cast %91 : vector<16x16x16xbf16> to vector<256x16xbf16>
    %93 = vector.extract_strided_slice %27 {offsets = [2, 0, 0], sizes = [16, 16, 8], strides = [1, 1, 1]} : vector<18x18x8xbf16> to vector<16x16x8xbf16>
    %94 = vector.shape_cast %93 : vector<16x16x8xbf16> to vector<256x8xbf16>
    %95 = vector.extract_strided_slice %27 {offsets = [2, 1, 0], sizes = [16, 16, 8], strides = [1, 1, 1]} : vector<18x18x8xbf16> to vector<16x16x8xbf16>
    %96 = vector.shape_cast %95 : vector<16x16x8xbf16> to vector<256x8xbf16>
    %97 = vector.extract_strided_slice %27 {offsets = [2, 2, 0], sizes = [16, 16, 8], strides = [1, 1, 1]} : vector<18x18x8xbf16> to vector<16x16x8xbf16>
    %98 = vector.shape_cast %97 : vector<16x16x8xbf16> to vector<256x8xbf16>
    %99 = tpu.concatenate %88, %90, %92, %94, %96, %98 in 1 : vector<256x16xbf16>, vector<256x16xbf16>, vector<256x16xbf16>, vector<256x8xbf16>, vector<256x8xbf16>, vector<256x8xbf16> -> vector<256x72xbf16>
    %c2 = arith.constant 2 : index
    %c0_57 = arith.constant 0 : index
    %c0_58 = arith.constant 0 : index
    %100 = vector.load %arg5[%c2, %c0_57, %c0_58] : memref<3x72x16xbf16, #tpu.memory_space<vmem>>, vector<1x72x16xbf16>
    %101 = vector.shape_cast %100 : vector<1x72x16xbf16> to vector<72x16xbf16>
    %cst_59 = arith.constant dense<0.000000e+00> : vector<256x16xf32>
    %102 = tpu.matmul %99, %101, %cst_59 {dimension_numbers = #tpu.dot_dimension_numbers<[1], [0], [0], [1], [0, 0, 1, 1], [], []>} : vector<256x72xbf16>, vector<72x16xbf16>, vector<256x16xf32> -> vector<256x16xf32>
    %103 = arith.addf %86, %102 : vector<256x16xf32>
    %c0_60 = arith.constant 0 : index
    %c0_61 = arith.constant 0 : index
    %104 = vector.load %arg7[%c0_60, %c0_61] : memref<1x16xf32, #tpu.memory_space<vmem>>, vector<1x16xf32>
    %105 = vector.broadcast %104 : vector<1x16xf32> to vector<256x16xf32>
    %106 = arith.mulf %103, %105 : vector<256x16xf32>
    %c0_62 = arith.constant 0 : index
    %c0_63 = arith.constant 0 : index
    %107 = vector.load %arg8[%c0_62, %c0_63] : memref<1x16xf32, #tpu.memory_space<vmem>>, vector<1x16xf32>
    %108 = vector.broadcast %107 : vector<1x16xf32> to vector<256x16xf32>
    %109 = arith.addf %106, %108 : vector<256x16xf32>
    %cst_64 = arith.constant 0.000000e+00 : f32
    %110 = vector.broadcast %cst_64 : f32 to vector<256x16xf32>
    %111 = arith.maximumf %109, %110 : vector<256x16xf32>
    %112 = vector.extract_strided_slice %49 {offsets = [1, 0, 0], sizes = [16, 16, 16], strides = [1, 1, 1]} : vector<18x16x16xbf16> to vector<16x16x16xbf16>
    %113 = vector.extract_strided_slice %26 {offsets = [1, 1, 0], sizes = [16, 16, 8], strides = [1, 1, 1]} : vector<18x18x8xf32> to vector<16x16x8xf32>
    %114 = vector.extract_strided_slice %112 {offsets = [0, 0, 0], sizes = [16, 16, 8], strides = [1, 1, 1]} : vector<16x16x16xbf16> to vector<16x16x8xbf16>
    %115 = arith.extf %114 : vector<16x16x8xbf16> to vector<16x16x8xf32>
    %116 = vector.extract_strided_slice %112 {offsets = [0, 0, 8], sizes = [16, 16, 8], strides = [1, 1, 1]} : vector<16x16x16xbf16> to vector<16x16x8xbf16>
    %117 = arith.extf %116 : vector<16x16x8xbf16> to vector<16x16x8xf32>
    %118 = arith.addf %115, %117 : vector<16x16x8xf32>
    %119 = arith.addf %118, %113 : vector<16x16x8xf32>
    %120 = vector.shape_cast %119 : vector<16x16x8xf32> to vector<256x8xf32>
    %121 = arith.truncf %120 : vector<256x8xf32> to vector<256x8xbf16>
    %c0_65 = arith.constant 0 : index
    %c0_66 = arith.constant 0 : index
    %122 = vector.load %arg6[%c0_65, %c0_66] : memref<8x2xbf16, #tpu.memory_space<vmem>>, vector<8x2xbf16>
    %cst_67 = arith.constant dense<0.000000e+00> : vector<256x2xf32>
    %123 = tpu.matmul %121, %122, %cst_67 {dimension_numbers = #tpu.dot_dimension_numbers<[1], [0], [0], [1], [0, 0, 1, 1], [], []>} : vector<256x8xbf16>, vector<8x2xbf16>, vector<256x2xf32> -> vector<256x2xf32>
    %124 = tpu.concatenate %111, %123 in 1 : vector<256x16xf32>, vector<256x2xf32> -> vector<256x18xf32>
    %cst_68 = arith.constant 0.000000e+00 : f32
    %125 = vector.broadcast %cst_68 : f32 to vector<256x6xf32>
    %126 = tpu.concatenate %124, %125 in 1 : vector<256x18xf32>, vector<256x6xf32> -> vector<256x24xf32>
    %127 = tpu.transpose %126, [1, 0] : vector<256x24xf32> -> vector<24x256xf32>
    %128 = vector.extract_strided_slice %127 {offsets = [0, 0], sizes = [16, 256], strides = [1, 1]} : vector<24x256xf32> to vector<16x256xf32>
    %129 = vector.shape_cast %128 : vector<16x256xf32> to vector<16x16x16xf32>
    %c0_69 = arith.constant 0 : index
    %c0_70 = arith.constant 0 : index
    %c0_71 = arith.constant 0 : index
    %c0_72 = arith.constant 0 : index
    %130 = vector.load %arg9[%c0_69, %c0_70, %c0_71, %c0_72] : memref<1x16x16x16xf32, #tpu.memory_space<vmem>>, vector<1x16x16x16xf32>
    %131 = vector.shape_cast %130 : vector<1x16x16x16xf32> to vector<16x16x16xf32>
    %132 = vector.shape_cast %129 : vector<16x16x16xf32> to vector<1x16x16x16xf32>
    tpu.vector_store %arg9[%c0_69, %c0_70, %c0_71, %c0_72], %132 {strides = array<i32>} : memref<1x16x16x16xf32, #tpu.memory_space<vmem>>, vector<1x16x16x16xf32>,
    %133 = vector.extract_strided_slice %127 {offsets = [16, 0], sizes = [2, 256], strides = [1, 1]} : vector<24x256xf32> to vector<2x256xf32>
    %134 = vector.shape_cast %133 : vector<2x256xf32> to vector<2x16x16xf32>
    %c0_73 = arith.constant 0 : index
    %c0_74 = arith.constant 0 : index
    %c0_75 = arith.constant 0 : index
    %c0_76 = arith.constant 0 : index
    %135 = vector.load %arg10[%c0_73, %c0_74, %c0_75, %c0_76] : memref<1x2x16x16xf32, #tpu.memory_space<vmem>>, vector<1x2x16x16xf32>
    %136 = vector.shape_cast %135 : vector<1x2x16x16xf32> to vector<2x16x16xf32>
    %137 = vector.shape_cast %134 : vector<2x16x16xf32> to vector<1x2x16x16xf32>
    tpu.vector_store %arg10[%c0_73, %c0_74, %c0_75, %c0_76], %137 {strides = array<i32>} : memref<1x2x16x16xf32, #tpu.memory_space<vmem>>, vector<1x2x16x16xf32>,
    return
  }
  func.func @transform_1(%arg0: i32, %arg1: i32) -> (i32, i32, i32, i32) {
    %c0_i32 = arith.constant 0 : i32
    %c0_i32_0 = arith.constant 0 : i32
    %c0_i32_1 = arith.constant 0 : i32
    %c0_i32_2 = arith.constant 0 : i32
    return %arg0, %c0_i32, %c0_i32_0, %c0_i32_1 : i32, i32, i32, i32
  }
  func.func @transform_2(%arg0: i32, %arg1: i32) -> (i32, i32, i32) {
    %c0_i32 = arith.constant 0 : i32
    %c0_i32_0 = arith.constant 0 : i32
    %c0_i32_1 = arith.constant 0 : i32
    return %arg1, %c0_i32, %c0_i32_0 : i32, i32, i32
  }
  func.func @transform_3(%arg0: i32, %arg1: i32) -> (i32, i32, i32) {
    %c0_i32 = arith.constant 0 : i32
    %c0_i32_0 = arith.constant 0 : i32
    %c0_i32_1 = arith.constant 0 : i32
    %c0_i32_2 = arith.constant 0 : i32
    return %c0_i32, %c0_i32_0, %c0_i32_1 : i32, i32, i32
  }
  func.func @transform_4(%arg0: i32, %arg1: i32) -> (i32, i32) {
    %c0_i32 = arith.constant 0 : i32
    %c0_i32_0 = arith.constant 0 : i32
    %c0_i32_1 = arith.constant 0 : i32
    return %c0_i32, %c0_i32_0 : i32, i32
  }
  func.func @transform_5(%arg0: i32, %arg1: i32) -> (i32, i32) {
    %c0_i32 = arith.constant 0 : i32
    %c0_i32_0 = arith.constant 0 : i32
    %c0_i32_1 = arith.constant 0 : i32
    return %c0_i32, %c0_i32_0 : i32, i32
  }
  func.func @transform_6(%arg0: i32, %arg1: i32) -> (i32, i32) {
    %c0_i32 = arith.constant 0 : i32
    %c0_i32_0 = arith.constant 0 : i32
    %c0_i32_1 = arith.constant 0 : i32
    return %c0_i32, %c0_i32_0 : i32, i32
  }
  func.func @transform_7(%arg0: i32, %arg1: i32) -> (i32, i32, i32, i32) {
    %c0_i32 = arith.constant 0 : i32
    %c0_i32_0 = arith.constant 0 : i32
    %c0_i32_1 = arith.constant 0 : i32
    return %arg0, %c0_i32, %arg1, %c0_i32_0 : i32, i32, i32, i32
  }
  func.func @transform_8(%arg0: i32, %arg1: i32) -> (i32, i32, i32, i32) {
    %c0_i32 = arith.constant 0 : i32
    %c0_i32_0 = arith.constant 0 : i32
    %c0_i32_1 = arith.constant 0 : i32
    return %arg0, %c0_i32, %arg1, %c0_i32_0 : i32, i32, i32, i32
  }
}

</mosaic_0001>

<llo_original>
// kernel: be_module_forward.4
$region0: #{be_module_forward.4}
  #allocation0 [shape = 'u32[]', space=smem, size = 0x4, offset = 0x4, fixed_abs, tag = 'smem constant byte address 0x4 - core index']
  #allocation1 [shape = 'u32[144,128]{1,0:T(1,128)}', space=vmem, size = 0x12000, scoped, tag = 'internal scratch']
  %s0 = inlined_call_operand.vmem [shape: bf16[2,8,8,8], index: 0, kind: input, shape index: {}]
  %s1 = inlined_call_operand.vmem [shape: bf16[8,8], index: 1, kind: input, shape index: {}]
  %s2 = inlined_call_operand.vmem [shape: f32[1,8], index: 2, kind: input, shape index: {}]
  %s3 = inlined_call_operand.vmem [shape: f32[1,8], index: 3, kind: input, shape index: {}]
  %s4 = inlined_call_operand.vmem [shape: bf16[18,8], index: 4, kind: input, shape index: {}]
  %s5 = inlined_call_operand.vmem [shape: bf16[2,8,18,8], index: 5, kind: output, shape index: {}]
  %s6 = sld [smem:[#allocation0]]
  $region53: #{be_module_forward.4} parent=0
    _
  %s8 = ssub.s32 1, %s6
  %s9 = scalar_select 0, %s8, %s6
  loop: start=0, step=1, limit=4
  $region2: #{be_module_forward.4} parent=0 // loop_pre_header
    _
  $region3: #{be_module_forward.4} parent=0 // loop_header
    %s11 = sphi 0, %s15
    %p12 = scmp.ge.s32.totalorder %s11, 4
    %s21 = sphi 0, %s23
    %s24 = sphi 0, %s21
    %s25 = sphi 0, %s24
    %s41 = sphi 0, %s25
    %s45 = sphi 0, %s45
    %s47 = sphi 0, %s45
    %s48 = sphi 0, %s47
    %s62 = sphi 0, %s48
    %s66 = sphi 0, %s66
    %s68 = sphi 0, %s66
    %s69 = sphi 0, %s68
    %s83 = sphi 0, %s69
    %s87 = sphi 0, %s87
    %s89 = sphi 0, %s87
    %s90 = sphi 0, %s89
    %s104 = sphi 0, %s90
    %s108 = sphi 0, %s108
    %s110 = sphi 0, %s108
    %s111 = sphi 0, %s110
    %s125 = sphi 0, %s111
    %s131 = sphi 0, %s133
    %s134 = sphi 0, %s131
    %s135 = sphi 0, %s134
    %s151 = sphi 0, %s135
  $region4: #{be_module_forward.4} parent=0 // loop_header_branch
    %14 = sbr.rel (%p12) target = $region8
  $region5: #{be_module_forward.4} parent=0 // loop_body
    %s16 = ssub.s32 %s11, 1
    %s17 = ssub.s32 %s11, 2
    %s18 = sadd.s32 %s11, 1
    %s19 = ssub.s32 %s11, %s18
    %p20 = scmp.eq.s32.totalorder %s19, 0
    %s22 = sadd.s32 %s21, 1
    %s23 = scalar_select %p20, %s21, %s22
    %p26 = pneg %p20
    %p27 = scmp.eq.s32.totalorder %s11, 1
    %p28 = por %p26, %p27
    %p29 = scmp.ne.s32.totalorder %s21, %s24
    %p30 = scmp.eq.s32.totalorder %s11, 0
    %p31 = por %p29, %p30
    %p32 = scmp.ne.s32.totalorder %s21, %s24
    %p33 = scmp.eq.s32.totalorder %s16, 1
    %p34 = por %p32, %p33
    %p35 = scmp.ne.s32.totalorder %s24, %s25
    %p36 = scmp.eq.s32.totalorder %s16, 0
    %p37 = por %p35, %p36
    %p38 = scmp.ne.s32.totalorder %s24, %s25
    %p39 = scmp.eq.s32.totalorder %s17, 1
    %p40 = por %p38, %p39
    %p42 = scmp.ne.s32.totalorder %s25, %s41
    %p43 = scmp.eq.s32.totalorder %s17, 0
    %p44 = por %p42, %p43
    %s46 = sadd.s32 %s45, 1
    %p49 = scmp.eq.s32.totalorder %s11, 1
    %p50 = scmp.ne.s32.totalorder %s45, %s47
    %p51 = scmp.eq.s32.totalorder %s11, 0
    %p52 = por %p50, %p51
    %p53 = scmp.ne.s32.totalorder %s45, %s47
    %p54 = scmp.eq.s32.totalorder %s16, 1
    %p55 = por %p53, %p54
    %p56 = scmp.ne.s32.totalorder %s47, %s48
    %p57 = scmp.eq.s32.totalorder %s16, 0
    %p58 = por %p56, %p57
    %p59 = scmp.ne.s32.totalorder %s47, %s48
    %p60 = scmp.eq.s32.totalorder %s17, 1
    %p61 = por %p59, %p60
    %p63 = scmp.ne.s32.totalorder %s48, %s62
    %p64 = scmp.eq.s32.totalorder %s17, 0
    %p65 = por %p63, %p64
    %s67 = sadd.s32 %s66, 1
    %p70 = scmp.eq.s32.totalorder %s11, 1
    %p71 = scmp.ne.s32.totalorder %s66, %s68
    %p72 = scmp.eq.s32.totalorder %s11, 0
    %p73 = por %p71, %p72
    %p74 = scmp.ne.s32.totalorder %s66, %s68
    %p75 = scmp.eq.s32.totalorder %s16, 1
    %p76 = por %p74, %p75
    %p77 = scmp.ne.s32.totalorder %s68, %s69
    %p78 = scmp.eq.s32.totalorder %s16, 0
    %p79 = por %p77, %p78
    %p80 = scmp.ne.s32.totalorder %s68, %s69
    %p81 = scmp.eq.s32.totalorder %s17, 1
    %p82 = por %p80, %p81
    %p84 = scmp.ne.s32.totalorder %s69, %s83
    %p85 = scmp.eq.s32.totalorder %s17, 0
    %p86 = por %p84, %p85
    %s88 = sadd.s32 %s87, 1
    %p91 = scmp.eq.s32.totalorder %s11, 1
    %p92 = scmp.ne.s32.totalorder %s87, %s89
    %p93 = scmp.eq.s32.totalorder %s11, 0
    %p94 = por %p92, %p93
    %p95 = scmp.ne.s32.totalorder %s87, %s89
    %p96 = scmp.eq.s32.totalorder %s16, 1
    %p97 = por %p95, %p96
    %p98 = scmp.ne.s32.totalorder %s89, %s90
    %p99 = scmp.eq.s32.totalorder %s16, 0
    %p100 = por %p98, %p99
    %p101 = scmp.ne.s32.totalorder %s89, %s90
    %p102 = scmp.eq.s32.totalorder %s17, 1
    %p103 = por %p101, %p102
    %p105 = scmp.ne.s32.totalorder %s90, %s104
    %p106 = scmp.eq.s32.totalorder %s17, 0
    %p107 = por %p105, %p106
    %s109 = sadd.s32 %s108, 1
    %p112 = scmp.eq.s32.totalorder %s11, 1
    %p113 = scmp.ne.s32.totalorder %s108, %s110
    %p114 = scmp.eq.s32.totalorder %s11, 0
    %p115 = por %p113, %p114
    %p116 = scmp.ne.s32.totalorder %s108, %s110
    %p117 = scmp.eq.s32.totalorder %s16, 1
    %p118 = por %p116, %p117
    %p119 = scmp.ne.s32.totalorder %s110, %s111
    %p120 = scmp.eq.s32.totalorder %s16, 0
    %p121 = por %p119, %p120
    %p122 = scmp.ne.s32.totalorder %s110, %s111
    %p123 = scmp.eq.s32.totalorder %s17, 1
    %p124 = por %p122, %p123
    %p126 = scmp.ne.s32.totalorder %s111, %s125
    %p127 = scmp.eq.s32.totalorder %s17, 0
    %p128 = por %p126, %p127
    %s129 = ssub.s32 %s11, %s18
    %p130 = scmp.eq.s32.totalorder %s129, 0
    %s132 = sadd.s32 %s131, 1
    %s133 = scalar_select %p130, %s131, %s132
    %p136 = pneg %p130
    %p137 = scmp.eq.s32.totalorder %s11, 1
    %p138 = por %p136, %p137
    %p139 = scmp.ne.s32.totalorder %s131, %s134
    %p140 = scmp.eq.s32.totalorder %s11, 0
    %p141 = por %p139, %p140
    %p142 = scmp.ne.s32.totalorder %s131, %s134
    %p143 = scmp.eq.s32.totalorder %s16, 1
    %p144 = por %p142, %p143
    %p145 = scmp.ne.s32.totalorder %s134, %s135
    %p146 = scmp.eq.s32.totalorder %s16, 0
    %p147 = por %p145, %p146
    %p148 = scmp.ne.s32.totalorder %s134, %s135
    %p149 = scmp.eq.s32.totalorder %s17, 1
    %p150 = por %p148, %p149
    %p152 = scmp.ne.s32.totalorder %s135, %s151
    %p153 = scmp.eq.s32.totalorder %s17, 0
    %p154 = por %p152, %p153
    %p155 = scmp.le.s32.totalorder 1, %s11
    %p156 = scmp.lt.s32.totalorder %s11, 3
    %p157 = pnand %p155, %p156
    %p158 = pneg %p157
    // Predicated region
    $region9: #{be_module_forward.4} parent=5 // pred_check
      _
    $region10: #{be_module_forward.4} parent=5 // pred_check_branch
      %160 = sbr.rel (%p157) target = $region12
    $region11: #{be_module_forward.4} parent=5 // pred_region
      %s161 = ssub.s32 %s11, 1
      // Predicated region
      $region13: #{be_module_forward.4} parent=11 // pred_check
        %p162 = pneg %p58
      $region14: #{be_module_forward.4} parent=11 // pred_check_branch
        %164 = sbr.rel (%p162) target = $region16
      $region15: #{be_module_forward.4} parent=11 // pred_region
        _
      $region16: #{be_module_forward.4} parent=11 // pred_fallthru
        _
      // Predicated region
      $region17: #{be_module_forward.4} parent=11 // pred_check
        %p165 = pneg %p79
      $region18: #{be_module_forward.4} parent=11 // pred_check_branch
        %167 = sbr.rel (%p165) target = $region20
      $region19: #{be_module_forward.4} parent=11 // pred_region
        _
      $region20: #{be_module_forward.4} parent=11 // pred_fallthru
        _
      // Predicated region
      $region21: #{be_module_forward.4} parent=11 // pred_check
        %p168 = pneg %p100
      $region22: #{be_module_forward.4} parent=11 // pred_check_branch
        %170 = sbr.rel (%p168) target = $region24
      $region23: #{be_module_forward.4} parent=11 // pred_region
        _
      $region24: #{be_module_forward.4} parent=11 // pred_fallthru
        _
      // Predicated region
      $region25: #{be_module_forward.4} parent=11 // pred_check
        %p171 = pneg %p121
      $region26: #{be_module_forward.4} parent=11 // pred_check_branch
        %173 = sbr.rel (%p171) target = $region28
      $region27: #{be_module_forward.4} parent=11 // pred_region
        _
      $region28: #{be_module_forward.4} parent=11 // pred_fallthru
        _
    $region12: #{be_module_forward.4} parent=5 // pred_fallthru
      _
    %p174 = scmp.lt.s32.totalorder %s11, 2
    // Predicated region
    $region29: #{be_module_forward.4} parent=5 // pred_check
      %p175 = pneg %p174
    $region30: #{be_module_forward.4} parent=5 // pred_check_branch
      %177 = sbr.rel (%p175) target = $region32
    $region31: #{be_module_forward.4} parent=5 // pred_region
      // Predicated region
      $region33: #{be_module_forward.4} parent=31 // pred_check
        %p178 = pneg %p31
      $region34: #{be_module_forward.4} parent=31 // pred_check_branch
        %180 = sbr.rel (%p178) target = $region36
      $region35: #{be_module_forward.4} parent=31 // pred_region
        %p181 = scmp.lt.s32.totalorder %s11, 1
        %s182 = scalar_select %p181, %s11, 1
        %s183 = smul.addr %s182, 8
        %s184 = smul.addr %s183, 4
        %s185 = scalar_lea.vmem %s0, %s184
      $region36: #{be_module_forward.4} parent=31 // pred_fallthru
        _
    $region32: #{be_module_forward.4} parent=5 // pred_fallthru
      _
    %p186 = scmp.le.s32.totalorder 1, %s11
    %p187 = scmp.lt.s32.totalorder %s11, 3
    %p188 = pnand %p186, %p187
    %p189 = pneg %p188
    // Predicated region
    $region37: #{be_module_forward.4} parent=5 // pred_check
      _
    $region38: #{be_module_forward.4} parent=5 // pred_check_branch
      %191 = sbr.rel (%p188) target = $region40
    $region39: #{be_module_forward.4} parent=5 // pred_region
      %s192 = ssub.s32 %s11, 1
      %p193 = scmp.lt.s32.totalorder %s16, 1
      %s194 = scalar_select %p193, %s16, 1
      %s195 = smul.addr %s194, 8
      %s196 = smul.addr %s195, 4
      %s197 = scalar_lea.vmem %s0, %s196
      %p198 = pneg %p37
      %p199 = pneg %p34
      %p200 = pneg %p58
      %p201 = pneg %p55
      %p202 = pneg %p79
      %p203 = pneg %p76
      %p204 = pneg %p100
      %p205 = pneg %p97
      %p206 = pneg %p121
      %p207 = pneg %p118
      %p208 = pneg %p147
      %p209 = pneg %p144
      %p210 = scmp.lt.s32.totalorder %s16, 1
      %s211 = scalar_select %p210, %s16, 1
      %s212 = smul.addr %s211, 24
      %s213 = smul.addr %s212, 4
      %s214 = scalar_lea.vmem %s5, %s213
      %p215 = scmp.lt.s32.totalorder %s16, 1
      %s216 = scalar_select %p215, %s16, 1
      %s217 = smul.addr %s216, 8
      %s218 = smul.addr %s217, 4
      %s219 = scalar_lea.vmem %s0, %s218
      %p220 = scmp.lt.s32.totalorder %s16, 1
      %s221 = scalar_select %p220, %s16, 1
      %s222 = smul.addr %s221, 24
      %s223 = smul.addr %s222, 4
      %s224 = scalar_lea.vmem %s5, %s223
      %v226 = vld [vmem:[%s219] sm:$0xf]
      %v227 = vld [vmem:[%s219 + $0x4] sm:$0xf]
      %v228 = vld [vmem:[%s219 + $0x8] sm:$0xf]
      %v229 = vld [vmem:[%s219 + $0xc] sm:$0xf]
      %v230 = vld [vmem:[%s219 + $0x10] sm:$0xf]
      %v231 = vld [vmem:[%s219 + $0x14] sm:$0xf]
      %v232 = vld [vmem:[%s219 + $0x18] sm:$0xf]
      %v233 = vld [vmem:[%s219 + $0x1c] sm:$0xf]
      %v234 = vld [vmem:[%s1] sm:$0xf]
      %v243 = vunpack.c.l.b16 %v226
      %v244 = vunpack.c.l.b16 %v227
      %v245 = vunpack.c.l.b16 %v228
      %v246 = vunpack.c.l.b16 %v229
      %v247 = vunpack.c.l.b16 %v230
      %v248 = vunpack.c.l.b16 %v231
      %v249 = vunpack.c.l.b16 %v232
      %v250 = vunpack.c.l.b16 %v233
      %v251 = vpack.c.b16 %v244, %v243
      %v252 = vpack.c.b16 %v246, %v245
      %v253 = vpack.c.b16 %v248, %v247
      %v254 = vpack.c.b16 %v250, %v249
      %vm255 = vcmask 64512
      %v257 = vsel %vm255, %v251, 0
      %v260 = vsel %vm255, %v252, 0
      %v263 = vsel %vm255, %v253, 0
      %v266 = vsel %vm255, %v254, 0
      %vm268 = vcmask 1043456
      %v270 = vsel %vm268, %v234, 0
      %272 = vmatprep.subr.bf16.mxu0 0
      %273 = vmatpush1.bf16.msra.mxu0 %v270
      %274 = vmatprep.subr.bf16.mxu0 0
      %275 = vmatpush1.bf16.msra.mxu0 0
      %276 = vmatprep.subr.bf16.mxu0 0
      %277 = vmatpush1.bf16.msra.mxu0 0
      %278 = vmatprep.subr.bf16.mxu0 0
      %279 = vmatpush1.bf16.msra.mxu0 0
      %280 = vmatprep.subr.bf16.mxu0 0
      %281 = vmatpush1.bf16.msra.mxu0 0
      %282 = vmatprep.subr.bf16.mxu0 0
      %283 = vmatpush1.bf16.msra.mxu0 0
      %284 = vmatprep.subr.bf16.mxu0 0
      %285 = vmatpush1.bf16.msra.mxu0 0
      %286 = vmatprep.subr.bf16.mxu0 0
      %287 = vmatpush1.bf16.msra.mxu0 0
      %288 = vmatprep.subr.bf16.mxu0 0
      %289 = vmatpush1.bf16.msra.mxu0 0
      %290 = vmatprep.subr.bf16.mxu0 0
      %291 = vmatpush1.bf16.msra.mxu0 0
      %292 = vmatprep.subr.bf16.mxu0 0
      %293 = vmatpush1.bf16.msra.mxu0 0
      %294 = vmatprep.subr.bf16.mxu0 0
      %295 = vmatpush1.bf16.msra.mxu0 0
      %296 = vmatprep.subr.bf16.mxu0 0
      %297 = vmatpush1.bf16.msra.mxu0 0
      %298 = vmatprep.subr.bf16.mxu0 0
      %299 = vmatpush1.bf16.msra.mxu0 0
      %300 = vmatprep.subr.bf16.mxu0 0
      %301 = vmatpush1.bf16.msra.mxu0 0
      %302 = vmatprep.subr.bf16.mxu0 0
      %303 = vmatpush1.bf16.msra.mxu0 0
      %304 = vmatprep.mubr.bf16.mxu0 0
      %305 = vmatmul.mubr.bf16.gmra.mrb[0].mxu0 %v257
      %v306 = vpop.f32.mrb[0].mxu0
      %v307 = vadd.f32 0.0, %v306
      %v308 = vpop.f32.mrb[0].mxu0
      %v309 = vpop.f32.mrb[0].mxu0
      %v310 = vadd.f32 0.0, %v309
      %v311 = vpop.f32.mrb[0].mxu0
      %312 = vmatprep.mubr.bf16.mxu0 0
      %313 = vmatmul.mubr.bf16.gmra.mrb[0].mxu0 %v260
      %v314 = vpop.f32.mrb[0].mxu0
      %v315 = vadd.f32 0.0, %v314
      %v316 = vpop.f32.mrb[0].mxu0
      %v317 = vpop.f32.mrb[0].mxu0
      %v318 = vadd.f32 0.0, %v317
      %v319 = vpop.f32.mrb[0].mxu0
      %320 = vmatprep.mubr.bf16.mxu0 0
      %321 = vmatmul.mubr.bf16.gmra.mrb[0].mxu0 %v263
      %v322 = vpop.f32.mrb[0].mxu0
      %v323 = vadd.f32 0.0, %v322
      %v324 = vpop.f32.mrb[0].mxu0
      %v325 = vpop.f32.mrb[0].mxu0
      %v326 = vadd.f32 0.0, %v325
      %v327 = vpop.f32.mrb[0].mxu0
      %328 = vmatprep.mubr.bf16.mxu0 0
      %329 = vmatmul.mubr.bf16.gmra.mrb[0].mxu0 %v266
      %v330 = vpop.f32.mrb[0].mxu0
      %v331 = vadd.f32 0.0, %v330
      %v332 = vpop.f32.mrb[0].mxu0
      %v333 = vpop.f32.mrb[0].mxu0
      %v334 = vadd.f32 0.0, %v333
      %v335 = vpop.f32.mrb[0].mxu0
      %336 = vdwg.mxu0
      %v337 = vld [vmem:[%s2] sm:$0x1]
      %v339 = vlaneseq
      %v340 = vshrl.u32 %v339, 7
      %v341 = vsub.s32 0, %v340
      %v342 = vrot.slane %v337, %v341
      %v344 = vmul.f32 %v307, %v342
      %v345 = vmul.f32 %v310, %v342
      %v346 = vmul.f32 %v315, %v342
      %v347 = vmul.f32 %v318, %v342
      %v348 = vmul.f32 %v323, %v342
      %v349 = vmul.f32 %v326, %v342
      %v350 = vmul.f32 %v331, %v342
      %v351 = vmul.f32 %v334, %v342
      %v352 = vld [vmem:[%s3] sm:$0x1]
      %v354 = vlaneseq
      %v355 = vshrl.u32 %v354, 7
      %v356 = vsub.s32 0, %v355
      %v357 = vrot.slane %v352, %v356
      %v359 = vadd.f32 %v344, %v357
      %v360 = vadd.f32 %v345, %v357
      %v361 = vadd.f32 %v346, %v357
      %v362 = vadd.f32 %v347, %v357
      %v363 = vadd.f32 %v348, %v357
      %v364 = vadd.f32 %v349, %v357
      %v365 = vadd.f32 %v350, %v357
      %v366 = vadd.f32 %v351, %v357
      %v367 = vmax.f32 %v359, 0.0
      %v368 = vmax.f32 %v360, 0.0
      %v369 = vmax.f32 %v361, 0.0
      %v370 = vmax.f32 %v362, 0.0
      %v371 = vmax.f32 %v363, 0.0
      %v372 = vmax.f32 %v364, 0.0
      %v373 = vmax.f32 %v365, 0.0
      %v374 = vmax.f32 %v366, 0.0
      %v375 = vpack.c.bf16 %v367, %v367
      %v376 = vpack.c.bf16 %v368, %v368
      %v377 = vpack.c.bf16 %v369, %v369
      %v378 = vpack.c.bf16 %v370, %v370
      %v379 = vpack.c.bf16 %v371, %v371
      %v380 = vpack.c.bf16 %v372, %v372
      %v381 = vpack.c.bf16 %v373, %v373
      %v382 = vpack.c.bf16 %v374, %v374
      %v383 = vld [vmem:[%s4] sm:$0xf]
      %v384 = vld [vmem:[%s4 + $0x4] sm:$0xf]
      %v385 = vld [vmem:[%s4 + $0x8] sm:$0x1]
      %v389 = vunpack.c.l.b16 %v383
      %v390 = vunpack.c.l.b16 %v384
      %v391 = vunpack.c.l.b16 %v385
      %v392 = vpack.c.b16 %v390, %v389
      %v393 = vpack.c.b16 %v391, %v391
      %v395 = vsel %vm255, %v392, 0
      %v398 = vsel %vm255, %v393, 0
      %v401 = vsel %vm268, %v375, 0
      %403 = vmatprep.subr.bf16.mxu0 0
      %404 = vmatpush1.bf16.msra.mxu0 %v401
      %405 = vmatprep.subr.bf16.mxu0 0
      %406 = vmatpush1.bf16.msra.mxu0 0
      %407 = vmatprep.subr.bf16.mxu0 0
      %408 = vmatpush1.bf16.msra.mxu0 0
      %409 = vmatprep.subr.bf16.mxu0 0
      %410 = vmatpush1.bf16.msra.mxu0 0
      %411 = vmatprep.subr.bf16.mxu0 0
      %412 = vmatpush1.bf16.msra.mxu0 0
      %413 = vmatprep.subr.bf16.mxu0 0
      %414 = vmatpush1.bf16.msra.mxu0 0
      %415 = vmatprep.subr.bf16.mxu0 0
      %416 = vmatpush1.bf16.msra.mxu0 0
      %417 = vmatprep.subr.bf16.mxu0 0
      %418 = vmatpush1.bf16.msra.mxu0 0
      %419 = vmatprep.subr.bf16.mxu0 0
      %420 = vmatpush1.bf16.msra.mxu0 0
      %421 = vmatprep.subr.bf16.mxu0 0
      %422 = vmatpush1.bf16.msra.mxu0 0
      %423 = vmatprep.subr.bf16.mxu0 0
      %424 = vmatpush1.bf16.msra.mxu0 0
      %425 = vmatprep.subr.bf16.mxu0 0
      %426 = vmatpush1.bf16.msra.mxu0 0
      %427 = vmatprep.subr.bf16.mxu0 0
      %428 = vmatpush1.bf16.msra.mxu0 0
      %429 = vmatprep.subr.bf16.mxu0 0
      %430 = vmatpush1.bf16.msra.mxu0 0
      %431 = vmatprep.subr.bf16.mxu0 0
      %432 = vmatpush1.bf16.msra.mxu0 0
      %433 = vmatprep.subr.bf16.mxu0 0
      %434 = vmatpush1.bf16.msra.mxu0 0
      %435 = vmatprep.mubr.bf16.mxu0 0
      %436 = vmatmul.mubr.bf16.gmra.mrb[0].mxu0 %v395
      %v437 = vpop.f32.mrb[0].mxu0
      %v438 = vadd.f32 0.0, %v437
      %v439 = vpop.f32.mrb[0].mxu0
      %v440 = vpop.f32.mrb[0].mxu0
      %v441 = vadd.f32 0.0, %v440
      %v442 = vpop.f32.mrb[0].mxu0
      %443 = vmatprep.mubr.bf16.mxu0 0
      %444 = vmatmul.mubr.bf16.gmra.mrb[0].mxu0 %v398
      %v445 = vpop.f32.mrb[0].mxu0
      %v446 = vadd.f32 0.0, %v445
      %v447 = vpop.f32.mrb[0].mxu0
      %v448 = vpop.f32.mrb[0].mxu0
      %v449 = vpop.f32.mrb[0].mxu0
      %450 = vdwg.mxu0
      %v451 = vpack.c.bf16 %v441, %v438
      %v452 = vpack.c.bf16 %v446, %v446
      %v455 = vunpack.c.l.b16 %v451
      %v456 = vunpack.c.h.b16 %v451
      %v457 = vunpack.c.l.b16 %v452
      %v458 = vpack.c.b16 %v455, %v455
      %v459 = vpack.c.b16 %v456, %v456
      %v460 = vpack.c.b16 %v457, %v457
      %vm464 = vcmask 60416
      %465 = vst.msk [vmem:[%s224] sm:$0xf] %vm464, %v458
      %466 = vst.msk [vmem:[%s224 + $0x4] sm:$0xf] %vm464, %v459
      %vm467 = vcmask 57344
      %468 = vst.msk [vmem:[%s224 + $0x8] sm:$0x1] %vm467, %v460
      %v470 = vsel %vm268, %v376, 0
      %472 = vmatprep.subr.bf16.mxu0 0
      %473 = vmatpush1.bf16.msra.mxu0 %v470
      %474 = vmatprep.subr.bf16.mxu0 0
      %475 = vmatpush1.bf16.msra.mxu0 0
      %476 = vmatprep.subr.bf16.mxu0 0
      %477 = vmatpush1.bf16.msra.mxu0 0
      %478 = vmatprep.subr.bf16.mxu0 0
      %479 = vmatpush1.bf16.msra.mxu0 0
      %480 = vmatprep.subr.bf16.mxu0 0
      %481 = vmatpush1.bf16.msra.mxu0 0
      %482 = vmatprep.subr.bf16.mxu0 0
      %483 = vmatpush1.bf16.msra.mxu0 0
      %484 = vmatprep.subr.bf16.mxu0 0
      %485 = vmatpush1.bf16.msra.mxu0 0
      %486 = vmatprep.subr.bf16.mxu0 0
      %487 = vmatpush1.bf16.msra.mxu0 0
      %488 = vmatprep.subr.bf16.mxu0 0
      %489 = vmatpush1.bf16.msra.mxu0 0
      %490 = vmatprep.subr.bf16.mxu0 0
      %491 = vmatpush1.bf16.msra.mxu0 0
      %492 = vmatprep.subr.bf16.mxu0 0
      %493 = vmatpush1.bf16.msra.mxu0 0
      %494 = vmatprep.subr.bf16.mxu0 0
      %495 = vmatpush1.bf16.msra.mxu0 0
      %496 = vmatprep.subr.bf16.mxu0 0
      %497 = vmatpush1.bf16.msra.mxu0 0
      %498 = vmatprep.subr.bf16.mxu0 0
      %499 = vmatpush1.bf16.msra.mxu0 0
      %500 = vmatprep.subr.bf16.mxu0 0
      %501 = vmatpush1.bf16.msra.mxu0 0
      %502 = vmatprep.subr.bf16.mxu0 0
      %503 = vmatpush1.bf16.msra.mxu0 0
      %504 = vmatprep.mubr.bf16.mxu0 0
      %505 = vmatmul.mubr.bf16.gmra.mrb[0].mxu0 %v395
      %v506 = vpop.f32.mrb[0].mxu0
      %v507 = vadd.f32 0.0, %v506
      %v508 = vpop.f32.mrb[0].mxu0
      %v509 = vpop.f32.mrb[0].mxu0
      %v510 = vadd.f32 0.0, %v509
      %v511 = vpop.f32.mrb[0].mxu0
      %512 = vmatprep.mubr.bf16.mxu0 0
      %513 = vmatmul.mubr.bf16.gmra.mrb[0].mxu0 %v398
      %v514 = vpop.f32.mrb[0].mxu0
      %v515 = vadd.f32 0.0, %v514
      %v516 = vpop.f32.mrb[0].mxu0
      %v517 = vpop.f32.mrb[0].mxu0
      %v518 = vpop.f32.mrb[0].mxu0
      %519 = vdwg.mxu0
      %v520 = vpack.c.bf16 %v510, %v507
      %v521 = vpack.c.bf16 %v515, %v515
      %v524 = vunpack.c.l.b16 %v520
      %v525 = vunpack.c.h.b16 %v520
      %v526 = vunpack.c.l.b16 %v521
      %v527 = vpack.c.b16 %v524, %v524
      %v528 = vpack.c.b16 %v525, %v525
      %v529 = vpack.c.b16 %v526, %v526
      %s533 = scalar_lea.vmem %s224, 12
      %534 = vst.msk [vmem:[%s533] sm:$0xf] %vm464, %v527
      %535 = vst.msk [vmem:[%s533 + $0x4] sm:$0xf] %vm464, %v528
      %536 = vst.msk [vmem:[%s533 + $0x8] sm:$0x1] %vm467, %v529
      %v538 = vsel %vm268, %v377, 0
      %540 = vmatprep.subr.bf16.mxu0 0
      %541 = vmatpush1.bf16.msra.mxu0 %v538
      %542 = vmatprep.subr.bf16.mxu0 0
      %543 = vmatpush1.bf16.msra.mxu0 0
      %544 = vmatprep.subr.bf16.mxu0 0
      %545 = vmatpush1.bf16.msra.mxu0 0
      %546 = vmatprep.subr.bf16.mxu0 0
      %547 = vmatpush1.bf16.msra.mxu0 0
      %548 = vmatprep.subr.bf16.mxu0 0
      %549 = vmatpush1.bf16.msra.mxu0 0
      %550 = vmatprep.subr.bf16.mxu0 0
      %551 = vmatpush1.bf16.msra.mxu0 0
      %552 = vmatprep.subr.bf16.mxu0 0
      %553 = vmatpush1.bf16.msra.mxu0 0
      %554 = vmatprep.subr.bf16.mxu0 0
      %555 = vmatpush1.bf16.msra.mxu0 0
      %556 = vmatprep.subr.bf16.mxu0 0
      %557 = vmatpush1.bf16.msra.mxu0 0
      %558 = vmatprep.subr.bf16.mxu0 0
      %559 = vmatpush1.bf16.msra.mxu0 0
      %560 = vmatprep.subr.bf16.mxu0 0
      %561 = vmatpush1.bf16.msra.mxu0 0
      %562 = vmatprep.subr.bf16.mxu0 0
      %563 = vmatpush1.bf16.msra.mxu0 0
      %564 = vmatprep.subr.bf16.mxu0 0
      %565 = vmatpush1.bf16.msra.mxu0 0
      %566 = vmatprep.subr.bf16.mxu0 0
      %567 = vmatpush1.bf16.msra.mxu0 0
      %568 = vmatprep.subr.bf16.mxu0 0
      %569 = vmatpush1.bf16.msra.mxu0 0
      %570 = vmatprep.subr.bf16.mxu0 0
      %571 = vmatpush1.bf16.msra.mxu0 0
      %572 = vmatprep.mubr.bf16.mxu0 0
      %573 = vmatmul.mubr.bf16.gmra.mrb[0].mxu0 %v395
      %v574 = vpop.f32.mrb[0].mxu0
      %v575 = vadd.f32 0.0, %v574
      %v576 = vpop.f32.mrb[0].mxu0
      %v577 = vpop.f32.mrb[0].mxu0
      %v578 = vadd.f32 0.0, %v577
      %v579 = vpop.f32.mrb[0].mxu0
      %580 = vmatprep.mubr.bf16.mxu0 0
      %581 = vmatmul.mubr.bf16.gmra.mrb[0].mxu0 %v398
      %v582 = vpop.f32.mrb[0].mxu0
      %v583 = vadd.f32 0.0, %v582
      %v584 = vpop.f32.mrb[0].mxu0
      %v585 = vpop.f32.mrb[0].mxu0
      %v586 = vpop.f32.mrb[0].mxu0
      %587 = vdwg.mxu0
      %v588 = vpack.c.bf16 %v578, %v575
      %v589 = vpack.c.bf16 %v583, %v583
      %v592 = vunpack.c.l.b16 %v588
      %v593 = vunpack.c.h.b16 %v588
      %v594 = vunpack.c.l.b16 %v589
      %v595 = vpack.c.b16 %v592, %v592
      %v596 = vpack.c.b16 %v593, %v593
      %v597 = vpack.c.b16 %v594, %v594
      %s601 = scalar_lea.vmem %s224, 24
      %602 = vst.msk [vmem:[%s601] sm:$0xf] %vm464, %v595
      %603 = vst.msk [vmem:[%s601 + $0x4] sm:$0xf] %vm464, %v596
      %604 = vst.msk [vmem:[%s601 + $0x8] sm:$0x1] %vm467, %v597
      %v606 = vsel %vm268, %v378, 0
      %608 = vmatprep.subr.bf16.mxu0 0
      %609 = vmatpush1.bf16.msra.mxu0 %v606
      %610 = vmatprep.subr.bf16.mxu0 0
      %611 = vmatpush1.bf16.msra.mxu0 0
      %612 = vmatprep.subr.bf16.mxu0 0
      %613 = vmatpush1.bf16.msra.mxu0 0
      %614 = vmatprep.subr.bf16.mxu0 0
      %615 = vmatpush1.bf16.msra.mxu0 0
      %616 = vmatprep.subr.bf16.mxu0 0
      %617 = vmatpush1.bf16.msra.mxu0 0
      %618 = vmatprep.subr.bf16.mxu0 0
      %619 = vmatpush1.bf16.msra.mxu0 0
      %620 = vmatprep.subr.bf16.mxu0 0
      %621 = vmatpush1.bf16.msra.mxu0 0
      %622 = vmatprep.subr.bf16.mxu0 0
      %623 = vmatpush1.bf16.msra.mxu0 0
      %624 = vmatprep.subr.bf16.mxu0 0
      %625 = vmatpush1.bf16.msra.mxu0 0
      %626 = vmatprep.subr.bf16.mxu0 0
      %627 = vmatpush1.bf16.msra.mxu0 0
      %628 = vmatprep.subr.bf16.mxu0 0
      %629 = vmatpush1.bf16.msra.mxu0 0
      %630 = vmatprep.subr.bf16.mxu0 0
      %631 = vmatpush1.bf16.msra.mxu0 0
      %632 = vmatprep.subr.bf16.mxu0 0
      %633 = vmatpush1.bf16.msra.mxu0 0
      %634 = vmatprep.subr.bf16.mxu0 0
      %635 = vmatpush1.bf16.msra.mxu0 0
      %636 = vmatprep.subr.bf16.mxu0 0
      %637 = vmatpush1.bf16.msra.mxu0 0
      %638 = vmatprep.subr.bf16.mxu0 0
      %639 = vmatpush1.bf16.msra.mxu0 0
      %640 = vmatprep.mubr.bf16.mxu0 0
      %641 = vmatmul.mubr.bf16.gmra.mrb[0].mxu0 %v395
      %v642 = vpop.f32.mrb[0].mxu0
      %v643 = vadd.f32 0.0, %v642
      %v644 = vpop.f32.mrb[0].mxu0
      %v645 = vpop.f32.mrb[0].mxu0
      %v646 = vadd.f32 0.0, %v645
      %v647 = vpop.f32.mrb[0].mxu0
      %648 = vmatprep.mubr.bf16.mxu0 0
      %649 = vmatmul.mubr.bf16.gmra.mrb[0].mxu0 %v398
      %v650 = vpop.f32.mrb[0].mxu0
      %v651 = vadd.f32 0.0, %v650
      %v652 = vpop.f32.mrb[0].mxu0
      %v653 = vpop.f32.mrb[0].mxu0
      %v654 = vpop.f32.mrb[0].mxu0
      %655 = vdwg.mxu0
      %v656 = vpack.c.bf16 %v646, %v643
      %v657 = vpack.c.bf16 %v651, %v651
      %v660 = vunpack.c.l.b16 %v656
      %v661 = vunpack.c.h.b16 %v656
      %v662 = vunpack.c.l.b16 %v657
      %v663 = vpack.c.b16 %v660, %v660
      %v664 = vpack.c.b16 %v661, %v661
      %v665 = vpack.c.b16 %v662, %v662
      %s669 = scalar_lea.vmem %s224, 36
      %670 = vst.msk [vmem:[%s669] sm:$0xf] %vm464, %v663
      %671 = vst.msk [vmem:[%s669 + $0x4] sm:$0xf] %vm464, %v664
      %672 = vst.msk [vmem:[%s669 + $0x8] sm:$0x1] %vm467, %v665
      %v674 = vsel %vm268, %v379, 0
      %676 = vmatprep.subr.bf16.mxu0 0
      %677 = vmatpush1.bf16.msra.mxu0 %v674
      %678 = vmatprep.subr.bf16.mxu0 0
      %679 = vmatpush1.bf16.msra.mxu0 0
      %680 = vmatprep.subr.bf16.mxu0 0
      %681 = vmatpush1.bf16.msra.mxu0 0
      %682 = vmatprep.subr.bf16.mxu0 0
      %683 = vmatpush1.bf16.msra.mxu0 0
      %684 = vmatprep.subr.bf16.mxu0 0
      %685 = vmatpush1.bf16.msra.mxu0 0
      %686 = vmatprep.subr.bf16.mxu0 0
      %687 = vmatpush1.bf16.msra.mxu0 0
      %688 = vmatprep.subr.bf16.mxu0 0
      %689 = vmatpush1.bf16.msra.mxu0 0
      %690 = vmatprep.subr.bf16.mxu0 0
      %691 = vmatpush1.bf16.msra.mxu0 0
      %692 = vmatprep.subr.bf16.mxu0 0
      %693 = vmatpush1.bf16.msra.mxu0 0
      %694 = vmatprep.subr.bf16.mxu0 0
      %695 = vmatpush1.bf16.msra.mxu0 0
      %696 = vmatprep.subr.bf16.mxu0 0
      %697 = vmatpush1.bf16.msra.mxu0 0
      %698 = vmatprep.subr.bf16.mxu0 0
      %699 = vmatpush1.bf16.msra.mxu0 0
      %700 = vmatprep.subr.bf16.mxu0 0
      %701 = vmatpush1.bf16.msra.mxu0 0
      %702 = vmatprep.subr.bf16.mxu0 0
      %703 = vmatpush1.bf16.msra.mxu0 0
      %704 = vmatprep.subr.bf16.mxu0 0
      %705 = vmatpush1.bf16.msra.mxu0 0
      %706 = vmatprep.subr.bf16.mxu0 0
      %707 = vmatpush1.bf16.msra.mxu0 0
      %708 = vmatprep.mubr.bf16.mxu0 0
      %709 = vmatmul.mubr.bf16.gmra.mrb[0].mxu0 %v395
      %v710 = vpop.f32.mrb[0].mxu0
      %v711 = vadd.f32 0.0, %v710
      %v712 = vpop.f32.mrb[0].mxu0
      %v713 = vpop.f32.mrb[0].mxu0
      %v714 = vadd.f32 0.0, %v713
      %v715 = vpop.f32.mrb[0].mxu0
      %716 = vmatprep.mubr.bf16.mxu0 0
      %717 = vmatmul.mubr.bf16.gmra.mrb[0].mxu0 %v398
      %v718 = vpop.f32.mrb[0].mxu0
      %v719 = vadd.f32 0.0, %v718
      %v720 = vpop.f32.mrb[0].mxu0
      %v721 = vpop.f32.mrb[0].mxu0
      %v722 = vpop.f32.mrb[0].mxu0
      %723 = vdwg.mxu0
      %v724 = vpack.c.bf16 %v714, %v711
      %v725 = vpack.c.bf16 %v719, %v719
      %v728 = vunpack.c.l.b16 %v724
      %v729 = vunpack.c.h.b16 %v724
      %v730 = vunpack.c.l.b16 %v725
      %v731 = vpack.c.b16 %v728, %v728
      %v732 = vpack.c.b16 %v729, %v729
      %v733 = vpack.c.b16 %v730, %v730
      %s737 = scalar_lea.vmem %s224, 48
      %738 = vst.msk [vmem:[%s737] sm:$0xf] %vm464, %v731
      %739 = vst.msk [vmem:[%s737 + $0x4] sm:$0xf] %vm464, %v732
      %740 = vst.msk [vmem:[%s737 + $0x8] sm:$0x1] %vm467, %v733
      %v742 = vsel %vm268, %v380, 0
      %744 = vmatprep.subr.bf16.mxu0 0
      %745 = vmatpush1.bf16.msra.mxu0 %v742
      %746 = vmatprep.subr.bf16.mxu0 0
      %747 = vmatpush1.bf16.msra.mxu0 0
      %748 = vmatprep.subr.bf16.mxu0 0
      %749 = vmatpush1.bf16.msra.mxu0 0
      %750 = vmatprep.subr.bf16.mxu0 0
      %751 = vmatpush1.bf16.msra.mxu0 0
      %752 = vmatprep.subr.bf16.mxu0 0
      %753 = vmatpush1.bf16.msra.mxu0 0
      %754 = vmatprep.subr.bf16.mxu0 0
      %755 = vmatpush1.bf16.msra.mxu0 0
      %756 = vmatprep.subr.bf16.mxu0 0
      %757 = vmatpush1.bf16.msra.mxu0 0
      %758 = vmatprep.subr.bf16.mxu0 0
      %759 = vmatpush1.bf16.msra.mxu0 0
      %760 = vmatprep.subr.bf16.mxu0 0
      %761 = vmatpush1.bf16.msra.mxu0 0
      %762 = vmatprep.subr.bf16.mxu0 0
      %763 = vmatpush1.bf16.msra.mxu0 0
      %764 = vmatprep.subr.bf16.mxu0 0
      %765 = vmatpush1.bf16.msra.mxu0 0
      %766 = vmatprep.subr.bf16.mxu0 0
      %767 = vmatpush1.bf16.msra.mxu0 0
      %768 = vmatprep.subr.bf16.mxu0 0
      %769 = vmatpush1.bf16.msra.mxu0 0
      %770 = vmatprep.subr.bf16.mxu0 0
      %771 = vmatpush1.bf16.msra.mxu0 0
      %772 = vmatprep.subr.bf16.mxu0 0
      %773 = vmatpush1.bf16.msra.mxu0 0
      %774 = vmatprep.subr.bf16.mxu0 0
      %775 = vmatpush1.bf16.msra.mxu0 0
      %776 = vmatprep.mubr.bf16.mxu0 0
      %777 = vmatmul.mubr.bf16.gmra.mrb[0].mxu0 %v395
      %v778 = vpop.f32.mrb[0].mxu0
      %v779 = vadd.f32 0.0, %v778
      %v780 = vpop.f32.mrb[0].mxu0
      %v781 = vpop.f32.mrb[0].mxu0
      %v782 = vadd.f32 0.0, %v781
      %v783 = vpop.f32.mrb[0].mxu0
      %784 = vmatprep.mubr.bf16.mxu0 0
      %785 = vmatmul.mubr.bf16.gmra.mrb[0].mxu0 %v398
      %v786 = vpop.f32.mrb[0].mxu0
      %v787 = vadd.f32 0.0, %v786
      %v788 = vpop.f32.mrb[0].mxu0
      %v789 = vpop.f32.mrb[0].mxu0
      %v790 = vpop.f32.mrb[0].mxu0
      %791 = vdwg.mxu0
      %v792 = vpack.c.bf16 %v782, %v779
      %v793 = vpack.c.bf16 %v787, %v787
      %v796 = vunpack.c.l.b16 %v792
      %v797 = vunpack.c.h.b16 %v792
      %v798 = vunpack.c.l.b16 %v793
      %v799 = vpack.c.b16 %v796, %v796
      %v800 = vpack.c.b16 %v797, %v797
      %v801 = vpack.c.b16 %v798, %v798
      %s805 = scalar_lea.vmem %s224, 60
      %806 = vst.msk [vmem:[%s805] sm:$0xf] %vm464, %v799
      %807 = vst.msk [vmem:[%s805 + $0x4] sm:$0xf] %vm464, %v800
      %808 = vst.msk [vmem:[%s805 + $0x8] sm:$0x1] %vm467, %v801
      %v810 = vsel %vm268, %v381, 0
      %812 = vmatprep.subr.bf16.mxu0 0
      %813 = vmatpush1.bf16.msra.mxu0 %v810
      %814 = vmatprep.subr.bf16.mxu0 0
      %815 = vmatpush1.bf16.msra.mxu0 0
      %816 = vmatprep.subr.bf16.mxu0 0
      %817 = vmatpush1.bf16.msra.mxu0 0
      %818 = vmatprep.subr.bf16.mxu0 0
      %819 = vmatpush1.bf16.msra.mxu0 0
      %820 = vmatprep.subr.bf16.mxu0 0
      %821 = vmatpush1.bf16.msra.mxu0 0
      %822 = vmatprep.subr.bf16.mxu0 0
      %823 = vmatpush1.bf16.msra.mxu0 0
      %824 = vmatprep.subr.bf16.mxu0 0
      %825 = vmatpush1.bf16.msra.mxu0 0
      %826 = vmatprep.subr.bf16.mxu0 0
      %827 = vmatpush1.bf16.msra.mxu0 0
      %828 = vmatprep.subr.bf16.mxu0 0
      %829 = vmatpush1.bf16.msra.mxu0 0
      %830 = vmatprep.subr.bf16.mxu0 0
      %831 = vmatpush1.bf16.msra.mxu0 0
      %832 = vmatprep.subr.bf16.mxu0 0
      %833 = vmatpush1.bf16.msra.mxu0 0
      %834 = vmatprep.subr.bf16.mxu0 0
      %835 = vmatpush1.bf16.msra.mxu0 0
      %836 = vmatprep.subr.bf16.mxu0 0
      %837 = vmatpush1.bf16.msra.mxu0 0
      %838 = vmatprep.subr.bf16.mxu0 0
      %839 = vmatpush1.bf16.msra.mxu0 0
      %840 = vmatprep.subr.bf16.mxu0 0
      %841 = vmatpush1.bf16.msra.mxu0 0
      %842 = vmatprep.subr.bf16.mxu0 0
      %843 = vmatpush1.bf16.msra.mxu0 0
      %844 = vmatprep.mubr.bf16.mxu0 0
      %845 = vmatmul.mubr.bf16.gmra.mrb[0].mxu0 %v395
      %v846 = vpop.f32.mrb[0].mxu0
      %v847 = vadd.f32 0.0, %v846
      %v848 = vpop.f32.mrb[0].mxu0
      %v849 = vpop.f32.mrb[0].mxu0
      %v850 = vadd.f32 0.0, %v849
      %v851 = vpop.f32.mrb[0].mxu0
      %852 = vmatprep.mubr.bf16.mxu0 0
      %853 = vmatmul.mubr.bf16.gmra.mrb[0].mxu0 %v398
      %v854 = vpop.f32.mrb[0].mxu0
      %v855 = vadd.f32 0.0, %v854
      %v856 = vpop.f32.mrb[0].mxu0
      %v857 = vpop.f32.mrb[0].mxu0
      %v858 = vpop.f32.mrb[0].mxu0
      %859 = vdwg.mxu0
      %v860 = vpack.c.bf16 %v850, %v847
      %v861 = vpack.c.bf16 %v855, %v855
      %v864 = vunpack.c.l.b16 %v860
      %v865 = vunpack.c.h.b16 %v860
      %v866 = vunpack.c.l.b16 %v861
      %v867 = vpack.c.b16 %v864, %v864
      %v868 = vpack.c.b16 %v865, %v865
      %v869 = vpack.c.b16 %v866, %v866
      %s873 = scalar_lea.vmem %s224, 72
      %874 = vst.msk [vmem:[%s873] sm:$0xf] %vm464, %v867
      %875 = vst.msk [vmem:[%s873 + $0x4] sm:$0xf] %vm464, %v868
      %876 = vst.msk [vmem:[%s873 + $0x8] sm:$0x1] %vm467, %v869
      %v878 = vsel %vm268, %v382, 0
      %880 = vmatprep.subr.bf16.mxu0 0
      %881 = vmatpush1.bf16.msra.mxu0 %v878
      %882 = vmatprep.subr.bf16.mxu0 0
      %883 = vmatpush1.bf16.msra.mxu0 0
      %884 = vmatprep.subr.bf16.mxu0 0
      %885 = vmatpush1.bf16.msra.mxu0 0
      %886 = vmatprep.subr.bf16.mxu0 0
      %887 = vmatpush1.bf16.msra.mxu0 0
      %888 = vmatprep.subr.bf16.mxu0 0
      %889 = vmatpush1.bf16.msra.mxu0 0
      %890 = vmatprep.subr.bf16.mxu0 0
      %891 = vmatpush1.bf16.msra.mxu0 0
      %892 = vmatprep.subr.bf16.mxu0 0
      %893 = vmatpush1.bf16.msra.mxu0 0
      %894 = vmatprep.subr.bf16.mxu0 0
      %895 = vmatpush1.bf16.msra.mxu0 0
      %896 = vmatprep.subr.bf16.mxu0 0
      %897 = vmatpush1.bf16.msra.mxu0 0
      %898 = vmatprep.subr.bf16.mxu0 0
      %899 = vmatpush1.bf16.msra.mxu0 0
      %900 = vmatprep.subr.bf16.mxu0 0
      %901 = vmatpush1.bf16.msra.mxu0 0
      %902 = vmatprep.subr.bf16.mxu0 0
      %903 = vmatpush1.bf16.msra.mxu0 0
      %904 = vmatprep.subr.bf16.mxu0 0
      %905 = vmatpush1.bf16.msra.mxu0 0
      %906 = vmatprep.subr.bf16.mxu0 0
      %907 = vmatpush1.bf16.msra.mxu0 0
      %908 = vmatprep.subr.bf16.mxu0 0
      %909 = vmatpush1.bf16.msra.mxu0 0
      %910 = vmatprep.subr.bf16.mxu0 0
      %911 = vmatpush1.bf16.msra.mxu0 0
      %912 = vmatprep.mubr.bf16.mxu0 0
      %913 = vmatmul.mubr.bf16.gmra.mrb[0].mxu0 %v395
      %v914 = vpop.f32.mrb[0].mxu0
      %v915 = vadd.f32 0.0, %v914
      %v916 = vpop.f32.mrb[0].mxu0
      %v917 = vpop.f32.mrb[0].mxu0
      %v918 = vadd.f32 0.0, %v917
      %v919 = vpop.f32.mrb[0].mxu0
      %920 = vmatprep.mubr.bf16.mxu0 0
      %921 = vmatmul.mubr.bf16.gmra.mrb[0].mxu0 %v398
      %v922 = vpop.f32.mrb[0].mxu0
      %v923 = vadd.f32 0.0, %v922
      %v924 = vpop.f32.mrb[0].mxu0
      %v925 = vpop.f32.mrb[0].mxu0
      %v926 = vpop.f32.mrb[0].mxu0
      %927 = vdwg.mxu0
      %v928 = vpack.c.bf16 %v918, %v915
      %v929 = vpack.c.bf16 %v923, %v923
      %v932 = vunpack.c.l.b16 %v928
      %v933 = vunpack.c.h.b16 %v928
      %v934 = vunpack.c.l.b16 %v929
      %v935 = vpack.c.b16 %v932, %v932
      %v936 = vpack.c.b16 %v933, %v933
      %v937 = vpack.c.b16 %v934, %v934
      %s941 = scalar_lea.vmem %s224, 84
      %942 = vst.msk [vmem:[%s941] sm:$0xf] %vm464, %v935
      %943 = vst.msk [vmem:[%s941 + $0x4] sm:$0xf] %vm464, %v936
      %944 = vst.msk [vmem:[%s941 + $0x8] sm:$0x1] %vm467, %v937
      %p945 = scmp.lt.s32.totalorder %s16, 1
      %s946 = scalar_select %p945, %s16, 1
      %s947 = smul.addr %s946, 24
      %s948 = smul.addr %s947, 4
      %s949 = scalar_lea.vmem %s5, %s948
      // Predicated region
      $region41: #{be_module_forward.4} parent=39 // pred_check
        %p950 = pneg %p144
      $region42: #{be_module_forward.4} parent=39 // pred_check_branch
        %952 = sbr.rel (%p950) target = $region44
      $region43: #{be_module_forward.4} parent=39 // pred_region
        _
      $region44: #{be_module_forward.4} parent=39 // pred_fallthru
        _
    $region40: #{be_module_forward.4} parent=5 // pred_fallthru
      _
    %p953 = scmp.le.s32.totalorder 2, %s11
    // Predicated region
    $region45: #{be_module_forward.4} parent=5 // pred_check
      %p954 = pneg %p953
    $region46: #{be_module_forward.4} parent=5 // pred_check_branch
      %956 = sbr.rel (%p954) target = $region48
    $region47: #{be_module_forward.4} parent=5 // pred_region
      %s957 = ssub.s32 %s11, 2
      // Predicated region
      $region49: #{be_module_forward.4} parent=47 // pred_check
        %p958 = pneg %p150
      $region50: #{be_module_forward.4} parent=47 // pred_check_branch
        %960 = sbr.rel (%p958) target = $region52
      $region51: #{be_module_forward.4} parent=47 // pred_region
        %p961 = scmp.lt.s32.totalorder %s17, 1
        %s962 = scalar_select %p961, %s17, 1
        %s963 = smul.addr %s962, 24
        %s964 = smul.addr %s963, 4
        %s965 = scalar_lea.vmem %s5, %s964
      $region52: #{be_module_forward.4} parent=47 // pred_fallthru
        _
    $region48: #{be_module_forward.4} parent=5 // pred_fallthru
      _
  $region6: #{be_module_forward.4} parent=0 // loop_footer
    %s15 = sadd.s32 1, %s11
  $region7: #{be_module_forward.4} parent=0 // loop_footer_branch
    %10 = sbr.rel target = $region3
  $region8: #{be_module_forward.4} parent=0 // loop_exit
    _

// kernel: be_module_forward.3
$region0: #{be_module_forward.3}
  #allocation0 [shape = 'u32[]', space=smem, size = 0x4, offset = 0x4, fixed_abs, tag = 'smem constant byte address 0x4 - core index']
  #allocation1 [shape = 'u32[144,128]{1,0:T(1,128)}', space=vmem, size = 0x12000, scoped, tag = 'internal scratch']
  %s0 = inlined_call_operand.vmem [shape: bf16[512,4], index: 0, kind: input, shape index: {}]
  %s1 = inlined_call_operand.vmem [shape: bf16[512,6], index: 1, kind: input, shape index: {}]
  %s2 = inlined_call_operand.vmem [shape: bf16[4,8], index: 2, kind: input, shape index: {}]
  %s3 = inlined_call_operand.vmem [shape: bf16[6,8], index: 3, kind: input, shape index: {}]
  %s4 = inlined_call_operand.vmem [shape: f32[1,8], index: 4, kind: input, shape index: {}]
  %s5 = inlined_call_operand.vmem [shape: f32[1,8], index: 5, kind: input, shape index: {}]
  %s6 = inlined_call_operand.vmem [shape: f32[1,8], index: 6, kind: input, shape index: {}]
  %s7 = inlined_call_operand.vmem [shape: f32[1,8], index: 7, kind: input, shape index: {}]
  %s8 = inlined_call_operand.vmem [shape: bf16[512,16], index: 8, kind: output, shape index: {}]
  %s9 = sld [smem:[#allocation0]]
  $region42: #{be_module_forward.3} parent=0
    _
  %s11 = ssub.s32 1, %s9
  %s12 = scalar_select 0, %s11, %s9
  // Predicated region
  $region2: #{be_module_forward.3} parent=0 // pred_check
    _
  $region3: #{be_module_forward.3} parent=0 // pred_check_branch
    %14 = sbr.rel (0) target = $region5
  $region4: #{be_module_forward.3} parent=0 // pred_region
    _
  $region5: #{be_module_forward.3} parent=0 // pred_fallthru
    _
  // Predicated region
  $region6: #{be_module_forward.3} parent=0 // pred_check
    _
  $region7: #{be_module_forward.3} parent=0 // pred_check_branch
    %16 = sbr.rel (0) target = $region9
  $region8: #{be_module_forward.3} parent=0 // pred_region
    _
  $region9: #{be_module_forward.3} parent=0 // pred_fallthru
    _
  // Predicated region
  $region10: #{be_module_forward.3} parent=0 // pred_check
    _
  $region11: #{be_module_forward.3} parent=0 // pred_check_branch
    %18 = sbr.rel (0) target = $region13
  $region12: #{be_module_forward.3} parent=0 // pred_region
    _
  $region13: #{be_module_forward.3} parent=0 // pred_fallthru
    _
  // Predicated region
  $region14: #{be_module_forward.3} parent=0 // pred_check
    _
  $region15: #{be_module_forward.3} parent=0 // pred_check_branch
    %20 = sbr.rel (0) target = $region17
  $region16: #{be_module_forward.3} parent=0 // pred_region
    _
  $region17: #{be_module_forward.3} parent=0 // pred_fallthru
    _
  // Predicated region
  $region18: #{be_module_forward.3} parent=0 // pred_check
    _
  $region19: #{be_module_forward.3} parent=0 // pred_check_branch
    %22 = sbr.rel (0) target = $region21
  $region20: #{be_module_forward.3} parent=0 // pred_region
    _
  $region21: #{be_module_forward.3} parent=0 // pred_fallthru
    _
  // Predicated region
  $region22: #{be_module_forward.3} parent=0 // pred_check
    _
  $region23: #{be_module_forward.3} parent=0 // pred_check_branch
    %24 = sbr.rel (0) target = $region25
  $region24: #{be_module_forward.3} parent=0 // pred_region
    _
  $region25: #{be_module_forward.3} parent=0 // pred_fallthru
    _
  // Predicated region
  $region26: #{be_module_forward.3} parent=0 // pred_check
    _
  $region27: #{be_module_forward.3} parent=0 // pred_check_branch
    %26 = sbr.rel (0) target = $region29
  $region28: #{be_module_forward.3} parent=0 // pred_region
    _
  $region29: #{be_module_forward.3} parent=0 // pred_fallthru
    _
  // Predicated region
  $region30: #{be_module_forward.3} parent=0 // pred_check
    _
  $region31: #{be_module_forward.3} parent=0 // pred_check_branch
    %28 = sbr.rel (0) target = $region33
  $region32: #{be_module_forward.3} parent=0 // pred_region
    _
  $region33: #{be_module_forward.3} parent=0 // pred_fallthru
    _
  %v30 = vld [vmem:[%s0] sm:$0xf]
  %v31 = vld [vmem:[%s0 + $0x4] sm:$0xf]
  %v32 = vld [vmem:[%s0 + $0x8] sm:$0xf]
  %v33 = vld [vmem:[%s0 + $0xc] sm:$0xf]
  %v34 = vld [vmem:[%s0 + $0x10] sm:$0xf]
  %v35 = vld [vmem:[%s0 + $0x14] sm:$0xf]
  %v36 = vld [vmem:[%s0 + $0x18] sm:$0xf]
  %v37 = vld [vmem:[%s0 + $0x1c] sm:$0xf]
  %v38 = vld [vmem:[%s0 + $0x20] sm:$0xf]
  %v39 = vld [vmem:[%s0 + $0x24] sm:$0xf]
  %v40 = vld [vmem:[%s0 + $0x28] sm:$0xf]
  %v41 = vld [vmem:[%s0 + $0x2c] sm:$0xf]
  %v42 = vld [vmem:[%s0 + $0x30] sm:$0xf]
  %v43 = vld [vmem:[%s0 + $0x34] sm:$0xf]
  %v44 = vld [vmem:[%s0 + $0x38] sm:$0xf]
  %v45 = vld [vmem:[%s0 + $0x3c] sm:$0xf]
  %v46 = vld [vmem:[%s0 + $0x40] sm:$0xf]
  %v47 = vld [vmem:[%s0 + $0x44] sm:$0xf]
  %v48 = vld [vmem:[%s0 + $0x48] sm:$0xf]
  %v49 = vld [vmem:[%s0 + $0x4c] sm:$0xf]
  %v50 = vld [vmem:[%s0 + $0x50] sm:$0xf]
  %v51 = vld [vmem:[%s0 + $0x54] sm:$0xf]
  %v52 = vld [vmem:[%s0 + $0x58] sm:$0xf]
  %v53 = vld [vmem:[%s0 + $0x5c] sm:$0xf]
  %v54 = vld [vmem:[%s0 + $0x60] sm:$0xf]
  %v55 = vld [vmem:[%s0 + $0x64] sm:$0xf]
  %v56 = vld [vmem:[%s0 + $0x68] sm:$0xf]
  %v57 = vld [vmem:[%s0 + $0x6c] sm:$0xf]
  %v58 = vld [vmem:[%s0 + $0x70] sm:$0xf]
  %v59 = vld [vmem:[%s0 + $0x74] sm:$0xf]
  %v60 = vld [vmem:[%s0 + $0x78] sm:$0xf]
  %v61 = vld [vmem:[%s0 + $0x7c] sm:$0xf]
  %v62 = vld [vmem:[%s0 + $0x80] sm:$0xf]
  %v63 = vld [vmem:[%s0 + $0x84] sm:$0xf]
  %v64 = vld [vmem:[%s0 + $0x88] sm:$0xf]
  %v65 = vld [vmem:[%s0 + $0x8c] sm:$0xf]
  %v66 = vld [vmem:[%s0 + $0x90] sm:$0xf]
  %v67 = vld [vmem:[%s0 + $0x94] sm:$0xf]
  %v68 = vld [vmem:[%s0 + $0x98] sm:$0xf]
  %v69 = vld [vmem:[%s0 + $0x9c] sm:$0xf]
  %v70 = vld [vmem:[%s0 + $0xa0] sm:$0xf]
  %v71 = vld [vmem:[%s0 + $0xa4] sm:$0xf]
  %v72 = vld [vmem:[%s0 + $0xa8] sm:$0xf]
  %v73 = vld [vmem:[%s0 + $0xac] sm:$0xf]
  %v74 = vld [vmem:[%s0 + $0xb0] sm:$0xf]
  %v75 = vld [vmem:[%s0 + $0xb4] sm:$0xf]
  %v76 = vld [vmem:[%s0 + $0xb8] sm:$0xf]
  %v77 = vld [vmem:[%s0 + $0xbc] sm:$0xf]
  %v78 = vld [vmem:[%s0 + $0xc0] sm:$0xf]
  %v79 = vld [vmem:[%s0 + $0xc4] sm:$0xf]
  %v80 = vld [vmem:[%s0 + $0xc8] sm:$0xf]
  %v81 = vld [vmem:[%s0 + $0xcc] sm:$0xf]
  %v82 = vld [vmem:[%s0 + $0xd0] sm:$0xf]
  %v83 = vld [vmem:[%s0 + $0xd4] sm:$0xf]
  %v84 = vld [vmem:[%s0 + $0xd8] sm:$0xf]
  %v85 = vld [vmem:[%s0 + $0xdc] sm:$0xf]
  %v86 = vld [vmem:[%s0 + $0xe0] sm:$0xf]
  %v87 = vld [vmem:[%s0 + $0xe4] sm:$0xf]
  %v88 = vld [vmem:[%s0 + $0xe8] sm:$0xf]
  %v89 = vld [vmem:[%s0 + $0xec] sm:$0xf]
  %v90 = vld [vmem:[%s0 + $0xf0] sm:$0xf]
  %v91 = vld [vmem:[%s0 + $0xf4] sm:$0xf]
  %v92 = vld [vmem:[%s0 + $0xf8] sm:$0xf]
  %v93 = vld [vmem:[%s0 + $0xfc] sm:$0xf]
  %v94 = vld [vmem:[%s2] sm:$0x3]
  %v159 = vunpack.c.l.b16 %v30
  %v160 = vunpack.c.l.b16 %v31
  %v161 = vunpack.c.l.b16 %v32
  %v162 = vunpack.c.l.b16 %v33
  %v163 = vunpack.c.l.b16 %v34
  %v164 = vunpack.c.l.b16 %v35
  %v165 = vunpack.c.l.b16 %v36
  %v166 = vunpack.c.l.b16 %v37
  %v167 = vunpack.c.l.b16 %v38
  %v168 = vunpack.c.l.b16 %v39
  %v169 = vunpack.c.l.b16 %v40
  %v170 = vunpack.c.l.b16 %v41
  %v171 = vunpack.c.l.b16 %v42
  %v172 = vunpack.c.l.b16 %v43
  %v173 = vunpack.c.l.b16 %v44
  %v174 = vunpack.c.l.b16 %v45
  %v175 = vunpack.c.l.b16 %v46
  %v176 = vunpack.c.l.b16 %v47
  %v177 = vunpack.c.l.b16 %v48
  %v178 = vunpack.c.l.b16 %v49
  %v179 = vunpack.c.l.b16 %v50
  %v180 = vunpack.c.l.b16 %v51
  %v181 = vunpack.c.l.b16 %v52
  %v182 = vunpack.c.l.b16 %v53
  %v183 = vunpack.c.l.b16 %v54
  %v184 = vunpack.c.l.b16 %v55
  %v185 = vunpack.c.l.b16 %v56
  %v186 = vunpack.c.l.b16 %v57
  %v187 = vunpack.c.l.b16 %v58
  %v188 = vunpack.c.l.b16 %v59
  %v189 = vunpack.c.l.b16 %v60
  %v190 = vunpack.c.l.b16 %v61
  %v191 = vunpack.c.l.b16 %v62
  %v192 = vunpack.c.l.b16 %v63
  %v193 = vunpack.c.l.b16 %v64
  %v194 = vunpack.c.l.b16 %v65
  %v195 = vunpack.c.l.b16 %v66
  %v196 = vunpack.c.l.b16 %v67
  %v197 = vunpack.c.l.b16 %v68
  %v198 = vunpack.c.l.b16 %v69
  %v199 = vunpack.c.l.b16 %v70
  %v200 = vunpack.c.l.b16 %v71
  %v201 = vunpack.c.l.b16 %v72
  %v202 = vunpack.c.l.b16 %v73
  %v203 = vunpack.c.l.b16 %v74
  %v204 = vunpack.c.l.b16 %v75
  %v205 = vunpack.c.l.b16 %v76
  %v206 = vunpack.c.l.b16 %v77
  %v207 = vunpack.c.l.b16 %v78
  %v208 = vunpack.c.l.b16 %v79
  %v209 = vunpack.c.l.b16 %v80
  %v210 = vunpack.c.l.b16 %v81
  %v211 = vunpack.c.l.b16 %v82
  %v212 = vunpack.c.l.b16 %v83
  %v213 = vunpack.c.l.b16 %v84
  %v214 = vunpack.c.l.b16 %v85
  %v215 = vunpack.c.l.b16 %v86
  %v216 = vunpack.c.l.b16 %v87
  %v217 = vunpack.c.l.b16 %v88
  %v218 = vunpack.c.l.b16 %v89
  %v219 = vunpack.c.l.b16 %v90
  %v220 = vunpack.c.l.b16 %v91
  %v221 = vunpack.c.l.b16 %v92
  %v222 = vunpack.c.l.b16 %v93
  %v223 = vpack.c.b16 %v160, %v159
  %v224 = vpack.c.b16 %v162, %v161
  %v225 = vpack.c.b16 %v164, %v163
  %v226 = vpack.c.b16 %v166, %v165
  %v227 = vpack.c.b16 %v168, %v167
  %v228 = vpack.c.b16 %v170, %v169
  %v229 = vpack.c.b16 %v172, %v171
  %v230 = vpack.c.b16 %v174, %v173
  %v231 = vpack.c.b16 %v176, %v175
  %v232 = vpack.c.b16 %v178, %v177
  %v233 = vpack.c.b16 %v180, %v179
  %v234 = vpack.c.b16 %v182, %v181
  %v235 = vpack.c.b16 %v184, %v183
  %v236 = vpack.c.b16 %v186, %v185
  %v237 = vpack.c.b16 %v188, %v187
  %v238 = vpack.c.b16 %v190, %v189
  %v239 = vpack.c.b16 %v192, %v191
  %v240 = vpack.c.b16 %v194, %v193
  %v241 = vpack.c.b16 %v196, %v195
  %v242 = vpack.c.b16 %v198, %v197
  %v243 = vpack.c.b16 %v200, %v199
  %v244 = vpack.c.b16 %v202, %v201
  %v245 = vpack.c.b16 %v204, %v203
  %v246 = vpack.c.b16 %v206, %v205
  %v247 = vpack.c.b16 %v208, %v207
  %v248 = vpack.c.b16 %v210, %v209
  %v249 = vpack.c.b16 %v212, %v211
  %v250 = vpack.c.b16 %v214, %v213
  %v251 = vpack.c.b16 %v216, %v215
  %v252 = vpack.c.b16 %v218, %v217
  %v253 = vpack.c.b16 %v220, %v219
  %v254 = vpack.c.b16 %v222, %v221
  %vm255 = vcmask 31744
  %v257 = vsel %vm255, %v223, 0
  %v260 = vsel %vm255, %v224, 0
  %v263 = vsel %vm255, %v225, 0
  %v266 = vsel %vm255, %v226, 0
  %v269 = vsel %vm255, %v227, 0
  %v272 = vsel %vm255, %v228, 0
  %v275 = vsel %vm255, %v229, 0
  %v278 = vsel %vm255, %v230, 0
  %v281 = vsel %vm255, %v231, 0
  %v284 = vsel %vm255, %v232, 0
  %v287 = vsel %vm255, %v233, 0
  %v290 = vsel %vm255, %v234, 0
  %v293 = vsel %vm255, %v235, 0
  %v296 = vsel %vm255, %v236, 0
  %v299 = vsel %vm255, %v237, 0
  %v302 = vsel %vm255, %v238, 0
  %v305 = vsel %vm255, %v239, 0
  %v308 = vsel %vm255, %v240, 0
  %v311 = vsel %vm255, %v241, 0
  %v314 = vsel %vm255, %v242, 0
  %v317 = vsel %vm255, %v243, 0
  %v320 = vsel %vm255, %v244, 0
  %v323 = vsel %vm255, %v245, 0
  %v326 = vsel %vm255, %v246, 0
  %v329 = vsel %vm255, %v247, 0
  %v332 = vsel %vm255, %v248, 0
  %v335 = vsel %vm255, %v249, 0
  %v338 = vsel %vm255, %v250, 0
  %v341 = vsel %vm255, %v251, 0
  %v344 = vsel %vm255, %v252, 0
  %v347 = vsel %vm255, %v253, 0
  %v350 = vsel %vm255, %v254, 0
  %vm352 = vcmask 1041408
  %v354 = vsel %vm352, %v94, 0
  %356 = vmatprep.subr.bf16.mxu0 0
  %357 = vmatpush1.bf16.msra.mxu0 %v354
  %358 = vmatprep.subr.bf16.mxu0 0
  %359 = vmatpush1.bf16.msra.mxu0 0
  %360 = vmatprep.subr.bf16.mxu0 0
  %361 = vmatpush1.bf16.msra.mxu0 0
  %362 = vmatprep.subr.bf16.mxu0 0
  %363 = vmatpush1.bf16.msra.mxu0 0
  %364 = vmatprep.subr.bf16.mxu0 0
  %365 = vmatpush1.bf16.msra.mxu0 0
  %366 = vmatprep.subr.bf16.mxu0 0
  %367 = vmatpush1.bf16.msra.mxu0 0
  %368 = vmatprep.subr.bf16.mxu0 0
  %369 = vmatpush1.bf16.msra.mxu0 0
  %370 = vmatprep.subr.bf16.mxu0 0
  %371 = vmatpush1.bf16.msra.mxu0 0
  %372 = vmatprep.subr.bf16.mxu0 0
  %373 = vmatpush1.bf16.msra.mxu0 0
  %374 = vmatprep.subr.bf16.mxu0 0
  %375 = vmatpush1.bf16.msra.mxu0 0
  %376 = vmatprep.subr.bf16.mxu0 0
  %377 = vmatpush1.bf16.msra.mxu0 0
  %378 = vmatprep.subr.bf16.mxu0 0
  %379 = vmatpush1.bf16.msra.mxu0 0
  %380 = vmatprep.subr.bf16.mxu0 0
  %381 = vmatpush1.bf16.msra.mxu0 0
  %382 = vmatprep.subr.bf16.mxu0 0
  %383 = vmatpush1.bf16.msra.mxu0 0
  %384 = vmatprep.subr.bf16.mxu0 0
  %385 = vmatpush1.bf16.msra.mxu0 0
  %386 = vmatprep.subr.bf16.mxu0 0
  %387 = vmatpush1.bf16.msra.mxu0 0
  %388 = vmatprep.mubr.bf16.mxu0 0
  %389 = vmatmul.mubr.bf16.gmra.mrb[0].mxu0 %v257
  %v390 = vpop.f32.mrb[0].mxu0
  %v391 = vadd.f32 0.0, %v390
  %v392 = vpop.f32.mrb[0].mxu0
  %v393 = vpop.f32.mrb[0].mxu0
  %v394 = vadd.f32 0.0, %v393
  %v395 = vpop.f32.mrb[0].mxu0
  %396 = vmatprep.mubr.bf16.mxu0 0
  %397 = vmatmul.mubr.bf16.gmra.mrb[0].mxu0 %v260
  %v398 = vpop.f32.mrb[0].mxu0
  %v399 = vadd.f32 0.0, %v398
  %v400 = vpop.f32.mrb[0].mxu0
  %v401 = vpop.f32.mrb[0].mxu0
  %v402 = vadd.f32 0.0, %v401
  %v403 = vpop.f32.mrb[0].mxu0
  %404 = vmatprep.mubr.bf16.mxu0 0
  %405 = vmatmul.mubr.bf16.gmra.mrb[0].mxu0 %v263
  %v406 = vpop.f32.mrb[0].mxu0
  %v407 = vadd.f32 0.0, %v406
  %v408 = vpop.f32.mrb[0].mxu0
  %v409 = vpop.f32.mrb[0].mxu0
  %v410 = vadd.f32 0.0, %v409
  %v411 = vpop.f32.mrb[0].mxu0
  %412 = vmatprep.mubr.bf16.mxu0 0
  %413 = vmatmul.mubr.bf16.gmra.mrb[0].mxu0 %v266
  %v414 = vpop.f32.mrb[0].mxu0
  %v415 = vadd.f32 0.0, %v414
  %v416 = vpop.f32.mrb[0].mxu0
  %v417 = vpop.f32.mrb[0].mxu0
  %v418 = vadd.f32 0.0, %v417
  %v419 = vpop.f32.mrb[0].mxu0
  %420 = vmatprep.mubr.bf16.mxu0 0
  %421 = vmatmul.mubr.bf16.gmra.mrb[0].mxu0 %v269
  %v422 = vpop.f32.mrb[0].mxu0
  %v423 = vadd.f32 0.0, %v422
  %v424 = vpop.f32.mrb[0].mxu0
  %v425 = vpop.f32.mrb[0].mxu0
  %v426 = vadd.f32 0.0, %v425
  %v427 = vpop.f32.mrb[0].mxu0
  %428 = vmatprep.mubr.bf16.mxu0 0
  %429 = vmatmul.mubr.bf16.gmra.mrb[0].mxu0 %v272
  %v430 = vpop.f32.mrb[0].mxu0
  %v431 = vadd.f32 0.0, %v430
  %v432 = vpop.f32.mrb[0].mxu0
  %v433 = vpop.f32.mrb[0].mxu0
  %v434 = vadd.f32 0.0, %v433
  %v435 = vpop.f32.mrb[0].mxu0
  %436 = vmatprep.mubr.bf16.mxu0 0
  %437 = vmatmul.mubr.bf16.gmra.mrb[0].mxu0 %v275
  %v438 = vpop.f32.mrb[0].mxu0
  %v439 = vadd.f32 0.0, %v438
  %v440 = vpop.f32.mrb[0].mxu0
  %v441 = vpop.f32.mrb[0].mxu0
  %v442 = vadd.f32 0.0, %v441
  %v443 = vpop.f32.mrb[0].mxu0
  %444 = vmatprep.mubr.bf16.mxu0 0
  %445 = vmatmul.mubr.bf16.gmra.mrb[0].mxu0 %v278
  %v446 = vpop.f32.mrb[0].mxu0
  %v447 = vadd.f32 0.0, %v446
  %v448 = vpop.f32.mrb[0].mxu0
  %v449 = vpop.f32.mrb[0].mxu0
  %v450 = vadd.f32 0.0, %v449
  %v451 = vpop.f32.mrb[0].mxu0
  %452 = vmatprep.mubr.bf16.mxu0 0
  %453 = vmatmul.mubr.bf16.gmra.mrb[0].mxu0 %v281
  %v454 = vpop.f32.mrb[0].mxu0
  %v455 = vadd.f32 0.0, %v454
  %v456 = vpop.f32.mrb[0].mxu0
  %v457 = vpop.f32.mrb[0].mxu0
  %v458 = vadd.f32 0.0, %v457
  %v459 = vpop.f32.mrb[0].mxu0
  %460 = vmatprep.mubr.bf16.mxu0 0
  %461 = vmatmul.mubr.bf16.gmra.mrb[0].mxu0 %v284
  %v462 = vpop.f32.mrb[0].mxu0
  %v463 = vadd.f32 0.0, %v462
  %v464 = vpop.f32.mrb[0].mxu0
  %v465 = vpop.f32.mrb[0].mxu0
  %v466 = vadd.f32 0.0, %v465
  %v467 = vpop.f32.mrb[0].mxu0
  %468 = vmatprep.mubr.bf16.mxu0 0
  %469 = vmatmul.mubr.bf16.gmra.mrb[0].mxu0 %v287
  %v470 = vpop.f32.mrb[0].mxu0
  %v471 = vadd.f32 0.0, %v470
  %v472 = vpop.f32.mrb[0].mxu0
  %v473 = vpop.f32.mrb[0].mxu0
  %v474 = vadd.f32 0.0, %v473
  %v475 = vpop.f32.mrb[0].mxu0
  %476 = vmatprep.mubr.bf16.mxu0 0
  %477 = vmatmul.mubr.bf16.gmra.mrb[0].mxu0 %v290
  %v478 = vpop.f32.mrb[0].mxu0
  %v479 = vadd.f32 0.0, %v478
  %v480 = vpop.f32.mrb[0].mxu0
  %v481 = vpop.f32.mrb[0].mxu0
  %v482 = vadd.f32 0.0, %v481
  %v483 = vpop.f32.mrb[0].mxu0
  %484 = vmatprep.mubr.bf16.mxu0 0
  %485 = vmatmul.mubr.bf16.gmra.mrb[0].mxu0 %v293
  %v486 = vpop.f32.mrb[0].mxu0
  %v487 = vadd.f32 0.0, %v486
  %v488 = vpop.f32.mrb[0].mxu0
  %v489 = vpop.f32.mrb[0].mxu0
  %v490 = vadd.f32 0.0, %v489
  %v491 = vpop.f32.mrb[0].mxu0
  %492 = vmatprep.mubr.bf16.mxu0 0
  %493 = vmatmul.mubr.bf16.gmra.mrb[0].mxu0 %v296
  %v494 = vpop.f32.mrb[0].mxu0
  %v495 = vadd.f32 0.0, %v494
  %v496 = vpop.f32.mrb[0].mxu0
  %v497 = vpop.f32.mrb[0].mxu0
  %v498 = vadd.f32 0.0, %v497
  %v499 = vpop.f32.mrb[0].mxu0
  %500 = vmatprep.mubr.bf16.mxu0 0
  %501 = vmatmul.mubr.bf16.gmra.mrb[0].mxu0 %v299
  %v502 = vpop.f32.mrb[0].mxu0
  %v503 = vadd.f32 0.0, %v502
  %v504 = vpop.f32.mrb[0].mxu0
  %v505 = vpop.f32.mrb[0].mxu0
  %v506 = vadd.f32 0.0, %v505
  %v507 = vpop.f32.mrb[0].mxu0
  %508 = vmatprep.mubr.bf16.mxu0 0
  %509 = vmatmul.mubr.bf16.gmra.mrb[0].mxu0 %v302
  %v510 = vpop.f32.mrb[0].mxu0
  %v511 = vadd.f32 0.0, %v510
  %v512 = vpop.f32.mrb[0].mxu0
  %v513 = vpop.f32.mrb[0].mxu0
  %v514 = vadd.f32 0.0, %v513
  %v515 = vpop.f32.mrb[0].mxu0
  %516 = vmatprep.mubr.bf16.mxu0 0
  %517 = vmatmul.mubr.bf16.gmra.mrb[0].mxu0 %v305
  %v518 = vpop.f32.mrb[0].mxu0
  %v519 = vadd.f32 0.0, %v518
  %v520 = vpop.f32.mrb[0].mxu0
  %v521 = vpop.f32.mrb[0].mxu0
  %v522 = vadd.f32 0.0, %v521
  %v523 = vpop.f32.mrb[0].mxu0
  %524 = vmatprep.mubr.bf16.mxu0 0
  %525 = vmatmul.mubr.bf16.gmra.mrb[0].mxu0 %v308
  %v526 = vpop.f32.mrb[0].mxu0
  %v527 = vadd.f32 0.0, %v526
  %v528 = vpop.f32.mrb[0].mxu0
  %v529 = vpop.f32.mrb[0].mxu0
  %v530 = vadd.f32 0.0, %v529
  %v531 = vpop.f32.mrb[0].mxu0
  %532 = vmatprep.mubr.bf16.mxu0 0
  %533 = vmatmul.mubr.bf16.gmra.mrb[0].mxu0 %v311
  %v534 = vpop.f32.mrb[0].mxu0
  %v535 = vadd.f32 0.0, %v534
  %v536 = vpop.f32.mrb[0].mxu0
  %v537 = vpop.f32.mrb[0].mxu0
  %v538 = vadd.f32 0.0, %v537
  %v539 = vpop.f32.mrb[0].mxu0
  %540 = vmatprep.mubr.bf16.mxu0 0
  %541 = vmatmul.mubr.bf16.gmra.mrb[0].mxu0 %v314
  %v542 = vpop.f32.mrb[0].mxu0
  %v543 = vadd.f32 0.0, %v542
  %v544 = vpop.f32.mrb[0].mxu0
  %v545 = vpop.f32.mrb[0].mxu0
  %v546 = vadd.f32 0.0, %v545
  %v547 = vpop.f32.mrb[0].mxu0
  %548 = vmatprep.mubr.bf16.mxu0 0
  %549 = vmatmul.mubr.bf16.gmra.mrb[0].mxu0 %v317
  %v550 = vpop.f32.mrb[0].mxu0
  %v551 = vadd.f32 0.0, %v550
  %v552 = vpop.f32.mrb[0].mxu0
  %v553 = vpop.f32.mrb[0].mxu0
  %v554 = vadd.f32 0.0, %v553
  %v555 = vpop.f32.mrb[0].mxu0
  %556 = vmatprep.mubr.bf16.mxu0 0
  %557 = vmatmul.mubr.bf16.gmra.mrb[0].mxu0 %v320
  %v558 = vpop.f32.mrb[0].mxu0
  %v559 = vadd.f32 0.0, %v558
  %v560 = vpop.f32.mrb[0].mxu0
  %v561 = vpop.f32.mrb[0].mxu0
  %v562 = vadd.f32 0.0, %v561
  %v563 = vpop.f32.mrb[0].mxu0
  %564 = vmatprep.mubr.bf16.mxu0 0
  %565 = vmatmul.mubr.bf16.gmra.mrb[0].mxu0 %v323
  %v566 = vpop.f32.mrb[0].mxu0
  %v567 = vadd.f32 0.0, %v566
  %v568 = vpop.f32.mrb[0].mxu0
  %v569 = vpop.f32.mrb[0].mxu0
  %v570 = vadd.f32 0.0, %v569
  %v571 = vpop.f32.mrb[0].mxu0
  %572 = vmatprep.mubr.bf16.mxu0 0
  %573 = vmatmul.mubr.bf16.gmra.mrb[0].mxu0 %v326
  %v574 = vpop.f32.mrb[0].mxu0
  %v575 = vadd.f32 0.0, %v574
  %v576 = vpop.f32.mrb[0].mxu0
  %v577 = vpop.f32.mrb[0].mxu0
  %v578 = vadd.f32 0.0, %v577
  %v579 = vpop.f32.mrb[0].mxu0
  %580 = vmatprep.mubr.bf16.mxu0 0
  %581 = vmatmul.mubr.bf16.gmra.mrb[0].mxu0 %v329
  %v582 = vpop.f32.mrb[0].mxu0
  %v583 = vadd.f32 0.0, %v582
  %v584 = vpop.f32.mrb[0].mxu0
  %v585 = vpop.f32.mrb[0].mxu0
  %v586 = vadd.f32 0.0, %v585
  %v587 = vpop.f32.mrb[0].mxu0
  %588 = vmatprep.mubr.bf16.mxu0 0
  %589 = vmatmul.mubr.bf16.gmra.mrb[0].mxu0 %v332
  %v590 = vpop.f32.mrb[0].mxu0
  %v591 = vadd.f32 0.0, %v590
  %v592 = vpop.f32.mrb[0].mxu0
  %v593 = vpop.f32.mrb[0].mxu0
  %v594 = vadd.f32 0.0, %v593
  %v595 = vpop.f32.mrb[0].mxu0
  %596 = vmatprep.mubr.bf16.mxu0 0
  %597 = vmatmul.mubr.bf16.gmra.mrb[0].mxu0 %v335
  %v598 = vpop.f32.mrb[0].mxu0
  %v599 = vadd.f32 0.0, %v598
  %v600 = vpop.f32.mrb[0].mxu0
  %v601 = vpop.f32.mrb[0].mxu0
  %v602 = vadd.f32 0.0, %v601
  %v603 = vpop.f32.mrb[0].mxu0
  %604 = vmatprep.mubr.bf16.mxu0 0
  %605 = vmatmul.mubr.bf16.gmra.mrb[0].mxu0 %v338
  %v606 = vpop.f32.mrb[0].mxu0
  %v607 = vadd.f32 0.0, %v606
  %v608 = vpop.f32.mrb[0].mxu0
  %v609 = vpop.f32.mrb[0].mxu0
  %v610 = vadd.f32 0.0, %v609
  %v611 = vpop.f32.mrb[0].mxu0
  %612 = vmatprep.mubr.bf16.mxu0 0
  %613 = vmatmul.mubr.bf16.gmra.mrb[0].mxu0 %v341
  %v614 = vpop.f32.mrb[0].mxu0
  %v615 = vadd.f32 0.0, %v614
  %v616 = vpop.f32.mrb[0].mxu0
  %v617 = vpop.f32.mrb[0].mxu0
  %v618 = vadd.f32 0.0, %v617
  %v619 = vpop.f32.mrb[0].mxu0
  %620 = vmatprep.mubr.bf16.mxu0 0
  %621 = vmatmul.mubr.bf16.gmra.mrb[0].mxu0 %v344
  %v622 = vpop.f32.mrb[0].mxu0
  %v623 = vadd.f32 0.0, %v622
  %v624 = vpop.f32.mrb[0].mxu0
  %v625 = vpop.f32.mrb[0].mxu0
  %v626 = vadd.f32 0.0, %v625
  %v627 = vpop.f32.mrb[0].mxu0
  %628 = vmatprep.mubr.bf16.mxu0 0
  %629 = vmatmul.mubr.bf16.gmra.mrb[0].mxu0 %v347
  %v630 = vpop.f32.mrb[0].mxu0
  %v631 = vadd.f32 0.0, %v630
  %v632 = vpop.f32.mrb[0].mxu0
  %v633 = vpop.f32.mrb[0].mxu0
  %v634 = vadd.f32 0.0, %v633
  %v635 = vpop.f32.mrb[0].mxu0
  %636 = vmatprep.mubr.bf16.mxu0 0
  %637 = vmatmul.mubr.bf16.gmra.mrb[0].mxu0 %v350
  %v638 = vpop.f32.mrb[0].mxu0
  %v639 = vadd.f32 0.0, %v638
  %v640 = vpop.f32.mrb[0].mxu0
  %v641 = vpop.f32.mrb[0].mxu0
  %v642 = vadd.f32 0.0, %v641
  %v643 = vpop.f32.mrb[0].mxu0
  %644 = vdwg.mxu0
  %v645 = vld [vmem:[%s4] sm:$0x1]
  %v647 = vlaneseq
  %v648 = vshrl.u32 %v647, 7
  %v649 = vsub.s32 0, %v648
  %v650 = vrot.slane %v645, %v649
  %v652 = vmul.f32 %v391, %v650
  %v653 = vmul.f32 %v394, %v650
  %v654 = vmul.f32 %v399, %v650
  %v655 = vmul.f32 %v402, %v650
  %v656 = vmul.f32 %v407, %v650
  %v657 = vmul.f32 %v410, %v650
  %v658 = vmul.f32 %v415, %v650
  %v659 = vmul.f32 %v418, %v650
  %v660 = vmul.f32 %v423, %v650
  %v661 = vmul.f32 %v426, %v650
  %v662 = vmul.f32 %v431, %v650
  %v663 = vmul.f32 %v434, %v650
  %v664 = vmul.f32 %v439, %v650
  %v665 = vmul.f32 %v442, %v650
  %v666 = vmul.f32 %v447, %v650
  %v667 = vmul.f32 %v450, %v650
  %v668 = vmul.f32 %v455, %v650
  %v669 = vmul.f32 %v458, %v650
  %v670 = vmul.f32 %v463, %v650
  %v671 = vmul.f32 %v466, %v650
  %v672 = vmul.f32 %v471, %v650
  %v673 = vmul.f32 %v474, %v650
  %v674 = vmul.f32 %v479, %v650
  %v675 = vmul.f32 %v482, %v650
  %v676 = vmul.f32 %v487, %v650
  %v677 = vmul.f32 %v490, %v650
  %v678 = vmul.f32 %v495, %v650
  %v679 = vmul.f32 %v498, %v650
  %v680 = vmul.f32 %v503, %v650
  %v681 = vmul.f32 %v506, %v650
  %v682 = vmul.f32 %v511, %v650
  %v683 = vmul.f32 %v514, %v650
  %v684 = vmul.f32 %v519, %v650
  %v685 = vmul.f32 %v522, %v650
  %v686 = vmul.f32 %v527, %v650
  %v687 = vmul.f32 %v530, %v650
  %v688 = vmul.f32 %v535, %v650
  %v689 = vmul.f32 %v538, %v650
  %v690 = vmul.f32 %v543, %v650
  %v691 = vmul.f32 %v546, %v650
  %v692 = vmul.f32 %v551, %v650
  %v693 = vmul.f32 %v554, %v650
  %v694 = vmul.f32 %v559, %v650
  %v695 = vmul.f32 %v562, %v650
  %v696 = vmul.f32 %v567, %v650
  %v697 = vmul.f32 %v570, %v650
  %v698 = vmul.f32 %v575, %v650
  %v699 = vmul.f32 %v578, %v650
  %v700 = vmul.f32 %v583, %v650
  %v701 = vmul.f32 %v586, %v650
  %v702 = vmul.f32 %v591, %v650
  %v703 = vmul.f32 %v594, %v650
  %v704 = vmul.f32 %v599, %v650
  %v705 = vmul.f32 %v602, %v650
  %v706 = vmul.f32 %v607, %v650
  %v707 = vmul.f32 %v610, %v650
  %v708 = vmul.f32 %v615, %v650
  %v709 = vmul.f32 %v618, %v650
  %v710 = vmul.f32 %v623, %v650
  %v711 = vmul.f32 %v626, %v650
  %v712 = vmul.f32 %v631, %v650
  %v713 = vmul.f32 %v634, %v650
  %v714 = vmul.f32 %v639, %v650
  %v715 = vmul.f32 %v642, %v650
  %v716 = vld [vmem:[%s5] sm:$0x1]
  %v718 = vlaneseq
  %v719 = vshrl.u32 %v718, 7
  %v720 = vsub.s32 0, %v719
  %v721 = vrot.slane %v716, %v720
  %v723 = vadd.f32 %v652, %v721
  %v724 = vadd.f32 %v653, %v721
  %v725 = vadd.f32 %v654, %v721
  %v726 = vadd.f32 %v655, %v721
  %v727 = vadd.f32 %v656, %v721
  %v728 = vadd.f32 %v657, %v721
  %v729 = vadd.f32 %v658, %v721
  %v730 = vadd.f32 %v659, %v721
  %v731 = vadd.f32 %v660, %v721
  %v732 = vadd.f32 %v661, %v721
  %v733 = vadd.f32 %v662, %v721
  %v734 = vadd.f32 %v663, %v721
  %v735 = vadd.f32 %v664, %v721
  %v736 = vadd.f32 %v665, %v721
  %v737 = vadd.f32 %v666, %v721
  %v738 = vadd.f32 %v667, %v721
  %v739 = vadd.f32 %v668, %v721
  %v740 = vadd.f32 %v669, %v721
  %v741 = vadd.f32 %v670, %v721
  %v742 = vadd.f32 %v671, %v721
  %v743 = vadd.f32 %v672, %v721
  %v744 = vadd.f32 %v673, %v721
  %v745 = vadd.f32 %v674, %v721
  %v746 = vadd.f32 %v675, %v721
  %v747 = vadd.f32 %v676, %v721
  %v748 = vadd.f32 %v677, %v721
  %v749 = vadd.f32 %v678, %v721
  %v750 = vadd.f32 %v679, %v721
  %v751 = vadd.f32 %v680, %v721
  %v752 = vadd.f32 %v681, %v721
  %v753 = vadd.f32 %v682, %v721
  %v754 = vadd.f32 %v683, %v721
  %v755 = vadd.f32 %v684, %v721
  %v756 = vadd.f32 %v685, %v721
  %v757 = vadd.f32 %v686, %v721
  %v758 = vadd.f32 %v687, %v721
  %v759 = vadd.f32 %v688, %v721
  %v760 = vadd.f32 %v689, %v721
  %v761 = vadd.f32 %v690, %v721
  %v762 = vadd.f32 %v691, %v721
  %v763 = vadd.f32 %v692, %v721
  %v764 = vadd.f32 %v693, %v721
  %v765 = vadd.f32 %v694, %v721
  %v766 = vadd.f32 %v695, %v721
  %v767 = vadd.f32 %v696, %v721
  %v768 = vadd.f32 %v697, %v721
  %v769 = vadd.f32 %v698, %v721
  %v770 = vadd.f32 %v699, %v721
  %v771 = vadd.f32 %v700, %v721
  %v772 = vadd.f32 %v701, %v721
  %v773 = vadd.f32 %v702, %v721
  %v774 = vadd.f32 %v703, %v721
  %v775 = vadd.f32 %v704, %v721
  %v776 = vadd.f32 %v705, %v721
  %v777 = vadd.f32 %v706, %v721
  %v778 = vadd.f32 %v707, %v721
  %v779 = vadd.f32 %v708, %v721
  %v780 = vadd.f32 %v709, %v721
  %v781 = vadd.f32 %v710, %v721
  %v782 = vadd.f32 %v711, %v721
  %v783 = vadd.f32 %v712, %v721
  %v784 = vadd.f32 %v713, %v721
  %v785 = vadd.f32 %v714, %v721
  %v786 = vadd.f32 %v715, %v721
  %v787 = vmax.f32 %v723, 0.0
  %v788 = vmax.f32 %v724, 0.0
  %v789 = vmax.f32 %v725, 0.0
  %v790 = vmax.f32 %v726, 0.0
  %v791 = vmax.f32 %v727, 0.0
  %v792 = vmax.f32 %v728, 0.0
  %v793 = vmax.f32 %v729, 0.0
  %v794 = vmax.f32 %v730, 0.0
  %v795 = vmax.f32 %v731, 0.0
  %v796 = vmax.f32 %v732, 0.0
  %v797 = vmax.f32 %v733, 0.0
  %v798 = vmax.f32 %v734, 0.0
  %v799 = vmax.f32 %v735, 0.0
  %v800 = vmax.f32 %v736, 0.0
  %v801 = vmax.f32 %v737, 0.0
  %v802 = vmax.f32 %v738, 0.0
  %v803 = vmax.f32 %v739, 0.0
  %v804 = vmax.f32 %v740, 0.0
  %v805 = vmax.f32 %v741, 0.0
  %v806 = vmax.f32 %v742, 0.0
  %v807 = vmax.f32 %v743, 0.0
  %v808 = vmax.f32 %v744, 0.0
  %v809 = vmax.f32 %v745, 0.0
  %v810 = vmax.f32 %v746, 0.0
  %v811 = vmax.f32 %v747, 0.0
  %v812 = vmax.f32 %v748, 0.0
  %v813 = vmax.f32 %v749, 0.0
  %v814 = vmax.f32 %v750, 0.0
  %v815 = vmax.f32 %v751, 0.0
  %v816 = vmax.f32 %v752, 0.0
  %v817 = vmax.f32 %v753, 0.0
  %v818 = vmax.f32 %v754, 0.0
  %v819 = vmax.f32 %v755, 0.0
  %v820 = vmax.f32 %v756, 0.0
  %v821 = vmax.f32 %v757, 0.0
  %v822 = vmax.f32 %v758, 0.0
  %v823 = vmax.f32 %v759, 0.0
  %v824 = vmax.f32 %v760, 0.0
  %v825 = vmax.f32 %v761, 0.0
  %v826 = vmax.f32 %v762, 0.0
  %v827 = vmax.f32 %v763, 0.0
  %v828 = vmax.f32 %v764, 0.0
  %v829 = vmax.f32 %v765, 0.0
  %v830 = vmax.f32 %v766, 0.0
  %v831 = vmax.f32 %v767, 0.0
  %v832 = vmax.f32 %v768, 0.0
  %v833 = vmax.f32 %v769, 0.0
  %v834 = vmax.f32 %v770, 0.0
  %v835 = vmax.f32 %v771, 0.0
  %v836 = vmax.f32 %v772, 0.0
  %v837 = vmax.f32 %v773, 0.0
  %v838 = vmax.f32 %v774, 0.0
  %v839 = vmax.f32 %v775, 0.0
  %v840 = vmax.f32 %v776, 0.0
  %v841 = vmax.f32 %v777, 0.0
  %v842 = vmax.f32 %v778, 0.0
  %v843 = vmax.f32 %v779, 0.0
  %v844 = vmax.f32 %v780, 0.0
  %v845 = vmax.f32 %v781, 0.0
  %v846 = vmax.f32 %v782, 0.0
  %v847 = vmax.f32 %v783, 0.0
  %v848 = vmax.f32 %v784, 0.0
  %v849 = vmax.f32 %v785, 0.0
  %v850 = vmax.f32 %v786, 0.0
  %v851 = vld [vmem:[%s1] sm:$0xf]
  %v852 = vld [vmem:[%s1 + $0x4] sm:$0xf]
  %v853 = vld [vmem:[%s1 + $0x8] sm:$0xf]
  %v854 = vld [vmem:[%s1 + $0xc] sm:$0xf]
  %v855 = vld [vmem:[%s1 + $0x10] sm:$0xf]
  %v856 = vld [vmem:[%s1 + $0x14] sm:$0xf]
  %v857 = vld [vmem:[%s1 + $0x18] sm:$0xf]
  %v858 = vld [vmem:[%s1 + $0x1c] sm:$0xf]
  %v859 = vld [vmem:[%s1 + $0x20] sm:$0xf]
  %v860 = vld [vmem:[%s1 + $0x24] sm:$0xf]
  %v861 = vld [vmem:[%s1 + $0x28] sm:$0xf]
  %v862 = vld [vmem:[%s1 + $0x2c] sm:$0xf]
  %v863 = vld [vmem:[%s1 + $0x30] sm:$0xf]
  %v864 = vld [vmem:[%s1 + $0x34] sm:$0xf]
  %v865 = vld [vmem:[%s1 + $0x38] sm:$0xf]
  %v866 = vld [vmem:[%s1 + $0x3c] sm:$0xf]
  %v867 = vld [vmem:[%s1 + $0x40] sm:$0xf]
  %v868 = vld [vmem:[%s1 + $0x44] sm:$0xf]
  %v869 = vld [vmem:[%s1 + $0x48] sm:$0xf]
  %v870 = vld [vmem:[%s1 + $0x4c] sm:$0xf]
  %v871 = vld [vmem:[%s1 + $0x50] sm:$0xf]
  %v872 = vld [vmem:[%s1 + $0x54] sm:$0xf]
  %v873 = vld [vmem:[%s1 + $0x58] sm:$0xf]
  %v874 = vld [vmem:[%s1 + $0x5c] sm:$0xf]
  %v875 = vld [vmem:[%s1 + $0x60] sm:$0xf]
  %v876 = vld [vmem:[%s1 + $0x64] sm:$0xf]
  %v877 = vld [vmem:[%s1 + $0x68] sm:$0xf]
  %v878 = vld [vmem:[%s1 + $0x6c] sm:$0xf]
  %v879 = vld [vmem:[%s1 + $0x70] sm:$0xf]
  %v880 = vld [vmem:[%s1 + $0x74] sm:$0xf]
  %v881 = vld [vmem:[%s1 + $0x78] sm:$0xf]
  %v882 = vld [vmem:[%s1 + $0x7c] sm:$0xf]
  %v883 = vld [vmem:[%s1 + $0x80] sm:$0xf]
  %v884 = vld [vmem:[%s1 + $0x84] sm:$0xf]
  %v885 = vld [vmem:[%s1 + $0x88] sm:$0xf]
  %v886 = vld [vmem:[%s1 + $0x8c] sm:$0xf]
  %v887 = vld [vmem:[%s1 + $0x90] sm:$0xf]
  %v888 = vld [vmem:[%s1 + $0x94] sm:$0xf]
  %v889 = vld [vmem:[%s1 + $0x98] sm:$0xf]
  %v890 = vld [vmem:[%s1 + $0x9c] sm:$0xf]
  %v891 = vld [vmem:[%s1 + $0xa0] sm:$0xf]
  %v892 = vld [vmem:[%s1 + $0xa4] sm:$0xf]
  %v893 = vld [vmem:[%s1 + $0xa8] sm:$0xf]
  %v894 = vld [vmem:[%s1 + $0xac] sm:$0xf]
  %v895 = vld [vmem:[%s1 + $0xb0] sm:$0xf]
  %v896 = vld [vmem:[%s1 + $0xb4] sm:$0xf]
  %v897 = vld [vmem:[%s1 + $0xb8] sm:$0xf]
  %v898 = vld [vmem:[%s1 + $0xbc] sm:$0xf]
  %v899 = vld [vmem:[%s1 + $0xc0] sm:$0xf]
  %v900 = vld [vmem:[%s1 + $0xc4] sm:$0xf]
  %v901 = vld [vmem:[%s1 + $0xc8] sm:$0xf]
  %v902 = vld [vmem:[%s1 + $0xcc] sm:$0xf]
  %v903 = vld [vmem:[%s1 + $0xd0] sm:$0xf]
  %v904 = vld [vmem:[%s1 + $0xd4] sm:$0xf]
  %v905 = vld [vmem:[%s1 + $0xd8] sm:$0xf]
  %v906 = vld [vmem:[%s1 + $0xdc] sm:$0xf]
  %v907 = vld [vmem:[%s1 + $0xe0] sm:$0xf]
  %v908 = vld [vmem:[%s1 + $0xe4] sm:$0xf]
  %v909 = vld [vmem:[%s1 + $0xe8] sm:$0xf]
  %v910 = vld [vmem:[%s1 + $0xec] sm:$0xf]
  %v911 = vld [vmem:[%s1 + $0xf0] sm:$0xf]
  %v912 = vld [vmem:[%s1 + $0xf4] sm:$0xf]
  %v913 = vld [vmem:[%s1 + $0xf8] sm:$0xf]
  %v914 = vld [vmem:[%s1 + $0xfc] sm:$0xf]
  %v915 = vld [vmem:[%s3] sm:$0x7]
  %v980 = vunpack.c.l.b16 %v851
  %v981 = vunpack.c.l.b16 %v852
  %v982 = vunpack.c.l.b16 %v853
  %v983 = vunpack.c.l.b16 %v854
  %v984 = vunpack.c.l.b16 %v855
  %v985 = vunpack.c.l.b16 %v856
  %v986 = vunpack.c.l.b16 %v857
  %v987 = vunpack.c.l.b16 %v858
  %v988 = vunpack.c.l.b16 %v859
  %v989 = vunpack.c.l.b16 %v860
  %v990 = vunpack.c.l.b16 %v861
  %v991 = vunpack.c.l.b16 %v862
  %v992 = vunpack.c.l.b16 %v863
  %v993 = vunpack.c.l.b16 %v864
  %v994 = vunpack.c.l.b16 %v865
  %v995 = vunpack.c.l.b16 %v866
  %v996 = vunpack.c.l.b16 %v867
  %v997 = vunpack.c.l.b16 %v868
  %v998 = vunpack.c.l.b16 %v869
  %v999 = vunpack.c.l.b16 %v870
  %v1000 = vunpack.c.l.b16 %v871
  %v1001 = vunpack.c.l.b16 %v872
  %v1002 = vunpack.c.l.b16 %v873
  %v1003 = vunpack.c.l.b16 %v874
  %v1004 = vunpack.c.l.b16 %v875
  %v1005 = vunpack.c.l.b16 %v876
  %v1006 = vunpack.c.l.b16 %v877
  %v1007 = vunpack.c.l.b16 %v878
  %v1008 = vunpack.c.l.b16 %v879
  %v1009 = vunpack.c.l.b16 %v880
  %v1010 = vunpack.c.l.b16 %v881
  %v1011 = vunpack.c.l.b16 %v882
  %v1012 = vunpack.c.l.b16 %v883
  %v1013 = vunpack.c.l.b16 %v884
  %v1014 = vunpack.c.l.b16 %v885
  %v1015 = vunpack.c.l.b16 %v886
  %v1016 = vunpack.c.l.b16 %v887
  %v1017 = vunpack.c.l.b16 %v888
  %v1018 = vunpack.c.l.b16 %v889
  %v1019 = vunpack.c.l.b16 %v890
  %v1020 = vunpack.c.l.b16 %v891
  %v1021 = vunpack.c.l.b16 %v892
  %v1022 = vunpack.c.l.b16 %v893
  %v1023 = vunpack.c.l.b16 %v894
  %v1024 = vunpack.c.l.b16 %v895
  %v1025 = vunpack.c.l.b16 %v896
  %v1026 = vunpack.c.l.b16 %v897
  %v1027 = vunpack.c.l.b16 %v898
  %v1028 = vunpack.c.l.b16 %v899
  %v1029 = vunpack.c.l.b16 %v900
  %v1030 = vunpack.c.l.b16 %v901
  %v1031 = vunpack.c.l.b16 %v902
  %v1032 = vunpack.c.l.b16 %v903
  %v1033 = vunpack.c.l.b16 %v904
  %v1034 = vunpack.c.l.b16 %v905
  %v1035 = vunpack.c.l.b16 %v906
  %v1036 = vunpack.c.l.b16 %v907
  %v1037 = vunpack.c.l.b16 %v908
  %v1038 = vunpack.c.l.b16 %v909
  %v1039 = vunpack.c.l.b16 %v910
  %v1040 = vunpack.c.l.b16 %v911
  %v1041 = vunpack.c.l.b16 %v912
  %v1042 = vunpack.c.l.b16 %v913
  %v1043 = vunpack.c.l.b16 %v914
  %v1044 = vpack.c.b16 %v981, %v980
  %v1045 = vpack.c.b16 %v983, %v982
  %v1046 = vpack.c.b16 %v985, %v984
  %v1047 = vpack.c.b16 %v987, %v986
  %v1048 = vpack.c.b16 %v989, %v988
  %v1049 = vpack.c.b16 %v991, %v990
  %v1050 = vpack.c.b16 %v993, %v992
  %v1051 = vpack.c.b16 %v995, %v994
  %v1052 = vpack.c.b16 %v997, %v996
  %v1053 = vpack.c.b16 %v999, %v998
  %v1054 = vpack.c.b16 %v1001, %v1000
  %v1055 = vpack.c.b16 %v1003, %v1002
  %v1056 = vpack.c.b16 %v1005, %v1004
  %v1057 = vpack.c.b16 %v1007, %v1006
  %v1058 = vpack.c.b16 %v1009, %v1008
  %v1059 = vpack.c.b16 %v1011, %v1010
  %v1060 = vpack.c.b16 %v1013, %v1012
  %v1061 = vpack.c.b16 %v1015, %v1014
  %v1062 = vpack.c.b16 %v1017, %v1016
  %v1063 = vpack.c.b16 %v1019, %v1018
  %v1064 = vpack.c.b16 %v1021, %v1020
  %v1065 = vpack.c.b16 %v1023, %v1022
  %v1066 = vpack.c.b16 %v1025, %v1024
  %v1067 = vpack.c.b16 %v1027, %v1026
  %v1068 = vpack.c.b16 %v1029, %v1028
  %v1069 = vpack.c.b16 %v1031, %v1030
  %v1070 = vpack.c.b16 %v1033, %v1032
  %v1071 = vpack.c.b16 %v1035, %v1034
  %v1072 = vpack.c.b16 %v1037, %v1036
  %v1073 = vpack.c.b16 %v1039, %v1038
  %v1074 = vpack.c.b16 %v1041, %v1040
  %v1075 = vpack.c.b16 %v1043, %v1042
  %vm1076 = vcmask 48128
  %v1078 = vsel %vm1076, %v1044, 0
  %v1081 = vsel %vm1076, %v1045, 0
  %v1084 = vsel %vm1076, %v1046, 0
  %v1087 = vsel %vm1076, %v1047, 0
  %v1090 = vsel %vm1076, %v1048, 0
  %v1093 = vsel %vm1076, %v1049, 0
  %v1096 = vsel %vm1076, %v1050, 0
  %v1099 = vsel %vm1076, %v1051, 0
  %v1102 = vsel %vm1076, %v1052, 0
  %v1105 = vsel %vm1076, %v1053, 0
  %v1108 = vsel %vm1076, %v1054, 0
  %v1111 = vsel %vm1076, %v1055, 0
  %v1114 = vsel %vm1076, %v1056, 0
  %v1117 = vsel %vm1076, %v1057, 0
  %v1120 = vsel %vm1076, %v1058, 0
  %v1123 = vsel %vm1076, %v1059, 0
  %v1126 = vsel %vm1076, %v1060, 0
  %v1129 = vsel %vm1076, %v1061, 0
  %v1132 = vsel %vm1076, %v1062, 0
  %v1135 = vsel %vm1076, %v1063, 0
  %v1138 = vsel %vm1076, %v1064, 0
  %v1141 = vsel %vm1076, %v1065, 0
  %v1144 = vsel %vm1076, %v1066, 0
  %v1147 = vsel %vm1076, %v1067, 0
  %v1150 = vsel %vm1076, %v1068, 0
  %v1153 = vsel %vm1076, %v1069, 0
  %v1156 = vsel %vm1076, %v1070, 0
  %v1159 = vsel %vm1076, %v1071, 0
  %v1162 = vsel %vm1076, %v1072, 0
  %v1165 = vsel %vm1076, %v1073, 0
  %v1168 = vsel %vm1076, %v1074, 0
  %v1171 = vsel %vm1076, %v1075, 0
  %vm1173 = vcmask 1042432
  %v1175 = vsel %vm1173, %v915, 0
  %1177 = vmatprep.subr.bf16.mxu0 0
  %1178 = vmatpush1.bf16.msra.mxu0 %v1175
  %1179 = vmatprep.subr.bf16.mxu0 0
  %1180 = vmatpush1.bf16.msra.mxu0 0
  %1181 = vmatprep.subr.bf16.mxu0 0
  %1182 = vmatpush1.bf16.msra.mxu0 0
  %1183 = vmatprep.subr.bf16.mxu0 0
  %1184 = vmatpush1.bf16.msra.mxu0 0
  %1185 = vmatprep.subr.bf16.mxu0 0
  %1186 = vmatpush1.bf16.msra.mxu0 0
  %1187 = vmatprep.subr.bf16.mxu0 0
  %1188 = vmatpush1.bf16.msra.mxu0 0
  %1189 = vmatprep.subr.bf16.mxu0 0
  %1190 = vmatpush1.bf16.msra.mxu0 0
  %1191 = vmatprep.subr.bf16.mxu0 0
  %1192 = vmatpush1.bf16.msra.mxu0 0
  %1193 = vmatprep.subr.bf16.mxu0 0
  %1194 = vmatpush1.bf16.msra.mxu0 0
  %1195 = vmatprep.subr.bf16.mxu0 0
  %1196 = vmatpush1.bf16.msra.mxu0 0
  %1197 = vmatprep.subr.bf16.mxu0 0
  %1198 = vmatpush1.bf16.msra.mxu0 0
  %1199 = vmatprep.subr.bf16.mxu0 0
  %1200 = vmatpush1.bf16.msra.mxu0 0
  %1201 = vmatprep.subr.bf16.mxu0 0
  %1202 = vmatpush1.bf16.msra.mxu0 0
  %1203 = vmatprep.subr.bf16.mxu0 0
  %1204 = vmatpush1.bf16.msra.mxu0 0
  %1205 = vmatprep.subr.bf16.mxu0 0
  %1206 = vmatpush1.bf16.msra.mxu0 0
  %1207 = vmatprep.subr.bf16.mxu0 0
  %1208 = vmatpush1.bf16.msra.mxu0 0
  %1209 = vmatprep.mubr.bf16.mxu0 0
  %1210 = vmatmul.mubr.bf16.gmra.mrb[0].mxu0 %v1078
  %v1211 = vpop.f32.mrb[0].mxu0
  %v1212 = vadd.f32 0.0, %v1211
  %v1213 = vpop.f32.mrb[0].mxu0
  %v1214 = vpop.f32.mrb[0].mxu0
  %v1215 = vadd.f32 0.0, %v1214
  %v1216 = vpop.f32.mrb[0].mxu0
  %1217 = vmatprep.mubr.bf16.mxu0 0
  %1218 = vmatmul.mubr.bf16.gmra.mrb[0].mxu0 %v1081
  %v1219 = vpop.f32.mrb[0].mxu0
  %v1220 = vadd.f32 0.0, %v1219
  %v1221 = vpop.f32.mrb[0].mxu0
  %v1222 = vpop.f32.mrb[0].mxu0
  %v1223 = vadd.f32 0.0, %v1222
  %v1224 = vpop.f32.mrb[0].mxu0
  %1225 = vmatprep.mubr.bf16.mxu0 0
  %1226 = vmatmul.mubr.bf16.gmra.mrb[0].mxu0 %v1084
  %v1227 = vpop.f32.mrb[0].mxu0
  %v1228 = vadd.f32 0.0, %v1227
  %v1229 = vpop.f32.mrb[0].mxu0
  %v1230 = vpop.f32.mrb[0].mxu0
  %v1231 = vadd.f32 0.0, %v1230
  %v1232 = vpop.f32.mrb[0].mxu0
  %1233 = vmatprep.mubr.bf16.mxu0 0
  %1234 = vmatmul.mubr.bf16.gmra.mrb[0].mxu0 %v1087
  %v1235 = vpop.f32.mrb[0].mxu0
  %v1236 = vadd.f32 0.0, %v1235
  %v1237 = vpop.f32.mrb[0].mxu0
  %v1238 = vpop.f32.mrb[0].mxu0
  %v1239 = vadd.f32 0.0, %v1238
  %v1240 = vpop.f32.mrb[0].mxu0
  %1241 = vmatprep.mubr.bf16.mxu0 0
  %1242 = vmatmul.mubr.bf16.gmra.mrb[0].mxu0 %v1090
  %v1243 = vpop.f32.mrb[0].mxu0
  %v1244 = vadd.f32 0.0, %v1243
  %v1245 = vpop.f32.mrb[0].mxu0
  %v1246 = vpop.f32.mrb[0].mxu0
  %v1247 = vadd.f32 0.0, %v1246
  %v1248 = vpop.f32.mrb[0].mxu0
  %1249 = vmatprep.mubr.bf16.mxu0 0
  %1250 = vmatmul.mubr.bf16.gmra.mrb[0].mxu0 %v1093
  %v1251 = vpop.f32.mrb[0].mxu0
  %v1252 = vadd.f32 0.0, %v1251
  %v1253 = vpop.f32.mrb[0].mxu0
  %v1254 = vpop.f32.mrb[0].mxu0
  %v1255 = vadd.f32 0.0, %v1254
  %v1256 = vpop.f32.mrb[0].mxu0
  %1257 = vmatprep.mubr.bf16.mxu0 0
  %1258 = vmatmul.mubr.bf16.gmra.mrb[0].mxu0 %v1096
  %v1259 = vpop.f32.mrb[0].mxu0
  %v1260 = vadd.f32 0.0, %v1259
  %v1261 = vpop.f32.mrb[0].mxu0
  %v1262 = vpop.f32.mrb[0].mxu0
  %v1263 = vadd.f32 0.0, %v1262
  %v1264 = vpop.f32.mrb[0].mxu0
  %1265 = vmatprep.mubr.bf16.mxu0 0
  %1266 = vmatmul.mubr.bf16.gmra.mrb[0].mxu0 %v1099
  %v1267 = vpop.f32.mrb[0].mxu0
  %v1268 = vadd.f32 0.0, %v1267
  %v1269 = vpop.f32.mrb[0].mxu0
  %v1270 = vpop.f32.mrb[0].mxu0
  %v1271 = vadd.f32 0.0, %v1270
  %v1272 = vpop.f32.mrb[0].mxu0
  %1273 = vmatprep.mubr.bf16.mxu0 0
  %1274 = vmatmul.mubr.bf16.gmra.mrb[0].mxu0 %v1102
  %v1275 = vpop.f32.mrb[0].mxu0
  %v1276 = vadd.f32 0.0, %v1275
  %v1277 = vpop.f32.mrb[0].mxu0
  %v1278 = vpop.f32.mrb[0].mxu0
  %v1279 = vadd.f32 0.0, %v1278
  %v1280 = vpop.f32.mrb[0].mxu0
  %1281 = vmatprep.mubr.bf16.mxu0 0
  %1282 = vmatmul.mubr.bf16.gmra.mrb[0].mxu0 %v1105
  %v1283 = vpop.f32.mrb[0].mxu0
  %v1284 = vadd.f32 0.0, %v1283
  %v1285 = vpop.f32.mrb[0].mxu0
  %v1286 = vpop.f32.mrb[0].mxu0
  %v1287 = vadd.f32 0.0, %v1286
  %v1288 = vpop.f32.mrb[0].mxu0
  %1289 = vmatprep.mubr.bf16.mxu0 0
  %1290 = vmatmul.mubr.bf16.gmra.mrb[0].mxu0 %v1108
  %v1291 = vpop.f32.mrb[0].mxu0
  %v1292 = vadd.f32 0.0, %v1291
  %v1293 = vpop.f32.mrb[0].mxu0
  %v1294 = vpop.f32.mrb[0].mxu0
  %v1295 = vadd.f32 0.0, %v1294
  %v1296 = vpop.f32.mrb[0].mxu0
  %1297 = vmatprep.mubr.bf16.mxu0 0
  %1298 = vmatmul.mubr.bf16.gmra.mrb[0].mxu0 %v1111
  %v1299 = vpop.f32.mrb[0].mxu0
  %v1300 = vadd.f32 0.0, %v1299
  %v1301 = vpop.f32.mrb[0].mxu0
  %v1302 = vpop.f32.mrb[0].mxu0
  %v1303 = vadd.f32 0.0, %v1302
  %v1304 = vpop.f32.mrb[0].mxu0
  %1305 = vmatprep.mubr.bf16.mxu0 0
  %1306 = vmatmul.mubr.bf16.gmra.mrb[0].mxu0 %v1114
  %v1307 = vpop.f32.mrb[0].mxu0
  %v1308 = vadd.f32 0.0, %v1307
  %v1309 = vpop.f32.mrb[0].mxu0
  %v1310 = vpop.f32.mrb[0].mxu0
  %v1311 = vadd.f32 0.0, %v1310
  %v1312 = vpop.f32.mrb[0].mxu0
  %1313 = vmatprep.mubr.bf16.mxu0 0
  %1314 = vmatmul.mubr.bf16.gmra.mrb[0].mxu0 %v1117
  %v1315 = vpop.f32.mrb[0].mxu0
  %v1316 = vadd.f32 0.0, %v1315
  %v1317 = vpop.f32.mrb[0].mxu0
  %v1318 = vpop.f32.mrb[0].mxu0
  %v1319 = vadd.f32 0.0, %v1318
  %v1320 = vpop.f32.mrb[0].mxu0
  %1321 = vmatprep.mubr.bf16.mxu0 0
  %1322 = vmatmul.mubr.bf16.gmra.mrb[0].mxu0 %v1120
  %v1323 = vpop.f32.mrb[0].mxu0
  %v1324 = vadd.f32 0.0, %v1323
  %v1325 = vpop.f32.mrb[0].mxu0
  %v1326 = vpop.f32.mrb[0].mxu0
  %v1327 = vadd.f32 0.0, %v1326
  %v1328 = vpop.f32.mrb[0].mxu0
  %1329 = vmatprep.mubr.bf16.mxu0 0
  %1330 = vmatmul.mubr.bf16.gmra.mrb[0].mxu0 %v1123
  %v1331 = vpop.f32.mrb[0].mxu0
  %v1332 = vadd.f32 0.0, %v1331
  %v1333 = vpop.f32.mrb[0].mxu0
  %v1334 = vpop.f32.mrb[0].mxu0
  %v1335 = vadd.f32 0.0, %v1334
  %v1336 = vpop.f32.mrb[0].mxu0
  %1337 = vmatprep.mubr.bf16.mxu0 0
  %1338 = vmatmul.mubr.bf16.gmra.mrb[0].mxu0 %v1126
  %v1339 = vpop.f32.mrb[0].mxu0
  %v1340 = vadd.f32 0.0, %v1339
  %v1341 = vpop.f32.mrb[0].mxu0
  %v1342 = vpop.f32.mrb[0].mxu0
  %v1343 = vadd.f32 0.0, %v1342
  %v1344 = vpop.f32.mrb[0].mxu0
  %1345 = vmatprep.mubr.bf16.mxu0 0
  %1346 = vmatmul.mubr.bf16.gmra.mrb[0].mxu0 %v1129
  %v1347 = vpop.f32.mrb[0].mxu0
  %v1348 = vadd.f32 0.0, %v1347
  %v1349 = vpop.f32.mrb[0].mxu0
  %v1350 = vpop.f32.mrb[0].mxu0
  %v1351 = vadd.f32 0.0, %v1350
  %v1352 = vpop.f32.mrb[0].mxu0
  %1353 = vmatprep.mubr.bf16.mxu0 0
  %1354 = vmatmul.mubr.bf16.gmra.mrb[0].mxu0 %v1132
  %v1355 = vpop.f32.mrb[0].mxu0
  %v1356 = vadd.f32 0.0, %v1355
  %v1357 = vpop.f32.mrb[0].mxu0
  %v1358 = vpop.f32.mrb[0].mxu0
  %v1359 = vadd.f32 0.0, %v1358
  %v1360 = vpop.f32.mrb[0].mxu0
  %1361 = vmatprep.mubr.bf16.mxu0 0
  %1362 = vmatmul.mubr.bf16.gmra.mrb[0].mxu0 %v1135
  %v1363 = vpop.f32.mrb[0].mxu0
  %v1364 = vadd.f32 0.0, %v1363
  %v1365 = vpop.f32.mrb[0].mxu0
  %v1366 = vpop.f32.mrb[0].mxu0
  %v1367 = vadd.f32 0.0, %v1366
  %v1368 = vpop.f32.mrb[0].mxu0
  %1369 = vmatprep.mubr.bf16.mxu0 0
  %1370 = vmatmul.mubr.bf16.gmra.mrb[0].mxu0 %v1138
  %v1371 = vpop.f32.mrb[0].mxu0
  %v1372 = vadd.f32 0.0, %v1371
  %v1373 = vpop.f32.mrb[0].mxu0
  %v1374 = vpop.f32.mrb[0].mxu0
  %v1375 = vadd.f32 0.0, %v1374
  %v1376 = vpop.f32.mrb[0].mxu0
  %1377 = vmatprep.mubr.bf16.mxu0 0
  %1378 = vmatmul.mubr.bf16.gmra.mrb[0].mxu0 %v1141
  %v1379 = vpop.f32.mrb[0].mxu0
  %v1380 = vadd.f32 0.0, %v1379
  %v1381 = vpop.f32.mrb[0].mxu0
  %v1382 = vpop.f32.mrb[0].mxu0
  %v1383 = vadd.f32 0.0, %v1382
  %v1384 = vpop.f32.mrb[0].mxu0
  %1385 = vmatprep.mubr.bf16.mxu0 0
  %1386 = vmatmul.mubr.bf16.gmra.mrb[0].mxu0 %v1144
  %v1387 = vpop.f32.mrb[0].mxu0
  %v1388 = vadd.f32 0.0, %v1387
  %v1389 = vpop.f32.mrb[0].mxu0
  %v1390 = vpop.f32.mrb[0].mxu0
  %v1391 = vadd.f32 0.0, %v1390
  %v1392 = vpop.f32.mrb[0].mxu0
  %1393 = vmatprep.mubr.bf16.mxu0 0
  %1394 = vmatmul.mubr.bf16.gmra.mrb[0].mxu0 %v1147
  %v1395 = vpop.f32.mrb[0].mxu0
  %v1396 = vadd.f32 0.0, %v1395
  %v1397 = vpop.f32.mrb[0].mxu0
  %v1398 = vpop.f32.mrb[0].mxu0
  %v1399 = vadd.f32 0.0, %v1398
  %v1400 = vpop.f32.mrb[0].mxu0
  %1401 = vmatprep.mubr.bf16.mxu0 0
  %1402 = vmatmul.mubr.bf16.gmra.mrb[0].mxu0 %v1150
  %v1403 = vpop.f32.mrb[0].mxu0
  %v1404 = vadd.f32 0.0, %v1403
  %v1405 = vpop.f32.mrb[0].mxu0
  %v1406 = vpop.f32.mrb[0].mxu0
  %v1407 = vadd.f32 0.0, %v1406
  %v1408 = vpop.f32.mrb[0].mxu0
  %1409 = vmatprep.mubr.bf16.mxu0 0
  %1410 = vmatmul.mubr.bf16.gmra.mrb[0].mxu0 %v1153
  %v1411 = vpop.f32.mrb[0].mxu0
  %v1412 = vadd.f32 0.0, %v1411
  %v1413 = vpop.f32.mrb[0].mxu0
  %v1414 = vpop.f32.mrb[0].mxu0
  %v1415 = vadd.f32 0.0, %v1414
  %v1416 = vpop.f32.mrb[0].mxu0
  %1417 = vmatprep.mubr.bf16.mxu0 0
  %1418 = vmatmul.mubr.bf16.gmra.mrb[0].mxu0 %v1156
  %v1419 = vpop.f32.mrb[0].mxu0
  %v1420 = vadd.f32 0.0, %v1419
  %v1421 = vpop.f32.mrb[0].mxu0
  %v1422 = vpop.f32.mrb[0].mxu0
  %v1423 = vadd.f32 0.0, %v1422
  %v1424 = vpop.f32.mrb[0].mxu0
  %1425 = vmatprep.mubr.bf16.mxu0 0
  %1426 = vmatmul.mubr.bf16.gmra.mrb[0].mxu0 %v1159
  %v1427 = vpop.f32.mrb[0].mxu0
  %v1428 = vadd.f32 0.0, %v1427
  %v1429 = vpop.f32.mrb[0].mxu0
  %v1430 = vpop.f32.mrb[0].mxu0
  %v1431 = vadd.f32 0.0, %v1430
  %v1432 = vpop.f32.mrb[0].mxu0
  %1433 = vmatprep.mubr.bf16.mxu0 0
  %1434 = vmatmul.mubr.bf16.gmra.mrb[0].mxu0 %v1162
  %v1435 = vpop.f32.mrb[0].mxu0
  %v1436 = vadd.f32 0.0, %v1435
  %v1437 = vpop.f32.mrb[0].mxu0
  %v1438 = vpop.f32.mrb[0].mxu0
  %v1439 = vadd.f32 0.0, %v1438
  %v1440 = vpop.f32.mrb[0].mxu0
  %1441 = vmatprep.mubr.bf16.mxu0 0
  %1442 = vmatmul.mubr.bf16.gmra.mrb[0].mxu0 %v1165
  %v1443 = vpop.f32.mrb[0].mxu0
  %v1444 = vadd.f32 0.0, %v1443
  %v1445 = vpop.f32.mrb[0].mxu0
  %v1446 = vpop.f32.mrb[0].mxu0
  %v1447 = vadd.f32 0.0, %v1446
  %v1448 = vpop.f32.mrb[0].mxu0
  %1449 = vmatprep.mubr.bf16.mxu0 0
  %1450 = vmatmul.mubr.bf16.gmra.mrb[0].mxu0 %v1168
  %v1451 = vpop.f32.mrb[0].mxu0
  %v1452 = vadd.f32 0.0, %v1451
  %v1453 = vpop.f32.mrb[0].mxu0
  %v1454 = vpop.f32.mrb[0].mxu0
  %v1455 = vadd.f32 0.0, %v1454
  %v1456 = vpop.f32.mrb[0].mxu0
  %1457 = vmatprep.mubr.bf16.mxu0 0
  %1458 = vmatmul.mubr.bf16.gmra.mrb[0].mxu0 %v1171
  %v1459 = vpop.f32.mrb[0].mxu0
  %v1460 = vadd.f32 0.0, %v1459
  %v1461 = vpop.f32.mrb[0].mxu0
  %v1462 = vpop.f32.mrb[0].mxu0
  %v1463 = vadd.f32 0.0, %v1462
  %v1464 = vpop.f32.mrb[0].mxu0
  %1465 = vdwg.mxu0
  %v1466 = vld [vmem:[%s6] sm:$0x1]
  %v1468 = vlaneseq
  %v1469 = vshrl.u32 %v1468, 7
  %v1470 = vsub.s32 0, %v1469
  %v1471 = vrot.slane %v1466, %v1470
  %v1473 = vmul.f32 %v1212, %v1471
  %v1474 = vmul.f32 %v1215, %v1471
  %v1475 = vmul.f32 %v1220, %v1471
  %v1476 = vmul.f32 %v1223, %v1471
  %v1477 = vmul.f32 %v1228, %v1471
  %v1478 = vmul.f32 %v1231, %v1471
  %v1479 = vmul.f32 %v1236, %v1471
  %v1480 = vmul.f32 %v1239, %v1471
  %v1481 = vmul.f32 %v1244, %v1471
  %v1482 = vmul.f32 %v1247, %v1471
  %v1483 = vmul.f32 %v1252, %v1471
  %v1484 = vmul.f32 %v1255, %v1471
  %v1485 = vmul.f32 %v1260, %v1471
  %v1486 = vmul.f32 %v1263, %v1471
  %v1487 = vmul.f32 %v1268, %v1471
  %v1488 = vmul.f32 %v1271, %v1471
  %v1489 = vmul.f32 %v1276, %v1471
  %v1490 = vmul.f32 %v1279, %v1471
  %v1491 = vmul.f32 %v1284, %v1471
  %v1492 = vmul.f32 %v1287, %v1471
  %v1493 = vmul.f32 %v1292, %v1471
  %v1494 = vmul.f32 %v1295, %v1471
  %v1495 = vmul.f32 %v1300, %v1471
  %v1496 = vmul.f32 %v1303, %v1471
  %v1497 = vmul.f32 %v1308, %v1471
  %v1498 = vmul.f32 %v1311, %v1471
  %v1499 = vmul.f32 %v1316, %v1471
  %v1500 = vmul.f32 %v1319, %v1471
  %v1501 = vmul.f32 %v1324, %v1471
  %v1502 = vmul.f32 %v1327, %v1471
  %v1503 = vmul.f32 %v1332, %v1471
  %v1504 = vmul.f32 %v1335, %v1471
  %v1505 = vmul.f32 %v1340, %v1471
  %v1506 = vmul.f32 %v1343, %v1471
  %v1507 = vmul.f32 %v1348, %v1471
  %v1508 = vmul.f32 %v1351, %v1471
  %v1509 = vmul.f32 %v1356, %v1471
  %v1510 = vmul.f32 %v1359, %v1471
  %v1511 = vmul.f32 %v1364, %v1471
  %v1512 = vmul.f32 %v1367, %v1471
  %v1513 = vmul.f32 %v1372, %v1471
  %v1514 = vmul.f32 %v1375, %v1471
  %v1515 = vmul.f32 %v1380, %v1471
  %v1516 = vmul.f32 %v1383, %v1471
  %v1517 = vmul.f32 %v1388, %v1471
  %v1518 = vmul.f32 %v1391, %v1471
  %v1519 = vmul.f32 %v1396, %v1471
  %v1520 = vmul.f32 %v1399, %v1471
  %v1521 = vmul.f32 %v1404, %v1471
  %v1522 = vmul.f32 %v1407, %v1471
  %v1523 = vmul.f32 %v1412, %v1471
  %v1524 = vmul.f32 %v1415, %v1471
  %v1525 = vmul.f32 %v1420, %v1471
  %v1526 = vmul.f32 %v1423, %v1471
  %v1527 = vmul.f32 %v1428, %v1471
  %v1528 = vmul.f32 %v1431, %v1471
  %v1529 = vmul.f32 %v1436, %v1471
  %v1530 = vmul.f32 %v1439, %v1471
  %v1531 = vmul.f32 %v1444, %v1471
  %v1532 = vmul.f32 %v1447, %v1471
  %v1533 = vmul.f32 %v1452, %v1471
  %v1534 = vmul.f32 %v1455, %v1471
  %v1535 = vmul.f32 %v1460, %v1471
  %v1536 = vmul.f32 %v1463, %v1471
  %v1537 = vld [vmem:[%s7] sm:$0x1]
  %v1539 = vlaneseq
  %v1540 = vshrl.u32 %v1539, 7
  %v1541 = vsub.s32 0, %v1540
  %v1542 = vrot.slane %v1537, %v1541
  %v1544 = vadd.f32 %v1473, %v1542
  %v1545 = vadd.f32 %v1474, %v1542
  %v1546 = vadd.f32 %v1475, %v1542
  %v1547 = vadd.f32 %v1476, %v1542
  %v1548 = vadd.f32 %v1477, %v1542
  %v1549 = vadd.f32 %v1478, %v1542
  %v1550 = vadd.f32 %v1479, %v1542
  %v1551 = vadd.f32 %v1480, %v1542
  %v1552 = vadd.f32 %v1481, %v1542
  %v1553 = vadd.f32 %v1482, %v1542
  %v1554 = vadd.f32 %v1483, %v1542
  %v1555 = vadd.f32 %v1484, %v1542
  %v1556 = vadd.f32 %v1485, %v1542
  %v1557 = vadd.f32 %v1486, %v1542
  %v1558 = vadd.f32 %v1487, %v1542
  %v1559 = vadd.f32 %v1488, %v1542
  %v1560 = vadd.f32 %v1489, %v1542
  %v1561 = vadd.f32 %v1490, %v1542
  %v1562 = vadd.f32 %v1491, %v1542
  %v1563 = vadd.f32 %v1492, %v1542
  %v1564 = vadd.f32 %v1493, %v1542
  %v1565 = vadd.f32 %v1494, %v1542
  %v1566 = vadd.f32 %v1495, %v1542
  %v1567 = vadd.f32 %v1496, %v1542
  %v1568 = vadd.f32 %v1497, %v1542
  %v1569 = vadd.f32 %v1498, %v1542
  %v1570 = vadd.f32 %v1499, %v1542
  %v1571 = vadd.f32 %v1500, %v1542
  %v1572 = vadd.f32 %v1501, %v1542
  %v1573 = vadd.f32 %v1502, %v1542
  %v1574 = vadd.f32 %v1503, %v1542
  %v1575 = vadd.f32 %v1504, %v1542
  %v1576 = vadd.f32 %v1505, %v1542
  %v1577 = vadd.f32 %v1506, %v1542
  %v1578 = vadd.f32 %v1507, %v1542
  %v1579 = vadd.f32 %v1508, %v1542
  %v1580 = vadd.f32 %v1509, %v1542
  %v1581 = vadd.f32 %v1510, %v1542
  %v1582 = vadd.f32 %v1511, %v1542
  %v1583 = vadd.f32 %v1512, %v1542
  %v1584 = vadd.f32 %v1513, %v1542
  %v1585 = vadd.f32 %v1514, %v1542
  %v1586 = vadd.f32 %v1515, %v1542
  %v1587 = vadd.f32 %v1516, %v1542
  %v1588 = vadd.f32 %v1517, %v1542
  %v1589 = vadd.f32 %v1518, %v1542
  %v1590 = vadd.f32 %v1519, %v1542
  %v1591 = vadd.f32 %v1520, %v1542
  %v1592 = vadd.f32 %v1521, %v1542
  %v1593 = vadd.f32 %v1522, %v1542
  %v1594 = vadd.f32 %v1523, %v1542
  %v1595 = vadd.f32 %v1524, %v1542
  %v1596 = vadd.f32 %v1525, %v1542
  %v1597 = vadd.f32 %v1526, %v1542
  %v1598 = vadd.f32 %v1527, %v1542
  %v1599 = vadd.f32 %v1528, %v1542
  %v1600 = vadd.f32 %v1529, %v1542
  %v1601 = vadd.f32 %v1530, %v1542
  %v1602 = vadd.f32 %v1531, %v1542
  %v1603 = vadd.f32 %v1532, %v1542
  %v1604 = vadd.f32 %v1533, %v1542
  %v1605 = vadd.f32 %v1534, %v1542
  %v1606 = vadd.f32 %v1535, %v1542
  %v1607 = vadd.f32 %v1536, %v1542
  %v1608 = vmax.f32 %v1544, 0.0
  %v1609 = vmax.f32 %v1545, 0.0
  %v1610 = vmax.f32 %v1546, 0.0
  %v1611 = vmax.f32 %v1547, 0.0
  %v1612 = vmax.f32 %v1548, 0.0
  %v1613 = vmax.f32 %v1549, 0.0
  %v1614 = vmax.f32 %v1550, 0.0
  %v1615 = vmax.f32 %v1551, 0.0
  %v1616 = vmax.f32 %v1552, 0.0
  %v1617 = vmax.f32 %v1553, 0.0
  %v1618 = vmax.f32 %v1554, 0.0
  %v1619 = vmax.f32 %v1555, 0.0
  %v1620 = vmax.f32 %v1556, 0.0
  %v1621 = vmax.f32 %v1557, 0.0
  %v1622 = vmax.f32 %v1558, 0.0
  %v1623 = vmax.f32 %v1559, 0.0
  %v1624 = vmax.f32 %v1560, 0.0
  %v1625 = vmax.f32 %v1561, 0.0
  %v1626 = vmax.f32 %v1562, 0.0
  %v1627 = vmax.f32 %v1563, 0.0
  %v1628 = vmax.f32 %v1564, 0.0
  %v1629 = vmax.f32 %v1565, 0.0
  %v1630 = vmax.f32 %v1566, 0.0
  %v1631 = vmax.f32 %v1567, 0.0
  %v1632 = vmax.f32 %v1568, 0.0
  %v1633 = vmax.f32 %v1569, 0.0
  %v1634 = vmax.f32 %v1570, 0.0
  %v1635 = vmax.f32 %v1571, 0.0
  %v1636 = vmax.f32 %v1572, 0.0
  %v1637 = vmax.f32 %v1573, 0.0
  %v1638 = vmax.f32 %v1574, 0.0
  %v1639 = vmax.f32 %v1575, 0.0
  %v1640 = vmax.f32 %v1576, 0.0
  %v1641 = vmax.f32 %v1577, 0.0
  %v1642 = vmax.f32 %v1578, 0.0
  %v1643 = vmax.f32 %v1579, 0.0
  %v1644 = vmax.f32 %v1580, 0.0
  %v1645 = vmax.f32 %v1581, 0.0
  %v1646 = vmax.f32 %v1582, 0.0
  %v1647 = vmax.f32 %v1583, 0.0
  %v1648 = vmax.f32 %v1584, 0.0
  %v1649 = vmax.f32 %v1585, 0.0
  %v1650 = vmax.f32 %v1586, 0.0
  %v1651 = vmax.f32 %v1587, 0.0
  %v1652 = vmax.f32 %v1588, 0.0
  %v1653 = vmax.f32 %v1589, 0.0
  %v1654 = vmax.f32 %v1590, 0.0
  %v1655 = vmax.f32 %v1591, 0.0
  %v1656 = vmax.f32 %v1592, 0.0
  %v1657 = vmax.f32 %v1593, 0.0
  %v1658 = vmax.f32 %v1594, 0.0
  %v1659 = vmax.f32 %v1595, 0.0
  %v1660 = vmax.f32 %v1596, 0.0
  %v1661 = vmax.f32 %v1597, 0.0
  %v1662 = vmax.f32 %v1598, 0.0
  %v1663 = vmax.f32 %v1599, 0.0
  %v1664 = vmax.f32 %v1600, 0.0
  %v1665 = vmax.f32 %v1601, 0.0
  %v1666 = vmax.f32 %v1602, 0.0
  %v1667 = vmax.f32 %v1603, 0.0
  %v1668 = vmax.f32 %v1604, 0.0
  %v1669 = vmax.f32 %v1605, 0.0
  %v1670 = vmax.f32 %v1606, 0.0
  %v1671 = vmax.f32 %v1607, 0.0
  %1736 = vrot.lane.b32.xlu0 %v1608, 8
  %v1737 = vpop.permute.xlu0 %1736
  %1738 = vrot.lane.b32.xlu0 %v1609, 8
  %v1739 = vpop.permute.xlu0 %1738
  %1740 = vrot.lane.b32.xlu0 %v1610, 8
  %v1741 = vpop.permute.xlu0 %1740
  %1742 = vrot.lane.b32.xlu0 %v1611, 8
  %v1743 = vpop.permute.xlu0 %1742
  %1744 = vrot.lane.b32.xlu0 %v1612, 8
  %v1745 = vpop.permute.xlu0 %1744
  %1746 = vrot.lane.b32.xlu0 %v1613, 8
  %v1747 = vpop.permute.xlu0 %1746
  %1748 = vrot.lane.b32.xlu0 %v1614, 8
  %v1749 = vpop.permute.xlu0 %1748
  %1750 = vrot.lane.b32.xlu0 %v1615, 8
  %v1751 = vpop.permute.xlu0 %1750
  %1752 = vrot.lane.b32.xlu0 %v1616, 8
  %v1753 = vpop.permute.xlu0 %1752
  %1754 = vrot.lane.b32.xlu0 %v1617, 8
  %v1755 = vpop.permute.xlu0 %1754
  %1756 = vrot.lane.b32.xlu0 %v1618, 8
  %v1757 = vpop.permute.xlu0 %1756
  %1758 = vrot.lane.b32.xlu0 %v1619, 8
  %v1759 = vpop.permute.xlu0 %1758
  %1760 = vrot.lane.b32.xlu0 %v1620, 8
  %v1761 = vpop.permute.xlu0 %1760
  %1762 = vrot.lane.b32.xlu0 %v1621, 8
  %v1763 = vpop.permute.xlu0 %1762
  %1764 = vrot.lane.b32.xlu0 %v1622, 8
  %v1765 = vpop.permute.xlu0 %1764
  %1766 = vrot.lane.b32.xlu0 %v1623, 8
  %v1767 = vpop.permute.xlu0 %1766
  %1768 = vrot.lane.b32.xlu0 %v1624, 8
  %v1769 = vpop.permute.xlu0 %1768
  %1770 = vrot.lane.b32.xlu0 %v1625, 8
  %v1771 = vpop.permute.xlu0 %1770
  %1772 = vrot.lane.b32.xlu0 %v1626, 8
  %v1773 = vpop.permute.xlu0 %1772
  %1774 = vrot.lane.b32.xlu0 %v1627, 8
  %v1775 = vpop.permute.xlu0 %1774
  %1776 = vrot.lane.b32.xlu0 %v1628, 8
  %v1777 = vpop.permute.xlu0 %1776
  %1778 = vrot.lane.b32.xlu0 %v1629, 8
  %v1779 = vpop.permute.xlu0 %1778
  %1780 = vrot.lane.b32.xlu0 %v1630, 8
  %v1781 = vpop.permute.xlu0 %1780
  %1782 = vrot.lane.b32.xlu0 %v1631, 8
  %v1783 = vpop.permute.xlu0 %1782
  %1784 = vrot.lane.b32.xlu0 %v1632, 8
  %v1785 = vpop.permute.xlu0 %1784
  %1786 = vrot.lane.b32.xlu0 %v1633, 8
  %v1787 = vpop.permute.xlu0 %1786
  %1788 = vrot.lane.b32.xlu0 %v1634, 8
  %v1789 = vpop.permute.xlu0 %1788
  %1790 = vrot.lane.b32.xlu0 %v1635, 8
  %v1791 = vpop.permute.xlu0 %1790
  %1792 = vrot.lane.b32.xlu0 %v1636, 8
  %v1793 = vpop.permute.xlu0 %1792
  %1794 = vrot.lane.b32.xlu0 %v1637, 8
  %v1795 = vpop.permute.xlu0 %1794
  %1796 = vrot.lane.b32.xlu0 %v1638, 8
  %v1797 = vpop.permute.xlu0 %1796
  %1798 = vrot.lane.b32.xlu0 %v1639, 8
  %v1799 = vpop.permute.xlu0 %1798
  %1800 = vrot.lane.b32.xlu0 %v1640, 8
  %v1801 = vpop.permute.xlu0 %1800
  %1802 = vrot.lane.b32.xlu0 %v1641, 8
  %v1803 = vpop.permute.xlu0 %1802
  %1804 = vrot.lane.b32.xlu0 %v1642, 8
  %v1805 = vpop.permute.xlu0 %1804
  %1806 = vrot.lane.b32.xlu0 %v1643, 8
  %v1807 = vpop.permute.xlu0 %1806
  %1808 = vrot.lane.b32.xlu0 %v1644, 8
  %v1809 = vpop.permute.xlu0 %1808
  %1810 = vrot.lane.b32.xlu0 %v1645, 8
  %v1811 = vpop.permute.xlu0 %1810
  %1812 = vrot.lane.b32.xlu0 %v1646, 8
  %v1813 = vpop.permute.xlu0 %1812
  %1814 = vrot.lane.b32.xlu0 %v1647, 8
  %v1815 = vpop.permute.xlu0 %1814
  %1816 = vrot.lane.b32.xlu0 %v1648, 8
  %v1817 = vpop.permute.xlu0 %1816
  %1818 = vrot.lane.b32.xlu0 %v1649, 8
  %v1819 = vpop.permute.xlu0 %1818
  %1820 = vrot.lane.b32.xlu0 %v1650, 8
  %v1821 = vpop.permute.xlu0 %1820
  %1822 = vrot.lane.b32.xlu0 %v1651, 8
  %v1823 = vpop.permute.xlu0 %1822
  %1824 = vrot.lane.b32.xlu0 %v1652, 8
  %v1825 = vpop.permute.xlu0 %1824
  %1826 = vrot.lane.b32.xlu0 %v1653, 8
  %v1827 = vpop.permute.xlu0 %1826
  %1828 = vrot.lane.b32.xlu0 %v1654, 8
  %v1829 = vpop.permute.xlu0 %1828
  %1830 = vrot.lane.b32.xlu0 %v1655, 8
  %v1831 = vpop.permute.xlu0 %1830
  %1832 = vrot.lane.b32.xlu0 %v1656, 8
  %v1833 = vpop.permute.xlu0 %1832
  %1834 = vrot.lane.b32.xlu0 %v1657, 8
  %v1835 = vpop.permute.xlu0 %1834
  %1836 = vrot.lane.b32.xlu0 %v1658, 8
  %v1837 = vpop.permute.xlu0 %1836
  %1838 = vrot.lane.b32.xlu0 %v1659, 8
  %v1839 = vpop.permute.xlu0 %1838
  %1840 = vrot.lane.b32.xlu0 %v1660, 8
  %v1841 = vpop.permute.xlu0 %1840
  %1842 = vrot.lane.b32.xlu0 %v1661, 8
  %v1843 = vpop.permute.xlu0 %1842
  %1844 = vrot.lane.b32.xlu0 %v1662, 8
  %v1845 = vpop.permute.xlu0 %1844
  %1846 = vrot.lane.b32.xlu0 %v1663, 8
  %v1847 = vpop.permute.xlu0 %1846
  %1848 = vrot.lane.b32.xlu0 %v1664, 8
  %v1849 = vpop.permute.xlu0 %1848
  %1850 = vrot.lane.b32.xlu0 %v1665, 8
  %v1851 = vpop.permute.xlu0 %1850
  %1852 = vrot.lane.b32.xlu0 %v1666, 8
  %v1853 = vpop.permute.xlu0 %1852
  %1854 = vrot.lane.b32.xlu0 %v1667, 8
  %v1855 = vpop.permute.xlu0 %1854
  %1856 = vrot.lane.b32.xlu0 %v1668, 8
  %v1857 = vpop.permute.xlu0 %1856
  %1858 = vrot.lane.b32.xlu0 %v1669, 8
  %v1859 = vpop.permute.xlu0 %1858
  %1860 = vrot.lane.b32.xlu0 %v1670, 8
  %v1861 = vpop.permute.xlu0 %1860
  %1862 = vrot.lane.b32.xlu0 %v1671, 8
  %v1863 = vpop.permute.xlu0 %1862
  %vm1928 = vcmask 64512
  %v1929 = vsel %vm1928, %v787, %v1737
  %v1930 = vsel %vm1928, %v788, %v1739
  %v1931 = vsel %vm1928, %v789, %v1741
  %v1932 = vsel %vm1928, %v790, %v1743
  %v1933 = vsel %vm1928, %v791, %v1745
  %v1934 = vsel %vm1928, %v792, %v1747
  %v1935 = vsel %vm1928, %v793, %v1749
  %v1936 = vsel %vm1928, %v794, %v1751
  %v1937 = vsel %vm1928, %v795, %v1753
  %v1938 = vsel %vm1928, %v796, %v1755
  %v1939 = vsel %vm1928, %v797, %v1757
  %v1940 = vsel %vm1928, %v798, %v1759
  %v1941 = vsel %vm1928, %v799, %v1761
  %v1942 = vsel %vm1928, %v800, %v1763
  %v1943 = vsel %vm1928, %v801, %v1765
  %v1944 = vsel %vm1928, %v802, %v1767
  %v1945 = vsel %vm1928, %v803, %v1769
  %v1946 = vsel %vm1928, %v804, %v1771
  %v1947 = vsel %vm1928, %v805, %v1773
  %v1948 = vsel %vm1928, %v806, %v1775
  %v1949 = vsel %vm1928, %v807, %v1777
  %v1950 = vsel %vm1928, %v808, %v1779
  %v1951 = vsel %vm1928, %v809, %v1781
  %v1952 = vsel %vm1928, %v810, %v1783
  %v1953 = vsel %vm1928, %v811, %v1785
  %v1954 = vsel %vm1928, %v812, %v1787
  %v1955 = vsel %vm1928, %v813, %v1789
  %v1956 = vsel %vm1928, %v814, %v1791
  %v1957 = vsel %vm1928, %v815, %v1793
  %v1958 = vsel %vm1928, %v816, %v1795
  %v1959 = vsel %vm1928, %v817, %v1797
  %v1960 = vsel %vm1928, %v818, %v1799
  %v1961 = vsel %vm1928, %v819, %v1801
  %v1962 = vsel %vm1928, %v820, %v1803
  %v1963 = vsel %vm1928, %v821, %v1805
  %v1964 = vsel %vm1928, %v822, %v1807
  %v1965 = vsel %vm1928, %v823, %v1809
  %v1966 = vsel %vm1928, %v824, %v1811
  %v1967 = vsel %vm1928, %v825, %v1813
  %v1968 = vsel %vm1928, %v826, %v1815
  %v1969 = vsel %vm1928, %v827, %v1817
  %v1970 = vsel %vm1928, %v828, %v1819
  %v1971 = vsel %vm1928, %v829, %v1821
  %v1972 = vsel %vm1928, %v830, %v1823
  %v1973 = vsel %vm1928, %v831, %v1825
  %v1974 = vsel %vm1928, %v832, %v1827
  %v1975 = vsel %vm1928, %v833, %v1829
  %v1976 = vsel %vm1928, %v834, %v1831
  %v1977 = vsel %vm1928, %v835, %v1833
  %v1978 = vsel %vm1928, %v836, %v1835
  %v1979 = vsel %vm1928, %v837, %v1837
  %v1980 = vsel %vm1928, %v838, %v1839
  %v1981 = vsel %vm1928, %v839, %v1841
  %v1982 = vsel %vm1928, %v840, %v1843
  %v1983 = vsel %vm1928, %v841, %v1845
  %v1984 = vsel %vm1928, %v842, %v1847
  %v1985 = vsel %vm1928, %v843, %v1849
  %v1986 = vsel %vm1928, %v844, %v1851
  %v1987 = vsel %vm1928, %v845, %v1853
  %v1988 = vsel %vm1928, %v846, %v1855
  %v1989 = vsel %vm1928, %v847, %v1857
  %v1990 = vsel %vm1928, %v848, %v1859
  %v1991 = vsel %vm1928, %v849, %v1861
  %v1992 = vsel %vm1928, %v850, %v1863
  %v1993 = vpack.c.bf16 %v1930, %v1929
  %v1994 = vpack.c.bf16 %v1932, %v1931
  %v1995 = vpack.c.bf16 %v1934, %v1933
  %v1996 = vpack.c.bf16 %v1936, %v1935
  %v1997 = vpack.c.bf16 %v1938, %v1937
  %v1998 = vpack.c.bf16 %v1940, %v1939
  %v1999 = vpack.c.bf16 %v1942, %v1941
  %v2000 = vpack.c.bf16 %v1944, %v1943
  %v2001 = vpack.c.bf16 %v1946, %v1945
  %v2002 = vpack.c.bf16 %v1948, %v1947
  %v2003 = vpack.c.bf16 %v1950, %v1949
  %v2004 = vpack.c.bf16 %v1952, %v1951
  %v2005 = vpack.c.bf16 %v1954, %v1953
  %v2006 = vpack.c.bf16 %v1956, %v1955
  %v2007 = vpack.c.bf16 %v1958, %v1957
  %v2008 = vpack.c.bf16 %v1960, %v1959
  %v2009 = vpack.c.bf16 %v1962, %v1961
  %v2010 = vpack.c.bf16 %v1964, %v1963
  %v2011 = vpack.c.bf16 %v1966, %v1965
  %v2012 = vpack.c.bf16 %v1968, %v1967
  %v2013 = vpack.c.bf16 %v1970, %v1969
  %v2014 = vpack.c.bf16 %v1972, %v1971
  %v2015 = vpack.c.bf16 %v1974, %v1973
  %v2016 = vpack.c.bf16 %v1976, %v1975
  %v2017 = vpack.c.bf16 %v1978, %v1977
  %v2018 = vpack.c.bf16 %v1980, %v1979
  %v2019 = vpack.c.bf16 %v1982, %v1981
  %v2020 = vpack.c.bf16 %v1984, %v1983
  %v2021 = vpack.c.bf16 %v1986, %v1985
  %v2022 = vpack.c.bf16 %v1988, %v1987
  %v2023 = vpack.c.bf16 %v1990, %v1989
  %v2024 = vpack.c.bf16 %v1992, %v1991
  %v2057 = vunpack.c.l.b16 %v1993
  %v2058 = vunpack.c.h.b16 %v1993
  %v2059 = vunpack.c.l.b16 %v1994
  %v2060 = vunpack.c.h.b16 %v1994
  %v2061 = vunpack.c.l.b16 %v1995
  %v2062 = vunpack.c.h.b16 %v1995
  %v2063 = vunpack.c.l.b16 %v1996
  %v2064 = vunpack.c.h.b16 %v1996
  %v2065 = vunpack.c.l.b16 %v1997
  %v2066 = vunpack.c.h.b16 %v1997
  %v2067 = vunpack.c.l.b16 %v1998
  %v2068 = vunpack.c.h.b16 %v1998
  %v2069 = vunpack.c.l.b16 %v1999
  %v2070 = vunpack.c.h.b16 %v1999
  %v2071 = vunpack.c.l.b16 %v2000
  %v2072 = vunpack.c.h.b16 %v2000
  %v2073 = vunpack.c.l.b16 %v2001
  %v2074 = vunpack.c.h.b16 %v2001
  %v2075 = vunpack.c.l.b16 %v2002
  %v2076 = vunpack.c.h.b16 %v2002
  %v2077 = vunpack.c.l.b16 %v2003
  %v2078 = vunpack.c.h.b16 %v2003
  %v2079 = vunpack.c.l.b16 %v2004
  %v2080 = vunpack.c.h.b16 %v2004
  %v2081 = vunpack.c.l.b16 %v2005
  %v2082 = vunpack.c.h.b16 %v2005
  %v2083 = vunpack.c.l.b16 %v2006
  %v2084 = vunpack.c.h.b16 %v2006
  %v2085 = vunpack.c.l.b16 %v2007
  %v2086 = vunpack.c.h.b16 %v2007
  %v2087 = vunpack.c.l.b16 %v2008
  %v2088 = vunpack.c.h.b16 %v2008
  %v2089 = vunpack.c.l.b16 %v2009
  %v2090 = vunpack.c.h.b16 %v2009
  %v2091 = vunpack.c.l.b16 %v2010
  %v2092 = vunpack.c.h.b16 %v2010
  %v2093 = vunpack.c.l.b16 %v2011
  %v2094 = vunpack.c.h.b16 %v2011
  %v2095 = vunpack.c.l.b16 %v2012
  %v2096 = vunpack.c.h.b16 %v2012
  %v2097 = vunpack.c.l.b16 %v2013
  %v2098 = vunpack.c.h.b16 %v2013
  %v2099 = vunpack.c.l.b16 %v2014
  %v2100 = vunpack.c.h.b16 %v2014
  %v2101 = vunpack.c.l.b16 %v2015
  %v2102 = vunpack.c.h.b16 %v2015
  %v2103 = vunpack.c.l.b16 %v2016
  %v2104 = vunpack.c.h.b16 %v2016
  %v2105 = vunpack.c.l.b16 %v2017
  %v2106 = vunpack.c.h.b16 %v2017
  %v2107 = vunpack.c.l.b16 %v2018
  %v2108 = vunpack.c.h.b16 %v2018
  %v2109 = vunpack.c.l.b16 %v2019
  %v2110 = vunpack.c.h.b16 %v2019
  %v2111 = vunpack.c.l.b16 %v2020
  %v2112 = vunpack.c.h.b16 %v2020
  %v2113 = vunpack.c.l.b16 %v2021
  %v2114 = vunpack.c.h.b16 %v2021
  %v2115 = vunpack.c.l.b16 %v2022
  %v2116 = vunpack.c.h.b16 %v2022
  %v2117 = vunpack.c.l.b16 %v2023
  %v2118 = vunpack.c.h.b16 %v2023
  %v2119 = vunpack.c.l.b16 %v2024
  %v2120 = vunpack.c.h.b16 %v2024
  %v2121 = vpack.c.b16 %v2057, %v2057
  %v2122 = vpack.c.b16 %v2058, %v2058
  %v2123 = vpack.c.b16 %v2059, %v2059
  %v2124 = vpack.c.b16 %v2060, %v2060
  %v2125 = vpack.c.b16 %v2061, %v2061
  %v2126 = vpack.c.b16 %v2062, %v2062
  %v2127 = vpack.c.b16 %v2063, %v2063
  %v2128 = vpack.c.b16 %v2064, %v2064
  %v2129 = vpack.c.b16 %v2065, %v2065
  %v2130 = vpack.c.b16 %v2066, %v2066
  %v2131 = vpack.c.b16 %v2067, %v2067
  %v2132 = vpack.c.b16 %v2068, %v2068
  %v2133 = vpack.c.b16 %v2069, %v2069
  %v2134 = vpack.c.b16 %v2070, %v2070
  %v2135 = vpack.c.b16 %v2071, %v2071
  %v2136 = vpack.c.b16 %v2072, %v2072
  %v2137 = vpack.c.b16 %v2073, %v2073
  %v2138 = vpack.c.b16 %v2074, %v2074
  %v2139 = vpack.c.b16 %v2075, %v2075
  %v2140 = vpack.c.b16 %v2076, %v2076
  %v2141 = vpack.c.b16 %v2077, %v2077
  %v2142 = vpack.c.b16 %v2078, %v2078
  %v2143 = vpack.c.b16 %v2079, %v2079
  %v2144 = vpack.c.b16 %v2080, %v2080
  %v2145 = vpack.c.b16 %v2081, %v2081
  %v2146 = vpack.c.b16 %v2082, %v2082
  %v2147 = vpack.c.b16 %v2083, %v2083
  %v2148 = vpack.c.b16 %v2084, %v2084
  %v2149 = vpack.c.b16 %v2085, %v2085
  %v2150 = vpack.c.b16 %v2086, %v2086
  %v2151 = vpack.c.b16 %v2087, %v2087
  %v2152 = vpack.c.b16 %v2088, %v2088
  %v2153 = vpack.c.b16 %v2089, %v2089
  %v2154 = vpack.c.b16 %v2090, %v2090
  %v2155 = vpack.c.b16 %v2091, %v2091
  %v2156 = vpack.c.b16 %v2092, %v2092
  %v2157 = vpack.c.b16 %v2093, %v2093
  %v2158 = vpack.c.b16 %v2094, %v2094
  %v2159 = vpack.c.b16 %v2095, %v2095
  %v2160 = vpack.c.b16 %v2096, %v2096
  %v2161 = vpack.c.b16 %v2097, %v2097
  %v2162 = vpack.c.b16 %v2098, %v2098
  %v2163 = vpack.c.b16 %v2099, %v2099
  %v2164 = vpack.c.b16 %v2100, %v2100
  %v2165 = vpack.c.b16 %v2101, %v2101
  %v2166 = vpack.c.b16 %v2102, %v2102
  %v2167 = vpack.c.b16 %v2103, %v2103
  %v2168 = vpack.c.b16 %v2104, %v2104
  %v2169 = vpack.c.b16 %v2105, %v2105
  %v2170 = vpack.c.b16 %v2106, %v2106
  %v2171 = vpack.c.b16 %v2107, %v2107
  %v2172 = vpack.c.b16 %v2108, %v2108
  %v2173 = vpack.c.b16 %v2109, %v2109
  %v2174 = vpack.c.b16 %v2110, %v2110
  %v2175 = vpack.c.b16 %v2111, %v2111
  %v2176 = vpack.c.b16 %v2112, %v2112
  %v2177 = vpack.c.b16 %v2113, %v2113
  %v2178 = vpack.c.b16 %v2114, %v2114
  %v2179 = vpack.c.b16 %v2115, %v2115
  %v2180 = vpack.c.b16 %v2116, %v2116
  %v2181 = vpack.c.b16 %v2117, %v2117
  %v2182 = vpack.c.b16 %v2118, %v2118
  %v2183 = vpack.c.b16 %v2119, %v2119
  %v2184 = vpack.c.b16 %v2120, %v2120
  %vm2249 = vcmask 125952
  %2250 = vst.msk [vmem:[%s8] sm:$0xf] %vm2249, %v2121
  %2251 = vst.msk [vmem:[%s8 + $0x4] sm:$0xf] %vm2249, %v2122
  %2252 = vst.msk [vmem:[%s8 + $0x8] sm:$0xf] %vm2249, %v2123
  %2253 = vst.msk [vmem:[%s8 + $0xc] sm:$0xf] %vm2249, %v2124
  %2254 = vst.msk [vmem:[%s8 + $0x10] sm:$0xf] %vm2249, %v2125
  %2255 = vst.msk [vmem:[%s8 + $0x14] sm:$0xf] %vm2249, %v2126
  %2256 = vst.msk [vmem:[%s8 + $0x18] sm:$0xf] %vm2249, %v2127
  %2257 = vst.msk [vmem:[%s8 + $0x1c] sm:$0xf] %vm2249, %v2128
  %2258 = vst.msk [vmem:[%s8 + $0x20] sm:$0xf] %vm2249, %v2129
  %2259 = vst.msk [vmem:[%s8 + $0x24] sm:$0xf] %vm2249, %v2130
  %2260 = vst.msk [vmem:[%s8 + $0x28] sm:$0xf] %vm2249, %v2131
  %2261 = vst.msk [vmem:[%s8 + $0x2c] sm:$0xf] %vm2249, %v2132
  %2262 = vst.msk [vmem:[%s8 + $0x30] sm:$0xf] %vm2249, %v2133
  %2263 = vst.msk [vmem:[%s8 + $0x34] sm:$0xf] %vm2249, %v2134
  %2264 = vst.msk [vmem:[%s8 + $0x38] sm:$0xf] %vm2249, %v2135
  %2265 = vst.msk [vmem:[%s8 + $0x3c] sm:$0xf] %vm2249, %v2136
  %2266 = vst.msk [vmem:[%s8 + $0x40] sm:$0xf] %vm2249, %v2137
  %2267 = vst.msk [vmem:[%s8 + $0x44] sm:$0xf] %vm2249, %v2138
  %2268 = vst.msk [vmem:[%s8 + $0x48] sm:$0xf] %vm2249, %v2139
  %2269 = vst.msk [vmem:[%s8 + $0x4c] sm:$0xf] %vm2249, %v2140
  %2270 = vst.msk [vmem:[%s8 + $0x50] sm:$0xf] %vm2249, %v2141
  %2271 = vst.msk [vmem:[%s8 + $0x54] sm:$0xf] %vm2249, %v2142
  %2272 = vst.msk [vmem:[%s8 + $0x58] sm:$0xf] %vm2249, %v2143
  %2273 = vst.msk [vmem:[%s8 + $0x5c] sm:$0xf] %vm2249, %v2144
  %2274 = vst.msk [vmem:[%s8 + $0x60] sm:$0xf] %vm2249, %v2145
  %2275 = vst.msk [vmem:[%s8 + $0x64] sm:$0xf] %vm2249, %v2146
  %2276 = vst.msk [vmem:[%s8 + $0x68] sm:$0xf] %vm2249, %v2147
  %2277 = vst.msk [vmem:[%s8 + $0x6c] sm:$0xf] %vm2249, %v2148
  %2278 = vst.msk [vmem:[%s8 + $0x70] sm:$0xf] %vm2249, %v2149
  %2279 = vst.msk [vmem:[%s8 + $0x74] sm:$0xf] %vm2249, %v2150
  %2280 = vst.msk [vmem:[%s8 + $0x78] sm:$0xf] %vm2249, %v2151
  %2281 = vst.msk [vmem:[%s8 + $0x7c] sm:$0xf] %vm2249, %v2152
  %2282 = vst.msk [vmem:[%s8 + $0x80] sm:$0xf] %vm2249, %v2153
  %2283 = vst.msk [vmem:[%s8 + $0x84] sm:$0xf] %vm2249, %v2154
  %2284 = vst.msk [vmem:[%s8 + $0x88] sm:$0xf] %vm2249, %v2155
  %2285 = vst.msk [vmem:[%s8 + $0x8c] sm:$0xf] %vm2249, %v2156
  %2286 = vst.msk [vmem:[%s8 + $0x90] sm:$0xf] %vm2249, %v2157
  %2287 = vst.msk [vmem:[%s8 + $0x94] sm:$0xf] %vm2249, %v2158
  %2288 = vst.msk [vmem:[%s8 + $0x98] sm:$0xf] %vm2249, %v2159
  %2289 = vst.msk [vmem:[%s8 + $0x9c] sm:$0xf] %vm2249, %v2160
  %2290 = vst.msk [vmem:[%s8 + $0xa0] sm:$0xf] %vm2249, %v2161
  %2291 = vst.msk [vmem:[%s8 + $0xa4] sm:$0xf] %vm2249, %v2162
  %2292 = vst.msk [vmem:[%s8 + $0xa8] sm:$0xf] %vm2249, %v2163
  %2293 = vst.msk [vmem:[%s8 + $0xac] sm:$0xf] %vm2249, %v2164
  %2294 = vst.msk [vmem:[%s8 + $0xb0] sm:$0xf] %vm2249, %v2165
  %2295 = vst.msk [vmem:[%s8 + $0xb4] sm:$0xf] %vm2249, %v2166
  %2296 = vst.msk [vmem:[%s8 + $0xb8] sm:$0xf] %vm2249, %v2167
  %2297 = vst.msk [vmem:[%s8 + $0xbc] sm:$0xf] %vm2249, %v2168
  %2298 = vst.msk [vmem:[%s8 + $0xc0] sm:$0xf] %vm2249, %v2169
  %2299 = vst.msk [vmem:[%s8 + $0xc4] sm:$0xf] %vm2249, %v2170
  %2300 = vst.msk [vmem:[%s8 + $0xc8] sm:$0xf] %vm2249, %v2171
  %2301 = vst.msk [vmem:[%s8 + $0xcc] sm:$0xf] %vm2249, %v2172
  %2302 = vst.msk [vmem:[%s8 + $0xd0] sm:$0xf] %vm2249, %v2173
  %2303 = vst.msk [vmem:[%s8 + $0xd4] sm:$0xf] %vm2249, %v2174
  %2304 = vst.msk [vmem:[%s8 + $0xd8] sm:$0xf] %vm2249, %v2175
  %2305 = vst.msk [vmem:[%s8 + $0xdc] sm:$0xf] %vm2249, %v2176
  %2306 = vst.msk [vmem:[%s8 + $0xe0] sm:$0xf] %vm2249, %v2177
  %2307 = vst.msk [vmem:[%s8 + $0xe4] sm:$0xf] %vm2249, %v2178
  %2308 = vst.msk [vmem:[%s8 + $0xe8] sm:$0xf] %vm2249, %v2179
  %2309 = vst.msk [vmem:[%s8 + $0xec] sm:$0xf] %vm2249, %v2180
  %2310 = vst.msk [vmem:[%s8 + $0xf0] sm:$0xf] %vm2249, %v2181
  %2311 = vst.msk [vmem:[%s8 + $0xf4] sm:$0xf] %vm2249, %v2182
  %2312 = vst.msk [vmem:[%s8 + $0xf8] sm:$0xf] %vm2249, %v2183
  %2313 = vst.msk [vmem:[%s8 + $0xfc] sm:$0xf] %vm2249, %v2184
  // Predicated region
  $region34: #{be_module_forward.3} parent=0 // pred_check
    _
  $region35: #{be_module_forward.3} parent=0 // pred_check_branch
    %2315 = sbr.rel (0) target = $region37
  $region36: #{be_module_forward.3} parent=0 // pred_region
    _
  $region37: #{be_module_forward.3} parent=0 // pred_fallthru
    _
  // Predicated region
  $region38: #{be_module_forward.3} parent=0 // pred_check
    _
  $region39: #{be_module_forward.3} parent=0 // pred_check_branch
    %2317 = sbr.rel (0) target = $region41
  $region40: #{be_module_forward.3} parent=0 // pred_region
    _
  $region41: #{be_module_forward.3} parent=0 // pred_fallthru
    _

// kernel: be_module_forward.5
$region0: #{be_module_forward.5}
  #allocation0 [shape = 'u32[]', space=smem, size = 0x4, offset = 0x4, fixed_abs, tag = 'smem constant byte address 0x4 - core index']
  #allocation1 [shape = 'u32[144,128]{1,0:T(1,128)}', space=vmem, size = 0x12000, scoped, tag = 'internal scratch']
  #allocation2 [shape = 'bf16[18,16,16]{2,1,0:T(16,128)(2,1)}', space=vmem, size = 0x12000, scoped, tag = 'scratch operand']
  #allocation3 [shape = 's32[3]{0}', space=sflag, size = 0xc, scoped, tag = 'scratch operand']
  #allocation8 [shape = 's32[]', space=sflag, size = 0x4, offset = 0, fixed_abs, tag = 'sflag constant byte address 0x0 - dummy sync flag']
  #allocation9 [shape = 's32[]', space=sflag, size = 0x4, offset = 0, fixed_abs, tag = 'sflag constant byte address 0x0 - dummy sync flag']
  #allocation10 [shape = 's32[]', space=sflag, size = 0x4, offset = 0, fixed_abs, tag = 'sflag constant byte address 0x0 - dummy sync flag']
  %s0 = inlined_call_operand.vmem [shape: bf16[2,16,16,16], index: 0, kind: input, shape index: {}]
  %s1 = inlined_call_operand.vmem [shape: bf16[2,8,18,8], index: 1, kind: input, shape index: {}]
  %s2 = inlined_call_operand.vmem [shape: bf16[1,18,8], index: 2, kind: input, shape index: {}]
  %s3 = inlined_call_operand.vmem [shape: bf16[3,72,16], index: 3, kind: input, shape index: {}]
  %s4 = inlined_call_operand.vmem [shape: bf16[8,2], index: 4, kind: input, shape index: {}]
  %s5 = inlined_call_operand.vmem [shape: f32[1,16], index: 5, kind: input, shape index: {}]
  %s6 = inlined_call_operand.vmem [shape: f32[1,16], index: 6, kind: input, shape index: {}]
  %s7 = inlined_call_operand.hbm [shape: f32[2,16,16,16], index: 7, kind: output, shape index: {0}]
  %s8 = inlined_call_operand.hbm [shape: f32[2,2,16,16], index: 8, kind: output, shape index: {1}]
  %9 = xla_tuple %s7, %s8
  %s10 = sld [smem:[#allocation0]]
  $region171: #{be_module_forward.5} parent=0
    _
  %s12 = ssub.s32 1, %s10
  %s13 = scalar_select 0, %s12, %s10
  $region1: #{be_module_forward.5} parent=0
    #allocation4 [shape = 'u8[262144]{0}', space=vmem, size = 0x40000, scoped, tag = 'output window, operand 0']
    #allocation5 [shape = 's32[2]{0}', space=sflag, size = 0x8, scoped, tag = 'scoped memory for be_module_forward.5']
    #allocation6 [shape = 'u8[32768]{0}', space=vmem, size = 0x8000, scoped, tag = 'output window, operand 1']
    #allocation7 [shape = 's32[2]{0}', space=sflag, size = 0x8, scoped, tag = 'scoped memory for be_module_forward.5']
    %14 = vsyncpa [#allocation5], 0
    %s15 = scalar_lea.sflag [#allocation5], 1
    %16 = vsyncpa %s15, 0
    %17 = vsyncpa [#allocation7], 0
    %s18 = scalar_lea.sflag [#allocation7], 1
    %19 = vsyncpa %s18, 0
    loop: start=0, step=1, limit=4
    $region2: #{be_module_forward.5} parent=1 // loop_pre_header
      _
    $region3: #{be_module_forward.5} parent=1 // loop_header
      %s21 = sphi 0, %s25
      %p22 = scmp.ge.s32.totalorder %s21, 4
      %s28 = sphi 0, %s40
      %s29 = sphi 0, %s36
      %s30 = sphi 0, %s28
      %s31 = sphi 0, %s29
      %s32 = sphi 0, %s30
      %s33 = sphi 0, %s31
      %s43 = sphi 0, %s45
      %s46 = sphi 0, %s43
      %s47 = sphi 0, %s46
      %s63 = sphi 0, %s47
      %s69 = sphi 0, %s71
      %s72 = sphi 0, %s69
      %s73 = sphi 0, %s72
      %s89 = sphi 0, %s73
      %s93 = sphi 0, %s93
      %s95 = sphi 0, %s93
      %s96 = sphi 0, %s95
      %s110 = sphi 0, %s96
      %s114 = sphi 0, %s114
      %s116 = sphi 0, %s114
      %s117 = sphi 0, %s116
      %s131 = sphi 0, %s117
      %s135 = sphi 0, %s135
      %s137 = sphi 0, %s135
      %s138 = sphi 0, %s137
      %s152 = sphi 0, %s138
      %s156 = sphi 0, %s156
      %s158 = sphi 0, %s156
      %s159 = sphi 0, %s158
      %s173 = sphi 0, %s159
      %s181 = sphi 0, %s183
      %s184 = sphi 0, %s181
      %s185 = sphi 0, %s184
      %s201 = sphi 0, %s185
      %s209 = sphi 0, %s211
      %s212 = sphi 0, %s209
      %s213 = sphi 0, %s212
      %s229 = sphi 0, %s213
    $region4: #{be_module_forward.5} parent=1 // loop_header_branch
      %24 = sbr.rel (%p22) target = $region8
    $region5: #{be_module_forward.5} parent=1 // loop_body
      %s26 = ssub.s32 %s21, 1
      %s27 = ssub.s32 %s21, 2
      %s34 = sadd.s32 1, %s29
      %p35 = scmp.ge.s32.totalorder %s34, 1
      %s36 = scalar_select %p35, 0, %s34
      %s37 = sadd.s32 1, %s28
      %s38 = scalar_select %p35, %s37, %s28
      %p39 = scmp.ge.s32.totalorder %s38, 2
      %s40 = scalar_select %p39, 0, %s38
      %s41 = ssub.s32 %s28, %s40
      %p42 = scmp.eq.s32.totalorder %s41, 0
      %s44 = sadd.s32 %s43, 1
      %s45 = scalar_select %p42, %s43, %s44
      %p48 = pneg %p42
      %p49 = scmp.eq.s32.totalorder %s21, 1
      %p50 = por %p48, %p49
      %p51 = scmp.ne.s32.totalorder %s43, %s46
      %p52 = scmp.eq.s32.totalorder %s21, 0
      %p53 = por %p51, %p52
      %p54 = scmp.ne.s32.totalorder %s43, %s46
      %p55 = scmp.eq.s32.totalorder %s26, 1
      %p56 = por %p54, %p55
      %p57 = scmp.ne.s32.totalorder %s46, %s47
      %p58 = scmp.eq.s32.totalorder %s26, 0
      %p59 = por %p57, %p58
      %p60 = scmp.ne.s32.totalorder %s46, %s47
      %p61 = scmp.eq.s32.totalorder %s27, 1
      %p62 = por %p60, %p61
      %p64 = scmp.ne.s32.totalorder %s47, %s63
      %p65 = scmp.eq.s32.totalorder %s27, 0
      %p66 = por %p64, %p65
      %s67 = ssub.s32 %s29, %s36
      %p68 = scmp.eq.s32.totalorder %s67, 0
      %s70 = sadd.s32 %s69, 1
      %s71 = scalar_select %p68, %s69, %s70
      %p74 = pneg %p68
      %p75 = scmp.eq.s32.totalorder %s21, 1
      %p76 = por %p74, %p75
      %p77 = scmp.ne.s32.totalorder %s69, %s72
      %p78 = scmp.eq.s32.totalorder %s21, 0
      %p79 = por %p77, %p78
      %p80 = scmp.ne.s32.totalorder %s69, %s72
      %p81 = scmp.eq.s32.totalorder %s26, 1
      %p82 = por %p80, %p81
      %p83 = scmp.ne.s32.totalorder %s72, %s73
      %p84 = scmp.eq.s32.totalorder %s26, 0
      %p85 = por %p83, %p84
      %p86 = scmp.ne.s32.totalorder %s72, %s73
      %p87 = scmp.eq.s32.totalorder %s27, 1
      %p88 = por %p86, %p87
      %p90 = scmp.ne.s32.totalorder %s73, %s89
      %p91 = scmp.eq.s32.totalorder %s27, 0
      %p92 = por %p90, %p91
      %s94 = sadd.s32 %s93, 1
      %p97 = scmp.eq.s32.totalorder %s21, 1
      %p98 = scmp.ne.s32.totalorder %s93, %s95
      %p99 = scmp.eq.s32.totalorder %s21, 0
      %p100 = por %p98, %p99
      %p101 = scmp.ne.s32.totalorder %s93, %s95
      %p102 = scmp.eq.s32.totalorder %s26, 1
      %p103 = por %p101, %p102
      %p104 = scmp.ne.s32.totalorder %s95, %s96
      %p105 = scmp.eq.s32.totalorder %s26, 0
      %p106 = por %p104, %p105
      %p107 = scmp.ne.s32.totalorder %s95, %s96
      %p108 = scmp.eq.s32.totalorder %s27, 1
      %p109 = por %p107, %p108
      %p111 = scmp.ne.s32.totalorder %s96, %s110
      %p112 = scmp.eq.s32.totalorder %s27, 0
      %p113 = por %p111, %p112
      %s115 = sadd.s32 %s114, 1
      %p118 = scmp.eq.s32.totalorder %s21, 1
      %p119 = scmp.ne.s32.totalorder %s114, %s116
      %p120 = scmp.eq.s32.totalorder %s21, 0
      %p121 = por %p119, %p120
      %p122 = scmp.ne.s32.totalorder %s114, %s116
      %p123 = scmp.eq.s32.totalorder %s26, 1
      %p124 = por %p122, %p123
      %p125 = scmp.ne.s32.totalorder %s116, %s117
      %p126 = scmp.eq.s32.totalorder %s26, 0
      %p127 = por %p125, %p126
      %p128 = scmp.ne.s32.totalorder %s116, %s117
      %p129 = scmp.eq.s32.totalorder %s27, 1
      %p130 = por %p128, %p129
      %p132 = scmp.ne.s32.totalorder %s117, %s131
      %p133 = scmp.eq.s32.totalorder %s27, 0
      %p134 = por %p132, %p133
      %s136 = sadd.s32 %s135, 1
      %p139 = scmp.eq.s32.totalorder %s21, 1
      %p140 = scmp.ne.s32.totalorder %s135, %s137
      %p141 = scmp.eq.s32.totalorder %s21, 0
      %p142 = por %p140, %p141
      %p143 = scmp.ne.s32.totalorder %s135, %s137
      %p144 = scmp.eq.s32.totalorder %s26, 1
      %p145 = por %p143, %p144
      %p146 = scmp.ne.s32.totalorder %s137, %s138
      %p147 = scmp.eq.s32.totalorder %s26, 0
      %p148 = por %p146, %p147
      %p149 = scmp.ne.s32.totalorder %s137, %s138
      %p150 = scmp.eq.s32.totalorder %s27, 1
      %p151 = por %p149, %p150
      %p153 = scmp.ne.s32.totalorder %s138, %s152
      %p154 = scmp.eq.s32.totalorder %s27, 0
      %p155 = por %p153, %p154
      %s157 = sadd.s32 %s156, 1
      %p160 = scmp.eq.s32.totalorder %s21, 1
      %p161 = scmp.ne.s32.totalorder %s156, %s158
      %p162 = scmp.eq.s32.totalorder %s21, 0
      %p163 = por %p161, %p162
      %p164 = scmp.ne.s32.totalorder %s156, %s158
      %p165 = scmp.eq.s32.totalorder %s26, 1
      %p166 = por %p164, %p165
      %p167 = scmp.ne.s32.totalorder %s158, %s159
      %p168 = scmp.eq.s32.totalorder %s26, 0
      %p169 = por %p167, %p168
      %p170 = scmp.ne.s32.totalorder %s158, %s159
      %p171 = scmp.eq.s32.totalorder %s27, 1
      %p172 = por %p170, %p171
      %p174 = scmp.ne.s32.totalorder %s159, %s173
      %p175 = scmp.eq.s32.totalorder %s27, 0
      %p176 = por %p174, %p175
      %s177 = ssub.s32 %s28, %s40
      %s178 = ssub.s32 %s29, %s36
      %s179 = sor.u32 %s177, %s178
      %p180 = scmp.eq.s32.totalorder %s179, 0
      %s182 = sadd.s32 %s181, 1
      %s183 = scalar_select %p180, %s181, %s182
      %p186 = pneg %p180
      %p187 = scmp.eq.s32.totalorder %s21, 1
      %p188 = por %p186, %p187
      %p189 = scmp.ne.s32.totalorder %s181, %s184
      %p190 = scmp.eq.s32.totalorder %s21, 0
      %p191 = por %p189, %p190
      %p192 = scmp.ne.s32.totalorder %s181, %s184
      %p193 = scmp.eq.s32.totalorder %s26, 1
      %p194 = por %p192, %p193
      %p195 = scmp.ne.s32.totalorder %s184, %s185
      %p196 = scmp.eq.s32.totalorder %s26, 0
      %p197 = por %p195, %p196
      %p198 = scmp.ne.s32.totalorder %s184, %s185
      %p199 = scmp.eq.s32.totalorder %s27, 1
      %p200 = por %p198, %p199
      %p202 = scmp.ne.s32.totalorder %s185, %s201
      %p203 = scmp.eq.s32.totalorder %s27, 0
      %p204 = por %p202, %p203
      %s205 = ssub.s32 %s28, %s40
      %s206 = ssub.s32 %s29, %s36
      %s207 = sor.u32 %s205, %s206
      %p208 = scmp.eq.s32.totalorder %s207, 0
      %s210 = sadd.s32 %s209, 1
      %s211 = scalar_select %p208, %s209, %s210
      %p214 = pneg %p208
      %p215 = scmp.eq.s32.totalorder %s21, 1
      %p216 = por %p214, %p215
      %p217 = scmp.ne.s32.totalorder %s209, %s212
      %p218 = scmp.eq.s32.totalorder %s21, 0
      %p219 = por %p217, %p218
      %p220 = scmp.ne.s32.totalorder %s209, %s212
      %p221 = scmp.eq.s32.totalorder %s26, 1
      %p222 = por %p220, %p221
      %p223 = scmp.ne.s32.totalorder %s212, %s213
      %p224 = scmp.eq.s32.totalorder %s26, 0
      %p225 = por %p223, %p224
      %p226 = scmp.ne.s32.totalorder %s212, %s213
      %p227 = scmp.eq.s32.totalorder %s27, 1
      %p228 = por %p226, %p227
      %p230 = scmp.ne.s32.totalorder %s213, %s229
      %p231 = scmp.eq.s32.totalorder %s27, 0
      %p232 = por %p230, %p231
      %p233 = scmp.le.s32.totalorder 1, %s21
      %p234 = scmp.lt.s32.totalorder %s21, 3
      %p235 = pnand %p233, %p234
      %p236 = pneg %p235
      // Predicated region
      $region9: #{be_module_forward.5} parent=5 // pred_check
        _
      $region10: #{be_module_forward.5} parent=5 // pred_check_branch
        %238 = sbr.rel (%p235) target = $region12
      $region11: #{be_module_forward.5} parent=5 // pred_region
        %s239 = ssub.s32 %s21, 1
        // Predicated region
        $region13: #{be_module_forward.5} parent=11 // pred_check
          %p240 = pneg %p85
        $region14: #{be_module_forward.5} parent=11 // pred_check_branch
          %242 = sbr.rel (%p240) target = $region16
        $region15: #{be_module_forward.5} parent=11 // pred_region
          %p243 = scmp.lt.s32.totalorder %s31, 0
          %s244 = scalar_select %p243, %s31, 0
          %s245 = smul.addr %s244, 3
          %s246 = smul.addr %s245, 4
          %s247 = scalar_lea.vmem %s2, %s246
        $region16: #{be_module_forward.5} parent=11 // pred_fallthru
          _
        // Predicated region
        $region17: #{be_module_forward.5} parent=11 // pred_check
          %p248 = pneg %p106
        $region18: #{be_module_forward.5} parent=11 // pred_check_branch
          %250 = sbr.rel (%p248) target = $region20
        $region19: #{be_module_forward.5} parent=11 // pred_region
          _
        $region20: #{be_module_forward.5} parent=11 // pred_fallthru
          _
        // Predicated region
        $region21: #{be_module_forward.5} parent=11 // pred_check
          %p251 = pneg %p127
        $region22: #{be_module_forward.5} parent=11 // pred_check_branch
          %253 = sbr.rel (%p251) target = $region24
        $region23: #{be_module_forward.5} parent=11 // pred_region
          _
        $region24: #{be_module_forward.5} parent=11 // pred_fallthru
          _
        // Predicated region
        $region25: #{be_module_forward.5} parent=11 // pred_check
          %p254 = pneg %p148
        $region26: #{be_module_forward.5} parent=11 // pred_check_branch
          %256 = sbr.rel (%p254) target = $region28
        $region27: #{be_module_forward.5} parent=11 // pred_region
          _
        $region28: #{be_module_forward.5} parent=11 // pred_fallthru
          _
        // Predicated region
        $region29: #{be_module_forward.5} parent=11 // pred_check
          %p257 = pneg %p169
        $region30: #{be_module_forward.5} parent=11 // pred_check_branch
          %259 = sbr.rel (%p257) target = $region32
        $region31: #{be_module_forward.5} parent=11 // pred_region
          _
        $region32: #{be_module_forward.5} parent=11 // pred_fallthru
          _
      $region12: #{be_module_forward.5} parent=5 // pred_fallthru
        _
      %p260 = scmp.lt.s32.totalorder %s21, 2
      // Predicated region
      $region33: #{be_module_forward.5} parent=5 // pred_check
        %p261 = pneg %p260
      $region34: #{be_module_forward.5} parent=5 // pred_check_branch
        %263 = sbr.rel (%p261) target = $region36
      $region35: #{be_module_forward.5} parent=5 // pred_region
        // Predicated region
        $region37: #{be_module_forward.5} parent=35 // pred_check
          %p264 = pneg %p53
        $region38: #{be_module_forward.5} parent=35 // pred_check_branch
          %266 = sbr.rel (%p264) target = $region40
        $region39: #{be_module_forward.5} parent=35 // pred_region
          %p267 = scmp.lt.s32.totalorder %s28, 1
          %s268 = scalar_select %p267, %s28, 1
          %s269 = smul.addr %s268, 24
          %s270 = smul.addr %s269, 4
          %s271 = scalar_lea.vmem %s1, %s270
        $region40: #{be_module_forward.5} parent=35 // pred_fallthru
          _
      $region36: #{be_module_forward.5} parent=5 // pred_fallthru
        _
      %p272 = scmp.le.s32.totalorder 1, %s21
      %p273 = scmp.lt.s32.totalorder %s21, 3
      %p274 = pnand %p272, %p273
      %p275 = pneg %p274
      // Predicated region
      $region41: #{be_module_forward.5} parent=5 // pred_check
        _
      $region42: #{be_module_forward.5} parent=5 // pred_check_branch
        %277 = sbr.rel (%p274) target = $region44
      $region43: #{be_module_forward.5} parent=5 // pred_region
        %s278 = ssub.s32 %s21, 1
        %p279 = scmp.lt.s32.totalorder %s30, 1
        %s280 = scalar_select %p279, %s30, 1
        %s281 = smul.addr %s280, 24
        %s282 = smul.addr %s281, 4
        %s283 = scalar_lea.vmem %s1, %s282
        %p284 = pneg %p59
        %p285 = pneg %p56
        %p286 = scmp.lt.s32.totalorder %s31, 0
        %s287 = scalar_select %p286, %s31, 0
        %s288 = smul.addr %s287, 3
        %s289 = smul.addr %s288, 4
        %s290 = scalar_lea.vmem %s2, %s289
        %p291 = pneg %p85
        %p292 = pneg %p82
        %p293 = pneg %p106
        %p294 = pneg %p103
        %p295 = pneg %p127
        %p296 = pneg %p124
        %p297 = pneg %p148
        %p298 = pneg %p145
        %p299 = pneg %p169
        %p300 = pneg %p166
        %p301 = pneg %p197
        %p302 = pneg %p194
        %s303 = sand.u32 %s184, 1
        %s304 = scalar_lea.sflag [#allocation5], %s303
        %s305 = sand.u32 %s184, 1
        %s306 = smul.addr %s305, 256
        %s307 = scalar_lea.vmem [#allocation4], %s306
        %p308 = pneg %p225
        %p309 = pneg %p222
        %s310 = sand.u32 %s212, 1
        %s311 = scalar_lea.sflag [#allocation7], %s310
        %s312 = sand.u32 %s212, 1
        %s313 = smul.addr %s312, 32
        %s314 = scalar_lea.vmem [#allocation6], %s313
        %p315 = scmp.lt.s32.totalorder %s30, 1
        %s316 = scalar_select %p315, %s30, 1
        %s317 = smul.addr %s316, 24
        %s318 = smul.addr %s317, 4
        %s319 = scalar_lea.vmem %s1, %s318
        %p320 = scmp.lt.s32.totalorder %s31, 0
        %s321 = scalar_select %p320, %s31, 0
        %s322 = smul.addr %s321, 3
        %s323 = smul.addr %s322, 4
        %s324 = scalar_lea.vmem %s2, %s323
        %s325 = smul.u32 2, %s31
        %s326 = smul.u32 2, %s31
        %s328 = smul.u32 %s31, 16
        %s329 = ssub.s32 %s328, 1
        %p330 = scmp.gt.s32.totalorder %s329, 0
        %s331 = scalar_select %p330, %s329, 0
        %s332 = sadd.s32 %s328, 16
        %p333 = scmp.lt.s32.totalorder %s332, 15
        %s334 = scalar_select %p333, %s332, 15
        %s335 = smul.u32 %s328, 2
        %s336 = smul.u32 %s30, 32
        %s337 = sadd.s32 %s335, %s336
        %s338 = smul.addr %s337, 4
        %s339 = scalar_lea.vmem %s0, %s338
        %s340 = scalar_lea.vmem [#allocation2], 8
        %p342 = scmp.lt.u32.totalorder 128, 8
        %p343 = pneg %p342
        // Predicated region
        $region45: #{be_module_forward.5} parent=43 // pred_check
          _
        $region46: #{be_module_forward.5} parent=43 // pred_check_branch
          %345 = sbr.rel (%p342) target = $region48
        $region47: #{be_module_forward.5} parent=43 // pred_region
          %s360 = sand.u32 128, 7
          %p361 = scmp.eq.s32.totalorder %s360, 0
          // Predicated region
          $region60: #{be_module_forward.5} parent=47 // pred_check
            %p362 = pneg %p361
          $region61: #{be_module_forward.5} parent=47 // pred_check_branch
            %364 = sbr.rel (%p362) target = $region63
          $region62: #{be_module_forward.5} parent=47 // pred_region
            loop: start=0, step=1, limit=1
            $region64: #{be_module_forward.5} parent=62 // loop_pre_header
              _
            $region65: #{be_module_forward.5} parent=62 // loop_header
              %s366 = sphi 0, %s370
              %p367 = scmp.ge.s32.totalorder %s366, 1
              %s371 = sphi %s339, %s339
              %s372 = sphi %s340, %s340
            $region66: #{be_module_forward.5} parent=62 // loop_header_branch
              %369 = sbr.rel (%p367) target = $region70
            $region67: #{be_module_forward.5} parent=62 // loop_body
              %v373 = vld [vmem:[%s371] sm:$0xff]
              %374 = vst [vmem:[%s372] sm:$0xff] %v373
              %v375 = vld [vmem:[%s371 + $0x8] sm:$0xff]
              %376 = vst [vmem:[%s372 + $0x8] sm:$0xff] %v375
              %v377 = vld [vmem:[%s371 + $0x10] sm:$0xff]
              %378 = vst [vmem:[%s372 + $0x10] sm:$0xff] %v377
              %v379 = vld [vmem:[%s371 + $0x18] sm:$0xff]
              %380 = vst [vmem:[%s372 + $0x18] sm:$0xff] %v379
              %v381 = vld [vmem:[%s371 + $0x20] sm:$0xff]
              %382 = vst [vmem:[%s372 + $0x20] sm:$0xff] %v381
              %v383 = vld [vmem:[%s371 + $0x28] sm:$0xff]
              %384 = vst [vmem:[%s372 + $0x28] sm:$0xff] %v383
              %v385 = vld [vmem:[%s371 + $0x30] sm:$0xff]
              %386 = vst [vmem:[%s372 + $0x30] sm:$0xff] %v385
              %v387 = vld [vmem:[%s371 + $0x38] sm:$0xff]
              %388 = vst [vmem:[%s372 + $0x38] sm:$0xff] %v387
              %v389 = vld [vmem:[%s371 + $0x40] sm:$0xff]
              %390 = vst [vmem:[%s372 + $0x40] sm:$0xff] %v389
              %v391 = vld [vmem:[%s371 + $0x48] sm:$0xff]
              %392 = vst [vmem:[%s372 + $0x48] sm:$0xff] %v391
              %v393 = vld [vmem:[%s371 + $0x50] sm:$0xff]
              %394 = vst [vmem:[%s372 + $0x50] sm:$0xff] %v393
              %v395 = vld [vmem:[%s371 + $0x58] sm:$0xff]
              %396 = vst [vmem:[%s372 + $0x58] sm:$0xff] %v395
              %v397 = vld [vmem:[%s371 + $0x60] sm:$0xff]
              %398 = vst [vmem:[%s372 + $0x60] sm:$0xff] %v397
              %v399 = vld [vmem:[%s371 + $0x68] sm:$0xff]
              %400 = vst [vmem:[%s372 + $0x68] sm:$0xff] %v399
              %v401 = vld [vmem:[%s371 + $0x70] sm:$0xff]
              %402 = vst [vmem:[%s372 + $0x70] sm:$0xff] %v401
              %v403 = vld [vmem:[%s371 + $0x78] sm:$0xff]
              %404 = vst [vmem:[%s372 + $0x78] sm:$0xff] %v403
            $region68: #{be_module_forward.5} parent=62 // loop_footer
              %s370 = sadd.s32 1, %s366
            $region69: #{be_module_forward.5} parent=62 // loop_footer_branch
              %365 = sbr.rel target = $region65
            $region70: #{be_module_forward.5} parent=62 // loop_exit
              _
          $region63: #{be_module_forward.5} parent=47 // pred_fallthru
            _
          %p405 = pneg %p361
          // Predicated region
          $region71: #{be_module_forward.5} parent=47 // pred_check
            _
          $region72: #{be_module_forward.5} parent=47 // pred_check_branch
            %407 = sbr.rel (%p361) target = $region74
          $region73: #{be_module_forward.5} parent=47 // pred_region
            %s408 = sand.u32 128, 7
          $region74: #{be_module_forward.5} parent=47 // pred_fallthru
            _
        $region48: #{be_module_forward.5} parent=43 // pred_fallthru
          _
        // Predicated region
        $region49: #{be_module_forward.5} parent=43 // pred_check
          %p346 = pneg %p342
        $region50: #{be_module_forward.5} parent=43 // pred_check_branch
          %348 = sbr.rel (%p346) target = $region52
        $region51: #{be_module_forward.5} parent=43 // pred_region
          %s349 = sshllo.u32 0, 128
          loop: start=0, step=1, limit=1
          $region53: #{be_module_forward.5} parent=51 // loop_pre_header
            _
          $region54: #{be_module_forward.5} parent=51 // loop_header
            %s351 = sphi 0, %s355
            %p352 = scmp.ge.s32.totalorder %s351, 1
            %s356 = sphi %s339, %s339
            %s357 = sphi %s340, %s340
          $region55: #{be_module_forward.5} parent=51 // loop_header_branch
            %354 = sbr.rel (%p352) target = $region59
          $region56: #{be_module_forward.5} parent=51 // loop_body
            %v358 = vld [vmem:[%s356] sm:%s349]
            %359 = vst [vmem:[%s357] sm:%s349] %v358
          $region57: #{be_module_forward.5} parent=51 // loop_footer
            %s355 = sadd.s32 1, %s351
          $region58: #{be_module_forward.5} parent=51 // loop_footer_branch
            %350 = sbr.rel target = $region54
          $region59: #{be_module_forward.5} parent=51 // loop_exit
            _
        $region52: #{be_module_forward.5} parent=43 // pred_fallthru
          _
        // Predicated region
        $region75: #{be_module_forward.5} parent=43 // pred_check
          _
        $region76: #{be_module_forward.5} parent=43 // pred_check_branch
          %411 = sbr.rel (0) target = $region78
        $region77: #{be_module_forward.5} parent=43 // pred_region
          %412 = vsyncadd [#allocation3], 2048
        $region78: #{be_module_forward.5} parent=43 // pred_fallthru
          _
        %s413 = smul.u32 %s331, 2
        %s414 = sadd.s32 %s413, %s336
        %s415 = smul.addr %s414, 4
        %s416 = scalar_lea.vmem %s0, %s415
        %s417 = scalar_lea.sflag [#allocation3], 1
        %p419 = scmp.lt.u32.totalorder 8, 8
        %p420 = pneg %p419
        // Predicated region
        $region79: #{be_module_forward.5} parent=43 // pred_check
          _
        $region80: #{be_module_forward.5} parent=43 // pred_check_branch
          %422 = sbr.rel (%p419) target = $region82
        $region81: #{be_module_forward.5} parent=43 // pred_region
          %s437 = sand.u32 8, 7
          %p438 = scmp.eq.s32.totalorder %s437, 0
          // Predicated region
          $region94: #{be_module_forward.5} parent=81 // pred_check
            %p439 = pneg %p438
          $region95: #{be_module_forward.5} parent=81 // pred_check_branch
            %441 = sbr.rel (%p439) target = $region97
          $region96: #{be_module_forward.5} parent=81 // pred_region
            loop: start=0, step=1, limit=1
            $region98: #{be_module_forward.5} parent=96 // loop_pre_header
              _
            $region99: #{be_module_forward.5} parent=96 // loop_header
              %s443 = sphi 0, %s447
              %p444 = scmp.ge.s32.totalorder %s443, 1
              %s448 = sphi %s416, %s416
              %s449 = sphi [#allocation2], [#allocation2]
            $region100: #{be_module_forward.5} parent=96 // loop_header_branch
              %446 = sbr.rel (%p444) target = $region104
            $region101: #{be_module_forward.5} parent=96 // loop_body
              %v450 = vld [vmem:[%s448] sm:$0xff]
              %451 = vst [vmem:[%s449] sm:$0xff] %v450
            $region102: #{be_module_forward.5} parent=96 // loop_footer
              %s447 = sadd.s32 1, %s443
            $region103: #{be_module_forward.5} parent=96 // loop_footer_branch
              %442 = sbr.rel target = $region99
            $region104: #{be_module_forward.5} parent=96 // loop_exit
              _
          $region97: #{be_module_forward.5} parent=81 // pred_fallthru
            _
          %p452 = pneg %p438
          // Predicated region
          $region105: #{be_module_forward.5} parent=81 // pred_check
            _
          $region106: #{be_module_forward.5} parent=81 // pred_check_branch
            %454 = sbr.rel (%p438) target = $region108
          $region107: #{be_module_forward.5} parent=81 // pred_region
            %s455 = sand.u32 8, 7
          $region108: #{be_module_forward.5} parent=81 // pred_fallthru
            _
        $region82: #{be_module_forward.5} parent=43 // pred_fallthru
          _
        // Predicated region
        $region83: #{be_module_forward.5} parent=43 // pred_check
          %p423 = pneg %p419
        $region84: #{be_module_forward.5} parent=43 // pred_check_branch
          %425 = sbr.rel (%p423) target = $region86
        $region85: #{be_module_forward.5} parent=43 // pred_region
          %s426 = sshllo.u32 0, 8
          loop: start=0, step=1, limit=1
          $region87: #{be_module_forward.5} parent=85 // loop_pre_header
            _
          $region88: #{be_module_forward.5} parent=85 // loop_header
            %s428 = sphi 0, %s432
            %p429 = scmp.ge.s32.totalorder %s428, 1
            %s433 = sphi %s416, %s416
            %s434 = sphi [#allocation2], [#allocation2]
          $region89: #{be_module_forward.5} parent=85 // loop_header_branch
            %431 = sbr.rel (%p429) target = $region93
          $region90: #{be_module_forward.5} parent=85 // loop_body
            %v435 = vld [vmem:[%s433] sm:%s426]
            %436 = vst [vmem:[%s434] sm:%s426] %v435
          $region91: #{be_module_forward.5} parent=85 // loop_footer
            %s432 = sadd.s32 1, %s428
          $region92: #{be_module_forward.5} parent=85 // loop_footer_branch
            %427 = sbr.rel target = $region88
          $region93: #{be_module_forward.5} parent=85 // loop_exit
            _
        $region86: #{be_module_forward.5} parent=43 // pred_fallthru
          _
        // Predicated region
        $region109: #{be_module_forward.5} parent=43 // pred_check
          _
        $region110: #{be_module_forward.5} parent=43 // pred_check_branch
          %458 = sbr.rel (0) target = $region112
        $region111: #{be_module_forward.5} parent=43 // pred_region
          %459 = vsyncadd %s417, 128
        $region112: #{be_module_forward.5} parent=43 // pred_fallthru
          _
        %s460 = smul.u32 %s334, 2
        %s461 = sadd.s32 %s460, %s336
        %s462 = smul.addr %s461, 4
        %s463 = scalar_lea.vmem %s0, %s462
        %s464 = scalar_lea.vmem [#allocation2], 136
        %s465 = scalar_lea.sflag [#allocation3], 2
        %p467 = scmp.lt.u32.totalorder 8, 8
        %p468 = pneg %p467
        // Predicated region
        $region113: #{be_module_forward.5} parent=43 // pred_check
          _
        $region114: #{be_module_forward.5} parent=43 // pred_check_branch
          %470 = sbr.rel (%p467) target = $region116
        $region115: #{be_module_forward.5} parent=43 // pred_region
          %s485 = sand.u32 8, 7
          %p486 = scmp.eq.s32.totalorder %s485, 0
          // Predicated region
          $region128: #{be_module_forward.5} parent=115 // pred_check
            %p487 = pneg %p486
          $region129: #{be_module_forward.5} parent=115 // pred_check_branch
            %489 = sbr.rel (%p487) target = $region131
          $region130: #{be_module_forward.5} parent=115 // pred_region
            loop: start=0, step=1, limit=1
            $region132: #{be_module_forward.5} parent=130 // loop_pre_header
              _
            $region133: #{be_module_forward.5} parent=130 // loop_header
              %s491 = sphi 0, %s495
              %p492 = scmp.ge.s32.totalorder %s491, 1
              %s496 = sphi %s463, %s463
              %s497 = sphi %s464, %s464
            $region134: #{be_module_forward.5} parent=130 // loop_header_branch
              %494 = sbr.rel (%p492) target = $region138
            $region135: #{be_module_forward.5} parent=130 // loop_body
              %v498 = vld [vmem:[%s496] sm:$0xff]
              %499 = vst [vmem:[%s497] sm:$0xff] %v498
            $region136: #{be_module_forward.5} parent=130 // loop_footer
              %s495 = sadd.s32 1, %s491
            $region137: #{be_module_forward.5} parent=130 // loop_footer_branch
              %490 = sbr.rel target = $region133
            $region138: #{be_module_forward.5} parent=130 // loop_exit
              _
          $region131: #{be_module_forward.5} parent=115 // pred_fallthru
            _
          %p500 = pneg %p486
          // Predicated region
          $region139: #{be_module_forward.5} parent=115 // pred_check
            _
          $region140: #{be_module_forward.5} parent=115 // pred_check_branch
            %502 = sbr.rel (%p486) target = $region142
          $region141: #{be_module_forward.5} parent=115 // pred_region
            %s503 = sand.u32 8, 7
          $region142: #{be_module_forward.5} parent=115 // pred_fallthru
            _
        $region116: #{be_module_forward.5} parent=43 // pred_fallthru
          _
        // Predicated region
        $region117: #{be_module_forward.5} parent=43 // pred_check
          %p471 = pneg %p467
        $region118: #{be_module_forward.5} parent=43 // pred_check_branch
          %473 = sbr.rel (%p471) target = $region120
        $region119: #{be_module_forward.5} parent=43 // pred_region
          %s474 = sshllo.u32 0, 8
          loop: start=0, step=1, limit=1
          $region121: #{be_module_forward.5} parent=119 // loop_pre_header
            _
          $region122: #{be_module_forward.5} parent=119 // loop_header
            %s476 = sphi 0, %s480
            %p477 = scmp.ge.s32.totalorder %s476, 1
            %s481 = sphi %s463, %s463
            %s482 = sphi %s464, %s464
          $region123: #{be_module_forward.5} parent=119 // loop_header_branch
            %479 = sbr.rel (%p477) target = $region127
          $region124: #{be_module_forward.5} parent=119 // loop_body
            %v483 = vld [vmem:[%s481] sm:%s474]
            %484 = vst [vmem:[%s482] sm:%s474] %v483
          $region125: #{be_module_forward.5} parent=119 // loop_footer
            %s480 = sadd.s32 1, %s476
          $region126: #{be_module_forward.5} parent=119 // loop_footer_branch
            %475 = sbr.rel target = $region122
          $region127: #{be_module_forward.5} parent=119 // loop_exit
            _
        $region120: #{be_module_forward.5} parent=43 // pred_fallthru
          _
        // Predicated region
        $region143: #{be_module_forward.5} parent=43 // pred_check
          _
        $region144: #{be_module_forward.5} parent=43 // pred_check_branch
          %506 = sbr.rel (0) target = $region146
        $region145: #{be_module_forward.5} parent=43 // pred_region
          %507 = vsyncadd %s465, 128
        $region146: #{be_module_forward.5} parent=43 // pred_fallthru
          _
        %v508 = vld [vmem:[%s324] sm:$0xf]
        %v509 = vld [vmem:[%s324 + $0x4] sm:$0xf]
        %v510 = vld [vmem:[%s324 + $0x8] sm:$0x1]
        %v511 = vld [vmem:[%s319] sm:$0xf]
        %v512 = vld [vmem:[%s319 + $0x4] sm:$0xf]
        %v513 = vld [vmem:[%s319 + $0x8] sm:$0x1]
        %v514 = vld [vmem:[%s319 + $0xc] sm:$0xf]
        %v515 = vld [vmem:[%s319 + $0x10] sm:$0xf]
        %v516 = vld [vmem:[%s319 + $0x14] sm:$0x1]
        %v517 = vld [vmem:[%s319 + $0x18] sm:$0xf]
        %v518 = vld [vmem:[%s319 + $0x1c] sm:$0xf]
        %v519 = vld [vmem:[%s319 + $0x20] sm:$0x1]
        %v520 = vld [vmem:[%s319 + $0x24] sm:$0xf]
        %v521 = vld [vmem:[%s319 + $0x28] sm:$0xf]
        %v522 = vld [vmem:[%s319 + $0x2c] sm:$0x1]
        %v523 = vld [vmem:[%s319 + $0x30] sm:$0xf]
        %v524 = vld [vmem:[%s319 + $0x34] sm:$0xf]
        %v525 = vld [vmem:[%s319 + $0x38] sm:$0x1]
        %v526 = vld [vmem:[%s319 + $0x3c] sm:$0xf]
        %v527 = vld [vmem:[%s319 + $0x40] sm:$0xf]
        %v528 = vld [vmem:[%s319 + $0x44] sm:$0x1]
        %v529 = vld [vmem:[%s319 + $0x48] sm:$0xf]
        %v530 = vld [vmem:[%s319 + $0x4c] sm:$0xf]
        %v531 = vld [vmem:[%s319 + $0x50] sm:$0x1]
        %v532 = vld [vmem:[%s319 + $0x54] sm:$0xf]
        %v533 = vld [vmem:[%s319 + $0x58] sm:$0xf]
        %v534 = vld [vmem:[%s319 + $0x5c] sm:$0x1]
        %v535 = vcombine.low %v511, %v523
        %v537 = vunpack.c.l.s4 1983009808
        %v538 = vunpack.c.0.s8 %v537
        %v539 = vlaneseq
        %v540 = vshrl.u32 %v539, 7
        %v541 = vsub.s32 %v538, %v540
        %v542 = vrot.slane %v535, %v541
        %v543 = vcombine.low %v517, %v529
        %v545 = vunpack.c.l.s4 1983009808
        %v546 = vunpack.c.0.s8 %v545
        %v547 = vlaneseq
        %v548 = vshrl.u32 %v547, 7
        %v549 = vsub.s32 %v546, %v548
        %v550 = vrot.slane %v543, %v549
        %v551 = vcombine.low %v542, %v550
        %v552 = vcombine.high %v542, %v550
        %v554 = vunpack.c.l.s4 1934713408
        %v555 = vunpack.c.0.s8 %v554
        %v556 = vlaneseq
        %v557 = vshrl.u32 %v556, 7
        %v558 = vsub.s32 %v555, %v557
        %v559 = vrot.slane %v551, %v558
        %v561 = vunpack.c.l.s4 1934713408
        %v562 = vunpack.c.0.s8 %v561
        %v563 = vlaneseq
        %v564 = vshrl.u32 %v563, 7
        %v565 = vsub.s32 %v562, %v564
        %v566 = vrot.slane %v552, %v565
        %v567 = vcombine.high %v559, 0
        %v568 = vcombine.high %v566, 0
        %v569 = vcombine.low %v514, %v526
        %v571 = vunpack.c.l.s4 1983009808
        %v572 = vunpack.c.0.s8 %v571
        %v573 = vlaneseq
        %v574 = vshrl.u32 %v573, 7
        %v575 = vsub.s32 %v572, %v574
        %v576 = vrot.slane %v569, %v575
        %v577 = vcombine.low %v520, %v532
        %v579 = vunpack.c.l.s4 1983009808
        %v580 = vunpack.c.0.s8 %v579
        %v581 = vlaneseq
        %v582 = vshrl.u32 %v581, 7
        %v583 = vsub.s32 %v580, %v582
        %v584 = vrot.slane %v577, %v583
        %v585 = vcombine.low %v576, %v584
        %v586 = vcombine.high %v576, %v584
        %v588 = vunpack.c.l.s4 1934713408
        %v589 = vunpack.c.0.s8 %v588
        %v590 = vlaneseq
        %v591 = vshrl.u32 %v590, 7
        %v592 = vsub.s32 %v589, %v591
        %v593 = vrot.slane %v585, %v592
        %v595 = vunpack.c.l.s4 1934713408
        %v596 = vunpack.c.0.s8 %v595
        %v597 = vlaneseq
        %v598 = vshrl.u32 %v597, 7
        %v599 = vsub.s32 %v596, %v598
        %v600 = vrot.slane %v586, %v599
        %v601 = vcombine.high %v593, 0
        %v602 = vcombine.high %v600, 0
        %v603 = vcombine.low %v512, %v524
        %v605 = vunpack.c.l.s4 1983009808
        %v606 = vunpack.c.0.s8 %v605
        %v607 = vlaneseq
        %v608 = vshrl.u32 %v607, 7
        %v609 = vsub.s32 %v606, %v608
        %v610 = vrot.slane %v603, %v609
        %v611 = vcombine.low %v518, %v530
        %v613 = vunpack.c.l.s4 1983009808
        %v614 = vunpack.c.0.s8 %v613
        %v615 = vlaneseq
        %v616 = vshrl.u32 %v615, 7
        %v617 = vsub.s32 %v614, %v616
        %v618 = vrot.slane %v611, %v617
        %v619 = vcombine.low %v610, %v618
        %v620 = vcombine.high %v610, %v618
        %v622 = vunpack.c.l.s4 1934713408
        %v623 = vunpack.c.0.s8 %v622
        %v624 = vlaneseq
        %v625 = vshrl.u32 %v624, 7
        %v626 = vsub.s32 %v623, %v625
        %v627 = vrot.slane %v619, %v626
        %v629 = vunpack.c.l.s4 1934713408
        %v630 = vunpack.c.0.s8 %v629
        %v631 = vlaneseq
        %v632 = vshrl.u32 %v631, 7
        %v633 = vsub.s32 %v630, %v632
        %v634 = vrot.slane %v620, %v633
        %v635 = vcombine.high %v627, 0
        %v636 = vcombine.high %v634, 0
        %v637 = vcombine.low %v515, %v527
        %v639 = vunpack.c.l.s4 1983009808
        %v640 = vunpack.c.0.s8 %v639
        %v641 = vlaneseq
        %v642 = vshrl.u32 %v641, 7
        %v643 = vsub.s32 %v640, %v642
        %v644 = vrot.slane %v637, %v643
        %v645 = vcombine.low %v521, %v533
        %v647 = vunpack.c.l.s4 1983009808
        %v648 = vunpack.c.0.s8 %v647
        %v649 = vlaneseq
        %v650 = vshrl.u32 %v649, 7
        %v651 = vsub.s32 %v648, %v650
        %v652 = vrot.slane %v645, %v651
        %v653 = vcombine.low %v644, %v652
        %v654 = vcombine.high %v644, %v652
        %v656 = vunpack.c.l.s4 1934713408
        %v657 = vunpack.c.0.s8 %v656
        %v658 = vlaneseq
        %v659 = vshrl.u32 %v658, 7
        %v660 = vsub.s32 %v657, %v659
        %v661 = vrot.slane %v653, %v660
        %v663 = vunpack.c.l.s4 1934713408
        %v664 = vunpack.c.0.s8 %v663
        %v665 = vlaneseq
        %v666 = vshrl.u32 %v665, 7
        %v667 = vsub.s32 %v664, %v666
        %v668 = vrot.slane %v654, %v667
        %v669 = vcombine.high %v661, 0
        %v670 = vcombine.high %v668, 0
        %v671 = vcombine.low %v513, %v525
        %v673 = vunpack.c.l.s4 1983009808
        %v674 = vunpack.c.0.s8 %v673
        %v675 = vlaneseq
        %v676 = vshrl.u32 %v675, 7
        %v677 = vsub.s32 %v674, %v676
        %v678 = vrot.slane %v671, %v677
        %v679 = vcombine.low %v519, %v531
        %v681 = vunpack.c.l.s4 1983009808
        %v682 = vunpack.c.0.s8 %v681
        %v683 = vlaneseq
        %v684 = vshrl.u32 %v683, 7
        %v685 = vsub.s32 %v682, %v684
        %v686 = vrot.slane %v679, %v685
        %v687 = vcombine.low %v678, %v686
        %v689 = vunpack.c.l.s4 1934713408
        %v690 = vunpack.c.0.s8 %v689
        %v691 = vlaneseq
        %v692 = vshrl.u32 %v691, 7
        %v693 = vsub.s32 %v690, %v692
        %v694 = vrot.slane %v687, %v693
        %v695 = vcombine.low %v516, %v528
        %v697 = vunpack.c.l.s4 1983009808
        %v698 = vunpack.c.0.s8 %v697
        %v699 = vlaneseq
        %v700 = vshrl.u32 %v699, 7
        %v701 = vsub.s32 %v698, %v700
        %v702 = vrot.slane %v695, %v701
        %v703 = vcombine.low %v522, %v534
        %v705 = vunpack.c.l.s4 1983009808
        %v706 = vunpack.c.0.s8 %v705
        %v707 = vlaneseq
        %v708 = vshrl.u32 %v707, 7
        %v709 = vsub.s32 %v706, %v708
        %v710 = vrot.slane %v703, %v709
        %v711 = vcombine.low %v702, %v710
        %v713 = vunpack.c.l.s4 1934713408
        %v714 = vunpack.c.0.s8 %v713
        %v715 = vlaneseq
        %v716 = vshrl.u32 %v715, 7
        %v717 = vsub.s32 %v714, %v716
        %v718 = vrot.slane %v711, %v717
        %v721 = vpack.i.b16 %v593, %v559
        %v722 = vshrl.u32 %v559, 16
        %v723 = vshrl.u32 %v593, 16
        %v724 = vpack.i.b16 %v723, %v722
        %v727 = vpack.i.b16 %v601, %v567
        %v728 = vshrl.u32 %v567, 16
        %v729 = vshrl.u32 %v601, 16
        %v730 = vpack.i.b16 %v729, %v728
        %v733 = vpack.i.b16 %v600, %v566
        %v734 = vshrl.u32 %v566, 16
        %v735 = vshrl.u32 %v600, 16
        %v736 = vpack.i.b16 %v735, %v734
        %v739 = vpack.i.b16 %v602, %v568
        %v740 = vshrl.u32 %v568, 16
        %v741 = vshrl.u32 %v602, 16
        %v742 = vpack.i.b16 %v741, %v740
        %v745 = vpack.i.b16 %v661, %v627
        %v746 = vshrl.u32 %v627, 16
        %v747 = vshrl.u32 %v661, 16
        %v748 = vpack.i.b16 %v747, %v746
        %v751 = vpack.i.b16 %v669, %v635
        %v752 = vshrl.u32 %v635, 16
        %v753 = vshrl.u32 %v669, 16
        %v754 = vpack.i.b16 %v753, %v752
        %v757 = vpack.i.b16 %v668, %v634
        %v758 = vshrl.u32 %v634, 16
        %v759 = vshrl.u32 %v668, 16
        %v760 = vpack.i.b16 %v759, %v758
        %v763 = vpack.i.b16 %v670, %v636
        %v764 = vshrl.u32 %v636, 16
        %v765 = vshrl.u32 %v670, 16
        %v766 = vpack.i.b16 %v765, %v764
        %v769 = vpack.i.b16 %v718, %v694
        %v770 = vshrl.u32 %v694, 16
        %v771 = vshrl.u32 %v718, 16
        %v772 = vpack.i.b16 %v771, %v770
        %v773 = vunpack.c.l.b16 %v724
        %v774 = vpack.c.b16 %v773, %v773
        %775 = vrot.lane.b32.xlu0 %v774, 8
        %v776 = vpop.permute.xlu0 %775
        %v777 = vunpack.c.l.b16 %v727
        %v778 = vpack.c.b16 %v777, %v777
        %779 = vrot.lane.b32.xlu0 %v778, 16
        %v780 = vpop.permute.xlu0 %779
        %v781 = vunpack.c.l.b16 %v730
        %v782 = vpack.c.b16 %v781, %v781
        %783 = vrot.lane.b32.xlu0 %v782, 24
        %v784 = vpop.permute.xlu0 %783
        %v785 = vunpack.c.l.b16 %v733
        %v786 = vpack.c.b16 %v785, %v785
        %787 = vrot.lane.b32.xlu0 %v786, 32
        %v788 = vpop.permute.xlu0 %787
        %v789 = vunpack.c.l.b16 %v736
        %v790 = vpack.c.b16 %v789, %v789
        %791 = vrot.lane.b32.xlu0 %v790, 40
        %v792 = vpop.permute.xlu0 %791
        %v793 = vunpack.c.l.b16 %v739
        %v794 = vpack.c.b16 %v793, %v793
        %795 = vrot.lane.b32.xlu0 %v794, 48
        %v796 = vpop.permute.xlu0 %795
        %v797 = vunpack.c.l.b16 %v742
        %v798 = vpack.c.b16 %v797, %v797
        %799 = vrot.lane.b32.xlu0 %v798, 56
        %v800 = vpop.permute.xlu0 %799
        %v801 = vunpack.c.l.b16 %v745
        %v802 = vpack.c.b16 %v801, %v801
        %803 = vrot.lane.b32.xlu0 %v802, 64
        %v804 = vpop.permute.xlu0 %803
        %v805 = vunpack.c.l.b16 %v748
        %v806 = vpack.c.b16 %v805, %v805
        %807 = vrot.lane.b32.xlu0 %v806, 72
        %v808 = vpop.permute.xlu0 %807
        %v809 = vunpack.c.l.b16 %v751
        %v810 = vpack.c.b16 %v809, %v809
        %811 = vrot.lane.b32.xlu0 %v810, 80
        %v812 = vpop.permute.xlu0 %811
        %v813 = vunpack.c.l.b16 %v754
        %v814 = vpack.c.b16 %v813, %v813
        %815 = vrot.lane.b32.xlu0 %v814, 88
        %v816 = vpop.permute.xlu0 %815
        %v817 = vunpack.c.l.b16 %v757
        %v818 = vpack.c.b16 %v817, %v817
        %819 = vrot.lane.b32.xlu0 %v818, 96
        %v820 = vpop.permute.xlu0 %819
        %v821 = vunpack.c.l.b16 %v760
        %v822 = vpack.c.b16 %v821, %v821
        %823 = vrot.lane.b32.xlu0 %v822, 104
        %v824 = vpop.permute.xlu0 %823
        %v825 = vunpack.c.l.b16 %v763
        %v826 = vpack.c.b16 %v825, %v825
        %827 = vrot.lane.b32.xlu0 %v826, 112
        %v828 = vpop.permute.xlu0 %827
        %v829 = vunpack.c.l.b16 %v766
        %v830 = vpack.c.b16 %v829, %v829
        %831 = vrot.lane.b32.xlu0 %v830, 120
        %v832 = vpop.permute.xlu0 %831
        %v833 = vunpack.c.l.b16 %v772
        %v834 = vpack.c.b16 %v833, %v833
        %835 = vrot.lane.b32.xlu0 %v834, 8
        %v836 = vpop.permute.xlu0 %835
        %vm837 = vcmask 64512
        %v840 = vsel %vm837, %v721, %v776
        %vm841 = vcmask 130048
        %v843 = vsel %vm841, %v840, %v780
        %vm844 = vcmask 195584
        %v846 = vsel %vm844, %v843, %v784
        %vm847 = vcmask 261120
        %v849 = vsel %vm847, %v846, %v788
        %vm850 = vcmask 326656
        %v852 = vsel %vm850, %v849, %v792
        %vm853 = vcmask 392192
        %v855 = vsel %vm853, %v852, %v796
        %vm856 = vcmask 457728
        %v858 = vsel %vm856, %v855, %v800
        %vm859 = vcmask 523264
        %v861 = vsel %vm859, %v858, %v804
        %vm862 = vcmask 588800
        %v864 = vsel %vm862, %v861, %v808
        %vm865 = vcmask 654336
        %v867 = vsel %vm865, %v864, %v812
        %vm868 = vcmask 719872
        %v870 = vsel %vm868, %v867, %v816
        %vm871 = vcmask 785408
        %v873 = vsel %vm871, %v870, %v820
        %vm874 = vcmask 850944
        %v876 = vsel %vm874, %v873, %v824
        %vm877 = vcmask 916480
        %v879 = vsel %vm877, %v876, %v828
        %vm880 = vcmask 982016
        %v882 = vsel %vm880, %v879, %v832
        %v885 = vsel %vm837, %v769, %v836
        %v889 = vunpack.c.l.b16 %v508
        %v890 = vunpack.c.l.b16 %v509
        %v891 = vunpack.c.l.b16 %v510
        %v892 = vpack.c.b16 %v890, %v889
        %v893 = vpack.c.b16 %v891, %v891
        %v895 = vsel %vm837, %v892, 0
        %v898 = vsel %vm837, %v893, 0
        %vm900 = vcmask 1043456
        %v901 = vsel %vm900, %v882, 0
        %v903 = vsel %vm900, %v885, 0
        %905 = vmatprep.subr.bf16.mxu0 %v903
        %906 = vmatpush1.bf16.msra.mxu0 %v901
        %907 = vmatprep.subr.bf16.mxu0 0
        %908 = vmatpush1.bf16.msra.mxu0 0
        %909 = vmatprep.subr.bf16.mxu0 0
        %910 = vmatpush1.bf16.msra.mxu0 0
        %911 = vmatprep.subr.bf16.mxu0 0
        %912 = vmatpush1.bf16.msra.mxu0 0
        %913 = vmatprep.subr.bf16.mxu0 0
        %914 = vmatpush1.bf16.msra.mxu0 0
        %915 = vmatprep.subr.bf16.mxu0 0
        %916 = vmatpush1.bf16.msra.mxu0 0
        %917 = vmatprep.subr.bf16.mxu0 0
        %918 = vmatpush1.bf16.msra.mxu0 0
        %919 = vmatprep.subr.bf16.mxu0 0
        %920 = vmatpush1.bf16.msra.mxu0 0
        %921 = vmatprep.subr.bf16.mxu0 0
        %922 = vmatpush1.bf16.msra.mxu0 0
        %923 = vmatprep.subr.bf16.mxu0 0
        %924 = vmatpush1.bf16.msra.mxu0 0
        %925 = vmatprep.subr.bf16.mxu0 0
        %926 = vmatpush1.bf16.msra.mxu0 0
        %927 = vmatprep.subr.bf16.mxu0 0
        %928 = vmatpush1.bf16.msra.mxu0 0
        %929 = vmatprep.subr.bf16.mxu0 0
        %930 = vmatpush1.bf16.msra.mxu0 0
        %931 = vmatprep.subr.bf16.mxu0 0
        %932 = vmatpush1.bf16.msra.mxu0 0
        %933 = vmatprep.subr.bf16.mxu0 0
        %934 = vmatpush1.bf16.msra.mxu0 0
        %935 = vmatprep.subr.bf16.mxu0 0
        %936 = vmatpush1.bf16.msra.mxu0 0
        %937 = vmatprep.mubr.bf16.mxu0 0
        %938 = vmatmul.mubr.bf16.gmra.mrb[0].mxu0 %v895
        %v939 = vpop.f32.mrb[0].mxu0
        %v940 = vadd.f32 0.0, %v939
        %v941 = vpop.f32.mrb[0].mxu0
        %v942 = vadd.f32 0.0, %v941
        %v943 = vpop.f32.mrb[0].mxu0
        %v944 = vadd.f32 0.0, %v943
        %v945 = vpop.f32.mrb[0].mxu0
        %v946 = vadd.f32 0.0, %v945
        %947 = vmatprep.mubr.bf16.mxu0 0
        %948 = vmatmul.mubr.bf16.gmra.mrb[0].mxu0 %v898
        %v949 = vpop.f32.mrb[0].mxu0
        %v950 = vadd.f32 0.0, %v949
        %v951 = vpop.f32.mrb[0].mxu0
        %v952 = vadd.f32 0.0, %v951
        %v953 = vpop.f32.mrb[0].mxu0
        %v954 = vpop.f32.mrb[0].mxu0
        %955 = vdwg.mxu0
        %959 = vrot.lane.b32.xlu0 %v940, 120
        %v960 = vpop.permute.xlu0 %959
        %961 = vrot.lane.b32.xlu0 %v944, 120
        %v962 = vpop.permute.xlu0 %961
        %963 = vrot.lane.b32.xlu0 %v950, 120
        %v964 = vpop.permute.xlu0 %963
        %968 = vrot.lane.b32.xlu0 %v940, 112
        %v969 = vpop.permute.xlu0 %968
        %970 = vrot.lane.b32.xlu0 %v944, 112
        %v971 = vpop.permute.xlu0 %970
        %972 = vrot.lane.b32.xlu0 %v950, 112
        %v973 = vpop.permute.xlu0 %972
        %977 = vrot.lane.b32.xlu0 %v940, 104
        %v978 = vpop.permute.xlu0 %977
        %979 = vrot.lane.b32.xlu0 %v944, 104
        %v980 = vpop.permute.xlu0 %979
        %981 = vrot.lane.b32.xlu0 %v950, 104
        %v982 = vpop.permute.xlu0 %981
        %986 = vrot.lane.b32.xlu0 %v940, 96
        %v987 = vpop.permute.xlu0 %986
        %988 = vrot.lane.b32.xlu0 %v944, 96
        %v989 = vpop.permute.xlu0 %988
        %990 = vrot.lane.b32.xlu0 %v950, 96
        %v991 = vpop.permute.xlu0 %990
        %995 = vrot.lane.b32.xlu0 %v940, 88
        %v996 = vpop.permute.xlu0 %995
        %997 = vrot.lane.b32.xlu0 %v944, 88
        %v998 = vpop.permute.xlu0 %997
        %999 = vrot.lane.b32.xlu0 %v950, 88
        %v1000 = vpop.permute.xlu0 %999
        %1004 = vrot.lane.b32.xlu0 %v940, 80
        %v1005 = vpop.permute.xlu0 %1004
        %1006 = vrot.lane.b32.xlu0 %v944, 80
        %v1007 = vpop.permute.xlu0 %1006
        %1008 = vrot.lane.b32.xlu0 %v950, 80
        %v1009 = vpop.permute.xlu0 %1008
        %1013 = vrot.lane.b32.xlu0 %v940, 72
        %v1014 = vpop.permute.xlu0 %1013
        %1015 = vrot.lane.b32.xlu0 %v944, 72
        %v1016 = vpop.permute.xlu0 %1015
        %1017 = vrot.lane.b32.xlu0 %v950, 72
        %v1018 = vpop.permute.xlu0 %1017
        %1022 = vrot.lane.b32.xlu0 %v940, 64
        %v1023 = vpop.permute.xlu0 %1022
        %1024 = vrot.lane.b32.xlu0 %v944, 64
        %v1025 = vpop.permute.xlu0 %1024
        %1026 = vrot.lane.b32.xlu0 %v950, 64
        %v1027 = vpop.permute.xlu0 %1026
        %1031 = vrot.lane.b32.xlu0 %v940, 56
        %v1032 = vpop.permute.xlu0 %1031
        %1033 = vrot.lane.b32.xlu0 %v944, 56
        %v1034 = vpop.permute.xlu0 %1033
        %1035 = vrot.lane.b32.xlu0 %v950, 56
        %v1036 = vpop.permute.xlu0 %1035
        %1040 = vrot.lane.b32.xlu0 %v940, 48
        %v1041 = vpop.permute.xlu0 %1040
        %1042 = vrot.lane.b32.xlu0 %v944, 48
        %v1043 = vpop.permute.xlu0 %1042
        %1044 = vrot.lane.b32.xlu0 %v950, 48
        %v1045 = vpop.permute.xlu0 %1044
        %1049 = vrot.lane.b32.xlu0 %v940, 40
        %v1050 = vpop.permute.xlu0 %1049
        %1051 = vrot.lane.b32.xlu0 %v944, 40
        %v1052 = vpop.permute.xlu0 %1051
        %1053 = vrot.lane.b32.xlu0 %v950, 40
        %v1054 = vpop.permute.xlu0 %1053
        %1058 = vrot.lane.b32.xlu0 %v940, 32
        %v1059 = vpop.permute.xlu0 %1058
        %1060 = vrot.lane.b32.xlu0 %v944, 32
        %v1061 = vpop.permute.xlu0 %1060
        %1062 = vrot.lane.b32.xlu0 %v950, 32
        %v1063 = vpop.permute.xlu0 %1062
        %1067 = vrot.lane.b32.xlu0 %v940, 24
        %v1068 = vpop.permute.xlu0 %1067
        %1069 = vrot.lane.b32.xlu0 %v944, 24
        %v1070 = vpop.permute.xlu0 %1069
        %1071 = vrot.lane.b32.xlu0 %v950, 24
        %v1072 = vpop.permute.xlu0 %1071
        %1076 = vrot.lane.b32.xlu0 %v940, 16
        %v1077 = vpop.permute.xlu0 %1076
        %1078 = vrot.lane.b32.xlu0 %v944, 16
        %v1079 = vpop.permute.xlu0 %1078
        %1080 = vrot.lane.b32.xlu0 %v950, 16
        %v1081 = vpop.permute.xlu0 %1080
        %1085 = vrot.lane.b32.xlu0 %v940, 8
        %v1086 = vpop.permute.xlu0 %1085
        %1087 = vrot.lane.b32.xlu0 %v944, 8
        %v1088 = vpop.permute.xlu0 %1087
        %1089 = vrot.lane.b32.xlu0 %v950, 8
        %v1090 = vpop.permute.xlu0 %1089
        %1097 = vrot.lane.b32.xlu0 %v942, 120
        %v1098 = vpop.permute.xlu0 %1097
        %1099 = vrot.lane.b32.xlu0 %v946, 120
        %v1100 = vpop.permute.xlu0 %1099
        %1101 = vrot.lane.b32.xlu0 %v952, 120
        %v1102 = vpop.permute.xlu0 %1101
        %v1105 = vcombine.low %v940, %v969
        %v1106 = vcombine.high %v940, %v969
        %v1108 = vunpack.c.l.s4 1983009808
        %v1109 = vunpack.c.0.s8 %v1108
        %v1110 = vlaneseq
        %v1111 = vshrl.u32 %v1110, 7
        %v1112 = vsub.s32 %v1109, %v1111
        %v1113 = vrot.slane %v1105, %v1112
        %v1115 = vunpack.c.l.s4 1983009808
        %v1116 = vunpack.c.0.s8 %v1115
        %v1117 = vlaneseq
        %v1118 = vshrl.u32 %v1117, 7
        %v1119 = vsub.s32 %v1116, %v1118
        %v1120 = vrot.slane %v1106, %v1119
        %v1121 = vcombine.low %v960, %v978
        %v1122 = vcombine.high %v960, %v978
        %v1124 = vunpack.c.l.s4 1983009808
        %v1125 = vunpack.c.0.s8 %v1124
        %v1126 = vlaneseq
        %v1127 = vshrl.u32 %v1126, 7
        %v1128 = vsub.s32 %v1125, %v1127
        %v1129 = vrot.slane %v1121, %v1128
        %v1131 = vunpack.c.l.s4 1983009808
        %v1132 = vunpack.c.0.s8 %v1131
        %v1133 = vlaneseq
        %v1134 = vshrl.u32 %v1133, 7
        %v1135 = vsub.s32 %v1132, %v1134
        %v1136 = vrot.slane %v1122, %v1135
        %v1137 = vcombine.low %v987, %v1005
        %v1138 = vcombine.high %v987, %v1005
        %v1140 = vunpack.c.l.s4 1983009808
        %v1141 = vunpack.c.0.s8 %v1140
        %v1142 = vlaneseq
        %v1143 = vshrl.u32 %v1142, 7
        %v1144 = vsub.s32 %v1141, %v1143
        %v1145 = vrot.slane %v1137, %v1144
        %v1147 = vunpack.c.l.s4 1983009808
        %v1148 = vunpack.c.0.s8 %v1147
        %v1149 = vlaneseq
        %v1150 = vshrl.u32 %v1149, 7
        %v1151 = vsub.s32 %v1148, %v1150
        %v1152 = vrot.slane %v1138, %v1151
        %v1153 = vcombine.low %v996, %v1014
        %v1154 = vcombine.high %v996, %v1014
        %v1156 = vunpack.c.l.s4 1983009808
        %v1157 = vunpack.c.0.s8 %v1156
        %v1158 = vlaneseq
        %v1159 = vshrl.u32 %v1158, 7
        %v1160 = vsub.s32 %v1157, %v1159
        %v1161 = vrot.slane %v1153, %v1160
        %v1163 = vunpack.c.l.s4 1983009808
        %v1164 = vunpack.c.0.s8 %v1163
        %v1165 = vlaneseq
        %v1166 = vshrl.u32 %v1165, 7
        %v1167 = vsub.s32 %v1164, %v1166
        %v1168 = vrot.slane %v1154, %v1167
        %v1169 = vcombine.low %v1113, %v1129
        %v1170 = vcombine.high %v1113, %v1129
        %v1172 = vunpack.c.l.s4 1934713408
        %v1173 = vunpack.c.0.s8 %v1172
        %v1174 = vlaneseq
        %v1175 = vshrl.u32 %v1174, 7
        %v1176 = vsub.s32 %v1173, %v1175
        %v1177 = vrot.slane %v1169, %v1176
        %v1179 = vunpack.c.l.s4 1934713408
        %v1180 = vunpack.c.0.s8 %v1179
        %v1181 = vlaneseq
        %v1182 = vshrl.u32 %v1181, 7
        %v1183 = vsub.s32 %v1180, %v1182
        %v1184 = vrot.slane %v1170, %v1183
        %v1185 = vcombine.low %v1120, %v1136
        %v1186 = vcombine.high %v1120, %v1136
        %v1188 = vunpack.c.l.s4 1934713408
        %v1189 = vunpack.c.0.s8 %v1188
        %v1190 = vlaneseq
        %v1191 = vshrl.u32 %v1190, 7
        %v1192 = vsub.s32 %v1189, %v1191
        %v1193 = vrot.slane %v1185, %v1192
        %v1195 = vunpack.c.l.s4 1934713408
        %v1196 = vunpack.c.0.s8 %v1195
        %v1197 = vlaneseq
        %v1198 = vshrl.u32 %v1197, 7
        %v1199 = vsub.s32 %v1196, %v1198
        %v1200 = vrot.slane %v1186, %v1199
        %v1201 = vcombine.low %v1145, %v1161
        %v1202 = vcombine.high %v1145, %v1161
        %v1204 = vunpack.c.l.s4 1934713408
        %v1205 = vunpack.c.0.s8 %v1204
        %v1206 = vlaneseq
        %v1207 = vshrl.u32 %v1206, 7
        %v1208 = vsub.s32 %v1205, %v1207
        %v1209 = vrot.slane %v1201, %v1208
        %v1211 = vunpack.c.l.s4 1934713408
        %v1212 = vunpack.c.0.s8 %v1211
        %v1213 = vlaneseq
        %v1214 = vshrl.u32 %v1213, 7
        %v1215 = vsub.s32 %v1212, %v1214
        %v1216 = vrot.slane %v1202, %v1215
        %v1217 = vcombine.low %v1152, %v1168
        %v1218 = vcombine.high %v1152, %v1168
        %v1220 = vunpack.c.l.s4 1934713408
        %v1221 = vunpack.c.0.s8 %v1220
        %v1222 = vlaneseq
        %v1223 = vshrl.u32 %v1222, 7
        %v1224 = vsub.s32 %v1221, %v1223
        %v1225 = vrot.slane %v1217, %v1224
        %v1227 = vunpack.c.l.s4 1934713408
        %v1228 = vunpack.c.0.s8 %v1227
        %v1229 = vlaneseq
        %v1230 = vshrl.u32 %v1229, 7
        %v1231 = vsub.s32 %v1228, %v1230
        %v1232 = vrot.slane %v1218, %v1231
        %v1233 = vcombine.low %v1177, %v1209
        %v1234 = vcombine.high %v1177, %v1209
        %v1235 = vcombine.low %v1184, %v1216
        %v1236 = vcombine.high %v1184, %v1216
        %v1237 = vcombine.low %v1193, %v1225
        %v1238 = vcombine.high %v1193, %v1225
        %v1239 = vcombine.low %v1200, %v1232
        %v1240 = vcombine.high %v1200, %v1232
        %v1241 = vcombine.low %v1023, %v1041
        %v1242 = vcombine.high %v1023, %v1041
        %v1244 = vunpack.c.l.s4 1983009808
        %v1245 = vunpack.c.0.s8 %v1244
        %v1246 = vlaneseq
        %v1247 = vshrl.u32 %v1246, 7
        %v1248 = vsub.s32 %v1245, %v1247
        %v1249 = vrot.slane %v1241, %v1248
        %v1251 = vunpack.c.l.s4 1983009808
        %v1252 = vunpack.c.0.s8 %v1251
        %v1253 = vlaneseq
        %v1254 = vshrl.u32 %v1253, 7
        %v1255 = vsub.s32 %v1252, %v1254
        %v1256 = vrot.slane %v1242, %v1255
        %v1257 = vcombine.low %v1032, %v1050
        %v1258 = vcombine.high %v1032, %v1050
        %v1260 = vunpack.c.l.s4 1983009808
        %v1261 = vunpack.c.0.s8 %v1260
        %v1262 = vlaneseq
        %v1263 = vshrl.u32 %v1262, 7
        %v1264 = vsub.s32 %v1261, %v1263
        %v1265 = vrot.slane %v1257, %v1264
        %v1267 = vunpack.c.l.s4 1983009808
        %v1268 = vunpack.c.0.s8 %v1267
        %v1269 = vlaneseq
        %v1270 = vshrl.u32 %v1269, 7
        %v1271 = vsub.s32 %v1268, %v1270
        %v1272 = vrot.slane %v1258, %v1271
        %v1273 = vcombine.low %v1059, %v1077
        %v1274 = vcombine.high %v1059, %v1077
        %v1276 = vunpack.c.l.s4 1983009808
        %v1277 = vunpack.c.0.s8 %v1276
        %v1278 = vlaneseq
        %v1279 = vshrl.u32 %v1278, 7
        %v1280 = vsub.s32 %v1277, %v1279
        %v1281 = vrot.slane %v1273, %v1280
        %v1283 = vunpack.c.l.s4 1983009808
        %v1284 = vunpack.c.0.s8 %v1283
        %v1285 = vlaneseq
        %v1286 = vshrl.u32 %v1285, 7
        %v1287 = vsub.s32 %v1284, %v1286
        %v1288 = vrot.slane %v1274, %v1287
        %v1289 = vcombine.low %v1068, %v1086
        %v1290 = vcombine.high %v1068, %v1086
        %v1292 = vunpack.c.l.s4 1983009808
        %v1293 = vunpack.c.0.s8 %v1292
        %v1294 = vlaneseq
        %v1295 = vshrl.u32 %v1294, 7
        %v1296 = vsub.s32 %v1293, %v1295
        %v1297 = vrot.slane %v1289, %v1296
        %v1299 = vunpack.c.l.s4 1983009808
        %v1300 = vunpack.c.0.s8 %v1299
        %v1301 = vlaneseq
        %v1302 = vshrl.u32 %v1301, 7
        %v1303 = vsub.s32 %v1300, %v1302
        %v1304 = vrot.slane %v1290, %v1303
        %v1305 = vcombine.low %v1249, %v1265
        %v1306 = vcombine.high %v1249, %v1265
        %v1308 = vunpack.c.l.s4 1934713408
        %v1309 = vunpack.c.0.s8 %v1308
        %v1310 = vlaneseq
        %v1311 = vshrl.u32 %v1310, 7
        %v1312 = vsub.s32 %v1309, %v1311
        %v1313 = vrot.slane %v1305, %v1312
        %v1315 = vunpack.c.l.s4 1934713408
        %v1316 = vunpack.c.0.s8 %v1315
        %v1317 = vlaneseq
        %v1318 = vshrl.u32 %v1317, 7
        %v1319 = vsub.s32 %v1316, %v1318
        %v1320 = vrot.slane %v1306, %v1319
        %v1321 = vcombine.low %v1256, %v1272
        %v1322 = vcombine.high %v1256, %v1272
        %v1324 = vunpack.c.l.s4 1934713408
        %v1325 = vunpack.c.0.s8 %v1324
        %v1326 = vlaneseq
        %v1327 = vshrl.u32 %v1326, 7
        %v1328 = vsub.s32 %v1325, %v1327
        %v1329 = vrot.slane %v1321, %v1328
        %v1331 = vunpack.c.l.s4 1934713408
        %v1332 = vunpack.c.0.s8 %v1331
        %v1333 = vlaneseq
        %v1334 = vshrl.u32 %v1333, 7
        %v1335 = vsub.s32 %v1332, %v1334
        %v1336 = vrot.slane %v1322, %v1335
        %v1337 = vcombine.low %v1281, %v1297
        %v1338 = vcombine.high %v1281, %v1297
        %v1340 = vunpack.c.l.s4 1934713408
        %v1341 = vunpack.c.0.s8 %v1340
        %v1342 = vlaneseq
        %v1343 = vshrl.u32 %v1342, 7
        %v1344 = vsub.s32 %v1341, %v1343
        %v1345 = vrot.slane %v1337, %v1344
        %v1347 = vunpack.c.l.s4 1934713408
        %v1348 = vunpack.c.0.s8 %v1347
        %v1349 = vlaneseq
        %v1350 = vshrl.u32 %v1349, 7
        %v1351 = vsub.s32 %v1348, %v1350
        %v1352 = vrot.slane %v1338, %v1351
        %v1353 = vcombine.low %v1288, %v1304
        %v1354 = vcombine.high %v1288, %v1304
        %v1356 = vunpack.c.l.s4 1934713408
        %v1357 = vunpack.c.0.s8 %v1356
        %v1358 = vlaneseq
        %v1359 = vshrl.u32 %v1358, 7
        %v1360 = vsub.s32 %v1357, %v1359
        %v1361 = vrot.slane %v1353, %v1360
        %v1363 = vunpack.c.l.s4 1934713408
        %v1364 = vunpack.c.0.s8 %v1363
        %v1365 = vlaneseq
        %v1366 = vshrl.u32 %v1365, 7
        %v1367 = vsub.s32 %v1364, %v1366
        %v1368 = vrot.slane %v1354, %v1367
        %v1369 = vcombine.low %v1313, %v1345
        %v1370 = vcombine.high %v1313, %v1345
        %v1371 = vcombine.low %v1320, %v1352
        %v1372 = vcombine.high %v1320, %v1352
        %v1373 = vcombine.low %v1329, %v1361
        %v1374 = vcombine.high %v1329, %v1361
        %v1375 = vcombine.low %v1336, %v1368
        %v1376 = vcombine.high %v1336, %v1368
        %v1377 = vcombine.high %v942, 0.0
        %v1379 = vunpack.c.l.s4 1983009808
        %v1380 = vunpack.c.0.s8 %v1379
        %v1381 = vlaneseq
        %v1382 = vshrl.u32 %v1381, 7
        %v1383 = vsub.s32 %v1380, %v1382
        %v1384 = vrot.slane %v942, %v1383
        %v1386 = vunpack.c.l.s4 1983009808
        %v1387 = vunpack.c.0.s8 %v1386
        %v1388 = vlaneseq
        %v1389 = vshrl.u32 %v1388, 7
        %v1390 = vsub.s32 %v1387, %v1389
        %v1391 = vrot.slane %v1377, %v1390
        %v1392 = vcombine.high %v1098, 0.0
        %v1394 = vunpack.c.l.s4 1983009808
        %v1395 = vunpack.c.0.s8 %v1394
        %v1396 = vlaneseq
        %v1397 = vshrl.u32 %v1396, 7
        %v1398 = vsub.s32 %v1395, %v1397
        %v1399 = vrot.slane %v1098, %v1398
        %v1401 = vunpack.c.l.s4 1983009808
        %v1402 = vunpack.c.0.s8 %v1401
        %v1403 = vlaneseq
        %v1404 = vshrl.u32 %v1403, 7
        %v1405 = vsub.s32 %v1402, %v1404
        %v1406 = vrot.slane %v1392, %v1405
        %v1407 = vcombine.low %v1384, %v1399
        %v1408 = vcombine.high %v1384, %v1399
        %v1410 = vunpack.c.l.s4 1934713408
        %v1411 = vunpack.c.0.s8 %v1410
        %v1412 = vlaneseq
        %v1413 = vshrl.u32 %v1412, 7
        %v1414 = vsub.s32 %v1411, %v1413
        %v1415 = vrot.slane %v1407, %v1414
        %v1417 = vunpack.c.l.s4 1934713408
        %v1418 = vunpack.c.0.s8 %v1417
        %v1419 = vlaneseq
        %v1420 = vshrl.u32 %v1419, 7
        %v1421 = vsub.s32 %v1418, %v1420
        %v1422 = vrot.slane %v1408, %v1421
        %v1423 = vcombine.low %v1391, %v1406
        %v1424 = vcombine.high %v1391, %v1406
        %v1426 = vunpack.c.l.s4 1934713408
        %v1427 = vunpack.c.0.s8 %v1426
        %v1428 = vlaneseq
        %v1429 = vshrl.u32 %v1428, 7
        %v1430 = vsub.s32 %v1427, %v1429
        %v1431 = vrot.slane %v1423, %v1430
        %v1433 = vunpack.c.l.s4 1934713408
        %v1434 = vunpack.c.0.s8 %v1433
        %v1435 = vlaneseq
        %v1436 = vshrl.u32 %v1435, 7
        %v1437 = vsub.s32 %v1434, %v1436
        %v1438 = vrot.slane %v1424, %v1437
        %v1439 = vcombine.high %v1415, 0.0
        %v1440 = vcombine.high %v1422, 0.0
        %v1441 = vcombine.high %v1431, 0.0
        %v1442 = vcombine.high %v1438, 0.0
        %v1443 = vcombine.low %v944, %v971
        %v1444 = vcombine.high %v944, %v971
        %v1446 = vunpack.c.l.s4 1983009808
        %v1447 = vunpack.c.0.s8 %v1446
        %v1448 = vlaneseq
        %v1449 = vshrl.u32 %v1448, 7
        %v1450 = vsub.s32 %v1447, %v1449
        %v1451 = vrot.slane %v1443, %v1450
        %v1453 = vunpack.c.l.s4 1983009808
        %v1454 = vunpack.c.0.s8 %v1453
        %v1455 = vlaneseq
        %v1456 = vshrl.u32 %v1455, 7
        %v1457 = vsub.s32 %v1454, %v1456
        %v1458 = vrot.slane %v1444, %v1457
        %v1459 = vcombine.low %v962, %v980
        %v1460 = vcombine.high %v962, %v980
        %v1462 = vunpack.c.l.s4 1983009808
        %v1463 = vunpack.c.0.s8 %v1462
        %v1464 = vlaneseq
        %v1465 = vshrl.u32 %v1464, 7
        %v1466 = vsub.s32 %v1463, %v1465
        %v1467 = vrot.slane %v1459, %v1466
        %v1469 = vunpack.c.l.s4 1983009808
        %v1470 = vunpack.c.0.s8 %v1469
        %v1471 = vlaneseq
        %v1472 = vshrl.u32 %v1471, 7
        %v1473 = vsub.s32 %v1470, %v1472
        %v1474 = vrot.slane %v1460, %v1473
        %v1475 = vcombine.low %v989, %v1007
        %v1476 = vcombine.high %v989, %v1007
        %v1478 = vunpack.c.l.s4 1983009808
        %v1479 = vunpack.c.0.s8 %v1478
        %v1480 = vlaneseq
        %v1481 = vshrl.u32 %v1480, 7
        %v1482 = vsub.s32 %v1479, %v1481
        %v1483 = vrot.slane %v1475, %v1482
        %v1485 = vunpack.c.l.s4 1983009808
        %v1486 = vunpack.c.0.s8 %v1485
        %v1487 = vlaneseq
        %v1488 = vshrl.u32 %v1487, 7
        %v1489 = vsub.s32 %v1486, %v1488
        %v1490 = vrot.slane %v1476, %v1489
        %v1491 = vcombine.low %v998, %v1016
        %v1492 = vcombine.high %v998, %v1016
        %v1494 = vunpack.c.l.s4 1983009808
        %v1495 = vunpack.c.0.s8 %v1494
        %v1496 = vlaneseq
        %v1497 = vshrl.u32 %v1496, 7
        %v1498 = vsub.s32 %v1495, %v1497
        %v1499 = vrot.slane %v1491, %v1498
        %v1501 = vunpack.c.l.s4 1983009808
        %v1502 = vunpack.c.0.s8 %v1501
        %v1503 = vlaneseq
        %v1504 = vshrl.u32 %v1503, 7
        %v1505 = vsub.s32 %v1502, %v1504
        %v1506 = vrot.slane %v1492, %v1505
        %v1507 = vcombine.low %v1451, %v1467
        %v1508 = vcombine.high %v1451, %v1467
        %v1510 = vunpack.c.l.s4 1934713408
        %v1511 = vunpack.c.0.s8 %v1510
        %v1512 = vlaneseq
        %v1513 = vshrl.u32 %v1512, 7
        %v1514 = vsub.s32 %v1511, %v1513
        %v1515 = vrot.slane %v1507, %v1514
        %v1517 = vunpack.c.l.s4 1934713408
        %v1518 = vunpack.c.0.s8 %v1517
        %v1519 = vlaneseq
        %v1520 = vshrl.u32 %v1519, 7
        %v1521 = vsub.s32 %v1518, %v1520
        %v1522 = vrot.slane %v1508, %v1521
        %v1523 = vcombine.low %v1458, %v1474
        %v1524 = vcombine.high %v1458, %v1474
        %v1526 = vunpack.c.l.s4 1934713408
        %v1527 = vunpack.c.0.s8 %v1526
        %v1528 = vlaneseq
        %v1529 = vshrl.u32 %v1528, 7
        %v1530 = vsub.s32 %v1527, %v1529
        %v1531 = vrot.slane %v1523, %v1530
        %v1533 = vunpack.c.l.s4 1934713408
        %v1534 = vunpack.c.0.s8 %v1533
        %v1535 = vlaneseq
        %v1536 = vshrl.u32 %v1535, 7
        %v1537 = vsub.s32 %v1534, %v1536
        %v1538 = vrot.slane %v1524, %v1537
        %v1539 = vcombine.low %v1483, %v1499
        %v1540 = vcombine.high %v1483, %v1499
        %v1542 = vunpack.c.l.s4 1934713408
        %v1543 = vunpack.c.0.s8 %v1542
        %v1544 = vlaneseq
        %v1545 = vshrl.u32 %v1544, 7
        %v1546 = vsub.s32 %v1543, %v1545
        %v1547 = vrot.slane %v1539, %v1546
        %v1549 = vunpack.c.l.s4 1934713408
        %v1550 = vunpack.c.0.s8 %v1549
        %v1551 = vlaneseq
        %v1552 = vshrl.u32 %v1551, 7
        %v1553 = vsub.s32 %v1550, %v1552
        %v1554 = vrot.slane %v1540, %v1553
        %v1555 = vcombine.low %v1490, %v1506
        %v1556 = vcombine.high %v1490, %v1506
        %v1558 = vunpack.c.l.s4 1934713408
        %v1559 = vunpack.c.0.s8 %v1558
        %v1560 = vlaneseq
        %v1561 = vshrl.u32 %v1560, 7
        %v1562 = vsub.s32 %v1559, %v1561
        %v1563 = vrot.slane %v1555, %v1562
        %v1565 = vunpack.c.l.s4 1934713408
        %v1566 = vunpack.c.0.s8 %v1565
        %v1567 = vlaneseq
        %v1568 = vshrl.u32 %v1567, 7
        %v1569 = vsub.s32 %v1566, %v1568
        %v1570 = vrot.slane %v1556, %v1569
        %v1571 = vcombine.low %v1515, %v1547
        %v1572 = vcombine.high %v1515, %v1547
        %v1573 = vcombine.low %v1522, %v1554
        %v1574 = vcombine.high %v1522, %v1554
        %v1575 = vcombine.low %v1531, %v1563
        %v1576 = vcombine.high %v1531, %v1563
        %v1577 = vcombine.low %v1538, %v1570
        %v1578 = vcombine.high %v1538, %v1570
        %v1579 = vcombine.low %v1025, %v1043
        %v1580 = vcombine.high %v1025, %v1043
        %v1582 = vunpack.c.l.s4 1983009808
        %v1583 = vunpack.c.0.s8 %v1582
        %v1584 = vlaneseq
        %v1585 = vshrl.u32 %v1584, 7
        %v1586 = vsub.s32 %v1583, %v1585
        %v1587 = vrot.slane %v1579, %v1586
        %v1589 = vunpack.c.l.s4 1983009808
        %v1590 = vunpack.c.0.s8 %v1589
        %v1591 = vlaneseq
        %v1592 = vshrl.u32 %v1591, 7
        %v1593 = vsub.s32 %v1590, %v1592
        %v1594 = vrot.slane %v1580, %v1593
        %v1595 = vcombine.low %v1034, %v1052
        %v1596 = vcombine.high %v1034, %v1052
        %v1598 = vunpack.c.l.s4 1983009808
        %v1599 = vunpack.c.0.s8 %v1598
        %v1600 = vlaneseq
        %v1601 = vshrl.u32 %v1600, 7
        %v1602 = vsub.s32 %v1599, %v1601
        %v1603 = vrot.slane %v1595, %v1602
        %v1605 = vunpack.c.l.s4 1983009808
        %v1606 = vunpack.c.0.s8 %v1605
        %v1607 = vlaneseq
        %v1608 = vshrl.u32 %v1607, 7
        %v1609 = vsub.s32 %v1606, %v1608
        %v1610 = vrot.slane %v1596, %v1609
        %v1611 = vcombine.low %v1061, %v1079
        %v1612 = vcombine.high %v1061, %v1079
        %v1614 = vunpack.c.l.s4 1983009808
        %v1615 = vunpack.c.0.s8 %v1614
        %v1616 = vlaneseq
        %v1617 = vshrl.u32 %v1616, 7
        %v1618 = vsub.s32 %v1615, %v1617
        %v1619 = vrot.slane %v1611, %v1618
        %v1621 = vunpack.c.l.s4 1983009808
        %v1622 = vunpack.c.0.s8 %v1621
        %v1623 = vlaneseq
        %v1624 = vshrl.u32 %v1623, 7
        %v1625 = vsub.s32 %v1622, %v1624
        %v1626 = vrot.slane %v1612, %v1625
        %v1627 = vcombine.low %v1070, %v1088
        %v1628 = vcombine.high %v1070, %v1088
        %v1630 = vunpack.c.l.s4 1983009808
        %v1631 = vunpack.c.0.s8 %v1630
        %v1632 = vlaneseq
        %v1633 = vshrl.u32 %v1632, 7
        %v1634 = vsub.s32 %v1631, %v1633
        %v1635 = vrot.slane %v1627, %v1634
        %v1637 = vunpack.c.l.s4 1983009808
        %v1638 = vunpack.c.0.s8 %v1637
        %v1639 = vlaneseq
        %v1640 = vshrl.u32 %v1639, 7
        %v1641 = vsub.s32 %v1638, %v1640
        %v1642 = vrot.slane %v1628, %v1641
        %v1643 = vcombine.low %v1587, %v1603
        %v1644 = vcombine.high %v1587, %v1603
        %v1646 = vunpack.c.l.s4 1934713408
        %v1647 = vunpack.c.0.s8 %v1646
        %v1648 = vlaneseq
        %v1649 = vshrl.u32 %v1648, 7
        %v1650 = vsub.s32 %v1647, %v1649
        %v1651 = vrot.slane %v1643, %v1650
        %v1653 = vunpack.c.l.s4 1934713408
        %v1654 = vunpack.c.0.s8 %v1653
        %v1655 = vlaneseq
        %v1656 = vshrl.u32 %v1655, 7
        %v1657 = vsub.s32 %v1654, %v1656
        %v1658 = vrot.slane %v1644, %v1657
        %v1659 = vcombine.low %v1594, %v1610
        %v1660 = vcombine.high %v1594, %v1610
        %v1662 = vunpack.c.l.s4 1934713408
        %v1663 = vunpack.c.0.s8 %v1662
        %v1664 = vlaneseq
        %v1665 = vshrl.u32 %v1664, 7
        %v1666 = vsub.s32 %v1663, %v1665
        %v1667 = vrot.slane %v1659, %v1666
        %v1669 = vunpack.c.l.s4 1934713408
        %v1670 = vunpack.c.0.s8 %v1669
        %v1671 = vlaneseq
        %v1672 = vshrl.u32 %v1671, 7
        %v1673 = vsub.s32 %v1670, %v1672
        %v1674 = vrot.slane %v1660, %v1673
        %v1675 = vcombine.low %v1619, %v1635
        %v1676 = vcombine.high %v1619, %v1635
        %v1678 = vunpack.c.l.s4 1934713408
        %v1679 = vunpack.c.0.s8 %v1678
        %v1680 = vlaneseq
        %v1681 = vshrl.u32 %v1680, 7
        %v1682 = vsub.s32 %v1679, %v1681
        %v1683 = vrot.slane %v1675, %v1682
        %v1685 = vunpack.c.l.s4 1934713408
        %v1686 = vunpack.c.0.s8 %v1685
        %v1687 = vlaneseq
        %v1688 = vshrl.u32 %v1687, 7
        %v1689 = vsub.s32 %v1686, %v1688
        %v1690 = vrot.slane %v1676, %v1689
        %v1691 = vcombine.low %v1626, %v1642
        %v1692 = vcombine.high %v1626, %v1642
        %v1694 = vunpack.c.l.s4 1934713408
        %v1695 = vunpack.c.0.s8 %v1694
        %v1696 = vlaneseq
        %v1697 = vshrl.u32 %v1696, 7
        %v1698 = vsub.s32 %v1695, %v1697
        %v1699 = vrot.slane %v1691, %v1698
        %v1701 = vunpack.c.l.s4 1934713408
        %v1702 = vunpack.c.0.s8 %v1701
        %v1703 = vlaneseq
        %v1704 = vshrl.u32 %v1703, 7
        %v1705 = vsub.s32 %v1702, %v1704
        %v1706 = vrot.slane %v1692, %v1705
        %v1707 = vcombine.low %v1651, %v1683
        %v1708 = vcombine.high %v1651, %v1683
        %v1709 = vcombine.low %v1658, %v1690
        %v1710 = vcombine.high %v1658, %v1690
        %v1711 = vcombine.low %v1667, %v1699
        %v1712 = vcombine.high %v1667, %v1699
        %v1713 = vcombine.low %v1674, %v1706
        %v1714 = vcombine.high %v1674, %v1706
        %v1715 = vcombine.high %v946, 0.0
        %v1717 = vunpack.c.l.s4 1983009808
        %v1718 = vunpack.c.0.s8 %v1717
        %v1719 = vlaneseq
        %v1720 = vshrl.u32 %v1719, 7
        %v1721 = vsub.s32 %v1718, %v1720
        %v1722 = vrot.slane %v946, %v1721
        %v1724 = vunpack.c.l.s4 1983009808
        %v1725 = vunpack.c.0.s8 %v1724
        %v1726 = vlaneseq
        %v1727 = vshrl.u32 %v1726, 7
        %v1728 = vsub.s32 %v1725, %v1727
        %v1729 = vrot.slane %v1715, %v1728
        %v1730 = vcombine.high %v1100, 0.0
        %v1732 = vunpack.c.l.s4 1983009808
        %v1733 = vunpack.c.0.s8 %v1732
        %v1734 = vlaneseq
        %v1735 = vshrl.u32 %v1734, 7
        %v1736 = vsub.s32 %v1733, %v1735
        %v1737 = vrot.slane %v1100, %v1736
        %v1739 = vunpack.c.l.s4 1983009808
        %v1740 = vunpack.c.0.s8 %v1739
        %v1741 = vlaneseq
        %v1742 = vshrl.u32 %v1741, 7
        %v1743 = vsub.s32 %v1740, %v1742
        %v1744 = vrot.slane %v1730, %v1743
        %v1745 = vcombine.low %v1722, %v1737
        %v1746 = vcombine.high %v1722, %v1737
        %v1748 = vunpack.c.l.s4 1934713408
        %v1749 = vunpack.c.0.s8 %v1748
        %v1750 = vlaneseq
        %v1751 = vshrl.u32 %v1750, 7
        %v1752 = vsub.s32 %v1749, %v1751
        %v1753 = vrot.slane %v1745, %v1752
        %v1755 = vunpack.c.l.s4 1934713408
        %v1756 = vunpack.c.0.s8 %v1755
        %v1757 = vlaneseq
        %v1758 = vshrl.u32 %v1757, 7
        %v1759 = vsub.s32 %v1756, %v1758
        %v1760 = vrot.slane %v1746, %v1759
        %v1761 = vcombine.low %v1729, %v1744
        %v1762 = vcombine.high %v1729, %v1744
        %v1764 = vunpack.c.l.s4 1934713408
        %v1765 = vunpack.c.0.s8 %v1764
        %v1766 = vlaneseq
        %v1767 = vshrl.u32 %v1766, 7
        %v1768 = vsub.s32 %v1765, %v1767
        %v1769 = vrot.slane %v1761, %v1768
        %v1771 = vunpack.c.l.s4 1934713408
        %v1772 = vunpack.c.0.s8 %v1771
        %v1773 = vlaneseq
        %v1774 = vshrl.u32 %v1773, 7
        %v1775 = vsub.s32 %v1772, %v1774
        %v1776 = vrot.slane %v1762, %v1775
        %v1777 = vcombine.high %v1753, 0.0
        %v1778 = vcombine.high %v1760, 0.0
        %v1779 = vcombine.high %v1769, 0.0
        %v1780 = vcombine.high %v1776, 0.0
        %v1781 = vcombine.low %v950, %v973
        %v1783 = vunpack.c.l.s4 1983009808
        %v1784 = vunpack.c.0.s8 %v1783
        %v1785 = vlaneseq
        %v1786 = vshrl.u32 %v1785, 7
        %v1787 = vsub.s32 %v1784, %v1786
        %v1788 = vrot.slane %v1781, %v1787
        %v1789 = vcombine.low %v964, %v982
        %v1791 = vunpack.c.l.s4 1983009808
        %v1792 = vunpack.c.0.s8 %v1791
        %v1793 = vlaneseq
        %v1794 = vshrl.u32 %v1793, 7
        %v1795 = vsub.s32 %v1792, %v1794
        %v1796 = vrot.slane %v1789, %v1795
        %v1797 = vcombine.low %v991, %v1009
        %v1799 = vunpack.c.l.s4 1983009808
        %v1800 = vunpack.c.0.s8 %v1799
        %v1801 = vlaneseq
        %v1802 = vshrl.u32 %v1801, 7
        %v1803 = vsub.s32 %v1800, %v1802
        %v1804 = vrot.slane %v1797, %v1803
        %v1805 = vcombine.low %v1000, %v1018
        %v1807 = vunpack.c.l.s4 1983009808
        %v1808 = vunpack.c.0.s8 %v1807
        %v1809 = vlaneseq
        %v1810 = vshrl.u32 %v1809, 7
        %v1811 = vsub.s32 %v1808, %v1810
        %v1812 = vrot.slane %v1805, %v1811
        %v1813 = vcombine.low %v1788, %v1796
        %v1815 = vunpack.c.l.s4 1934713408
        %v1816 = vunpack.c.0.s8 %v1815
        %v1817 = vlaneseq
        %v1818 = vshrl.u32 %v1817, 7
        %v1819 = vsub.s32 %v1816, %v1818
        %v1820 = vrot.slane %v1813, %v1819
        %v1821 = vcombine.low %v1804, %v1812
        %v1823 = vunpack.c.l.s4 1934713408
        %v1824 = vunpack.c.0.s8 %v1823
        %v1825 = vlaneseq
        %v1826 = vshrl.u32 %v1825, 7
        %v1827 = vsub.s32 %v1824, %v1826
        %v1828 = vrot.slane %v1821, %v1827
        %v1829 = vcombine.low %v1820, %v1828
        %v1830 = vcombine.high %v1820, %v1828
        %v1831 = vcombine.low %v1027, %v1045
        %v1833 = vunpack.c.l.s4 1983009808
        %v1834 = vunpack.c.0.s8 %v1833
        %v1835 = vlaneseq
        %v1836 = vshrl.u32 %v1835, 7
        %v1837 = vsub.s32 %v1834, %v1836
        %v1838 = vrot.slane %v1831, %v1837
        %v1839 = vcombine.low %v1036, %v1054
        %v1841 = vunpack.c.l.s4 1983009808
        %v1842 = vunpack.c.0.s8 %v1841
        %v1843 = vlaneseq
        %v1844 = vshrl.u32 %v1843, 7
        %v1845 = vsub.s32 %v1842, %v1844
        %v1846 = vrot.slane %v1839, %v1845
        %v1847 = vcombine.low %v1063, %v1081
        %v1849 = vunpack.c.l.s4 1983009808
        %v1850 = vunpack.c.0.s8 %v1849
        %v1851 = vlaneseq
        %v1852 = vshrl.u32 %v1851, 7
        %v1853 = vsub.s32 %v1850, %v1852
        %v1854 = vrot.slane %v1847, %v1853
        %v1855 = vcombine.low %v1072, %v1090
        %v1857 = vunpack.c.l.s4 1983009808
        %v1858 = vunpack.c.0.s8 %v1857
        %v1859 = vlaneseq
        %v1860 = vshrl.u32 %v1859, 7
        %v1861 = vsub.s32 %v1858, %v1860
        %v1862 = vrot.slane %v1855, %v1861
        %v1863 = vcombine.low %v1838, %v1846
        %v1865 = vunpack.c.l.s4 1934713408
        %v1866 = vunpack.c.0.s8 %v1865
        %v1867 = vlaneseq
        %v1868 = vshrl.u32 %v1867, 7
        %v1869 = vsub.s32 %v1866, %v1868
        %v1870 = vrot.slane %v1863, %v1869
        %v1871 = vcombine.low %v1854, %v1862
        %v1873 = vunpack.c.l.s4 1934713408
        %v1874 = vunpack.c.0.s8 %v1873
        %v1875 = vlaneseq
        %v1876 = vshrl.u32 %v1875, 7
        %v1877 = vsub.s32 %v1874, %v1876
        %v1878 = vrot.slane %v1871, %v1877
        %v1879 = vcombine.low %v1870, %v1878
        %v1880 = vcombine.high %v1870, %v1878
        %v1882 = vcombine.low %v952, %v1102
        %v1884 = vunpack.c.l.s4 1934713408
        %v1885 = vunpack.c.0.s8 %v1884
        %v1886 = vlaneseq
        %v1887 = vshrl.u32 %v1886, 7
        %v1888 = vsub.s32 %v1885, %v1887
        %v1889 = vrot.slane %v1882, %v1888
        %v1890 = vcombine.high %v1889, 0.0
        %v1891 = vpack.c.bf16 %v1369, %v1233
        %v1892 = vpack.c.bf16 %v1415, %v1415
        %v1893 = vpack.c.bf16 %v1370, %v1234
        %v1894 = vpack.c.bf16 %v1439, %v1439
        %v1895 = vpack.c.bf16 %v1371, %v1235
        %v1896 = vpack.c.bf16 %v1422, %v1422
        %v1897 = vpack.c.bf16 %v1372, %v1236
        %v1898 = vpack.c.bf16 %v1440, %v1440
        %v1899 = vpack.c.bf16 %v1373, %v1237
        %v1900 = vpack.c.bf16 %v1431, %v1431
        %v1901 = vpack.c.bf16 %v1374, %v1238
        %v1902 = vpack.c.bf16 %v1441, %v1441
        %v1903 = vpack.c.bf16 %v1375, %v1239
        %v1904 = vpack.c.bf16 %v1438, %v1438
        %v1905 = vpack.c.bf16 %v1376, %v1240
        %v1906 = vpack.c.bf16 %v1442, %v1442
        %v1907 = vpack.c.bf16 %v1707, %v1571
        %v1908 = vpack.c.bf16 %v1753, %v1753
        %v1909 = vpack.c.bf16 %v1708, %v1572
        %v1910 = vpack.c.bf16 %v1777, %v1777
        %v1911 = vpack.c.bf16 %v1709, %v1573
        %v1912 = vpack.c.bf16 %v1760, %v1760
        %v1913 = vpack.c.bf16 %v1710, %v1574
        %v1914 = vpack.c.bf16 %v1778, %v1778
        %v1915 = vpack.c.bf16 %v1711, %v1575
        %v1916 = vpack.c.bf16 %v1769, %v1769
        %v1917 = vpack.c.bf16 %v1712, %v1576
        %v1918 = vpack.c.bf16 %v1779, %v1779
        %v1919 = vpack.c.bf16 %v1713, %v1577
        %v1920 = vpack.c.bf16 %v1776, %v1776
        %v1921 = vpack.c.bf16 %v1714, %v1578
        %v1922 = vpack.c.bf16 %v1780, %v1780
        %v1923 = vpack.c.bf16 %v1879, %v1829
        %v1924 = vpack.c.bf16 %v1889, %v1889
        %v1925 = vpack.c.bf16 %v1880, %v1830
        %v1926 = vpack.c.bf16 %v1890, %v1890
        %s1927 = smul.u32 4, 16
        %s1928 = smul.u32 %s1927, 2
        %s1929 = smul.u32 %s1928, 1
        %s1930 = sshll.u32 %s1929, 4
        %1931 = dma.done [#allocation3], %s1930
        %s1932 = smul.u32 4, 1
        %s1933 = smul.u32 %s1932, 2
        %s1934 = smul.u32 %s1933, 1
        %s1935 = sshll.u32 %s1934, 4
        %1936 = dma.done %s417, %s1935
        %s1937 = sshll.u32 %s1934, 4
        %1938 = dma.done %s465, %s1937
        %p1939 = scmp.eq.s32.totalorder %s31, 0
        // Predicated region
        $region147: #{be_module_forward.5} parent=43 // pred_check
          %p1940 = pneg %p1939
        $region148: #{be_module_forward.5} parent=43 // pred_check_branch
          %1942 = sbr.rel (%p1940) target = $region150
        $region149: #{be_module_forward.5} parent=43 // pred_region
          %1943 = vst.msk [vmem:[#allocation2] sm:$0xff] %vm841, 0
          %1944 = vst.msk [vmem:[%s464] sm:$0xff] %vm841, 0
        $region150: #{be_module_forward.5} parent=43 // pred_fallthru
          _
        %v1945 = vld [vmem:[#allocation2] sm:$0xff]
        %v1946 = vld [vmem:[#allocation2 + $0x8] sm:$0xff]
        %v1947 = vld [vmem:[#allocation2 + $0x10] sm:$0xff]
        %v1948 = vld [vmem:[#allocation2 + $0x18] sm:$0xff]
        %v1949 = vld [vmem:[#allocation2 + $0x20] sm:$0xff]
        %v1950 = vld [vmem:[#allocation2 + $0x28] sm:$0xff]
        %v1951 = vld [vmem:[#allocation2 + $0x30] sm:$0xff]
        %v1952 = vld [vmem:[#allocation2 + $0x38] sm:$0xff]
        %v1953 = vld [vmem:[#allocation2 + $0x40] sm:$0xff]
        %v1954 = vld [vmem:[#allocation2 + $0x48] sm:$0xff]
        %v1955 = vld [vmem:[#allocation2 + $0x50] sm:$0xff]
        %v1956 = vld [vmem:[#allocation2 + $0x58] sm:$0xff]
        %v1957 = vld [vmem:[#allocation2 + $0x60] sm:$0xff]
        %v1958 = vld [vmem:[#allocation2 + $0x68] sm:$0xff]
        %v1959 = vld [vmem:[#allocation2 + $0x70] sm:$0xff]
        %v1960 = vld [vmem:[#allocation2 + $0x78] sm:$0xff]
        %v1961 = vld [vmem:[#allocation2 + $0x80] sm:$0xff]
        %v1962 = vld [vmem:[#allocation2 + $0x88] sm:$0xff]
        %v1964 = vshrl.u32 %v1945, 16
        %v1966 = vrot.slane %v1964, 7
        %v1967 = vshll.u32 %v1945, 16
        %v1969 = vor.u32 %v1966, %v1967
        %v1971 = vshrl.u32 %v1946, 16
        %v1973 = vrot.slane %v1971, 7
        %v1974 = vshll.u32 %v1946, 16
        %v1976 = vor.u32 %v1973, %v1974
        %v1978 = vshrl.u32 %v1947, 16
        %v1980 = vrot.slane %v1978, 7
        %v1981 = vshll.u32 %v1947, 16
        %v1983 = vor.u32 %v1980, %v1981
        %v1985 = vshrl.u32 %v1948, 16
        %v1987 = vrot.slane %v1985, 7
        %v1988 = vshll.u32 %v1948, 16
        %v1990 = vor.u32 %v1987, %v1988
        %v1992 = vshrl.u32 %v1949, 16
        %v1994 = vrot.slane %v1992, 7
        %v1995 = vshll.u32 %v1949, 16
        %v1997 = vor.u32 %v1994, %v1995
        %v1999 = vshrl.u32 %v1950, 16
        %v2001 = vrot.slane %v1999, 7
        %v2002 = vshll.u32 %v1950, 16
        %v2004 = vor.u32 %v2001, %v2002
        %v2006 = vshrl.u32 %v1951, 16
        %v2008 = vrot.slane %v2006, 7
        %v2009 = vshll.u32 %v1951, 16
        %v2011 = vor.u32 %v2008, %v2009
        %v2013 = vshrl.u32 %v1952, 16
        %v2015 = vrot.slane %v2013, 7
        %v2016 = vshll.u32 %v1952, 16
        %v2018 = vor.u32 %v2015, %v2016
        %v2020 = vshrl.u32 %v1953, 16
        %v2022 = vrot.slane %v2020, 7
        %v2023 = vshll.u32 %v1953, 16
        %v2025 = vor.u32 %v2022, %v2023
        %v2027 = vshrl.u32 %v1954, 16
        %v2029 = vrot.slane %v2027, 7
        %v2030 = vshll.u32 %v1954, 16
        %v2032 = vor.u32 %v2029, %v2030
        %v2034 = vshrl.u32 %v1955, 16
        %v2036 = vrot.slane %v2034, 7
        %v2037 = vshll.u32 %v1955, 16
        %v2039 = vor.u32 %v2036, %v2037
        %v2041 = vshrl.u32 %v1956, 16
        %v2043 = vrot.slane %v2041, 7
        %v2044 = vshll.u32 %v1956, 16
        %v2046 = vor.u32 %v2043, %v2044
        %v2048 = vshrl.u32 %v1957, 16
        %v2050 = vrot.slane %v2048, 7
        %v2051 = vshll.u32 %v1957, 16
        %v2053 = vor.u32 %v2050, %v2051
        %v2055 = vshrl.u32 %v1958, 16
        %v2057 = vrot.slane %v2055, 7
        %v2058 = vshll.u32 %v1958, 16
        %v2060 = vor.u32 %v2057, %v2058
        %v2062 = vshrl.u32 %v1959, 16
        %v2064 = vrot.slane %v2062, 7
        %v2065 = vshll.u32 %v1959, 16
        %v2067 = vor.u32 %v2064, %v2065
        %v2069 = vshrl.u32 %v1960, 16
        %v2071 = vrot.slane %v2069, 7
        %v2072 = vshll.u32 %v1960, 16
        %v2074 = vor.u32 %v2071, %v2072
        %v2076 = vshrl.u32 %v1961, 16
        %v2078 = vrot.slane %v2076, 7
        %v2079 = vshll.u32 %v1961, 16
        %v2081 = vor.u32 %v2078, %v2079
        %v2083 = vshrl.u32 %v1962, 16
        %v2085 = vrot.slane %v2083, 7
        %v2086 = vshll.u32 %v1962, 16
        %v2088 = vor.u32 %v2085, %v2086
        %vm2125 = vcmask 1040384
        %vm2126 = vsmask.f32 256
        %vm2127 = vmand %vm2125, %vm2126
        %v2128 = vsel %vm2127, 0, %v1969
        %v2129 = vsel %vm2127, 0, %v1976
        %v2130 = vsel %vm2127, 0, %v1983
        %v2131 = vsel %vm2127, 0, %v1990
        %v2132 = vsel %vm2127, 0, %v1997
        %v2133 = vsel %vm2127, 0, %v2004
        %v2134 = vsel %vm2127, 0, %v2011
        %v2135 = vsel %vm2127, 0, %v2018
        %v2136 = vsel %vm2127, 0, %v2025
        %v2137 = vsel %vm2127, 0, %v2032
        %v2138 = vsel %vm2127, 0, %v2039
        %v2139 = vsel %vm2127, 0, %v2046
        %v2140 = vsel %vm2127, 0, %v2053
        %v2141 = vsel %vm2127, 0, %v2060
        %v2142 = vsel %vm2127, 0, %v2067
        %v2143 = vsel %vm2127, 0, %v2074
        %v2144 = vsel %vm2127, 0, %v2081
        %v2145 = vsel %vm2127, 0, %v2088
        %v2146 = vsel %vm2127, %v1966, 0
        %v2147 = vsel %vm2127, %v1973, 0
        %v2148 = vsel %vm2127, %v1980, 0
        %v2149 = vsel %vm2127, %v1987, 0
        %v2150 = vsel %vm2127, %v1994, 0
        %v2151 = vsel %vm2127, %v2001, 0
        %v2152 = vsel %vm2127, %v2008, 0
        %v2153 = vsel %vm2127, %v2015, 0
        %v2154 = vsel %vm2127, %v2022, 0
        %v2155 = vsel %vm2127, %v2029, 0
        %v2156 = vsel %vm2127, %v2036, 0
        %v2157 = vsel %vm2127, %v2043, 0
        %v2158 = vsel %vm2127, %v2050, 0
        %v2159 = vsel %vm2127, %v2057, 0
        %v2160 = vsel %vm2127, %v2064, 0
        %v2161 = vsel %vm2127, %v2071, 0
        %v2162 = vsel %vm2127, %v2078, 0
        %v2163 = vsel %vm2127, %v2085, 0
        %vm2164 = vsmask.f32 7424
        %v2166 = vshrl.u32 %v2128, 16
        %v2168 = vshll.u32 %v2128, 16
        %v2170 = vrot.slane %v2168, 1
        %v2171 = vor.u32 %v2166, %v2170
        %v2173 = vshll.u32 %v2146, 16
        %v2175 = vrot.slane %v2173, 1
        %v2176 = vsel %vm2164, %v2171, %v2175
        %v2178 = vshrl.u32 %v2129, 16
        %v2180 = vshll.u32 %v2129, 16
        %v2182 = vrot.slane %v2180, 1
        %v2183 = vor.u32 %v2178, %v2182
        %v2185 = vshll.u32 %v2147, 16
        %v2187 = vrot.slane %v2185, 1
        %v2188 = vsel %vm2164, %v2183, %v2187
        %v2190 = vshrl.u32 %v2130, 16
        %v2192 = vshll.u32 %v2130, 16
        %v2194 = vrot.slane %v2192, 1
        %v2195 = vor.u32 %v2190, %v2194
        %v2197 = vshll.u32 %v2148, 16
        %v2199 = vrot.slane %v2197, 1
        %v2200 = vsel %vm2164, %v2195, %v2199
        %v2202 = vshrl.u32 %v2131, 16
        %v2204 = vshll.u32 %v2131, 16
        %v2206 = vrot.slane %v2204, 1
        %v2207 = vor.u32 %v2202, %v2206
        %v2209 = vshll.u32 %v2149, 16
        %v2211 = vrot.slane %v2209, 1
        %v2212 = vsel %vm2164, %v2207, %v2211
        %v2214 = vshrl.u32 %v2132, 16
        %v2216 = vshll.u32 %v2132, 16
        %v2218 = vrot.slane %v2216, 1
        %v2219 = vor.u32 %v2214, %v2218
        %v2221 = vshll.u32 %v2150, 16
        %v2223 = vrot.slane %v2221, 1
        %v2224 = vsel %vm2164, %v2219, %v2223
        %v2226 = vshrl.u32 %v2133, 16
        %v2228 = vshll.u32 %v2133, 16
        %v2230 = vrot.slane %v2228, 1
        %v2231 = vor.u32 %v2226, %v2230
        %v2233 = vshll.u32 %v2151, 16
        %v2235 = vrot.slane %v2233, 1
        %v2236 = vsel %vm2164, %v2231, %v2235
        %v2238 = vshrl.u32 %v2134, 16
        %v2240 = vshll.u32 %v2134, 16
        %v2242 = vrot.slane %v2240, 1
        %v2243 = vor.u32 %v2238, %v2242
        %v2245 = vshll.u32 %v2152, 16
        %v2247 = vrot.slane %v2245, 1
        %v2248 = vsel %vm2164, %v2243, %v2247
        %v2250 = vshrl.u32 %v2135, 16
        %v2252 = vshll.u32 %v2135, 16
        %v2254 = vrot.slane %v2252, 1
        %v2255 = vor.u32 %v2250, %v2254
        %v2257 = vshll.u32 %v2153, 16
        %v2259 = vrot.slane %v2257, 1
        %v2260 = vsel %vm2164, %v2255, %v2259
        %v2262 = vshrl.u32 %v2136, 16
        %v2264 = vshll.u32 %v2136, 16
        %v2266 = vrot.slane %v2264, 1
        %v2267 = vor.u32 %v2262, %v2266
        %v2269 = vshll.u32 %v2154, 16
        %v2271 = vrot.slane %v2269, 1
        %v2272 = vsel %vm2164, %v2267, %v2271
        %v2274 = vshrl.u32 %v2137, 16
        %v2276 = vshll.u32 %v2137, 16
        %v2278 = vrot.slane %v2276, 1
        %v2279 = vor.u32 %v2274, %v2278
        %v2281 = vshll.u32 %v2155, 16
        %v2283 = vrot.slane %v2281, 1
        %v2284 = vsel %vm2164, %v2279, %v2283
        %v2286 = vshrl.u32 %v2138, 16
        %v2288 = vshll.u32 %v2138, 16
        %v2290 = vrot.slane %v2288, 1
        %v2291 = vor.u32 %v2286, %v2290
        %v2293 = vshll.u32 %v2156, 16
        %v2295 = vrot.slane %v2293, 1
        %v2296 = vsel %vm2164, %v2291, %v2295
        %v2298 = vshrl.u32 %v2139, 16
        %v2300 = vshll.u32 %v2139, 16
        %v2302 = vrot.slane %v2300, 1
        %v2303 = vor.u32 %v2298, %v2302
        %v2305 = vshll.u32 %v2157, 16
        %v2307 = vrot.slane %v2305, 1
        %v2308 = vsel %vm2164, %v2303, %v2307
        %v2310 = vshrl.u32 %v2140, 16
        %v2312 = vshll.u32 %v2140, 16
        %v2314 = vrot.slane %v2312, 1
        %v2315 = vor.u32 %v2310, %v2314
        %v2317 = vshll.u32 %v2158, 16
        %v2319 = vrot.slane %v2317, 1
        %v2320 = vsel %vm2164, %v2315, %v2319
        %v2322 = vshrl.u32 %v2141, 16
        %v2324 = vshll.u32 %v2141, 16
        %v2326 = vrot.slane %v2324, 1
        %v2327 = vor.u32 %v2322, %v2326
        %v2329 = vshll.u32 %v2159, 16
        %v2331 = vrot.slane %v2329, 1
        %v2332 = vsel %vm2164, %v2327, %v2331
        %v2334 = vshrl.u32 %v2142, 16
        %v2336 = vshll.u32 %v2142, 16
        %v2338 = vrot.slane %v2336, 1
        %v2339 = vor.u32 %v2334, %v2338
        %v2341 = vshll.u32 %v2160, 16
        %v2343 = vrot.slane %v2341, 1
        %v2344 = vsel %vm2164, %v2339, %v2343
        %v2346 = vshrl.u32 %v2143, 16
        %v2348 = vshll.u32 %v2143, 16
        %v2350 = vrot.slane %v2348, 1
        %v2351 = vor.u32 %v2346, %v2350
        %v2353 = vshll.u32 %v2161, 16
        %v2355 = vrot.slane %v2353, 1
        %v2356 = vsel %vm2164, %v2351, %v2355
        %vm2389 = vcmask 1046528
        %v2390 = vrot.slane %v2128, 1
        %v2391 = vrot.slane %v2146, 1
        %v2392 = vsel %vm2389, %v2390, %v2391
        %v2393 = vrot.slane %v2129, 1
        %v2394 = vrot.slane %v2147, 1
        %v2395 = vsel %vm2389, %v2393, %v2394
        %v2396 = vrot.slane %v2130, 1
        %v2397 = vrot.slane %v2148, 1
        %v2398 = vsel %vm2389, %v2396, %v2397
        %v2399 = vrot.slane %v2131, 1
        %v2400 = vrot.slane %v2149, 1
        %v2401 = vsel %vm2389, %v2399, %v2400
        %v2402 = vrot.slane %v2132, 1
        %v2403 = vrot.slane %v2150, 1
        %v2404 = vsel %vm2389, %v2402, %v2403
        %v2405 = vrot.slane %v2133, 1
        %v2406 = vrot.slane %v2151, 1
        %v2407 = vsel %vm2389, %v2405, %v2406
        %v2408 = vrot.slane %v2134, 1
        %v2409 = vrot.slane %v2152, 1
        %v2410 = vsel %vm2389, %v2408, %v2409
        %v2411 = vrot.slane %v2135, 1
        %v2412 = vrot.slane %v2153, 1
        %v2413 = vsel %vm2389, %v2411, %v2412
        %v2414 = vrot.slane %v2136, 1
        %v2415 = vrot.slane %v2154, 1
        %v2416 = vsel %vm2389, %v2414, %v2415
        %v2417 = vrot.slane %v2137, 1
        %v2418 = vrot.slane %v2155, 1
        %v2419 = vsel %vm2389, %v2417, %v2418
        %v2420 = vrot.slane %v2138, 1
        %v2421 = vrot.slane %v2156, 1
        %v2422 = vsel %vm2389, %v2420, %v2421
        %v2423 = vrot.slane %v2139, 1
        %v2424 = vrot.slane %v2157, 1
        %v2425 = vsel %vm2389, %v2423, %v2424
        %v2426 = vrot.slane %v2140, 1
        %v2427 = vrot.slane %v2158, 1
        %v2428 = vsel %vm2389, %v2426, %v2427
        %v2429 = vrot.slane %v2141, 1
        %v2430 = vrot.slane %v2159, 1
        %v2431 = vsel %vm2389, %v2429, %v2430
        %v2432 = vrot.slane %v2142, 1
        %v2433 = vrot.slane %v2160, 1
        %v2434 = vsel %vm2389, %v2432, %v2433
        %v2435 = vrot.slane %v2143, 1
        %v2436 = vrot.slane %v2161, 1
        %v2437 = vsel %vm2389, %v2435, %v2436
        %v2439 = vshrl.u32 %v1891, 16
        %v2441 = vshll.u32 %v1891, 16
        %v2443 = vrot.slane %v2441, 1
        %v2444 = vor.u32 %v2439, %v2443
        %v2446 = vshll.u32 %v1892, 16
        %v2448 = vrot.slane %v2446, 1
        %v2449 = vsel %vm2164, %v2444, %v2448
        %v2451 = vshrl.u32 %v1893, 16
        %v2453 = vshll.u32 %v1893, 16
        %v2455 = vrot.slane %v2453, 1
        %v2456 = vor.u32 %v2451, %v2455
        %v2458 = vshll.u32 %v1894, 16
        %v2460 = vrot.slane %v2458, 1
        %v2461 = vsel %vm2164, %v2456, %v2460
        %v2463 = vshrl.u32 %v1895, 16
        %v2465 = vshll.u32 %v1895, 16
        %v2467 = vrot.slane %v2465, 1
        %v2468 = vor.u32 %v2463, %v2467
        %v2470 = vshll.u32 %v1896, 16
        %v2472 = vrot.slane %v2470, 1
        %v2473 = vsel %vm2164, %v2468, %v2472
        %v2475 = vshrl.u32 %v1897, 16
        %v2477 = vshll.u32 %v1897, 16
        %v2479 = vrot.slane %v2477, 1
        %v2480 = vor.u32 %v2475, %v2479
        %v2482 = vshll.u32 %v1898, 16
        %v2484 = vrot.slane %v2482, 1
        %v2485 = vsel %vm2164, %v2480, %v2484
        %v2487 = vshrl.u32 %v1899, 16
        %v2489 = vshll.u32 %v1899, 16
        %v2491 = vrot.slane %v2489, 1
        %v2492 = vor.u32 %v2487, %v2491
        %v2494 = vshll.u32 %v1900, 16
        %v2496 = vrot.slane %v2494, 1
        %v2497 = vsel %vm2164, %v2492, %v2496
        %v2499 = vshrl.u32 %v1901, 16
        %v2501 = vshll.u32 %v1901, 16
        %v2503 = vrot.slane %v2501, 1
        %v2504 = vor.u32 %v2499, %v2503
        %v2506 = vshll.u32 %v1902, 16
        %v2508 = vrot.slane %v2506, 1
        %v2509 = vsel %vm2164, %v2504, %v2508
        %v2511 = vshrl.u32 %v1903, 16
        %v2513 = vshll.u32 %v1903, 16
        %v2515 = vrot.slane %v2513, 1
        %v2516 = vor.u32 %v2511, %v2515
        %v2518 = vshll.u32 %v1904, 16
        %v2520 = vrot.slane %v2518, 1
        %v2521 = vsel %vm2164, %v2516, %v2520
        %v2523 = vshrl.u32 %v1905, 16
        %v2525 = vshll.u32 %v1905, 16
        %v2527 = vrot.slane %v2525, 1
        %v2528 = vor.u32 %v2523, %v2527
        %v2530 = vshll.u32 %v1906, 16
        %v2532 = vrot.slane %v2530, 1
        %v2533 = vsel %vm2164, %v2528, %v2532
        %v2535 = vshrl.u32 %v1907, 16
        %v2537 = vshll.u32 %v1907, 16
        %v2539 = vrot.slane %v2537, 1
        %v2540 = vor.u32 %v2535, %v2539
        %v2542 = vshll.u32 %v1908, 16
        %v2544 = vrot.slane %v2542, 1
        %v2545 = vsel %vm2164, %v2540, %v2544
        %v2547 = vshrl.u32 %v1909, 16
        %v2549 = vshll.u32 %v1909, 16
        %v2551 = vrot.slane %v2549, 1
        %v2552 = vor.u32 %v2547, %v2551
        %v2554 = vshll.u32 %v1910, 16
        %v2556 = vrot.slane %v2554, 1
        %v2557 = vsel %vm2164, %v2552, %v2556
        %v2559 = vshrl.u32 %v1911, 16
        %v2561 = vshll.u32 %v1911, 16
        %v2563 = vrot.slane %v2561, 1
        %v2564 = vor.u32 %v2559, %v2563
        %v2566 = vshll.u32 %v1912, 16
        %v2568 = vrot.slane %v2566, 1
        %v2569 = vsel %vm2164, %v2564, %v2568
        %v2571 = vshrl.u32 %v1913, 16
        %v2573 = vshll.u32 %v1913, 16
        %v2575 = vrot.slane %v2573, 1
        %v2576 = vor.u32 %v2571, %v2575
        %v2578 = vshll.u32 %v1914, 16
        %v2580 = vrot.slane %v2578, 1
        %v2581 = vsel %vm2164, %v2576, %v2580
        %v2583 = vshrl.u32 %v1915, 16
        %v2585 = vshll.u32 %v1915, 16
        %v2587 = vrot.slane %v2585, 1
        %v2588 = vor.u32 %v2583, %v2587
        %v2590 = vshll.u32 %v1916, 16
        %v2592 = vrot.slane %v2590, 1
        %v2593 = vsel %vm2164, %v2588, %v2592
        %v2595 = vshrl.u32 %v1917, 16
        %v2597 = vshll.u32 %v1917, 16
        %v2599 = vrot.slane %v2597, 1
        %v2600 = vor.u32 %v2595, %v2599
        %v2602 = vshll.u32 %v1918, 16
        %v2604 = vrot.slane %v2602, 1
        %v2605 = vsel %vm2164, %v2600, %v2604
        %v2607 = vshrl.u32 %v1919, 16
        %v2609 = vshll.u32 %v1919, 16
        %v2611 = vrot.slane %v2609, 1
        %v2612 = vor.u32 %v2607, %v2611
        %v2614 = vshll.u32 %v1920, 16
        %v2616 = vrot.slane %v2614, 1
        %v2617 = vsel %vm2164, %v2612, %v2616
        %v2619 = vshrl.u32 %v1921, 16
        %v2621 = vshll.u32 %v1921, 16
        %v2623 = vrot.slane %v2621, 1
        %v2624 = vor.u32 %v2619, %v2623
        %v2626 = vshll.u32 %v1922, 16
        %v2628 = vrot.slane %v2626, 1
        %v2629 = vsel %vm2164, %v2624, %v2628
        %v2662 = vrot.slane %v1891, 1
        %v2663 = vrot.slane %v1892, 1
        %v2664 = vsel %vm2389, %v2662, %v2663
        %v2665 = vrot.slane %v1893, 1
        %v2666 = vrot.slane %v1894, 1
        %v2667 = vsel %vm2389, %v2665, %v2666
        %v2668 = vrot.slane %v1895, 1
        %v2669 = vrot.slane %v1896, 1
        %v2670 = vsel %vm2389, %v2668, %v2669
        %v2671 = vrot.slane %v1897, 1
        %v2672 = vrot.slane %v1898, 1
        %v2673 = vsel %vm2389, %v2671, %v2672
        %v2674 = vrot.slane %v1899, 1
        %v2675 = vrot.slane %v1900, 1
        %v2676 = vsel %vm2389, %v2674, %v2675
        %v2677 = vrot.slane %v1901, 1
        %v2678 = vrot.slane %v1902, 1
        %v2679 = vsel %vm2389, %v2677, %v2678
        %v2680 = vrot.slane %v1903, 1
        %v2681 = vrot.slane %v1904, 1
        %v2682 = vsel %vm2389, %v2680, %v2681
        %v2683 = vrot.slane %v1905, 1
        %v2684 = vrot.slane %v1906, 1
        %v2685 = vsel %vm2389, %v2683, %v2684
        %v2686 = vrot.slane %v1907, 1
        %v2687 = vrot.slane %v1908, 1
        %v2688 = vsel %vm2389, %v2686, %v2687
        %v2689 = vrot.slane %v1909, 1
        %v2690 = vrot.slane %v1910, 1
        %v2691 = vsel %vm2389, %v2689, %v2690
        %v2692 = vrot.slane %v1911, 1
        %v2693 = vrot.slane %v1912, 1
        %v2694 = vsel %vm2389, %v2692, %v2693
        %v2695 = vrot.slane %v1913, 1
        %v2696 = vrot.slane %v1914, 1
        %v2697 = vsel %vm2389, %v2695, %v2696
        %v2698 = vrot.slane %v1915, 1
        %v2699 = vrot.slane %v1916, 1
        %v2700 = vsel %vm2389, %v2698, %v2699
        %v2701 = vrot.slane %v1917, 1
        %v2702 = vrot.slane %v1918, 1
        %v2703 = vsel %vm2389, %v2701, %v2702
        %v2704 = vrot.slane %v1919, 1
        %v2705 = vrot.slane %v1920, 1
        %v2706 = vsel %vm2389, %v2704, %v2705
        %v2707 = vrot.slane %v1921, 1
        %v2708 = vrot.slane %v1922, 1
        %v2709 = vsel %vm2389, %v2707, %v2708
        %2710 = vrot.lane.b32.xlu0 %v2176, 16
        %v2711 = vpop.permute.xlu0 %2710
        %2712 = vrot.lane.b32.xlu0 %v2188, 16
        %v2713 = vpop.permute.xlu0 %2712
        %2714 = vrot.lane.b32.xlu0 %v2200, 16
        %v2715 = vpop.permute.xlu0 %2714
        %2716 = vrot.lane.b32.xlu0 %v2212, 16
        %v2717 = vpop.permute.xlu0 %2716
        %2718 = vrot.lane.b32.xlu0 %v2224, 16
        %v2719 = vpop.permute.xlu0 %2718
        %2720 = vrot.lane.b32.xlu0 %v2236, 16
        %v2721 = vpop.permute.xlu0 %2720
        %2722 = vrot.lane.b32.xlu0 %v2248, 16
        %v2723 = vpop.permute.xlu0 %2722
        %2724 = vrot.lane.b32.xlu0 %v2260, 16
        %v2725 = vpop.permute.xlu0 %2724
        %2726 = vrot.lane.b32.xlu0 %v2272, 16
        %v2727 = vpop.permute.xlu0 %2726
        %2728 = vrot.lane.b32.xlu0 %v2284, 16
        %v2729 = vpop.permute.xlu0 %2728
        %2730 = vrot.lane.b32.xlu0 %v2296, 16
        %v2731 = vpop.permute.xlu0 %2730
        %2732 = vrot.lane.b32.xlu0 %v2308, 16
        %v2733 = vpop.permute.xlu0 %2732
        %2734 = vrot.lane.b32.xlu0 %v2320, 16
        %v2735 = vpop.permute.xlu0 %2734
        %2736 = vrot.lane.b32.xlu0 %v2332, 16
        %v2737 = vpop.permute.xlu0 %2736
        %2738 = vrot.lane.b32.xlu0 %v2344, 16
        %v2739 = vpop.permute.xlu0 %2738
        %2740 = vrot.lane.b32.xlu0 %v2356, 16
        %v2741 = vpop.permute.xlu0 %2740
        %2742 = vrot.lane.b32.xlu0 %v2392, 32
        %v2743 = vpop.permute.xlu0 %2742
        %2744 = vrot.lane.b32.xlu0 %v2395, 32
        %v2745 = vpop.permute.xlu0 %2744
        %2746 = vrot.lane.b32.xlu0 %v2398, 32
        %v2747 = vpop.permute.xlu0 %2746
        %2748 = vrot.lane.b32.xlu0 %v2401, 32
        %v2749 = vpop.permute.xlu0 %2748
        %2750 = vrot.lane.b32.xlu0 %v2404, 32
        %v2751 = vpop.permute.xlu0 %2750
        %2752 = vrot.lane.b32.xlu0 %v2407, 32
        %v2753 = vpop.permute.xlu0 %2752
        %2754 = vrot.lane.b32.xlu0 %v2410, 32
        %v2755 = vpop.permute.xlu0 %2754
        %2756 = vrot.lane.b32.xlu0 %v2413, 32
        %v2757 = vpop.permute.xlu0 %2756
        %2758 = vrot.lane.b32.xlu0 %v2416, 32
        %v2759 = vpop.permute.xlu0 %2758
        %2760 = vrot.lane.b32.xlu0 %v2419, 32
        %v2761 = vpop.permute.xlu0 %2760
        %2762 = vrot.lane.b32.xlu0 %v2422, 32
        %v2763 = vpop.permute.xlu0 %2762
        %2764 = vrot.lane.b32.xlu0 %v2425, 32
        %v2765 = vpop.permute.xlu0 %2764
        %2766 = vrot.lane.b32.xlu0 %v2428, 32
        %v2767 = vpop.permute.xlu0 %2766
        %2768 = vrot.lane.b32.xlu0 %v2431, 32
        %v2769 = vpop.permute.xlu0 %2768
        %2770 = vrot.lane.b32.xlu0 %v2434, 32
        %v2771 = vpop.permute.xlu0 %2770
        %2772 = vrot.lane.b32.xlu0 %v2437, 32
        %v2773 = vpop.permute.xlu0 %2772
        %2774 = vrot.lane.b32.xlu0 %v1891, 48
        %v2775 = vpop.permute.xlu0 %2774
        %2776 = vrot.lane.b32.xlu0 %v1893, 48
        %v2777 = vpop.permute.xlu0 %2776
        %2778 = vrot.lane.b32.xlu0 %v1895, 48
        %v2779 = vpop.permute.xlu0 %2778
        %2780 = vrot.lane.b32.xlu0 %v1897, 48
        %v2781 = vpop.permute.xlu0 %2780
        %2782 = vrot.lane.b32.xlu0 %v1899, 48
        %v2783 = vpop.permute.xlu0 %2782
        %2784 = vrot.lane.b32.xlu0 %v1901, 48
        %v2785 = vpop.permute.xlu0 %2784
        %2786 = vrot.lane.b32.xlu0 %v1903, 48
        %v2787 = vpop.permute.xlu0 %2786
        %2788 = vrot.lane.b32.xlu0 %v1905, 48
        %v2789 = vpop.permute.xlu0 %2788
        %2790 = vrot.lane.b32.xlu0 %v1907, 48
        %v2791 = vpop.permute.xlu0 %2790
        %2792 = vrot.lane.b32.xlu0 %v1909, 48
        %v2793 = vpop.permute.xlu0 %2792
        %2794 = vrot.lane.b32.xlu0 %v1911, 48
        %v2795 = vpop.permute.xlu0 %2794
        %2796 = vrot.lane.b32.xlu0 %v1913, 48
        %v2797 = vpop.permute.xlu0 %2796
        %2798 = vrot.lane.b32.xlu0 %v1915, 48
        %v2799 = vpop.permute.xlu0 %2798
        %2800 = vrot.lane.b32.xlu0 %v1917, 48
        %v2801 = vpop.permute.xlu0 %2800
        %2802 = vrot.lane.b32.xlu0 %v1919, 48
        %v2803 = vpop.permute.xlu0 %2802
        %2804 = vrot.lane.b32.xlu0 %v1921, 48
        %v2805 = vpop.permute.xlu0 %2804
        %2806 = vrot.lane.b32.xlu0 %v2449, 56
        %v2807 = vpop.permute.xlu0 %2806
        %2808 = vrot.lane.b32.xlu0 %v2461, 56
        %v2809 = vpop.permute.xlu0 %2808
        %2810 = vrot.lane.b32.xlu0 %v2473, 56
        %v2811 = vpop.permute.xlu0 %2810
        %2812 = vrot.lane.b32.xlu0 %v2485, 56
        %v2813 = vpop.permute.xlu0 %2812
        %2814 = vrot.lane.b32.xlu0 %v2497, 56
        %v2815 = vpop.permute.xlu0 %2814
        %2816 = vrot.lane.b32.xlu0 %v2509, 56
        %v2817 = vpop.permute.xlu0 %2816
        %2818 = vrot.lane.b32.xlu0 %v2521, 56
        %v2819 = vpop.permute.xlu0 %2818
        %2820 = vrot.lane.b32.xlu0 %v2533, 56
        %v2821 = vpop.permute.xlu0 %2820
        %2822 = vrot.lane.b32.xlu0 %v2545, 56
        %v2823 = vpop.permute.xlu0 %2822
        %2824 = vrot.lane.b32.xlu0 %v2557, 56
        %v2825 = vpop.permute.xlu0 %2824
        %2826 = vrot.lane.b32.xlu0 %v2569, 56
        %v2827 = vpop.permute.xlu0 %2826
        %2828 = vrot.lane.b32.xlu0 %v2581, 56
        %v2829 = vpop.permute.xlu0 %2828
        %2830 = vrot.lane.b32.xlu0 %v2593, 56
        %v2831 = vpop.permute.xlu0 %2830
        %2832 = vrot.lane.b32.xlu0 %v2605, 56
        %v2833 = vpop.permute.xlu0 %2832
        %2834 = vrot.lane.b32.xlu0 %v2617, 56
        %v2835 = vpop.permute.xlu0 %2834
        %2836 = vrot.lane.b32.xlu0 %v2629, 56
        %v2837 = vpop.permute.xlu0 %2836
        %2838 = vrot.lane.b32.xlu0 %v2664, 64
        %v2839 = vpop.permute.xlu0 %2838
        %2840 = vrot.lane.b32.xlu0 %v2667, 64
        %v2841 = vpop.permute.xlu0 %2840
        %2842 = vrot.lane.b32.xlu0 %v2670, 64
        %v2843 = vpop.permute.xlu0 %2842
        %2844 = vrot.lane.b32.xlu0 %v2673, 64
        %v2845 = vpop.permute.xlu0 %2844
        %2846 = vrot.lane.b32.xlu0 %v2676, 64
        %v2847 = vpop.permute.xlu0 %2846
        %2848 = vrot.lane.b32.xlu0 %v2679, 64
        %v2849 = vpop.permute.xlu0 %2848
        %2850 = vrot.lane.b32.xlu0 %v2682, 64
        %v2851 = vpop.permute.xlu0 %2850
        %2852 = vrot.lane.b32.xlu0 %v2685, 64
        %v2853 = vpop.permute.xlu0 %2852
        %2854 = vrot.lane.b32.xlu0 %v2688, 64
        %v2855 = vpop.permute.xlu0 %2854
        %2856 = vrot.lane.b32.xlu0 %v2691, 64
        %v2857 = vpop.permute.xlu0 %2856
        %2858 = vrot.lane.b32.xlu0 %v2694, 64
        %v2859 = vpop.permute.xlu0 %2858
        %2860 = vrot.lane.b32.xlu0 %v2697, 64
        %v2861 = vpop.permute.xlu0 %2860
        %2862 = vrot.lane.b32.xlu0 %v2700, 64
        %v2863 = vpop.permute.xlu0 %2862
        %2864 = vrot.lane.b32.xlu0 %v2703, 64
        %v2865 = vpop.permute.xlu0 %2864
        %2866 = vrot.lane.b32.xlu0 %v2706, 64
        %v2867 = vpop.permute.xlu0 %2866
        %2868 = vrot.lane.b32.xlu0 %v2709, 64
        %v2869 = vpop.permute.xlu0 %2868
        %v2871 = vsel %vm841, %v2128, %v2711
        %v2873 = vsel %vm841, %v2129, %v2713
        %v2875 = vsel %vm841, %v2130, %v2715
        %v2877 = vsel %vm841, %v2131, %v2717
        %v2879 = vsel %vm841, %v2132, %v2719
        %v2881 = vsel %vm841, %v2133, %v2721
        %v2883 = vsel %vm841, %v2134, %v2723
        %v2885 = vsel %vm841, %v2135, %v2725
        %v2887 = vsel %vm841, %v2136, %v2727
        %v2889 = vsel %vm841, %v2137, %v2729
        %v2891 = vsel %vm841, %v2138, %v2731
        %v2893 = vsel %vm841, %v2139, %v2733
        %v2895 = vsel %vm841, %v2140, %v2735
        %v2897 = vsel %vm841, %v2141, %v2737
        %v2899 = vsel %vm841, %v2142, %v2739
        %v2901 = vsel %vm841, %v2143, %v2741
        %v2903 = vsel %vm847, %v2871, %v2743
        %v2905 = vsel %vm847, %v2873, %v2745
        %v2907 = vsel %vm847, %v2875, %v2747
        %v2909 = vsel %vm847, %v2877, %v2749
        %v2911 = vsel %vm847, %v2879, %v2751
        %v2913 = vsel %vm847, %v2881, %v2753
        %v2915 = vsel %vm847, %v2883, %v2755
        %v2917 = vsel %vm847, %v2885, %v2757
        %v2919 = vsel %vm847, %v2887, %v2759
        %v2921 = vsel %vm847, %v2889, %v2761
        %v2923 = vsel %vm847, %v2891, %v2763
        %v2925 = vsel %vm847, %v2893, %v2765
        %v2927 = vsel %vm847, %v2895, %v2767
        %v2929 = vsel %vm847, %v2897, %v2769
        %v2931 = vsel %vm847, %v2899, %v2771
        %v2933 = vsel %vm847, %v2901, %v2773
        %v2935 = vsel %vm853, %v2903, %v2775
        %v2937 = vsel %vm853, %v2905, %v2777
        %v2939 = vsel %vm853, %v2907, %v2779
        %v2941 = vsel %vm853, %v2909, %v2781
        %v2943 = vsel %vm853, %v2911, %v2783
        %v2945 = vsel %vm853, %v2913, %v2785
        %v2947 = vsel %vm853, %v2915, %v2787
        %v2949 = vsel %vm853, %v2917, %v2789
        %v2951 = vsel %vm853, %v2919, %v2791
        %v2953 = vsel %vm853, %v2921, %v2793
        %v2955 = vsel %vm853, %v2923, %v2795
        %v2957 = vsel %vm853, %v2925, %v2797
        %v2959 = vsel %vm853, %v2927, %v2799
        %v2961 = vsel %vm853, %v2929, %v2801
        %v2963 = vsel %vm853, %v2931, %v2803
        %v2965 = vsel %vm853, %v2933, %v2805
        %v2967 = vsel %vm856, %v2935, %v2807
        %v2969 = vsel %vm856, %v2937, %v2809
        %v2971 = vsel %vm856, %v2939, %v2811
        %v2973 = vsel %vm856, %v2941, %v2813
        %v2975 = vsel %vm856, %v2943, %v2815
        %v2977 = vsel %vm856, %v2945, %v2817
        %v2979 = vsel %vm856, %v2947, %v2819
        %v2981 = vsel %vm856, %v2949, %v2821
        %v2983 = vsel %vm856, %v2951, %v2823
        %v2985 = vsel %vm856, %v2953, %v2825
        %v2987 = vsel %vm856, %v2955, %v2827
        %v2989 = vsel %vm856, %v2957, %v2829
        %v2991 = vsel %vm856, %v2959, %v2831
        %v2993 = vsel %vm856, %v2961, %v2833
        %v2995 = vsel %vm856, %v2963, %v2835
        %v2997 = vsel %vm856, %v2965, %v2837
        %v2999 = vsel %vm859, %v2967, %v2839
        %v3001 = vsel %vm859, %v2969, %v2841
        %v3003 = vsel %vm859, %v2971, %v2843
        %v3005 = vsel %vm859, %v2973, %v2845
        %v3007 = vsel %vm859, %v2975, %v2847
        %v3009 = vsel %vm859, %v2977, %v2849
        %v3011 = vsel %vm859, %v2979, %v2851
        %v3013 = vsel %vm859, %v2981, %v2853
        %v3015 = vsel %vm859, %v2983, %v2855
        %v3017 = vsel %vm859, %v2985, %v2857
        %v3019 = vsel %vm859, %v2987, %v2859
        %v3021 = vsel %vm859, %v2989, %v2861
        %v3023 = vsel %vm859, %v2991, %v2863
        %v3025 = vsel %vm859, %v2993, %v2865
        %v3027 = vsel %vm859, %v2995, %v2867
        %v3029 = vsel %vm859, %v2997, %v2869
        %v3030 = vld [vmem:[%s3] sm:$0xf]
        %v3031 = vld [vmem:[%s3 + $0x4] sm:$0xf]
        %v3032 = vld [vmem:[%s3 + $0x8] sm:$0xf]
        %v3033 = vld [vmem:[%s3 + $0xc] sm:$0xf]
        %v3034 = vld [vmem:[%s3 + $0x10] sm:$0xf]
        %v3035 = vld [vmem:[%s3 + $0x14] sm:$0xf]
        %v3036 = vld [vmem:[%s3 + $0x18] sm:$0xf]
        %v3037 = vld [vmem:[%s3 + $0x1c] sm:$0xf]
        %v3038 = vld [vmem:[%s3 + $0x20] sm:$0xf]
        %v3040 = vshrl.u32 %v2144, 16
        %v3042 = vshll.u32 %v2144, 16
        %v3044 = vrot.slane %v3042, 1
        %v3045 = vor.u32 %v3040, %v3044
        %v3047 = vshll.u32 %v2162, 16
        %v3049 = vrot.slane %v3047, 1
        %v3050 = vsel %vm2164, %v3045, %v3049
        %v3053 = vrot.slane %v2144, 1
        %v3054 = vrot.slane %v2162, 1
        %v3055 = vsel %vm2389, %v3053, %v3054
        %v3057 = vshrl.u32 %v1923, 16
        %v3059 = vshll.u32 %v1923, 16
        %v3061 = vrot.slane %v3059, 1
        %v3062 = vor.u32 %v3057, %v3061
        %v3064 = vshll.u32 %v1924, 16
        %v3066 = vrot.slane %v3064, 1
        %v3067 = vsel %vm2164, %v3062, %v3066
        %v3070 = vrot.slane %v1923, 1
        %v3071 = vrot.slane %v1924, 1
        %v3072 = vsel %vm2389, %v3070, %v3071
        %3073 = vrot.lane.b32.xlu0 %v3050, 16
        %v3074 = vpop.permute.xlu0 %3073
        %3075 = vrot.lane.b32.xlu0 %v3055, 32
        %v3076 = vpop.permute.xlu0 %3075
        %3077 = vrot.lane.b32.xlu0 %v1923, 48
        %v3078 = vpop.permute.xlu0 %3077
        %3079 = vrot.lane.b32.xlu0 %v3067, 56
        %v3080 = vpop.permute.xlu0 %3079
        %3081 = vrot.lane.b32.xlu0 %v3072, 64
        %v3082 = vpop.permute.xlu0 %3081
        %v3084 = vsel %vm841, %v2144, %v3074
        %v3086 = vsel %vm847, %v3084, %v3076
        %v3088 = vsel %vm853, %v3086, %v3078
        %v3090 = vsel %vm856, %v3088, %v3080
        %v3092 = vsel %vm859, %v3090, %v3082
        %s3093 = scalar_lea.vmem %s3, 36
        %v3094 = vld [vmem:[%s3093] sm:$0xf]
        %v3095 = vld [vmem:[%s3093 + $0x4] sm:$0xf]
        %v3096 = vld [vmem:[%s3093 + $0x8] sm:$0xf]
        %v3097 = vld [vmem:[%s3093 + $0xc] sm:$0xf]
        %v3098 = vld [vmem:[%s3093 + $0x10] sm:$0xf]
        %v3099 = vld [vmem:[%s3093 + $0x14] sm:$0xf]
        %v3100 = vld [vmem:[%s3093 + $0x18] sm:$0xf]
        %v3101 = vld [vmem:[%s3093 + $0x1c] sm:$0xf]
        %v3102 = vld [vmem:[%s3093 + $0x20] sm:$0xf]
        %v3112 = vunpack.c.l.b16 %v3094
        %v3113 = vunpack.c.l.b16 %v3095
        %v3114 = vunpack.c.l.b16 %v3096
        %v3115 = vunpack.c.l.b16 %v3097
        %v3116 = vunpack.c.l.b16 %v3098
        %v3117 = vunpack.c.l.b16 %v3099
        %v3118 = vunpack.c.l.b16 %v3100
        %v3119 = vunpack.c.l.b16 %v3101
        %v3120 = vunpack.c.l.b16 %v3102
        %v3121 = vpack.c.b16 %v3113, %v3112
        %v3122 = vpack.c.b16 %v3115, %v3114
        %v3123 = vpack.c.b16 %v3117, %v3116
        %v3124 = vpack.c.b16 %v3119, %v3118
        %v3125 = vpack.c.b16 %v3120, %v3120
        %v3130 = vsel %vm862, %v3001, 0
        %v3132 = vsel %vm862, %v3003, 0
        %v3134 = vsel %vm862, %v3005, 0
        %v3136 = vsel %vm862, %v3007, 0
        %v3138 = vsel %vm862, %v3009, 0
        %v3140 = vsel %vm862, %v3011, 0
        %v3142 = vsel %vm862, %v3013, 0
        %v3144 = vsel %vm862, %v3015, 0
        %v3146 = vsel %vm862, %v3017, 0
        %v3148 = vsel %vm862, %v3019, 0
        %v3150 = vsel %vm862, %v3021, 0
        %v3152 = vsel %vm862, %v3023, 0
        %v3154 = vsel %vm862, %v3025, 0
        %v3156 = vsel %vm862, %v3027, 0
        %v3158 = vsel %vm862, %v3029, 0
        %v3160 = vsel %vm862, %v3092, 0
        %v3163 = vsel %vm900, %v3125, 0
        %3165 = vmatprep.subr.bf16.mxu0 0
        %3166 = vmatpush1.bf16.msra.mxu0 %v3121
        %3167 = vmatprep.subr.bf16.mxu0 0
        %3168 = vmatpush1.bf16.msra.mxu0 %v3122
        %3169 = vmatprep.subr.bf16.mxu0 0
        %3170 = vmatpush1.bf16.msra.mxu0 %v3123
        %3171 = vmatprep.subr.bf16.mxu0 0
        %3172 = vmatpush1.bf16.msra.mxu0 %v3124
        %3173 = vmatprep.subr.bf16.mxu0 0
        %3174 = vmatpush1.bf16.msra.mxu0 %v3163
        %3175 = vmatprep.subr.bf16.mxu0 0
        %3176 = vmatpush1.bf16.msra.mxu0 0
        %3177 = vmatprep.subr.bf16.mxu0 0
        %3178 = vmatpush1.bf16.msra.mxu0 0
        %3179 = vmatprep.subr.bf16.mxu0 0
        %3180 = vmatpush1.bf16.msra.mxu0 0
        %3181 = vmatprep.subr.bf16.mxu0 0
        %3182 = vmatpush1.bf16.msra.mxu0 0
        %3183 = vmatprep.subr.bf16.mxu0 0
        %3184 = vmatpush1.bf16.msra.mxu0 0
        %3185 = vmatprep.subr.bf16.mxu0 0
        %3186 = vmatpush1.bf16.msra.mxu0 0
        %3187 = vmatprep.subr.bf16.mxu0 0
        %3188 = vmatpush1.bf16.msra.mxu0 0
        %3189 = vmatprep.subr.bf16.mxu0 0
        %3190 = vmatpush1.bf16.msra.mxu0 0
        %3191 = vmatprep.subr.bf16.mxu0 0
        %3192 = vmatpush1.bf16.msra.mxu0 0
        %3193 = vmatprep.subr.bf16.mxu0 0
        %3194 = vmatpush1.bf16.msra.mxu0 0
        %3195 = vmatprep.subr.bf16.mxu0 0
        %3196 = vmatpush1.bf16.msra.mxu0 0
        %3197 = vmatprep.mubr.bf16.mxu0 0
        %3198 = vmatmul.mubr.bf16.gmra.mrb[0].mxu0 %v3130
        %v3199 = vpop.f32.mrb[0].mxu0
        %v3200 = vadd.f32 0.0, %v3199
        %v3201 = vpop.f32.mrb[0].mxu0
        %v3202 = vpop.f32.mrb[0].mxu0
        %v3203 = vadd.f32 0.0, %v3202
        %v3204 = vpop.f32.mrb[0].mxu0
        %3205 = vmatprep.mubr.bf16.mxu0 0
        %3206 = vmatmul.mubr.bf16.gmra.mrb[0].mxu0 %v3132
        %v3207 = vpop.f32.mrb[0].mxu0
        %v3208 = vadd.f32 0.0, %v3207
        %v3209 = vpop.f32.mrb[0].mxu0
        %v3210 = vpop.f32.mrb[0].mxu0
        %v3211 = vadd.f32 0.0, %v3210
        %v3212 = vpop.f32.mrb[0].mxu0
        %3213 = vmatprep.mubr.bf16.mxu0 0
        %3214 = vmatmul.mubr.bf16.gmra.mrb[0].mxu0 %v3134
        %v3215 = vpop.f32.mrb[0].mxu0
        %v3216 = vadd.f32 0.0, %v3215
        %v3217 = vpop.f32.mrb[0].mxu0
        %v3218 = vpop.f32.mrb[0].mxu0
        %v3219 = vadd.f32 0.0, %v3218
        %v3220 = vpop.f32.mrb[0].mxu0
        %3221 = vmatprep.mubr.bf16.mxu0 0
        %3222 = vmatmul.mubr.bf16.gmra.mrb[0].mxu0 %v3136
        %v3223 = vpop.f32.mrb[0].mxu0
        %v3224 = vadd.f32 0.0, %v3223
        %v3225 = vpop.f32.mrb[0].mxu0
        %v3226 = vpop.f32.mrb[0].mxu0
        %v3227 = vadd.f32 0.0, %v3226
        %v3228 = vpop.f32.mrb[0].mxu0
        %3229 = vmatprep.mubr.bf16.mxu0 0
        %3230 = vmatmul.mubr.bf16.gmra.mrb[0].mxu0 %v3138
        %v3231 = vpop.f32.mrb[0].mxu0
        %v3232 = vadd.f32 0.0, %v3231
        %v3233 = vpop.f32.mrb[0].mxu0
        %v3234 = vpop.f32.mrb[0].mxu0
        %v3235 = vadd.f32 0.0, %v3234
        %v3236 = vpop.f32.mrb[0].mxu0
        %3237 = vmatprep.mubr.bf16.mxu0 0
        %3238 = vmatmul.mubr.bf16.gmra.mrb[0].mxu0 %v3140
        %v3239 = vpop.f32.mrb[0].mxu0
        %v3240 = vadd.f32 0.0, %v3239
        %v3241 = vpop.f32.mrb[0].mxu0
        %v3242 = vpop.f32.mrb[0].mxu0
        %v3243 = vadd.f32 0.0, %v3242
        %v3244 = vpop.f32.mrb[0].mxu0
        %3245 = vmatprep.mubr.bf16.mxu0 0
        %3246 = vmatmul.mubr.bf16.gmra.mrb[0].mxu0 %v3142
        %v3247 = vpop.f32.mrb[0].mxu0
        %v3248 = vadd.f32 0.0, %v3247
        %v3249 = vpop.f32.mrb[0].mxu0
        %v3250 = vpop.f32.mrb[0].mxu0
        %v3251 = vadd.f32 0.0, %v3250
        %v3252 = vpop.f32.mrb[0].mxu0
        %3253 = vmatprep.mubr.bf16.mxu0 0
        %3254 = vmatmul.mubr.bf16.gmra.mrb[0].mxu0 %v3144
        %v3255 = vpop.f32.mrb[0].mxu0
        %v3256 = vadd.f32 0.0, %v3255
        %v3257 = vpop.f32.mrb[0].mxu0
        %v3258 = vpop.f32.mrb[0].mxu0
        %v3259 = vadd.f32 0.0, %v3258
        %v3260 = vpop.f32.mrb[0].mxu0
        %3261 = vmatprep.mubr.bf16.mxu0 0
        %3262 = vmatmul.mubr.bf16.gmra.mrb[0].mxu0 %v3146
        %v3263 = vpop.f32.mrb[0].mxu0
        %v3264 = vadd.f32 0.0, %v3263
        %v3265 = vpop.f32.mrb[0].mxu0
        %v3266 = vpop.f32.mrb[0].mxu0
        %v3267 = vadd.f32 0.0, %v3266
        %v3268 = vpop.f32.mrb[0].mxu0
        %3269 = vmatprep.mubr.bf16.mxu0 0
        %3270 = vmatmul.mubr.bf16.gmra.mrb[0].mxu0 %v3148
        %v3271 = vpop.f32.mrb[0].mxu0
        %v3272 = vadd.f32 0.0, %v3271
        %v3273 = vpop.f32.mrb[0].mxu0
        %v3274 = vpop.f32.mrb[0].mxu0
        %v3275 = vadd.f32 0.0, %v3274
        %v3276 = vpop.f32.mrb[0].mxu0
        %3277 = vmatprep.mubr.bf16.mxu0 0
        %3278 = vmatmul.mubr.bf16.gmra.mrb[0].mxu0 %v3150
        %v3279 = vpop.f32.mrb[0].mxu0
        %v3280 = vadd.f32 0.0, %v3279
        %v3281 = vpop.f32.mrb[0].mxu0
        %v3282 = vpop.f32.mrb[0].mxu0
        %v3283 = vadd.f32 0.0, %v3282
        %v3284 = vpop.f32.mrb[0].mxu0
        %3285 = vmatprep.mubr.bf16.mxu0 0
        %3286 = vmatmul.mubr.bf16.gmra.mrb[0].mxu0 %v3152
        %v3287 = vpop.f32.mrb[0].mxu0
        %v3288 = vadd.f32 0.0, %v3287
        %v3289 = vpop.f32.mrb[0].mxu0
        %v3290 = vpop.f32.mrb[0].mxu0
        %v3291 = vadd.f32 0.0, %v3290
        %v3292 = vpop.f32.mrb[0].mxu0
        %3293 = vmatprep.mubr.bf16.mxu0 0
        %3294 = vmatmul.mubr.bf16.gmra.mrb[0].mxu0 %v3154
        %v3295 = vpop.f32.mrb[0].mxu0
        %v3296 = vadd.f32 0.0, %v3295
        %v3297 = vpop.f32.mrb[0].mxu0
        %v3298 = vpop.f32.mrb[0].mxu0
        %v3299 = vadd.f32 0.0, %v3298
        %v3300 = vpop.f32.mrb[0].mxu0
        %3301 = vmatprep.mubr.bf16.mxu0 0
        %3302 = vmatmul.mubr.bf16.gmra.mrb[0].mxu0 %v3156
        %v3303 = vpop.f32.mrb[0].mxu0
        %v3304 = vadd.f32 0.0, %v3303
        %v3305 = vpop.f32.mrb[0].mxu0
        %v3306 = vpop.f32.mrb[0].mxu0
        %v3307 = vadd.f32 0.0, %v3306
        %v3308 = vpop.f32.mrb[0].mxu0
        %3309 = vmatprep.mubr.bf16.mxu0 0
        %3310 = vmatmul.mubr.bf16.gmra.mrb[0].mxu0 %v3158
        %v3311 = vpop.f32.mrb[0].mxu0
        %v3312 = vadd.f32 0.0, %v3311
        %v3313 = vpop.f32.mrb[0].mxu0
        %v3314 = vpop.f32.mrb[0].mxu0
        %v3315 = vadd.f32 0.0, %v3314
        %v3316 = vpop.f32.mrb[0].mxu0
        %3317 = vmatprep.mubr.bf16.mxu0 0
        %3318 = vmatmul.mubr.bf16.gmra.mrb[0].mxu0 %v3160
        %v3319 = vpop.f32.mrb[0].mxu0
        %v3320 = vadd.f32 0.0, %v3319
        %v3321 = vpop.f32.mrb[0].mxu0
        %v3322 = vpop.f32.mrb[0].mxu0
        %v3323 = vadd.f32 0.0, %v3322
        %v3324 = vpop.f32.mrb[0].mxu0
        %3325 = vdwg.mxu0
        %v3335 = vunpack.c.l.b16 %v3030
        %v3336 = vunpack.c.l.b16 %v3031
        %v3337 = vunpack.c.l.b16 %v3032
        %v3338 = vunpack.c.l.b16 %v3033
        %v3339 = vunpack.c.l.b16 %v3034
        %v3340 = vunpack.c.l.b16 %v3035
        %v3341 = vunpack.c.l.b16 %v3036
        %v3342 = vunpack.c.l.b16 %v3037
        %v3343 = vunpack.c.l.b16 %v3038
        %v3344 = vpack.c.b16 %v3336, %v3335
        %v3345 = vpack.c.b16 %v3338, %v3337
        %v3346 = vpack.c.b16 %v3340, %v3339
        %v3347 = vpack.c.b16 %v3342, %v3341
        %v3348 = vpack.c.b16 %v3343, %v3343
        %v3353 = vsel %vm862, %v2999, 0
        %v3356 = vsel %vm900, %v3348, 0
        %3358 = vmatprep.subr.bf16.mxu0 0
        %3359 = vmatpush1.bf16.msra.mxu0 %v3344
        %3360 = vmatprep.subr.bf16.mxu0 0
        %3361 = vmatpush1.bf16.msra.mxu0 %v3345
        %3362 = vmatprep.subr.bf16.mxu0 0
        %3363 = vmatpush1.bf16.msra.mxu0 %v3346
        %3364 = vmatprep.subr.bf16.mxu0 0
        %3365 = vmatpush1.bf16.msra.mxu0 %v3347
        %3366 = vmatprep.subr.bf16.mxu0 0
        %3367 = vmatpush1.bf16.msra.mxu0 %v3356
        %3368 = vmatprep.subr.bf16.mxu0 0
        %3369 = vmatpush1.bf16.msra.mxu0 0
        %3370 = vmatprep.subr.bf16.mxu0 0
        %3371 = vmatpush1.bf16.msra.mxu0 0
        %3372 = vmatprep.subr.bf16.mxu0 0
        %3373 = vmatpush1.bf16.msra.mxu0 0
        %3374 = vmatprep.subr.bf16.mxu0 0
        %3375 = vmatpush1.bf16.msra.mxu0 0
        %3376 = vmatprep.subr.bf16.mxu0 0
        %3377 = vmatpush1.bf16.msra.mxu0 0
        %3378 = vmatprep.subr.bf16.mxu0 0
        %3379 = vmatpush1.bf16.msra.mxu0 0
        %3380 = vmatprep.subr.bf16.mxu0 0
        %3381 = vmatpush1.bf16.msra.mxu0 0
        %3382 = vmatprep.subr.bf16.mxu0 0
        %3383 = vmatpush1.bf16.msra.mxu0 0
        %3384 = vmatprep.subr.bf16.mxu0 0
        %3385 = vmatpush1.bf16.msra.mxu0 0
        %3386 = vmatprep.subr.bf16.mxu0 0
        %3387 = vmatpush1.bf16.msra.mxu0 0
        %3388 = vmatprep.subr.bf16.mxu0 0
        %3389 = vmatpush1.bf16.msra.mxu0 0
        %3390 = vmatprep.mubr.bf16.mxu0 0
        %3391 = vmatmul.mubr.bf16.gmra.mrb[0].mxu0 %v3353
        %v3392 = vpop.f32.mrb[0].mxu0
        %v3393 = vadd.f32 %v3200, %v3392
        %v3394 = vpop.f32.mrb[0].mxu0
        %v3395 = vpop.f32.mrb[0].mxu0
        %v3396 = vadd.f32 %v3203, %v3395
        %v3397 = vpop.f32.mrb[0].mxu0
        %3398 = vmatprep.mubr.bf16.mxu0 0
        %3399 = vmatmul.mubr.bf16.gmra.mrb[0].mxu0 %v3130
        %v3400 = vpop.f32.mrb[0].mxu0
        %v3401 = vadd.f32 %v3208, %v3400
        %v3402 = vpop.f32.mrb[0].mxu0
        %v3403 = vpop.f32.mrb[0].mxu0
        %v3404 = vadd.f32 %v3211, %v3403
        %v3405 = vpop.f32.mrb[0].mxu0
        %3406 = vmatprep.mubr.bf16.mxu0 0
        %3407 = vmatmul.mubr.bf16.gmra.mrb[0].mxu0 %v3132
        %v3408 = vpop.f32.mrb[0].mxu0
        %v3409 = vadd.f32 %v3216, %v3408
        %v3410 = vpop.f32.mrb[0].mxu0
        %v3411 = vpop.f32.mrb[0].mxu0
        %v3412 = vadd.f32 %v3219, %v3411
        %v3413 = vpop.f32.mrb[0].mxu0
        %3414 = vmatprep.mubr.bf16.mxu0 0
        %3415 = vmatmul.mubr.bf16.gmra.mrb[0].mxu0 %v3134
        %v3416 = vpop.f32.mrb[0].mxu0
        %v3417 = vadd.f32 %v3224, %v3416
        %v3418 = vpop.f32.mrb[0].mxu0
        %v3419 = vpop.f32.mrb[0].mxu0
        %v3420 = vadd.f32 %v3227, %v3419
        %v3421 = vpop.f32.mrb[0].mxu0
        %3422 = vmatprep.mubr.bf16.mxu0 0
        %3423 = vmatmul.mubr.bf16.gmra.mrb[0].mxu0 %v3136
        %v3424 = vpop.f32.mrb[0].mxu0
        %v3425 = vadd.f32 %v3232, %v3424
        %v3426 = vpop.f32.mrb[0].mxu0
        %v3427 = vpop.f32.mrb[0].mxu0
        %v3428 = vadd.f32 %v3235, %v3427
        %v3429 = vpop.f32.mrb[0].mxu0
        %3430 = vmatprep.mubr.bf16.mxu0 0
        %3431 = vmatmul.mubr.bf16.gmra.mrb[0].mxu0 %v3138
        %v3432 = vpop.f32.mrb[0].mxu0
        %v3433 = vadd.f32 %v3240, %v3432
        %v3434 = vpop.f32.mrb[0].mxu0
        %v3435 = vpop.f32.mrb[0].mxu0
        %v3436 = vadd.f32 %v3243, %v3435
        %v3437 = vpop.f32.mrb[0].mxu0
        %3438 = vmatprep.mubr.bf16.mxu0 0
        %3439 = vmatmul.mubr.bf16.gmra.mrb[0].mxu0 %v3140
        %v3440 = vpop.f32.mrb[0].mxu0
        %v3441 = vadd.f32 %v3248, %v3440
        %v3442 = vpop.f32.mrb[0].mxu0
        %v3443 = vpop.f32.mrb[0].mxu0
        %v3444 = vadd.f32 %v3251, %v3443
        %v3445 = vpop.f32.mrb[0].mxu0
        %3446 = vmatprep.mubr.bf16.mxu0 0
        %3447 = vmatmul.mubr.bf16.gmra.mrb[0].mxu0 %v3142
        %v3448 = vpop.f32.mrb[0].mxu0
        %v3449 = vadd.f32 %v3256, %v3448
        %v3450 = vpop.f32.mrb[0].mxu0
        %v3451 = vpop.f32.mrb[0].mxu0
        %v3452 = vadd.f32 %v3259, %v3451
        %v3453 = vpop.f32.mrb[0].mxu0
        %3454 = vmatprep.mubr.bf16.mxu0 0
        %3455 = vmatmul.mubr.bf16.gmra.mrb[0].mxu0 %v3144
        %v3456 = vpop.f32.mrb[0].mxu0
        %v3457 = vadd.f32 %v3264, %v3456
        %v3458 = vpop.f32.mrb[0].mxu0
        %v3459 = vpop.f32.mrb[0].mxu0
        %v3460 = vadd.f32 %v3267, %v3459
        %v3461 = vpop.f32.mrb[0].mxu0
        %3462 = vmatprep.mubr.bf16.mxu0 0
        %3463 = vmatmul.mubr.bf16.gmra.mrb[0].mxu0 %v3146
        %v3464 = vpop.f32.mrb[0].mxu0
        %v3465 = vadd.f32 %v3272, %v3464
        %v3466 = vpop.f32.mrb[0].mxu0
        %v3467 = vpop.f32.mrb[0].mxu0
        %v3468 = vadd.f32 %v3275, %v3467
        %v3469 = vpop.f32.mrb[0].mxu0
        %3470 = vmatprep.mubr.bf16.mxu0 0
        %3471 = vmatmul.mubr.bf16.gmra.mrb[0].mxu0 %v3148
        %v3472 = vpop.f32.mrb[0].mxu0
        %v3473 = vadd.f32 %v3280, %v3472
        %v3474 = vpop.f32.mrb[0].mxu0
        %v3475 = vpop.f32.mrb[0].mxu0
        %v3476 = vadd.f32 %v3283, %v3475
        %v3477 = vpop.f32.mrb[0].mxu0
        %3478 = vmatprep.mubr.bf16.mxu0 0
        %3479 = vmatmul.mubr.bf16.gmra.mrb[0].mxu0 %v3150
        %v3480 = vpop.f32.mrb[0].mxu0
        %v3481 = vadd.f32 %v3288, %v3480
        %v3482 = vpop.f32.mrb[0].mxu0
        %v3483 = vpop.f32.mrb[0].mxu0
        %v3484 = vadd.f32 %v3291, %v3483
        %v3485 = vpop.f32.mrb[0].mxu0
        %3486 = vmatprep.mubr.bf16.mxu0 0
        %3487 = vmatmul.mubr.bf16.gmra.mrb[0].mxu0 %v3152
        %v3488 = vpop.f32.mrb[0].mxu0
        %v3489 = vadd.f32 %v3296, %v3488
        %v3490 = vpop.f32.mrb[0].mxu0
        %v3491 = vpop.f32.mrb[0].mxu0
        %v3492 = vadd.f32 %v3299, %v3491
        %v3493 = vpop.f32.mrb[0].mxu0
        %3494 = vmatprep.mubr.bf16.mxu0 0
        %3495 = vmatmul.mubr.bf16.gmra.mrb[0].mxu0 %v3154
        %v3496 = vpop.f32.mrb[0].mxu0
        %v3497 = vadd.f32 %v3304, %v3496
        %v3498 = vpop.f32.mrb[0].mxu0
        %v3499 = vpop.f32.mrb[0].mxu0
        %v3500 = vadd.f32 %v3307, %v3499
        %v3501 = vpop.f32.mrb[0].mxu0
        %3502 = vmatprep.mubr.bf16.mxu0 0
        %3503 = vmatmul.mubr.bf16.gmra.mrb[0].mxu0 %v3156
        %v3504 = vpop.f32.mrb[0].mxu0
        %v3505 = vadd.f32 %v3312, %v3504
        %v3506 = vpop.f32.mrb[0].mxu0
        %v3507 = vpop.f32.mrb[0].mxu0
        %v3508 = vadd.f32 %v3315, %v3507
        %v3509 = vpop.f32.mrb[0].mxu0
        %3510 = vmatprep.mubr.bf16.mxu0 0
        %3511 = vmatmul.mubr.bf16.gmra.mrb[0].mxu0 %v3158
        %v3512 = vpop.f32.mrb[0].mxu0
        %v3513 = vadd.f32 %v3320, %v3512
        %v3514 = vpop.f32.mrb[0].mxu0
        %v3515 = vpop.f32.mrb[0].mxu0
        %v3516 = vadd.f32 %v3323, %v3515
        %v3517 = vpop.f32.mrb[0].mxu0
        %3518 = vdwg.mxu0
        %v3520 = vshrl.u32 %v2145, 16
        %v3522 = vshll.u32 %v2145, 16
        %v3524 = vrot.slane %v3522, 1
        %v3525 = vor.u32 %v3520, %v3524
        %v3527 = vshll.u32 %v2163, 16
        %v3529 = vrot.slane %v3527, 1
        %v3530 = vsel %vm2164, %v3525, %v3529
        %v3533 = vrot.slane %v2145, 1
        %v3534 = vrot.slane %v2163, 1
        %v3535 = vsel %vm2389, %v3533, %v3534
        %v3537 = vshrl.u32 %v1925, 16
        %v3539 = vshll.u32 %v1925, 16
        %v3541 = vrot.slane %v3539, 1
        %v3542 = vor.u32 %v3537, %v3541
        %v3544 = vshll.u32 %v1926, 16
        %v3546 = vrot.slane %v3544, 1
        %v3547 = vsel %vm2164, %v3542, %v3546
        %v3550 = vrot.slane %v1925, 1
        %v3551 = vrot.slane %v1926, 1
        %v3552 = vsel %vm2389, %v3550, %v3551
        %3553 = vrot.lane.b32.xlu0 %v3530, 16
        %v3554 = vpop.permute.xlu0 %3553
        %3555 = vrot.lane.b32.xlu0 %v3535, 32
        %v3556 = vpop.permute.xlu0 %3555
        %3557 = vrot.lane.b32.xlu0 %v1925, 48
        %v3558 = vpop.permute.xlu0 %3557
        %3559 = vrot.lane.b32.xlu0 %v3547, 56
        %v3560 = vpop.permute.xlu0 %3559
        %3561 = vrot.lane.b32.xlu0 %v3552, 64
        %v3562 = vpop.permute.xlu0 %3561
        %v3564 = vsel %vm841, %v2145, %v3554
        %v3566 = vsel %vm847, %v3564, %v3556
        %v3568 = vsel %vm853, %v3566, %v3558
        %v3570 = vsel %vm856, %v3568, %v3560
        %v3572 = vsel %vm859, %v3570, %v3562
        %s3573 = scalar_lea.vmem %s3, 72
        %v3574 = vld [vmem:[%s3573] sm:$0xf]
        %v3575 = vld [vmem:[%s3573 + $0x4] sm:$0xf]
        %v3576 = vld [vmem:[%s3573 + $0x8] sm:$0xf]
        %v3577 = vld [vmem:[%s3573 + $0xc] sm:$0xf]
        %v3578 = vld [vmem:[%s3573 + $0x10] sm:$0xf]
        %v3579 = vld [vmem:[%s3573 + $0x14] sm:$0xf]
        %v3580 = vld [vmem:[%s3573 + $0x18] sm:$0xf]
        %v3581 = vld [vmem:[%s3573 + $0x1c] sm:$0xf]
        %v3582 = vld [vmem:[%s3573 + $0x20] sm:$0xf]
        %v3592 = vunpack.c.l.b16 %v3574
        %v3593 = vunpack.c.l.b16 %v3575
        %v3594 = vunpack.c.l.b16 %v3576
        %v3595 = vunpack.c.l.b16 %v3577
        %v3596 = vunpack.c.l.b16 %v3578
        %v3597 = vunpack.c.l.b16 %v3579
        %v3598 = vunpack.c.l.b16 %v3580
        %v3599 = vunpack.c.l.b16 %v3581
        %v3600 = vunpack.c.l.b16 %v3582
        %v3601 = vpack.c.b16 %v3593, %v3592
        %v3602 = vpack.c.b16 %v3595, %v3594
        %v3603 = vpack.c.b16 %v3597, %v3596
        %v3604 = vpack.c.b16 %v3599, %v3598
        %v3605 = vpack.c.b16 %v3600, %v3600
        %v3610 = vsel %vm862, %v3572, 0
        %v3613 = vsel %vm900, %v3605, 0
        %3615 = vmatprep.subr.bf16.mxu0 0
        %3616 = vmatpush1.bf16.msra.mxu0 %v3601
        %3617 = vmatprep.subr.bf16.mxu0 0
        %3618 = vmatpush1.bf16.msra.mxu0 %v3602
        %3619 = vmatprep.subr.bf16.mxu0 0
        %3620 = vmatpush1.bf16.msra.mxu0 %v3603
        %3621 = vmatprep.subr.bf16.mxu0 0
        %3622 = vmatpush1.bf16.msra.mxu0 %v3604
        %3623 = vmatprep.subr.bf16.mxu0 0
        %3624 = vmatpush1.bf16.msra.mxu0 %v3613
        %3625 = vmatprep.subr.bf16.mxu0 0
        %3626 = vmatpush1.bf16.msra.mxu0 0
        %3627 = vmatprep.subr.bf16.mxu0 0
        %3628 = vmatpush1.bf16.msra.mxu0 0
        %3629 = vmatprep.subr.bf16.mxu0 0
        %3630 = vmatpush1.bf16.msra.mxu0 0
        %3631 = vmatprep.subr.bf16.mxu0 0
        %3632 = vmatpush1.bf16.msra.mxu0 0
        %3633 = vmatprep.subr.bf16.mxu0 0
        %3634 = vmatpush1.bf16.msra.mxu0 0
        %3635 = vmatprep.subr.bf16.mxu0 0
        %3636 = vmatpush1.bf16.msra.mxu0 0
        %3637 = vmatprep.subr.bf16.mxu0 0
        %3638 = vmatpush1.bf16.msra.mxu0 0
        %3639 = vmatprep.subr.bf16.mxu0 0
        %3640 = vmatpush1.bf16.msra.mxu0 0
        %3641 = vmatprep.subr.bf16.mxu0 0
        %3642 = vmatpush1.bf16.msra.mxu0 0
        %3643 = vmatprep.subr.bf16.mxu0 0
        %3644 = vmatpush1.bf16.msra.mxu0 0
        %3645 = vmatprep.subr.bf16.mxu0 0
        %3646 = vmatpush1.bf16.msra.mxu0 0
        %3647 = vmatprep.mubr.bf16.mxu0 0
        %3648 = vmatmul.mubr.bf16.gmra.mrb[0].mxu0 %v3132
        %v3649 = vpop.f32.mrb[0].mxu0
        %v3650 = vadd.f32 0.0, %v3649
        %v3651 = vpop.f32.mrb[0].mxu0
        %v3652 = vpop.f32.mrb[0].mxu0
        %v3653 = vadd.f32 0.0, %v3652
        %v3654 = vpop.f32.mrb[0].mxu0
        %3655 = vmatprep.mubr.bf16.mxu0 0
        %3656 = vmatmul.mubr.bf16.gmra.mrb[0].mxu0 %v3134
        %v3657 = vpop.f32.mrb[0].mxu0
        %v3658 = vadd.f32 0.0, %v3657
        %v3659 = vpop.f32.mrb[0].mxu0
        %v3660 = vpop.f32.mrb[0].mxu0
        %v3661 = vadd.f32 0.0, %v3660
        %v3662 = vpop.f32.mrb[0].mxu0
        %3663 = vmatprep.mubr.bf16.mxu0 0
        %3664 = vmatmul.mubr.bf16.gmra.mrb[0].mxu0 %v3136
        %v3665 = vpop.f32.mrb[0].mxu0
        %v3666 = vadd.f32 0.0, %v3665
        %v3667 = vpop.f32.mrb[0].mxu0
        %v3668 = vpop.f32.mrb[0].mxu0
        %v3669 = vadd.f32 0.0, %v3668
        %v3670 = vpop.f32.mrb[0].mxu0
        %3671 = vmatprep.mubr.bf16.mxu0 0
        %3672 = vmatmul.mubr.bf16.gmra.mrb[0].mxu0 %v3138
        %v3673 = vpop.f32.mrb[0].mxu0
        %v3674 = vadd.f32 0.0, %v3673
        %v3675 = vpop.f32.mrb[0].mxu0
        %v3676 = vpop.f32.mrb[0].mxu0
        %v3677 = vadd.f32 0.0, %v3676
        %v3678 = vpop.f32.mrb[0].mxu0
        %3679 = vmatprep.mubr.bf16.mxu0 0
        %3680 = vmatmul.mubr.bf16.gmra.mrb[0].mxu0 %v3140
        %v3681 = vpop.f32.mrb[0].mxu0
        %v3682 = vadd.f32 0.0, %v3681
        %v3683 = vpop.f32.mrb[0].mxu0
        %v3684 = vpop.f32.mrb[0].mxu0
        %v3685 = vadd.f32 0.0, %v3684
        %v3686 = vpop.f32.mrb[0].mxu0
        %3687 = vmatprep.mubr.bf16.mxu0 0
        %3688 = vmatmul.mubr.bf16.gmra.mrb[0].mxu0 %v3142
        %v3689 = vpop.f32.mrb[0].mxu0
        %v3690 = vadd.f32 0.0, %v3689
        %v3691 = vpop.f32.mrb[0].mxu0
        %v3692 = vpop.f32.mrb[0].mxu0
        %v3693 = vadd.f32 0.0, %v3692
        %v3694 = vpop.f32.mrb[0].mxu0
        %3695 = vmatprep.mubr.bf16.mxu0 0
        %3696 = vmatmul.mubr.bf16.gmra.mrb[0].mxu0 %v3144
        %v3697 = vpop.f32.mrb[0].mxu0
        %v3698 = vadd.f32 0.0, %v3697
        %v3699 = vpop.f32.mrb[0].mxu0
        %v3700 = vpop.f32.mrb[0].mxu0
        %v3701 = vadd.f32 0.0, %v3700
        %v3702 = vpop.f32.mrb[0].mxu0
        %3703 = vmatprep.mubr.bf16.mxu0 0
        %3704 = vmatmul.mubr.bf16.gmra.mrb[0].mxu0 %v3146
        %v3705 = vpop.f32.mrb[0].mxu0
        %v3706 = vadd.f32 0.0, %v3705
        %v3707 = vpop.f32.mrb[0].mxu0
        %v3708 = vpop.f32.mrb[0].mxu0
        %v3709 = vadd.f32 0.0, %v3708
        %v3710 = vpop.f32.mrb[0].mxu0
        %3711 = vmatprep.mubr.bf16.mxu0 0
        %3712 = vmatmul.mubr.bf16.gmra.mrb[0].mxu0 %v3148
        %v3713 = vpop.f32.mrb[0].mxu0
        %v3714 = vadd.f32 0.0, %v3713
        %v3715 = vpop.f32.mrb[0].mxu0
        %v3716 = vpop.f32.mrb[0].mxu0
        %v3717 = vadd.f32 0.0, %v3716
        %v3718 = vpop.f32.mrb[0].mxu0
        %3719 = vmatprep.mubr.bf16.mxu0 0
        %3720 = vmatmul.mubr.bf16.gmra.mrb[0].mxu0 %v3150
        %v3721 = vpop.f32.mrb[0].mxu0
        %v3722 = vadd.f32 0.0, %v3721
        %v3723 = vpop.f32.mrb[0].mxu0
        %v3724 = vpop.f32.mrb[0].mxu0
        %v3725 = vadd.f32 0.0, %v3724
        %v3726 = vpop.f32.mrb[0].mxu0
        %3727 = vmatprep.mubr.bf16.mxu0 0
        %3728 = vmatmul.mubr.bf16.gmra.mrb[0].mxu0 %v3152
        %v3729 = vpop.f32.mrb[0].mxu0
        %v3730 = vadd.f32 0.0, %v3729
        %v3731 = vpop.f32.mrb[0].mxu0
        %v3732 = vpop.f32.mrb[0].mxu0
        %v3733 = vadd.f32 0.0, %v3732
        %v3734 = vpop.f32.mrb[0].mxu0
        %3735 = vmatprep.mubr.bf16.mxu0 0
        %3736 = vmatmul.mubr.bf16.gmra.mrb[0].mxu0 %v3154
        %v3737 = vpop.f32.mrb[0].mxu0
        %v3738 = vadd.f32 0.0, %v3737
        %v3739 = vpop.f32.mrb[0].mxu0
        %v3740 = vpop.f32.mrb[0].mxu0
        %v3741 = vadd.f32 0.0, %v3740
        %v3742 = vpop.f32.mrb[0].mxu0
        %3743 = vmatprep.mubr.bf16.mxu0 0
        %3744 = vmatmul.mubr.bf16.gmra.mrb[0].mxu0 %v3156
        %v3745 = vpop.f32.mrb[0].mxu0
        %v3746 = vadd.f32 0.0, %v3745
        %v3747 = vpop.f32.mrb[0].mxu0
        %v3748 = vpop.f32.mrb[0].mxu0
        %v3749 = vadd.f32 0.0, %v3748
        %v3750 = vpop.f32.mrb[0].mxu0
        %3751 = vmatprep.mubr.bf16.mxu0 0
        %3752 = vmatmul.mubr.bf16.gmra.mrb[0].mxu0 %v3158
        %v3753 = vpop.f32.mrb[0].mxu0
        %v3754 = vadd.f32 0.0, %v3753
        %v3755 = vpop.f32.mrb[0].mxu0
        %v3756 = vpop.f32.mrb[0].mxu0
        %v3757 = vadd.f32 0.0, %v3756
        %v3758 = vpop.f32.mrb[0].mxu0
        %3759 = vmatprep.mubr.bf16.mxu0 0
        %3760 = vmatmul.mubr.bf16.gmra.mrb[0].mxu0 %v3160
        %v3761 = vpop.f32.mrb[0].mxu0
        %v3762 = vadd.f32 0.0, %v3761
        %v3763 = vpop.f32.mrb[0].mxu0
        %v3764 = vpop.f32.mrb[0].mxu0
        %v3765 = vadd.f32 0.0, %v3764
        %v3766 = vpop.f32.mrb[0].mxu0
        %3767 = vmatprep.mubr.bf16.mxu0 0
        %3768 = vmatmul.mubr.bf16.gmra.mrb[0].mxu0 %v3610
        %v3769 = vpop.f32.mrb[0].mxu0
        %v3770 = vadd.f32 0.0, %v3769
        %v3771 = vpop.f32.mrb[0].mxu0
        %v3772 = vpop.f32.mrb[0].mxu0
        %v3773 = vadd.f32 0.0, %v3772
        %v3774 = vpop.f32.mrb[0].mxu0
        %3775 = vdwg.mxu0
        %v3776 = vadd.f32 %v3393, %v3650
        %v3777 = vadd.f32 %v3396, %v3653
        %v3778 = vadd.f32 %v3401, %v3658
        %v3779 = vadd.f32 %v3404, %v3661
        %v3780 = vadd.f32 %v3409, %v3666
        %v3781 = vadd.f32 %v3412, %v3669
        %v3782 = vadd.f32 %v3417, %v3674
        %v3783 = vadd.f32 %v3420, %v3677
        %v3784 = vadd.f32 %v3425, %v3682
        %v3785 = vadd.f32 %v3428, %v3685
        %v3786 = vadd.f32 %v3433, %v3690
        %v3787 = vadd.f32 %v3436, %v3693
        %v3788 = vadd.f32 %v3441, %v3698
        %v3789 = vadd.f32 %v3444, %v3701
        %v3790 = vadd.f32 %v3449, %v3706
        %v3791 = vadd.f32 %v3452, %v3709
        %v3792 = vadd.f32 %v3457, %v3714
        %v3793 = vadd.f32 %v3460, %v3717
        %v3794 = vadd.f32 %v3465, %v3722
        %v3795 = vadd.f32 %v3468, %v3725
        %v3796 = vadd.f32 %v3473, %v3730
        %v3797 = vadd.f32 %v3476, %v3733
        %v3798 = vadd.f32 %v3481, %v3738
        %v3799 = vadd.f32 %v3484, %v3741
        %v3800 = vadd.f32 %v3489, %v3746
        %v3801 = vadd.f32 %v3492, %v3749
        %v3802 = vadd.f32 %v3497, %v3754
        %v3803 = vadd.f32 %v3500, %v3757
        %v3804 = vadd.f32 %v3505, %v3762
        %v3805 = vadd.f32 %v3508, %v3765
        %v3806 = vadd.f32 %v3513, %v3770
        %v3807 = vadd.f32 %v3516, %v3773
        %v3808 = vld [vmem:[%s5] sm:$0x1]
        %v3810 = vlaneseq
        %v3811 = vshrl.u32 %v3810, 7
        %v3812 = vsub.s32 0, %v3811
        %v3813 = vrot.slane %v3808, %v3812
        %v3815 = vmul.f32 %v3776, %v3813
        %v3816 = vmul.f32 %v3777, %v3813
        %v3817 = vmul.f32 %v3778, %v3813
        %v3818 = vmul.f32 %v3779, %v3813
        %v3819 = vmul.f32 %v3780, %v3813
        %v3820 = vmul.f32 %v3781, %v3813
        %v3821 = vmul.f32 %v3782, %v3813
        %v3822 = vmul.f32 %v3783, %v3813
        %v3823 = vmul.f32 %v3784, %v3813
        %v3824 = vmul.f32 %v3785, %v3813
        %v3825 = vmul.f32 %v3786, %v3813
        %v3826 = vmul.f32 %v3787, %v3813
        %v3827 = vmul.f32 %v3788, %v3813
        %v3828 = vmul.f32 %v3789, %v3813
        %v3829 = vmul.f32 %v3790, %v3813
        %v3830 = vmul.f32 %v3791, %v3813
        %v3831 = vmul.f32 %v3792, %v3813
        %v3832 = vmul.f32 %v3793, %v3813
        %v3833 = vmul.f32 %v3794, %v3813
        %v3834 = vmul.f32 %v3795, %v3813
        %v3835 = vmul.f32 %v3796, %v3813
        %v3836 = vmul.f32 %v3797, %v3813
        %v3837 = vmul.f32 %v3798, %v3813
        %v3838 = vmul.f32 %v3799, %v3813
        %v3839 = vmul.f32 %v3800, %v3813
        %v3840 = vmul.f32 %v3801, %v3813
        %v3841 = vmul.f32 %v3802, %v3813
        %v3842 = vmul.f32 %v3803, %v3813
        %v3843 = vmul.f32 %v3804, %v3813
        %v3844 = vmul.f32 %v3805, %v3813
        %v3845 = vmul.f32 %v3806, %v3813
        %v3846 = vmul.f32 %v3807, %v3813
        %v3847 = vld [vmem:[%s6] sm:$0x1]
        %v3849 = vlaneseq
        %v3850 = vshrl.u32 %v3849, 7
        %v3851 = vsub.s32 0, %v3850
        %v3852 = vrot.slane %v3847, %v3851
        %v3854 = vadd.f32 %v3815, %v3852
        %v3855 = vadd.f32 %v3816, %v3852
        %v3856 = vadd.f32 %v3817, %v3852
        %v3857 = vadd.f32 %v3818, %v3852
        %v3858 = vadd.f32 %v3819, %v3852
        %v3859 = vadd.f32 %v3820, %v3852
        %v3860 = vadd.f32 %v3821, %v3852
        %v3861 = vadd.f32 %v3822, %v3852
        %v3862 = vadd.f32 %v3823, %v3852
        %v3863 = vadd.f32 %v3824, %v3852
        %v3864 = vadd.f32 %v3825, %v3852
        %v3865 = vadd.f32 %v3826, %v3852
        %v3866 = vadd.f32 %v3827, %v3852
        %v3867 = vadd.f32 %v3828, %v3852
        %v3868 = vadd.f32 %v3829, %v3852
        %v3869 = vadd.f32 %v3830, %v3852
        %v3870 = vadd.f32 %v3831, %v3852
        %v3871 = vadd.f32 %v3832, %v3852
        %v3872 = vadd.f32 %v3833, %v3852
        %v3873 = vadd.f32 %v3834, %v3852
        %v3874 = vadd.f32 %v3835, %v3852
        %v3875 = vadd.f32 %v3836, %v3852
        %v3876 = vadd.f32 %v3837, %v3852
        %v3877 = vadd.f32 %v3838, %v3852
        %v3878 = vadd.f32 %v3839, %v3852
        %v3879 = vadd.f32 %v3840, %v3852
        %v3880 = vadd.f32 %v3841, %v3852
        %v3881 = vadd.f32 %v3842, %v3852
        %v3882 = vadd.f32 %v3843, %v3852
        %v3883 = vadd.f32 %v3844, %v3852
        %v3884 = vadd.f32 %v3845, %v3852
        %v3885 = vadd.f32 %v3846, %v3852
        %v3886 = vmax.f32 %v3854, 0.0
        %v3887 = vmax.f32 %v3855, 0.0
        %v3888 = vmax.f32 %v3856, 0.0
        %v3889 = vmax.f32 %v3857, 0.0
        %v3890 = vmax.f32 %v3858, 0.0
        %v3891 = vmax.f32 %v3859, 0.0
        %v3892 = vmax.f32 %v3860, 0.0
        %v3893 = vmax.f32 %v3861, 0.0
        %v3894 = vmax.f32 %v3862, 0.0
        %v3895 = vmax.f32 %v3863, 0.0
        %v3896 = vmax.f32 %v3864, 0.0
        %v3897 = vmax.f32 %v3865, 0.0
        %v3898 = vmax.f32 %v3866, 0.0
        %v3899 = vmax.f32 %v3867, 0.0
        %v3900 = vmax.f32 %v3868, 0.0
        %v3901 = vmax.f32 %v3869, 0.0
        %v3902 = vmax.f32 %v3870, 0.0
        %v3903 = vmax.f32 %v3871, 0.0
        %v3904 = vmax.f32 %v3872, 0.0
        %v3905 = vmax.f32 %v3873, 0.0
        %v3906 = vmax.f32 %v3874, 0.0
        %v3907 = vmax.f32 %v3875, 0.0
        %v3908 = vmax.f32 %v3876, 0.0
        %v3909 = vmax.f32 %v3877, 0.0
        %v3910 = vmax.f32 %v3878, 0.0
        %v3911 = vmax.f32 %v3879, 0.0
        %v3912 = vmax.f32 %v3880, 0.0
        %v3913 = vmax.f32 %v3881, 0.0
        %v3914 = vmax.f32 %v3882, 0.0
        %v3915 = vmax.f32 %v3883, 0.0
        %v3916 = vmax.f32 %v3884, 0.0
        %v3917 = vmax.f32 %v3885, 0.0
        %v3918 = vunpack.c.l.bf16 %v1946
        %v3919 = vunpack.c.h.bf16 %v1946
        %v3920 = vunpack.c.l.bf16 %v1947
        %v3921 = vunpack.c.h.bf16 %v1947
        %v3922 = vunpack.c.l.bf16 %v1948
        %v3923 = vunpack.c.h.bf16 %v1948
        %v3924 = vunpack.c.l.bf16 %v1949
        %v3925 = vunpack.c.h.bf16 %v1949
        %v3926 = vunpack.c.l.bf16 %v1950
        %v3927 = vunpack.c.h.bf16 %v1950
        %v3928 = vunpack.c.l.bf16 %v1951
        %v3929 = vunpack.c.h.bf16 %v1951
        %v3930 = vunpack.c.l.bf16 %v1952
        %v3931 = vunpack.c.h.bf16 %v1952
        %v3932 = vunpack.c.l.bf16 %v1953
        %v3933 = vunpack.c.h.bf16 %v1953
        %v3934 = vunpack.c.l.bf16 %v1954
        %v3935 = vunpack.c.h.bf16 %v1954
        %v3936 = vunpack.c.l.bf16 %v1955
        %v3937 = vunpack.c.h.bf16 %v1955
        %v3938 = vunpack.c.l.bf16 %v1956
        %v3939 = vunpack.c.h.bf16 %v1956
        %v3940 = vunpack.c.l.bf16 %v1957
        %v3941 = vunpack.c.h.bf16 %v1957
        %v3942 = vunpack.c.l.bf16 %v1958
        %v3943 = vunpack.c.h.bf16 %v1958
        %v3944 = vunpack.c.l.bf16 %v1959
        %v3945 = vunpack.c.h.bf16 %v1959
        %v3946 = vunpack.c.l.bf16 %v1960
        %v3947 = vunpack.c.h.bf16 %v1960
        %v3948 = vunpack.c.l.bf16 %v1961
        %v3949 = vunpack.c.h.bf16 %v1961
        %3982 = vrot.lane.b32.xlu0 %v3918, 120
        %v3983 = vpop.permute.xlu0 %3982
        %3984 = vrot.lane.b32.xlu0 %v3919, 120
        %v3985 = vpop.permute.xlu0 %3984
        %3986 = vrot.lane.b32.xlu0 %v3920, 120
        %v3987 = vpop.permute.xlu0 %3986
        %3988 = vrot.lane.b32.xlu0 %v3921, 120
        %v3989 = vpop.permute.xlu0 %3988
        %3990 = vrot.lane.b32.xlu0 %v3922, 120
        %v3991 = vpop.permute.xlu0 %3990
        %3992 = vrot.lane.b32.xlu0 %v3923, 120
        %v3993 = vpop.permute.xlu0 %3992
        %3994 = vrot.lane.b32.xlu0 %v3924, 120
        %v3995 = vpop.permute.xlu0 %3994
        %3996 = vrot.lane.b32.xlu0 %v3925, 120
        %v3997 = vpop.permute.xlu0 %3996
        %3998 = vrot.lane.b32.xlu0 %v3926, 120
        %v3999 = vpop.permute.xlu0 %3998
        %4000 = vrot.lane.b32.xlu0 %v3927, 120
        %v4001 = vpop.permute.xlu0 %4000
        %4002 = vrot.lane.b32.xlu0 %v3928, 120
        %v4003 = vpop.permute.xlu0 %4002
        %4004 = vrot.lane.b32.xlu0 %v3929, 120
        %v4005 = vpop.permute.xlu0 %4004
        %4006 = vrot.lane.b32.xlu0 %v3930, 120
        %v4007 = vpop.permute.xlu0 %4006
        %4008 = vrot.lane.b32.xlu0 %v3931, 120
        %v4009 = vpop.permute.xlu0 %4008
        %4010 = vrot.lane.b32.xlu0 %v3932, 120
        %v4011 = vpop.permute.xlu0 %4010
        %4012 = vrot.lane.b32.xlu0 %v3933, 120
        %v4013 = vpop.permute.xlu0 %4012
        %4014 = vrot.lane.b32.xlu0 %v3934, 120
        %v4015 = vpop.permute.xlu0 %4014
        %4016 = vrot.lane.b32.xlu0 %v3935, 120
        %v4017 = vpop.permute.xlu0 %4016
        %4018 = vrot.lane.b32.xlu0 %v3936, 120
        %v4019 = vpop.permute.xlu0 %4018
        %4020 = vrot.lane.b32.xlu0 %v3937, 120
        %v4021 = vpop.permute.xlu0 %4020
        %4022 = vrot.lane.b32.xlu0 %v3938, 120
        %v4023 = vpop.permute.xlu0 %4022
        %4024 = vrot.lane.b32.xlu0 %v3939, 120
        %v4025 = vpop.permute.xlu0 %4024
        %4026 = vrot.lane.b32.xlu0 %v3940, 120
        %v4027 = vpop.permute.xlu0 %4026
        %4028 = vrot.lane.b32.xlu0 %v3941, 120
        %v4029 = vpop.permute.xlu0 %4028
        %4030 = vrot.lane.b32.xlu0 %v3942, 120
        %v4031 = vpop.permute.xlu0 %4030
        %4032 = vrot.lane.b32.xlu0 %v3943, 120
        %v4033 = vpop.permute.xlu0 %4032
        %4034 = vrot.lane.b32.xlu0 %v3944, 120
        %v4035 = vpop.permute.xlu0 %4034
        %4036 = vrot.lane.b32.xlu0 %v3945, 120
        %v4037 = vpop.permute.xlu0 %4036
        %4038 = vrot.lane.b32.xlu0 %v3946, 120
        %v4039 = vpop.permute.xlu0 %4038
        %4040 = vrot.lane.b32.xlu0 %v3947, 120
        %v4041 = vpop.permute.xlu0 %4040
        %4042 = vrot.lane.b32.xlu0 %v3948, 120
        %v4043 = vpop.permute.xlu0 %4042
        %4044 = vrot.lane.b32.xlu0 %v3949, 120
        %v4045 = vpop.permute.xlu0 %4044
        %v4078 = vadd.f32 %v3918, %v3983
        %v4079 = vadd.f32 %v3919, %v3985
        %v4080 = vadd.f32 %v3920, %v3987
        %v4081 = vadd.f32 %v3921, %v3989
        %v4082 = vadd.f32 %v3922, %v3991
        %v4083 = vadd.f32 %v3923, %v3993
        %v4084 = vadd.f32 %v3924, %v3995
        %v4085 = vadd.f32 %v3925, %v3997
        %v4086 = vadd.f32 %v3926, %v3999
        %v4087 = vadd.f32 %v3927, %v4001
        %v4088 = vadd.f32 %v3928, %v4003
        %v4089 = vadd.f32 %v3929, %v4005
        %v4090 = vadd.f32 %v3930, %v4007
        %v4091 = vadd.f32 %v3931, %v4009
        %v4092 = vadd.f32 %v3932, %v4011
        %v4093 = vadd.f32 %v3933, %v4013
        %v4094 = vadd.f32 %v3934, %v4015
        %v4095 = vadd.f32 %v3935, %v4017
        %v4096 = vadd.f32 %v3936, %v4019
        %v4097 = vadd.f32 %v3937, %v4021
        %v4098 = vadd.f32 %v3938, %v4023
        %v4099 = vadd.f32 %v3939, %v4025
        %v4100 = vadd.f32 %v3940, %v4027
        %v4101 = vadd.f32 %v3941, %v4029
        %v4102 = vadd.f32 %v3942, %v4031
        %v4103 = vadd.f32 %v3943, %v4033
        %v4104 = vadd.f32 %v3944, %v4035
        %v4105 = vadd.f32 %v3945, %v4037
        %v4106 = vadd.f32 %v3946, %v4039
        %v4107 = vadd.f32 %v3947, %v4041
        %v4108 = vadd.f32 %v3948, %v4043
        %v4109 = vadd.f32 %v3949, %v4045
        %vm4158 = vcmask 1046528
        %v4159 = vrot.slane %v1234, 1
        %v4160 = vrot.slane %v1370, 1
        %v4161 = vsel %vm4158, %v4159, %v4160
        %v4162 = vrot.slane %v1439, 1
        %v4163 = vsel %vm4158, %v4160, %v4162
        %v4164 = vrot.slane %v1235, 1
        %v4165 = vrot.slane %v1371, 1
        %v4166 = vsel %vm4158, %v4164, %v4165
        %v4167 = vrot.slane %v1422, 1
        %v4168 = vsel %vm4158, %v4165, %v4167
        %v4169 = vrot.slane %v1236, 1
        %v4170 = vrot.slane %v1372, 1
        %v4171 = vsel %vm4158, %v4169, %v4170
        %v4172 = vrot.slane %v1440, 1
        %v4173 = vsel %vm4158, %v4170, %v4172
        %v4174 = vrot.slane %v1237, 1
        %v4175 = vrot.slane %v1373, 1
        %v4176 = vsel %vm4158, %v4174, %v4175
        %v4177 = vrot.slane %v1431, 1
        %v4178 = vsel %vm4158, %v4175, %v4177
        %v4179 = vrot.slane %v1238, 1
        %v4180 = vrot.slane %v1374, 1
        %v4181 = vsel %vm4158, %v4179, %v4180
        %v4182 = vrot.slane %v1441, 1
        %v4183 = vsel %vm4158, %v4180, %v4182
        %v4184 = vrot.slane %v1239, 1
        %v4185 = vrot.slane %v1375, 1
        %v4186 = vsel %vm4158, %v4184, %v4185
        %v4187 = vrot.slane %v1438, 1
        %v4188 = vsel %vm4158, %v4185, %v4187
        %v4189 = vrot.slane %v1240, 1
        %v4190 = vrot.slane %v1376, 1
        %v4191 = vsel %vm4158, %v4189, %v4190
        %v4192 = vrot.slane %v1442, 1
        %v4193 = vsel %vm4158, %v4190, %v4192
        %v4194 = vrot.slane %v1571, 1
        %v4195 = vrot.slane %v1707, 1
        %v4196 = vsel %vm4158, %v4194, %v4195
        %v4197 = vrot.slane %v1753, 1
        %v4198 = vsel %vm4158, %v4195, %v4197
        %v4199 = vrot.slane %v1572, 1
        %v4200 = vrot.slane %v1708, 1
        %v4201 = vsel %vm4158, %v4199, %v4200
        %v4202 = vrot.slane %v1777, 1
        %v4203 = vsel %vm4158, %v4200, %v4202
        %v4204 = vrot.slane %v1573, 1
        %v4205 = vrot.slane %v1709, 1
        %v4206 = vsel %vm4158, %v4204, %v4205
        %v4207 = vrot.slane %v1760, 1
        %v4208 = vsel %vm4158, %v4205, %v4207
        %v4209 = vrot.slane %v1574, 1
        %v4210 = vrot.slane %v1710, 1
        %v4211 = vsel %vm4158, %v4209, %v4210
        %v4212 = vrot.slane %v1778, 1
        %v4213 = vsel %vm4158, %v4210, %v4212
        %v4214 = vrot.slane %v1575, 1
        %v4215 = vrot.slane %v1711, 1
        %v4216 = vsel %vm4158, %v4214, %v4215
        %v4217 = vrot.slane %v1769, 1
        %v4218 = vsel %vm4158, %v4215, %v4217
        %v4219 = vrot.slane %v1576, 1
        %v4220 = vrot.slane %v1712, 1
        %v4221 = vsel %vm4158, %v4219, %v4220
        %v4222 = vrot.slane %v1779, 1
        %v4223 = vsel %vm4158, %v4220, %v4222
        %v4224 = vrot.slane %v1577, 1
        %v4225 = vrot.slane %v1713, 1
        %v4226 = vsel %vm4158, %v4224, %v4225
        %v4227 = vrot.slane %v1776, 1
        %v4228 = vsel %vm4158, %v4225, %v4227
        %v4229 = vrot.slane %v1578, 1
        %v4230 = vrot.slane %v1714, 1
        %v4231 = vsel %vm4158, %v4229, %v4230
        %v4232 = vrot.slane %v1780, 1
        %v4233 = vsel %vm4158, %v4230, %v4232
        %v4234 = vrot.slane %v1829, 1
        %v4235 = vrot.slane %v1879, 1
        %v4236 = vsel %vm4158, %v4234, %v4235
        %v4237 = vrot.slane %v1889, 1
        %v4238 = vsel %vm4158, %v4235, %v4237
        %v4271 = vadd.f32 %v4078, %v4161
        %v4272 = vadd.f32 %v4079, %v4163
        %v4273 = vadd.f32 %v4080, %v4166
        %v4274 = vadd.f32 %v4081, %v4168
        %v4275 = vadd.f32 %v4082, %v4171
        %v4276 = vadd.f32 %v4083, %v4173
        %v4277 = vadd.f32 %v4084, %v4176
        %v4278 = vadd.f32 %v4085, %v4178
        %v4279 = vadd.f32 %v4086, %v4181
        %v4280 = vadd.f32 %v4087, %v4183
        %v4281 = vadd.f32 %v4088, %v4186
        %v4282 = vadd.f32 %v4089, %v4188
        %v4283 = vadd.f32 %v4090, %v4191
        %v4284 = vadd.f32 %v4091, %v4193
        %v4285 = vadd.f32 %v4092, %v4196
        %v4286 = vadd.f32 %v4093, %v4198
        %v4287 = vadd.f32 %v4094, %v4201
        %v4288 = vadd.f32 %v4095, %v4203
        %v4289 = vadd.f32 %v4096, %v4206
        %v4290 = vadd.f32 %v4097, %v4208
        %v4291 = vadd.f32 %v4098, %v4211
        %v4292 = vadd.f32 %v4099, %v4213
        %v4293 = vadd.f32 %v4100, %v4216
        %v4294 = vadd.f32 %v4101, %v4218
        %v4295 = vadd.f32 %v4102, %v4221
        %v4296 = vadd.f32 %v4103, %v4223
        %v4297 = vadd.f32 %v4104, %v4226
        %v4298 = vadd.f32 %v4105, %v4228
        %v4299 = vadd.f32 %v4106, %v4231
        %v4300 = vadd.f32 %v4107, %v4233
        %v4301 = vadd.f32 %v4108, %v4236
        %v4302 = vadd.f32 %v4109, %v4238
        %v4303 = vpack.c.bf16 %v4272, %v4271
        %v4304 = vpack.c.bf16 %v4274, %v4273
        %v4305 = vpack.c.bf16 %v4276, %v4275
        %v4306 = vpack.c.bf16 %v4278, %v4277
        %v4307 = vpack.c.bf16 %v4280, %v4279
        %v4308 = vpack.c.bf16 %v4282, %v4281
        %v4309 = vpack.c.bf16 %v4284, %v4283
        %v4310 = vpack.c.bf16 %v4286, %v4285
        %v4311 = vpack.c.bf16 %v4288, %v4287
        %v4312 = vpack.c.bf16 %v4290, %v4289
        %v4313 = vpack.c.bf16 %v4292, %v4291
        %v4314 = vpack.c.bf16 %v4294, %v4293
        %v4315 = vpack.c.bf16 %v4296, %v4295
        %v4316 = vpack.c.bf16 %v4298, %v4297
        %v4317 = vpack.c.bf16 %v4300, %v4299
        %v4318 = vpack.c.bf16 %v4302, %v4301
        %v4319 = vld [vmem:[%s4] sm:$0xf]
        %v4321 = vsel %vm837, %v4303, 0
        %v4324 = vsel %vm837, %v4304, 0
        %v4327 = vsel %vm837, %v4305, 0
        %v4330 = vsel %vm837, %v4306, 0
        %v4333 = vsel %vm837, %v4307, 0
        %v4336 = vsel %vm837, %v4308, 0
        %v4339 = vsel %vm837, %v4309, 0
        %v4342 = vsel %vm837, %v4310, 0
        %v4345 = vsel %vm837, %v4311, 0
        %v4348 = vsel %vm837, %v4312, 0
        %v4351 = vsel %vm837, %v4313, 0
        %v4354 = vsel %vm837, %v4314, 0
        %v4357 = vsel %vm837, %v4315, 0
        %v4360 = vsel %vm837, %v4316, 0
        %v4363 = vsel %vm837, %v4317, 0
        %v4366 = vsel %vm837, %v4318, 0
        %v4369 = vsel %vm900, %v4319, 0
        %4371 = vmatprep.subr.bf16.mxu0 0
        %4372 = vmatpush1.bf16.msra.mxu0 %v4369
        %4373 = vmatprep.subr.bf16.mxu0 0
        %4374 = vmatpush1.bf16.msra.mxu0 0
        %4375 = vmatprep.subr.bf16.mxu0 0
        %4376 = vmatpush1.bf16.msra.mxu0 0
        %4377 = vmatprep.subr.bf16.mxu0 0
        %4378 = vmatpush1.bf16.msra.mxu0 0
        %4379 = vmatprep.subr.bf16.mxu0 0
        %4380 = vmatpush1.bf16.msra.mxu0 0
        %4381 = vmatprep.subr.bf16.mxu0 0
        %4382 = vmatpush1.bf16.msra.mxu0 0
        %4383 = vmatprep.subr.bf16.mxu0 0
        %4384 = vmatpush1.bf16.msra.mxu0 0
        %4385 = vmatprep.subr.bf16.mxu0 0
        %4386 = vmatpush1.bf16.msra.mxu0 0
        %4387 = vmatprep.subr.bf16.mxu0 0
        %4388 = vmatpush1.bf16.msra.mxu0 0
        %4389 = vmatprep.subr.bf16.mxu0 0
        %4390 = vmatpush1.bf16.msra.mxu0 0
        %4391 = vmatprep.subr.bf16.mxu0 0
        %4392 = vmatpush1.bf16.msra.mxu0 0
        %4393 = vmatprep.subr.bf16.mxu0 0
        %4394 = vmatpush1.bf16.msra.mxu0 0
        %4395 = vmatprep.subr.bf16.mxu0 0
        %4396 = vmatpush1.bf16.msra.mxu0 0
        %4397 = vmatprep.subr.bf16.mxu0 0
        %4398 = vmatpush1.bf16.msra.mxu0 0
        %4399 = vmatprep.subr.bf16.mxu0 0
        %4400 = vmatpush1.bf16.msra.mxu0 0
        %4401 = vmatprep.subr.bf16.mxu0 0
        %4402 = vmatpush1.bf16.msra.mxu0 0
        %4403 = vmatprep.mubr.bf16.mxu0 0
        %4404 = vmatmul.mubr.bf16.gmra.mrb[0].mxu0 %v4321
        %v4405 = vpop.f32.mrb[0].mxu0
        %v4406 = vadd.f32 0.0, %v4405
        %v4407 = vpop.f32.mrb[0].mxu0
        %v4408 = vpop.f32.mrb[0].mxu0
        %v4409 = vadd.f32 0.0, %v4408
        %v4410 = vpop.f32.mrb[0].mxu0
        %4411 = vmatprep.mubr.bf16.mxu0 0
        %4412 = vmatmul.mubr.bf16.gmra.mrb[0].mxu0 %v4324
        %v4413 = vpop.f32.mrb[0].mxu0
        %v4414 = vadd.f32 0.0, %v4413
        %v4415 = vpop.f32.mrb[0].mxu0
        %v4416 = vpop.f32.mrb[0].mxu0
        %v4417 = vadd.f32 0.0, %v4416
        %v4418 = vpop.f32.mrb[0].mxu0
        %4419 = vmatprep.mubr.bf16.mxu0 0
        %4420 = vmatmul.mubr.bf16.gmra.mrb[0].mxu0 %v4327
        %v4421 = vpop.f32.mrb[0].mxu0
        %v4422 = vadd.f32 0.0, %v4421
        %v4423 = vpop.f32.mrb[0].mxu0
        %v4424 = vpop.f32.mrb[0].mxu0
        %v4425 = vadd.f32 0.0, %v4424
        %v4426 = vpop.f32.mrb[0].mxu0
        %4427 = vmatprep.mubr.bf16.mxu0 0
        %4428 = vmatmul.mubr.bf16.gmra.mrb[0].mxu0 %v4330
        %v4429 = vpop.f32.mrb[0].mxu0
        %v4430 = vadd.f32 0.0, %v4429
        %v4431 = vpop.f32.mrb[0].mxu0
        %v4432 = vpop.f32.mrb[0].mxu0
        %v4433 = vadd.f32 0.0, %v4432
        %v4434 = vpop.f32.mrb[0].mxu0
        %4435 = vmatprep.mubr.bf16.mxu0 0
        %4436 = vmatmul.mubr.bf16.gmra.mrb[0].mxu0 %v4333
        %v4437 = vpop.f32.mrb[0].mxu0
        %v4438 = vadd.f32 0.0, %v4437
        %v4439 = vpop.f32.mrb[0].mxu0
        %v4440 = vpop.f32.mrb[0].mxu0
        %v4441 = vadd.f32 0.0, %v4440
        %v4442 = vpop.f32.mrb[0].mxu0
        %4443 = vmatprep.mubr.bf16.mxu0 0
        %4444 = vmatmul.mubr.bf16.gmra.mrb[0].mxu0 %v4336
        %v4445 = vpop.f32.mrb[0].mxu0
        %v4446 = vadd.f32 0.0, %v4445
        %v4447 = vpop.f32.mrb[0].mxu0
        %v4448 = vpop.f32.mrb[0].mxu0
        %v4449 = vadd.f32 0.0, %v4448
        %v4450 = vpop.f32.mrb[0].mxu0
        %4451 = vmatprep.mubr.bf16.mxu0 0
        %4452 = vmatmul.mubr.bf16.gmra.mrb[0].mxu0 %v4339
        %v4453 = vpop.f32.mrb[0].mxu0
        %v4454 = vadd.f32 0.0, %v4453
        %v4455 = vpop.f32.mrb[0].mxu0
        %v4456 = vpop.f32.mrb[0].mxu0
        %v4457 = vadd.f32 0.0, %v4456
        %v4458 = vpop.f32.mrb[0].mxu0
        %4459 = vmatprep.mubr.bf16.mxu0 0
        %4460 = vmatmul.mubr.bf16.gmra.mrb[0].mxu0 %v4342
        %v4461 = vpop.f32.mrb[0].mxu0
        %v4462 = vadd.f32 0.0, %v4461
        %v4463 = vpop.f32.mrb[0].mxu0
        %v4464 = vpop.f32.mrb[0].mxu0
        %v4465 = vadd.f32 0.0, %v4464
        %v4466 = vpop.f32.mrb[0].mxu0
        %4467 = vmatprep.mubr.bf16.mxu0 0
        %4468 = vmatmul.mubr.bf16.gmra.mrb[0].mxu0 %v4345
        %v4469 = vpop.f32.mrb[0].mxu0
        %v4470 = vadd.f32 0.0, %v4469
        %v4471 = vpop.f32.mrb[0].mxu0
        %v4472 = vpop.f32.mrb[0].mxu0
        %v4473 = vadd.f32 0.0, %v4472
        %v4474 = vpop.f32.mrb[0].mxu0
        %4475 = vmatprep.mubr.bf16.mxu0 0
        %4476 = vmatmul.mubr.bf16.gmra.mrb[0].mxu0 %v4348
        %v4477 = vpop.f32.mrb[0].mxu0
        %v4478 = vadd.f32 0.0, %v4477
        %v4479 = vpop.f32.mrb[0].mxu0
        %v4480 = vpop.f32.mrb[0].mxu0
        %v4481 = vadd.f32 0.0, %v4480
        %v4482 = vpop.f32.mrb[0].mxu0
        %4483 = vmatprep.mubr.bf16.mxu0 0
        %4484 = vmatmul.mubr.bf16.gmra.mrb[0].mxu0 %v4351
        %v4485 = vpop.f32.mrb[0].mxu0
        %v4486 = vadd.f32 0.0, %v4485
        %v4487 = vpop.f32.mrb[0].mxu0
        %v4488 = vpop.f32.mrb[0].mxu0
        %v4489 = vadd.f32 0.0, %v4488
        %v4490 = vpop.f32.mrb[0].mxu0
        %4491 = vmatprep.mubr.bf16.mxu0 0
        %4492 = vmatmul.mubr.bf16.gmra.mrb[0].mxu0 %v4354
        %v4493 = vpop.f32.mrb[0].mxu0
        %v4494 = vadd.f32 0.0, %v4493
        %v4495 = vpop.f32.mrb[0].mxu0
        %v4496 = vpop.f32.mrb[0].mxu0
        %v4497 = vadd.f32 0.0, %v4496
        %v4498 = vpop.f32.mrb[0].mxu0
        %4499 = vmatprep.mubr.bf16.mxu0 0
        %4500 = vmatmul.mubr.bf16.gmra.mrb[0].mxu0 %v4357
        %v4501 = vpop.f32.mrb[0].mxu0
        %v4502 = vadd.f32 0.0, %v4501
        %v4503 = vpop.f32.mrb[0].mxu0
        %v4504 = vpop.f32.mrb[0].mxu0
        %v4505 = vadd.f32 0.0, %v4504
        %v4506 = vpop.f32.mrb[0].mxu0
        %4507 = vmatprep.mubr.bf16.mxu0 0
        %4508 = vmatmul.mubr.bf16.gmra.mrb[0].mxu0 %v4360
        %v4509 = vpop.f32.mrb[0].mxu0
        %v4510 = vadd.f32 0.0, %v4509
        %v4511 = vpop.f32.mrb[0].mxu0
        %v4512 = vpop.f32.mrb[0].mxu0
        %v4513 = vadd.f32 0.0, %v4512
        %v4514 = vpop.f32.mrb[0].mxu0
        %4515 = vmatprep.mubr.bf16.mxu0 0
        %4516 = vmatmul.mubr.bf16.gmra.mrb[0].mxu0 %v4363
        %v4517 = vpop.f32.mrb[0].mxu0
        %v4518 = vadd.f32 0.0, %v4517
        %v4519 = vpop.f32.mrb[0].mxu0
        %v4520 = vpop.f32.mrb[0].mxu0
        %v4521 = vadd.f32 0.0, %v4520
        %v4522 = vpop.f32.mrb[0].mxu0
        %4523 = vmatprep.mubr.bf16.mxu0 0
        %4524 = vmatmul.mubr.bf16.gmra.mrb[0].mxu0 %v4366
        %v4525 = vpop.f32.mrb[0].mxu0
        %v4526 = vadd.f32 0.0, %v4525
        %v4527 = vpop.f32.mrb[0].mxu0
        %v4528 = vpop.f32.mrb[0].mxu0
        %v4529 = vadd.f32 0.0, %v4528
        %v4530 = vpop.f32.mrb[0].mxu0
        %4531 = vdwg.mxu0
        %4564 = vrot.lane.b32.xlu0 %v4406, 16
        %v4565 = vpop.permute.xlu0 %4564
        %4566 = vrot.lane.b32.xlu0 %v4409, 16
        %v4567 = vpop.permute.xlu0 %4566
        %4568 = vrot.lane.b32.xlu0 %v4414, 16
        %v4569 = vpop.permute.xlu0 %4568
        %4570 = vrot.lane.b32.xlu0 %v4417, 16
        %v4571 = vpop.permute.xlu0 %4570
        %4572 = vrot.lane.b32.xlu0 %v4422, 16
        %v4573 = vpop.permute.xlu0 %4572
        %4574 = vrot.lane.b32.xlu0 %v4425, 16
        %v4575 = vpop.permute.xlu0 %4574
        %4576 = vrot.lane.b32.xlu0 %v4430, 16
        %v4577 = vpop.permute.xlu0 %4576
        %4578 = vrot.lane.b32.xlu0 %v4433, 16
        %v4579 = vpop.permute.xlu0 %4578
        %4580 = vrot.lane.b32.xlu0 %v4438, 16
        %v4581 = vpop.permute.xlu0 %4580
        %4582 = vrot.lane.b32.xlu0 %v4441, 16
        %v4583 = vpop.permute.xlu0 %4582
        %4584 = vrot.lane.b32.xlu0 %v4446, 16
        %v4585 = vpop.permute.xlu0 %4584
        %4586 = vrot.lane.b32.xlu0 %v4449, 16
        %v4587 = vpop.permute.xlu0 %4586
        %4588 = vrot.lane.b32.xlu0 %v4454, 16
        %v4589 = vpop.permute.xlu0 %4588
        %4590 = vrot.lane.b32.xlu0 %v4457, 16
        %v4591 = vpop.permute.xlu0 %4590
        %4592 = vrot.lane.b32.xlu0 %v4462, 16
        %v4593 = vpop.permute.xlu0 %4592
        %4594 = vrot.lane.b32.xlu0 %v4465, 16
        %v4595 = vpop.permute.xlu0 %4594
        %4596 = vrot.lane.b32.xlu0 %v4470, 16
        %v4597 = vpop.permute.xlu0 %4596
        %4598 = vrot.lane.b32.xlu0 %v4473, 16
        %v4599 = vpop.permute.xlu0 %4598
        %4600 = vrot.lane.b32.xlu0 %v4478, 16
        %v4601 = vpop.permute.xlu0 %4600
        %4602 = vrot.lane.b32.xlu0 %v4481, 16
        %v4603 = vpop.permute.xlu0 %4602
        %4604 = vrot.lane.b32.xlu0 %v4486, 16
        %v4605 = vpop.permute.xlu0 %4604
        %4606 = vrot.lane.b32.xlu0 %v4489, 16
        %v4607 = vpop.permute.xlu0 %4606
        %4608 = vrot.lane.b32.xlu0 %v4494, 16
        %v4609 = vpop.permute.xlu0 %4608
        %4610 = vrot.lane.b32.xlu0 %v4497, 16
        %v4611 = vpop.permute.xlu0 %4610
        %4612 = vrot.lane.b32.xlu0 %v4502, 16
        %v4613 = vpop.permute.xlu0 %4612
        %4614 = vrot.lane.b32.xlu0 %v4505, 16
        %v4615 = vpop.permute.xlu0 %4614
        %4616 = vrot.lane.b32.xlu0 %v4510, 16
        %v4617 = vpop.permute.xlu0 %4616
        %4618 = vrot.lane.b32.xlu0 %v4513, 16
        %v4619 = vpop.permute.xlu0 %4618
        %4620 = vrot.lane.b32.xlu0 %v4518, 16
        %v4621 = vpop.permute.xlu0 %4620
        %4622 = vrot.lane.b32.xlu0 %v4521, 16
        %v4623 = vpop.permute.xlu0 %4622
        %4624 = vrot.lane.b32.xlu0 %v4526, 16
        %v4625 = vpop.permute.xlu0 %4624
        %4626 = vrot.lane.b32.xlu0 %v4529, 16
        %v4627 = vpop.permute.xlu0 %4626
        %v4660 = vsel %vm841, %v3886, %v4565
        %v4661 = vsel %vm841, %v3887, %v4567
        %v4662 = vsel %vm841, %v3888, %v4569
        %v4663 = vsel %vm841, %v3889, %v4571
        %v4664 = vsel %vm841, %v3890, %v4573
        %v4665 = vsel %vm841, %v3891, %v4575
        %v4666 = vsel %vm841, %v3892, %v4577
        %v4667 = vsel %vm841, %v3893, %v4579
        %v4668 = vsel %vm841, %v3894, %v4581
        %v4669 = vsel %vm841, %v3895, %v4583
        %v4670 = vsel %vm841, %v3896, %v4585
        %v4671 = vsel %vm841, %v3897, %v4587
        %v4672 = vsel %vm841, %v3898, %v4589
        %v4673 = vsel %vm841, %v3899, %v4591
        %v4674 = vsel %vm841, %v3900, %v4593
        %v4675 = vsel %vm841, %v3901, %v4595
        %v4676 = vsel %vm841, %v3902, %v4597
        %v4677 = vsel %vm841, %v3903, %v4599
        %v4678 = vsel %vm841, %v3904, %v4601
        %v4679 = vsel %vm841, %v3905, %v4603
        %v4680 = vsel %vm841, %v3906, %v4605
        %v4681 = vsel %vm841, %v3907, %v4607
        %v4682 = vsel %vm841, %v3908, %v4609
        %v4683 = vsel %vm841, %v3909, %v4611
        %v4684 = vsel %vm841, %v3910, %v4613
        %v4685 = vsel %vm841, %v3911, %v4615
        %v4686 = vsel %vm841, %v3912, %v4617
        %v4687 = vsel %vm841, %v3913, %v4619
        %v4688 = vsel %vm841, %v3914, %v4621
        %v4689 = vsel %vm841, %v3915, %v4623
        %v4690 = vsel %vm841, %v3916, %v4625
        %v4691 = vsel %vm841, %v3917, %v4627
        %vm4692 = vcmask 146432
        %v4693 = vsel %vm4692, %v4660, 0.0
        %v4694 = vsel %vm4692, %v4661, 0.0
        %v4695 = vsel %vm4692, %v4662, 0.0
        %v4696 = vsel %vm4692, %v4663, 0.0
        %v4697 = vsel %vm4692, %v4664, 0.0
        %v4698 = vsel %vm4692, %v4665, 0.0
        %v4699 = vsel %vm4692, %v4666, 0.0
        %v4700 = vsel %vm4692, %v4667, 0.0
        %v4701 = vsel %vm4692, %v4668, 0.0
        %v4702 = vsel %vm4692, %v4669, 0.0
        %v4703 = vsel %vm4692, %v4670, 0.0
        %v4704 = vsel %vm4692, %v4671, 0.0
        %v4705 = vsel %vm4692, %v4672, 0.0
        %v4706 = vsel %vm4692, %v4673, 0.0
        %v4707 = vsel %vm4692, %v4674, 0.0
        %v4708 = vsel %vm4692, %v4675, 0.0
        %v4709 = vsel %vm4692, %v4676, 0.0
        %v4710 = vsel %vm4692, %v4677, 0.0
        %v4711 = vsel %vm4692, %v4678, 0.0
        %v4712 = vsel %vm4692, %v4679, 0.0
        %v4713 = vsel %vm4692, %v4680, 0.0
        %v4714 = vsel %vm4692, %v4681, 0.0
        %v4715 = vsel %vm4692, %v4682, 0.0
        %v4716 = vsel %vm4692, %v4683, 0.0
        %v4717 = vsel %vm4692, %v4684, 0.0
        %v4718 = vsel %vm4692, %v4685, 0.0
        %v4719 = vsel %vm4692, %v4686, 0.0
        %v4720 = vsel %vm4692, %v4687, 0.0
        %v4721 = vsel %vm4692, %v4688, 0.0
        %v4722 = vsel %vm4692, %v4689, 0.0
        %v4723 = vsel %vm4692, %v4690, 0.0
        %v4724 = vsel %vm4692, %v4691, 0.0
        %4725 = vxpose.xlu0.b32.start [1/16] %v4693, 128
        %4726 = vxpose.xlu0.b32.cont [2/16] %v4694, 128
        %4727 = vxpose.xlu0.b32.cont [3/16] %v4695, 128
        %4728 = vxpose.xlu0.b32.cont [4/16] %v4696, 128
        %4729 = vxpose.xlu0.b32.cont [5/16] %v4697, 128
        %4730 = vxpose.xlu0.b32.cont [6/16] %v4698, 128
        %4731 = vxpose.xlu0.b32.cont [7/16] %v4699, 128
        %4732 = vxpose.xlu0.b32.cont [8/16] %v4700, 128
        %4733 = vxpose.xlu0.b32.cont [9/16] %v4701, 128
        %4734 = vxpose.xlu0.b32.cont [10/16] %v4702, 128
        %4735 = vxpose.xlu0.b32.cont [11/16] %v4703, 128
        %4736 = vxpose.xlu0.b32.cont [12/16] %v4704, 128
        %4737 = vxpose.xlu0.b32.cont [13/16] %v4705, 128
        %4738 = vxpose.xlu0.b32.cont [14/16] %v4706, 128
        %4739 = vxpose.xlu0.b32.cont [15/16] %v4707, 128
        %4740 = vxpose.xlu0.b32.end [16/16] %v4708, 128
        %v4741 = vpop.trf.xlu0
        %v4742 = vpop.trf.xlu0
        %v4743 = vpop.trf.xlu0
        %v4744 = vpop.trf.xlu0
        %v4745 = vpop.trf.xlu0
        %v4746 = vpop.trf.xlu0
        %v4747 = vpop.trf.xlu0
        %v4748 = vpop.trf.xlu0
        %v4749 = vpop.trf.xlu0
        %v4750 = vpop.trf.xlu0
        %v4751 = vpop.trf.xlu0
        %v4752 = vpop.trf.xlu0
        %v4753 = vpop.trf.xlu0
        %v4754 = vpop.trf.xlu0
        %v4755 = vpop.trf.xlu0
        %v4756 = vpop.trf.xlu0
        %4757 = vxpose.xlu0.b32.start [1/16] %v4709, 128
        %4758 = vxpose.xlu0.b32.cont [2/16] %v4710, 128
        %4759 = vxpose.xlu0.b32.cont [3/16] %v4711, 128
        %4760 = vxpose.xlu0.b32.cont [4/16] %v4712, 128
        %4761 = vxpose.xlu0.b32.cont [5/16] %v4713, 128
        %4762 = vxpose.xlu0.b32.cont [6/16] %v4714, 128
        %4763 = vxpose.xlu0.b32.cont [7/16] %v4715, 128
        %4764 = vxpose.xlu0.b32.cont [8/16] %v4716, 128
        %4765 = vxpose.xlu0.b32.cont [9/16] %v4717, 128
        %4766 = vxpose.xlu0.b32.cont [10/16] %v4718, 128
        %4767 = vxpose.xlu0.b32.cont [11/16] %v4719, 128
        %4768 = vxpose.xlu0.b32.cont [12/16] %v4720, 128
        %4769 = vxpose.xlu0.b32.cont [13/16] %v4721, 128
        %4770 = vxpose.xlu0.b32.cont [14/16] %v4722, 128
        %4771 = vxpose.xlu0.b32.cont [15/16] %v4723, 128
        %4772 = vxpose.xlu0.b32.end [16/16] %v4724, 128
        %v4773 = vpop.trf.xlu0
        %v4774 = vpop.trf.xlu0
        %v4775 = vpop.trf.xlu0
        %v4776 = vpop.trf.xlu0
        %v4777 = vpop.trf.xlu0
        %v4778 = vpop.trf.xlu0
        %v4779 = vpop.trf.xlu0
        %v4780 = vpop.trf.xlu0
        %v4781 = vpop.trf.xlu0
        %v4782 = vpop.trf.xlu0
        %v4783 = vpop.trf.xlu0
        %v4784 = vpop.trf.xlu0
        %v4785 = vpop.trf.xlu0
        %v4786 = vpop.trf.xlu0
        %v4787 = vpop.trf.xlu0
        %v4788 = vpop.trf.xlu0
        %4791 = vrot.lane.b32.xlu0 %v4741, 112
        %v4792 = vpop.permute.xlu0 %4791
        %4793 = vrot.lane.b32.xlu0 %v4742, 112
        %v4794 = vpop.permute.xlu0 %4793
        %4797 = vrot.lane.b32.xlu0 %v4741, 96
        %v4798 = vpop.permute.xlu0 %4797
        %4799 = vrot.lane.b32.xlu0 %v4742, 96
        %v4800 = vpop.permute.xlu0 %4799
        %4803 = vrot.lane.b32.xlu0 %v4741, 80
        %v4804 = vpop.permute.xlu0 %4803
        %4805 = vrot.lane.b32.xlu0 %v4742, 80
        %v4806 = vpop.permute.xlu0 %4805
        %4809 = vrot.lane.b32.xlu0 %v4741, 64
        %v4810 = vpop.permute.xlu0 %4809
        %4811 = vrot.lane.b32.xlu0 %v4742, 64
        %v4812 = vpop.permute.xlu0 %4811
        %4815 = vrot.lane.b32.xlu0 %v4741, 48
        %v4816 = vpop.permute.xlu0 %4815
        %4817 = vrot.lane.b32.xlu0 %v4742, 48
        %v4818 = vpop.permute.xlu0 %4817
        %4821 = vrot.lane.b32.xlu0 %v4741, 32
        %v4822 = vpop.permute.xlu0 %4821
        %4823 = vrot.lane.b32.xlu0 %v4742, 32
        %v4824 = vpop.permute.xlu0 %4823
        %4827 = vrot.lane.b32.xlu0 %v4741, 16
        %v4828 = vpop.permute.xlu0 %4827
        %4829 = vrot.lane.b32.xlu0 %v4742, 16
        %v4830 = vpop.permute.xlu0 %4829
        %4835 = vrot.lane.b32.xlu0 %v4773, 112
        %v4836 = vpop.permute.xlu0 %4835
        %4837 = vrot.lane.b32.xlu0 %v4774, 112
        %v4838 = vpop.permute.xlu0 %4837
        %4841 = vrot.lane.b32.xlu0 %v4773, 96
        %v4842 = vpop.permute.xlu0 %4841
        %4843 = vrot.lane.b32.xlu0 %v4774, 96
        %v4844 = vpop.permute.xlu0 %4843
        %4847 = vrot.lane.b32.xlu0 %v4773, 80
        %v4848 = vpop.permute.xlu0 %4847
        %4849 = vrot.lane.b32.xlu0 %v4774, 80
        %v4850 = vpop.permute.xlu0 %4849
        %4853 = vrot.lane.b32.xlu0 %v4773, 64
        %v4854 = vpop.permute.xlu0 %4853
        %4855 = vrot.lane.b32.xlu0 %v4774, 64
        %v4856 = vpop.permute.xlu0 %4855
        %4859 = vrot.lane.b32.xlu0 %v4773, 48
        %v4860 = vpop.permute.xlu0 %4859
        %4861 = vrot.lane.b32.xlu0 %v4774, 48
        %v4862 = vpop.permute.xlu0 %4861
        %4865 = vrot.lane.b32.xlu0 %v4773, 32
        %v4866 = vpop.permute.xlu0 %4865
        %4867 = vrot.lane.b32.xlu0 %v4774, 32
        %v4868 = vpop.permute.xlu0 %4867
        %4871 = vrot.lane.b32.xlu0 %v4773, 16
        %v4872 = vpop.permute.xlu0 %4871
        %4873 = vrot.lane.b32.xlu0 %v4774, 16
        %v4874 = vpop.permute.xlu0 %4873
        %v4877 = vcombine.low %v4741, %v4798
        %v4878 = vcombine.high %v4741, %v4798
        %v4880 = vunpack.c.l.s4 1983009808
        %v4881 = vunpack.c.0.s8 %v4880
        %v4882 = vlaneseq
        %v4883 = vshrl.u32 %v4882, 7
        %v4884 = vsub.s32 %v4881, %v4883
        %v4885 = vrot.slane %v4877, %v4884
        %v4887 = vunpack.c.l.s4 1983009808
        %v4888 = vunpack.c.0.s8 %v4887
        %v4889 = vlaneseq
        %v4890 = vshrl.u32 %v4889, 7
        %v4891 = vsub.s32 %v4888, %v4890
        %v4892 = vrot.slane %v4878, %v4891
        %v4893 = vcombine.low %v4792, %v4804
        %v4894 = vcombine.high %v4792, %v4804
        %v4896 = vunpack.c.l.s4 1983009808
        %v4897 = vunpack.c.0.s8 %v4896
        %v4898 = vlaneseq
        %v4899 = vshrl.u32 %v4898, 7
        %v4900 = vsub.s32 %v4897, %v4899
        %v4901 = vrot.slane %v4893, %v4900
        %v4903 = vunpack.c.l.s4 1983009808
        %v4904 = vunpack.c.0.s8 %v4903
        %v4905 = vlaneseq
        %v4906 = vshrl.u32 %v4905, 7
        %v4907 = vsub.s32 %v4904, %v4906
        %v4908 = vrot.slane %v4894, %v4907
        %v4909 = vcombine.low %v4810, %v4822
        %v4910 = vcombine.high %v4810, %v4822
        %v4912 = vunpack.c.l.s4 1983009808
        %v4913 = vunpack.c.0.s8 %v4912
        %v4914 = vlaneseq
        %v4915 = vshrl.u32 %v4914, 7
        %v4916 = vsub.s32 %v4913, %v4915
        %v4917 = vrot.slane %v4909, %v4916
        %v4919 = vunpack.c.l.s4 1983009808
        %v4920 = vunpack.c.0.s8 %v4919
        %v4921 = vlaneseq
        %v4922 = vshrl.u32 %v4921, 7
        %v4923 = vsub.s32 %v4920, %v4922
        %v4924 = vrot.slane %v4910, %v4923
        %v4925 = vcombine.low %v4816, %v4828
        %v4926 = vcombine.high %v4816, %v4828
        %v4928 = vunpack.c.l.s4 1983009808
        %v4929 = vunpack.c.0.s8 %v4928
        %v4930 = vlaneseq
        %v4931 = vshrl.u32 %v4930, 7
        %v4932 = vsub.s32 %v4929, %v4931
        %v4933 = vrot.slane %v4925, %v4932
        %v4935 = vunpack.c.l.s4 1983009808
        %v4936 = vunpack.c.0.s8 %v4935
        %v4937 = vlaneseq
        %v4938 = vshrl.u32 %v4937, 7
        %v4939 = vsub.s32 %v4936, %v4938
        %v4940 = vrot.slane %v4926, %v4939
        %v4941 = vcombine.low %v4885, %v4901
        %v4942 = vcombine.high %v4885, %v4901
        %v4944 = vunpack.c.l.s4 1934713408
        %v4945 = vunpack.c.0.s8 %v4944
        %v4946 = vlaneseq
        %v4947 = vshrl.u32 %v4946, 7
        %v4948 = vsub.s32 %v4945, %v4947
        %v4949 = vrot.slane %v4941, %v4948
        %v4951 = vunpack.c.l.s4 1934713408
        %v4952 = vunpack.c.0.s8 %v4951
        %v4953 = vlaneseq
        %v4954 = vshrl.u32 %v4953, 7
        %v4955 = vsub.s32 %v4952, %v4954
        %v4956 = vrot.slane %v4942, %v4955
        %v4957 = vcombine.low %v4892, %v4908
        %v4958 = vcombine.high %v4892, %v4908
        %v4960 = vunpack.c.l.s4 1934713408
        %v4961 = vunpack.c.0.s8 %v4960
        %v4962 = vlaneseq
        %v4963 = vshrl.u32 %v4962, 7
        %v4964 = vsub.s32 %v4961, %v4963
        %v4965 = vrot.slane %v4957, %v4964
        %v4967 = vunpack.c.l.s4 1934713408
        %v4968 = vunpack.c.0.s8 %v4967
        %v4969 = vlaneseq
        %v4970 = vshrl.u32 %v4969, 7
        %v4971 = vsub.s32 %v4968, %v4970
        %v4972 = vrot.slane %v4958, %v4971
        %v4973 = vcombine.low %v4917, %v4933
        %v4974 = vcombine.high %v4917, %v4933
        %v4976 = vunpack.c.l.s4 1934713408
        %v4977 = vunpack.c.0.s8 %v4976
        %v4978 = vlaneseq
        %v4979 = vshrl.u32 %v4978, 7
        %v4980 = vsub.s32 %v4977, %v4979
        %v4981 = vrot.slane %v4973, %v4980
        %v4983 = vunpack.c.l.s4 1934713408
        %v4984 = vunpack.c.0.s8 %v4983
        %v4985 = vlaneseq
        %v4986 = vshrl.u32 %v4985, 7
        %v4987 = vsub.s32 %v4984, %v4986
        %v4988 = vrot.slane %v4974, %v4987
        %v4989 = vcombine.low %v4924, %v4940
        %v4990 = vcombine.high %v4924, %v4940
        %v4992 = vunpack.c.l.s4 1934713408
        %v4993 = vunpack.c.0.s8 %v4992
        %v4994 = vlaneseq
        %v4995 = vshrl.u32 %v4994, 7
        %v4996 = vsub.s32 %v4993, %v4995
        %v4997 = vrot.slane %v4989, %v4996
        %v4999 = vunpack.c.l.s4 1934713408
        %v5000 = vunpack.c.0.s8 %v4999
        %v5001 = vlaneseq
        %v5002 = vshrl.u32 %v5001, 7
        %v5003 = vsub.s32 %v5000, %v5002
        %v5004 = vrot.slane %v4990, %v5003
        %v5005 = vcombine.low %v4949, %v4981
        %v5006 = vcombine.high %v4949, %v4981
        %v5007 = vcombine.low %v4956, %v4988
        %v5008 = vcombine.high %v4956, %v4988
        %v5009 = vcombine.low %v4965, %v4997
        %v5010 = vcombine.high %v4965, %v4997
        %v5011 = vcombine.low %v4972, %v5004
        %v5012 = vcombine.high %v4972, %v5004
        %v5013 = vcombine.low %v4773, %v4842
        %v5014 = vcombine.high %v4773, %v4842
        %v5016 = vunpack.c.l.s4 1983009808
        %v5017 = vunpack.c.0.s8 %v5016
        %v5018 = vlaneseq
        %v5019 = vshrl.u32 %v5018, 7
        %v5020 = vsub.s32 %v5017, %v5019
        %v5021 = vrot.slane %v5013, %v5020
        %v5023 = vunpack.c.l.s4 1983009808
        %v5024 = vunpack.c.0.s8 %v5023
        %v5025 = vlaneseq
        %v5026 = vshrl.u32 %v5025, 7
        %v5027 = vsub.s32 %v5024, %v5026
        %v5028 = vrot.slane %v5014, %v5027
        %v5029 = vcombine.low %v4836, %v4848
        %v5030 = vcombine.high %v4836, %v4848
        %v5032 = vunpack.c.l.s4 1983009808
        %v5033 = vunpack.c.0.s8 %v5032
        %v5034 = vlaneseq
        %v5035 = vshrl.u32 %v5034, 7
        %v5036 = vsub.s32 %v5033, %v5035
        %v5037 = vrot.slane %v5029, %v5036
        %v5039 = vunpack.c.l.s4 1983009808
        %v5040 = vunpack.c.0.s8 %v5039
        %v5041 = vlaneseq
        %v5042 = vshrl.u32 %v5041, 7
        %v5043 = vsub.s32 %v5040, %v5042
        %v5044 = vrot.slane %v5030, %v5043
        %v5045 = vcombine.low %v4854, %v4866
        %v5046 = vcombine.high %v4854, %v4866
        %v5048 = vunpack.c.l.s4 1983009808
        %v5049 = vunpack.c.0.s8 %v5048
        %v5050 = vlaneseq
        %v5051 = vshrl.u32 %v5050, 7
        %v5052 = vsub.s32 %v5049, %v5051
        %v5053 = vrot.slane %v5045, %v5052
        %v5055 = vunpack.c.l.s4 1983009808
        %v5056 = vunpack.c.0.s8 %v5055
        %v5057 = vlaneseq
        %v5058 = vshrl.u32 %v5057, 7
        %v5059 = vsub.s32 %v5056, %v5058
        %v5060 = vrot.slane %v5046, %v5059
        %v5061 = vcombine.low %v4860, %v4872
        %v5062 = vcombine.high %v4860, %v4872
        %v5064 = vunpack.c.l.s4 1983009808
        %v5065 = vunpack.c.0.s8 %v5064
        %v5066 = vlaneseq
        %v5067 = vshrl.u32 %v5066, 7
        %v5068 = vsub.s32 %v5065, %v5067
        %v5069 = vrot.slane %v5061, %v5068
        %v5071 = vunpack.c.l.s4 1983009808
        %v5072 = vunpack.c.0.s8 %v5071
        %v5073 = vlaneseq
        %v5074 = vshrl.u32 %v5073, 7
        %v5075 = vsub.s32 %v5072, %v5074
        %v5076 = vrot.slane %v5062, %v5075
        %v5077 = vcombine.low %v5021, %v5037
        %v5078 = vcombine.high %v5021, %v5037
        %v5080 = vunpack.c.l.s4 1934713408
        %v5081 = vunpack.c.0.s8 %v5080
        %v5082 = vlaneseq
        %v5083 = vshrl.u32 %v5082, 7
        %v5084 = vsub.s32 %v5081, %v5083
        %v5085 = vrot.slane %v5077, %v5084
        %v5087 = vunpack.c.l.s4 1934713408
        %v5088 = vunpack.c.0.s8 %v5087
        %v5089 = vlaneseq
        %v5090 = vshrl.u32 %v5089, 7
        %v5091 = vsub.s32 %v5088, %v5090
        %v5092 = vrot.slane %v5078, %v5091
        %v5093 = vcombine.low %v5028, %v5044
        %v5094 = vcombine.high %v5028, %v5044
        %v5096 = vunpack.c.l.s4 1934713408
        %v5097 = vunpack.c.0.s8 %v5096
        %v5098 = vlaneseq
        %v5099 = vshrl.u32 %v5098, 7
        %v5100 = vsub.s32 %v5097, %v5099
        %v5101 = vrot.slane %v5093, %v5100
        %v5103 = vunpack.c.l.s4 1934713408
        %v5104 = vunpack.c.0.s8 %v5103
        %v5105 = vlaneseq
        %v5106 = vshrl.u32 %v5105, 7
        %v5107 = vsub.s32 %v5104, %v5106
        %v5108 = vrot.slane %v5094, %v5107
        %v5109 = vcombine.low %v5053, %v5069
        %v5110 = vcombine.high %v5053, %v5069
        %v5112 = vunpack.c.l.s4 1934713408
        %v5113 = vunpack.c.0.s8 %v5112
        %v5114 = vlaneseq
        %v5115 = vshrl.u32 %v5114, 7
        %v5116 = vsub.s32 %v5113, %v5115
        %v5117 = vrot.slane %v5109, %v5116
        %v5119 = vunpack.c.l.s4 1934713408
        %v5120 = vunpack.c.0.s8 %v5119
        %v5121 = vlaneseq
        %v5122 = vshrl.u32 %v5121, 7
        %v5123 = vsub.s32 %v5120, %v5122
        %v5124 = vrot.slane %v5110, %v5123
        %v5125 = vcombine.low %v5060, %v5076
        %v5126 = vcombine.high %v5060, %v5076
        %v5128 = vunpack.c.l.s4 1934713408
        %v5129 = vunpack.c.0.s8 %v5128
        %v5130 = vlaneseq
        %v5131 = vshrl.u32 %v5130, 7
        %v5132 = vsub.s32 %v5129, %v5131
        %v5133 = vrot.slane %v5125, %v5132
        %v5135 = vunpack.c.l.s4 1934713408
        %v5136 = vunpack.c.0.s8 %v5135
        %v5137 = vlaneseq
        %v5138 = vshrl.u32 %v5137, 7
        %v5139 = vsub.s32 %v5136, %v5138
        %v5140 = vrot.slane %v5126, %v5139
        %v5141 = vcombine.low %v5085, %v5117
        %v5142 = vcombine.high %v5085, %v5117
        %v5143 = vcombine.low %v5092, %v5124
        %v5144 = vcombine.high %v5092, %v5124
        %v5145 = vcombine.low %v5101, %v5133
        %v5146 = vcombine.high %v5101, %v5133
        %v5147 = vcombine.low %v5108, %v5140
        %v5148 = vcombine.high %v5108, %v5140
        %v5149 = vcombine.low %v4742, %v4800
        %v5150 = vcombine.high %v4742, %v4800
        %v5152 = vunpack.c.l.s4 1983009808
        %v5153 = vunpack.c.0.s8 %v5152
        %v5154 = vlaneseq
        %v5155 = vshrl.u32 %v5154, 7
        %v5156 = vsub.s32 %v5153, %v5155
        %v5157 = vrot.slane %v5149, %v5156
        %v5159 = vunpack.c.l.s4 1983009808
        %v5160 = vunpack.c.0.s8 %v5159
        %v5161 = vlaneseq
        %v5162 = vshrl.u32 %v5161, 7
        %v5163 = vsub.s32 %v5160, %v5162
        %v5164 = vrot.slane %v5150, %v5163
        %v5165 = vcombine.low %v4794, %v4806
        %v5166 = vcombine.high %v4794, %v4806
        %v5168 = vunpack.c.l.s4 1983009808
        %v5169 = vunpack.c.0.s8 %v5168
        %v5170 = vlaneseq
        %v5171 = vshrl.u32 %v5170, 7
        %v5172 = vsub.s32 %v5169, %v5171
        %v5173 = vrot.slane %v5165, %v5172
        %v5175 = vunpack.c.l.s4 1983009808
        %v5176 = vunpack.c.0.s8 %v5175
        %v5177 = vlaneseq
        %v5178 = vshrl.u32 %v5177, 7
        %v5179 = vsub.s32 %v5176, %v5178
        %v5180 = vrot.slane %v5166, %v5179
        %v5181 = vcombine.low %v4812, %v4824
        %v5182 = vcombine.high %v4812, %v4824
        %v5184 = vunpack.c.l.s4 1983009808
        %v5185 = vunpack.c.0.s8 %v5184
        %v5186 = vlaneseq
        %v5187 = vshrl.u32 %v5186, 7
        %v5188 = vsub.s32 %v5185, %v5187
        %v5189 = vrot.slane %v5181, %v5188
        %v5191 = vunpack.c.l.s4 1983009808
        %v5192 = vunpack.c.0.s8 %v5191
        %v5193 = vlaneseq
        %v5194 = vshrl.u32 %v5193, 7
        %v5195 = vsub.s32 %v5192, %v5194
        %v5196 = vrot.slane %v5182, %v5195
        %v5197 = vcombine.low %v4818, %v4830
        %v5198 = vcombine.high %v4818, %v4830
        %v5200 = vunpack.c.l.s4 1983009808
        %v5201 = vunpack.c.0.s8 %v5200
        %v5202 = vlaneseq
        %v5203 = vshrl.u32 %v5202, 7
        %v5204 = vsub.s32 %v5201, %v5203
        %v5205 = vrot.slane %v5197, %v5204
        %v5207 = vunpack.c.l.s4 1983009808
        %v5208 = vunpack.c.0.s8 %v5207
        %v5209 = vlaneseq
        %v5210 = vshrl.u32 %v5209, 7
        %v5211 = vsub.s32 %v5208, %v5210
        %v5212 = vrot.slane %v5198, %v5211
        %v5213 = vcombine.low %v5157, %v5173
        %v5214 = vcombine.high %v5157, %v5173
        %v5216 = vunpack.c.l.s4 1934713408
        %v5217 = vunpack.c.0.s8 %v5216
        %v5218 = vlaneseq
        %v5219 = vshrl.u32 %v5218, 7
        %v5220 = vsub.s32 %v5217, %v5219
        %v5221 = vrot.slane %v5213, %v5220
        %v5223 = vunpack.c.l.s4 1934713408
        %v5224 = vunpack.c.0.s8 %v5223
        %v5225 = vlaneseq
        %v5226 = vshrl.u32 %v5225, 7
        %v5227 = vsub.s32 %v5224, %v5226
        %v5228 = vrot.slane %v5214, %v5227
        %v5229 = vcombine.low %v5164, %v5180
        %v5230 = vcombine.high %v5164, %v5180
        %v5232 = vunpack.c.l.s4 1934713408
        %v5233 = vunpack.c.0.s8 %v5232
        %v5234 = vlaneseq
        %v5235 = vshrl.u32 %v5234, 7
        %v5236 = vsub.s32 %v5233, %v5235
        %v5237 = vrot.slane %v5229, %v5236
        %v5239 = vunpack.c.l.s4 1934713408
        %v5240 = vunpack.c.0.s8 %v5239
        %v5241 = vlaneseq
        %v5242 = vshrl.u32 %v5241, 7
        %v5243 = vsub.s32 %v5240, %v5242
        %v5244 = vrot.slane %v5230, %v5243
        %v5245 = vcombine.low %v5189, %v5205
        %v5246 = vcombine.high %v5189, %v5205
        %v5248 = vunpack.c.l.s4 1934713408
        %v5249 = vunpack.c.0.s8 %v5248
        %v5250 = vlaneseq
        %v5251 = vshrl.u32 %v5250, 7
        %v5252 = vsub.s32 %v5249, %v5251
        %v5253 = vrot.slane %v5245, %v5252
        %v5255 = vunpack.c.l.s4 1934713408
        %v5256 = vunpack.c.0.s8 %v5255
        %v5257 = vlaneseq
        %v5258 = vshrl.u32 %v5257, 7
        %v5259 = vsub.s32 %v5256, %v5258
        %v5260 = vrot.slane %v5246, %v5259
        %v5261 = vcombine.low %v5196, %v5212
        %v5262 = vcombine.high %v5196, %v5212
        %v5264 = vunpack.c.l.s4 1934713408
        %v5265 = vunpack.c.0.s8 %v5264
        %v5266 = vlaneseq
        %v5267 = vshrl.u32 %v5266, 7
        %v5268 = vsub.s32 %v5265, %v5267
        %v5269 = vrot.slane %v5261, %v5268
        %v5271 = vunpack.c.l.s4 1934713408
        %v5272 = vunpack.c.0.s8 %v5271
        %v5273 = vlaneseq
        %v5274 = vshrl.u32 %v5273, 7
        %v5275 = vsub.s32 %v5272, %v5274
        %v5276 = vrot.slane %v5262, %v5275
        %v5277 = vcombine.low %v5221, %v5253
        %v5278 = vcombine.high %v5221, %v5253
        %v5279 = vcombine.low %v5228, %v5260
        %v5280 = vcombine.high %v5228, %v5260
        %v5281 = vcombine.low %v5237, %v5269
        %v5282 = vcombine.high %v5237, %v5269
        %v5283 = vcombine.low %v5244, %v5276
        %v5284 = vcombine.high %v5244, %v5276
        %v5285 = vcombine.low %v4774, %v4844
        %v5286 = vcombine.high %v4774, %v4844
        %v5288 = vunpack.c.l.s4 1983009808
        %v5289 = vunpack.c.0.s8 %v5288
        %v5290 = vlaneseq
        %v5291 = vshrl.u32 %v5290, 7
        %v5292 = vsub.s32 %v5289, %v5291
        %v5293 = vrot.slane %v5285, %v5292
        %v5295 = vunpack.c.l.s4 1983009808
        %v5296 = vunpack.c.0.s8 %v5295
        %v5297 = vlaneseq
        %v5298 = vshrl.u32 %v5297, 7
        %v5299 = vsub.s32 %v5296, %v5298
        %v5300 = vrot.slane %v5286, %v5299
        %v5301 = vcombine.low %v4838, %v4850
        %v5302 = vcombine.high %v4838, %v4850
        %v5304 = vunpack.c.l.s4 1983009808
        %v5305 = vunpack.c.0.s8 %v5304
        %v5306 = vlaneseq
        %v5307 = vshrl.u32 %v5306, 7
        %v5308 = vsub.s32 %v5305, %v5307
        %v5309 = vrot.slane %v5301, %v5308
        %v5311 = vunpack.c.l.s4 1983009808
        %v5312 = vunpack.c.0.s8 %v5311
        %v5313 = vlaneseq
        %v5314 = vshrl.u32 %v5313, 7
        %v5315 = vsub.s32 %v5312, %v5314
        %v5316 = vrot.slane %v5302, %v5315
        %v5317 = vcombine.low %v4856, %v4868
        %v5318 = vcombine.high %v4856, %v4868
        %v5320 = vunpack.c.l.s4 1983009808
        %v5321 = vunpack.c.0.s8 %v5320
        %v5322 = vlaneseq
        %v5323 = vshrl.u32 %v5322, 7
        %v5324 = vsub.s32 %v5321, %v5323
        %v5325 = vrot.slane %v5317, %v5324
        %v5327 = vunpack.c.l.s4 1983009808
        %v5328 = vunpack.c.0.s8 %v5327
        %v5329 = vlaneseq
        %v5330 = vshrl.u32 %v5329, 7
        %v5331 = vsub.s32 %v5328, %v5330
        %v5332 = vrot.slane %v5318, %v5331
        %v5333 = vcombine.low %v4862, %v4874
        %v5334 = vcombine.high %v4862, %v4874
        %v5336 = vunpack.c.l.s4 1983009808
        %v5337 = vunpack.c.0.s8 %v5336
        %v5338 = vlaneseq
        %v5339 = vshrl.u32 %v5338, 7
        %v5340 = vsub.s32 %v5337, %v5339
        %v5341 = vrot.slane %v5333, %v5340
        %v5343 = vunpack.c.l.s4 1983009808
        %v5344 = vunpack.c.0.s8 %v5343
        %v5345 = vlaneseq
        %v5346 = vshrl.u32 %v5345, 7
        %v5347 = vsub.s32 %v5344, %v5346
        %v5348 = vrot.slane %v5334, %v5347
        %v5349 = vcombine.low %v5293, %v5309
        %v5350 = vcombine.high %v5293, %v5309
        %v5352 = vunpack.c.l.s4 1934713408
        %v5353 = vunpack.c.0.s8 %v5352
        %v5354 = vlaneseq
        %v5355 = vshrl.u32 %v5354, 7
        %v5356 = vsub.s32 %v5353, %v5355
        %v5357 = vrot.slane %v5349, %v5356
        %v5359 = vunpack.c.l.s4 1934713408
        %v5360 = vunpack.c.0.s8 %v5359
        %v5361 = vlaneseq
        %v5362 = vshrl.u32 %v5361, 7
        %v5363 = vsub.s32 %v5360, %v5362
        %v5364 = vrot.slane %v5350, %v5363
        %v5365 = vcombine.low %v5300, %v5316
        %v5366 = vcombine.high %v5300, %v5316
        %v5368 = vunpack.c.l.s4 1934713408
        %v5369 = vunpack.c.0.s8 %v5368
        %v5370 = vlaneseq
        %v5371 = vshrl.u32 %v5370, 7
        %v5372 = vsub.s32 %v5369, %v5371
        %v5373 = vrot.slane %v5365, %v5372
        %v5375 = vunpack.c.l.s4 1934713408
        %v5376 = vunpack.c.0.s8 %v5375
        %v5377 = vlaneseq
        %v5378 = vshrl.u32 %v5377, 7
        %v5379 = vsub.s32 %v5376, %v5378
        %v5380 = vrot.slane %v5366, %v5379
        %v5381 = vcombine.low %v5325, %v5341
        %v5382 = vcombine.high %v5325, %v5341
        %v5384 = vunpack.c.l.s4 1934713408
        %v5385 = vunpack.c.0.s8 %v5384
        %v5386 = vlaneseq
        %v5387 = vshrl.u32 %v5386, 7
        %v5388 = vsub.s32 %v5385, %v5387
        %v5389 = vrot.slane %v5381, %v5388
        %v5391 = vunpack.c.l.s4 1934713408
        %v5392 = vunpack.c.0.s8 %v5391
        %v5393 = vlaneseq
        %v5394 = vshrl.u32 %v5393, 7
        %v5395 = vsub.s32 %v5392, %v5394
        %v5396 = vrot.slane %v5382, %v5395
        %v5397 = vcombine.low %v5332, %v5348
        %v5398 = vcombine.high %v5332, %v5348
        %v5400 = vunpack.c.l.s4 1934713408
        %v5401 = vunpack.c.0.s8 %v5400
        %v5402 = vlaneseq
        %v5403 = vshrl.u32 %v5402, 7
        %v5404 = vsub.s32 %v5401, %v5403
        %v5405 = vrot.slane %v5397, %v5404
        %v5407 = vunpack.c.l.s4 1934713408
        %v5408 = vunpack.c.0.s8 %v5407
        %v5409 = vlaneseq
        %v5410 = vshrl.u32 %v5409, 7
        %v5411 = vsub.s32 %v5408, %v5410
        %v5412 = vrot.slane %v5398, %v5411
        %v5413 = vcombine.low %v5357, %v5389
        %v5414 = vcombine.high %v5357, %v5389
        %v5415 = vcombine.low %v5364, %v5396
        %v5416 = vcombine.high %v5364, %v5396
        %v5417 = vcombine.low %v5373, %v5405
        %v5418 = vcombine.high %v5373, %v5405
        %v5419 = vcombine.low %v5380, %v5412
        %v5420 = vcombine.high %v5380, %v5412
        %5421 = vst.msk [vmem:[%s307] sm:$0xff] %vm841, %v5005
        %5422 = vst.msk [vmem:[%s307 + $0x8] sm:$0xff] %vm841, %v5141
        %5423 = vst.msk [vmem:[%s307 + $0x10] sm:$0xff] %vm841, %v5006
        %5424 = vst.msk [vmem:[%s307 + $0x18] sm:$0xff] %vm841, %v5142
        %5425 = vst.msk [vmem:[%s307 + $0x20] sm:$0xff] %vm841, %v5007
        %5426 = vst.msk [vmem:[%s307 + $0x28] sm:$0xff] %vm841, %v5143
        %5427 = vst.msk [vmem:[%s307 + $0x30] sm:$0xff] %vm841, %v5008
        %5428 = vst.msk [vmem:[%s307 + $0x38] sm:$0xff] %vm841, %v5144
        %5429 = vst.msk [vmem:[%s307 + $0x40] sm:$0xff] %vm841, %v5009
        %5430 = vst.msk [vmem:[%s307 + $0x48] sm:$0xff] %vm841, %v5145
        %5431 = vst.msk [vmem:[%s307 + $0x50] sm:$0xff] %vm841, %v5010
        %5432 = vst.msk [vmem:[%s307 + $0x58] sm:$0xff] %vm841, %v5146
        %5433 = vst.msk [vmem:[%s307 + $0x60] sm:$0xff] %vm841, %v5011
        %5434 = vst.msk [vmem:[%s307 + $0x68] sm:$0xff] %vm841, %v5147
        %5435 = vst.msk [vmem:[%s307 + $0x70] sm:$0xff] %vm841, %v5012
        %5436 = vst.msk [vmem:[%s307 + $0x78] sm:$0xff] %vm841, %v5148
        %5437 = vst.msk [vmem:[%s307 + $0x80] sm:$0xff] %vm841, %v5277
        %5438 = vst.msk [vmem:[%s307 + $0x88] sm:$0xff] %vm841, %v5413
        %5439 = vst.msk [vmem:[%s307 + $0x90] sm:$0xff] %vm841, %v5278
        %5440 = vst.msk [vmem:[%s307 + $0x98] sm:$0xff] %vm841, %v5414
        %5441 = vst.msk [vmem:[%s307 + $0xa0] sm:$0xff] %vm841, %v5279
        %5442 = vst.msk [vmem:[%s307 + $0xa8] sm:$0xff] %vm841, %v5415
        %5443 = vst.msk [vmem:[%s307 + $0xb0] sm:$0xff] %vm841, %v5280
        %5444 = vst.msk [vmem:[%s307 + $0xb8] sm:$0xff] %vm841, %v5416
        %5445 = vst.msk [vmem:[%s307 + $0xc0] sm:$0xff] %vm841, %v5281
        %5446 = vst.msk [vmem:[%s307 + $0xc8] sm:$0xff] %vm841, %v5417
        %5447 = vst.msk [vmem:[%s307 + $0xd0] sm:$0xff] %vm841, %v5282
        %5448 = vst.msk [vmem:[%s307 + $0xd8] sm:$0xff] %vm841, %v5418
        %5449 = vst.msk [vmem:[%s307 + $0xe0] sm:$0xff] %vm841, %v5283
        %5450 = vst.msk [vmem:[%s307 + $0xe8] sm:$0xff] %vm841, %v5419
        %5451 = vst.msk [vmem:[%s307 + $0xf0] sm:$0xff] %vm841, %v5284
        %5452 = vst.msk [vmem:[%s307 + $0xf8] sm:$0xff] %vm841, %v5420
        %5454 = vrot.lane.b32.xlu0 %v4743, 112
        %v5455 = vpop.permute.xlu0 %5454
        %5457 = vrot.lane.b32.xlu0 %v4743, 96
        %v5458 = vpop.permute.xlu0 %5457
        %5460 = vrot.lane.b32.xlu0 %v4743, 80
        %v5461 = vpop.permute.xlu0 %5460
        %5463 = vrot.lane.b32.xlu0 %v4743, 64
        %v5464 = vpop.permute.xlu0 %5463
        %5466 = vrot.lane.b32.xlu0 %v4743, 48
        %v5467 = vpop.permute.xlu0 %5466
        %5469 = vrot.lane.b32.xlu0 %v4743, 32
        %v5470 = vpop.permute.xlu0 %5469
        %5472 = vrot.lane.b32.xlu0 %v4743, 16
        %v5473 = vpop.permute.xlu0 %5472
        %5476 = vrot.lane.b32.xlu0 %v4775, 112
        %v5477 = vpop.permute.xlu0 %5476
        %5479 = vrot.lane.b32.xlu0 %v4775, 96
        %v5480 = vpop.permute.xlu0 %5479
        %5482 = vrot.lane.b32.xlu0 %v4775, 80
        %v5483 = vpop.permute.xlu0 %5482
        %5485 = vrot.lane.b32.xlu0 %v4775, 64
        %v5486 = vpop.permute.xlu0 %5485
        %5488 = vrot.lane.b32.xlu0 %v4775, 48
        %v5489 = vpop.permute.xlu0 %5488
        %5491 = vrot.lane.b32.xlu0 %v4775, 32
        %v5492 = vpop.permute.xlu0 %5491
        %5494 = vrot.lane.b32.xlu0 %v4775, 16
        %v5495 = vpop.permute.xlu0 %5494
        %v5497 = vcombine.low %v4743, %v5458
        %v5499 = vunpack.c.l.s4 1983009808
        %v5500 = vunpack.c.0.s8 %v5499
        %v5501 = vlaneseq
        %v5502 = vshrl.u32 %v5501, 7
        %v5503 = vsub.s32 %v5500, %v5502
        %v5504 = vrot.slane %v5497, %v5503
        %v5505 = vcombine.low %v5455, %v5461
        %v5507 = vunpack.c.l.s4 1983009808
        %v5508 = vunpack.c.0.s8 %v5507
        %v5509 = vlaneseq
        %v5510 = vshrl.u32 %v5509, 7
        %v5511 = vsub.s32 %v5508, %v5510
        %v5512 = vrot.slane %v5505, %v5511
        %v5513 = vcombine.low %v5464, %v5470
        %v5515 = vunpack.c.l.s4 1983009808
        %v5516 = vunpack.c.0.s8 %v5515
        %v5517 = vlaneseq
        %v5518 = vshrl.u32 %v5517, 7
        %v5519 = vsub.s32 %v5516, %v5518
        %v5520 = vrot.slane %v5513, %v5519
        %v5521 = vcombine.low %v5467, %v5473
        %v5523 = vunpack.c.l.s4 1983009808
        %v5524 = vunpack.c.0.s8 %v5523
        %v5525 = vlaneseq
        %v5526 = vshrl.u32 %v5525, 7
        %v5527 = vsub.s32 %v5524, %v5526
        %v5528 = vrot.slane %v5521, %v5527
        %v5529 = vcombine.low %v5504, %v5512
        %v5531 = vunpack.c.l.s4 1934713408
        %v5532 = vunpack.c.0.s8 %v5531
        %v5533 = vlaneseq
        %v5534 = vshrl.u32 %v5533, 7
        %v5535 = vsub.s32 %v5532, %v5534
        %v5536 = vrot.slane %v5529, %v5535
        %v5537 = vcombine.low %v5520, %v5528
        %v5539 = vunpack.c.l.s4 1934713408
        %v5540 = vunpack.c.0.s8 %v5539
        %v5541 = vlaneseq
        %v5542 = vshrl.u32 %v5541, 7
        %v5543 = vsub.s32 %v5540, %v5542
        %v5544 = vrot.slane %v5537, %v5543
        %v5545 = vcombine.low %v5536, %v5544
        %v5546 = vcombine.high %v5536, %v5544
        %v5547 = vcombine.low %v4775, %v5480
        %v5549 = vunpack.c.l.s4 1983009808
        %v5550 = vunpack.c.0.s8 %v5549
        %v5551 = vlaneseq
        %v5552 = vshrl.u32 %v5551, 7
        %v5553 = vsub.s32 %v5550, %v5552
        %v5554 = vrot.slane %v5547, %v5553
        %v5555 = vcombine.low %v5477, %v5483
        %v5557 = vunpack.c.l.s4 1983009808
        %v5558 = vunpack.c.0.s8 %v5557
        %v5559 = vlaneseq
        %v5560 = vshrl.u32 %v5559, 7
        %v5561 = vsub.s32 %v5558, %v5560
        %v5562 = vrot.slane %v5555, %v5561
        %v5563 = vcombine.low %v5486, %v5492
        %v5565 = vunpack.c.l.s4 1983009808
        %v5566 = vunpack.c.0.s8 %v5565
        %v5567 = vlaneseq
        %v5568 = vshrl.u32 %v5567, 7
        %v5569 = vsub.s32 %v5566, %v5568
        %v5570 = vrot.slane %v5563, %v5569
        %v5571 = vcombine.low %v5489, %v5495
        %v5573 = vunpack.c.l.s4 1983009808
        %v5574 = vunpack.c.0.s8 %v5573
        %v5575 = vlaneseq
        %v5576 = vshrl.u32 %v5575, 7
        %v5577 = vsub.s32 %v5574, %v5576
        %v5578 = vrot.slane %v5571, %v5577
        %v5579 = vcombine.low %v5554, %v5562
        %v5581 = vunpack.c.l.s4 1934713408
        %v5582 = vunpack.c.0.s8 %v5581
        %v5583 = vlaneseq
        %v5584 = vshrl.u32 %v5583, 7
        %v5585 = vsub.s32 %v5582, %v5584
        %v5586 = vrot.slane %v5579, %v5585
        %v5587 = vcombine.low %v5570, %v5578
        %v5589 = vunpack.c.l.s4 1934713408
        %v5590 = vunpack.c.0.s8 %v5589
        %v5591 = vlaneseq
        %v5592 = vshrl.u32 %v5591, 7
        %v5593 = vsub.s32 %v5590, %v5592
        %v5594 = vrot.slane %v5587, %v5593
        %v5595 = vcombine.low %v5586, %v5594
        %v5596 = vcombine.high %v5586, %v5594
        %5597 = vst.msk [vmem:[%s314] sm:$0xff] %vm841, %v5545
        %5598 = vst.msk [vmem:[%s314 + $0x8] sm:$0xff] %vm841, %v5595
        %5599 = vst.msk [vmem:[%s314 + $0x10] sm:$0xff] %vm841, %v5546
        %5600 = vst.msk [vmem:[%s314 + $0x18] sm:$0xff] %vm841, %v5596
        %s5601 = sand.u32 %s184, 1
        %s5602 = scalar_lea.sflag [#allocation5], %s5601
        %s5603 = sand.u32 %s184, 1
        %s5604 = smul.addr %s5603, 256
        %s5605 = scalar_lea.vmem [#allocation4], %s5604
        %s5606 = sand.u32 %s212, 1
        %s5607 = scalar_lea.sflag [#allocation7], %s5606
        %s5608 = sand.u32 %s212, 1
        %s5609 = smul.addr %s5608, 32
        %s5610 = scalar_lea.vmem [#allocation6], %s5609
        // Predicated region
        $region151: #{be_module_forward.5} parent=43 // pred_check
          %p5611 = pneg %p194
        $region152: #{be_module_forward.5} parent=43 // pred_check_branch
          %5613 = sbr.rel (%p5611) target = $region154
        $region153: #{be_module_forward.5} parent=43 // pred_region
          %s5614 = smul.u32 2, %s31
          %s5616 = ssub.s32 4096, 4096
          %5617 = vsyncadd %s5602, %s5616
          %s5618 = smul.addr %s30, 32
          %s5619 = sadd.s32 %s5614, %s5618
          %s5620 = smul.addr %s5619, 128
          %s5621 = scalar_lea.hbm %s7, %s5620
          %s5622 = sshll.u32 %s5605, 4
          %s5623 = int_to_ptr.vmem [resolvable:$true] %s5622
          %5628 = dma.vmem_to_hbm [thread:$0]  %s5623, 4096, %s5621, %s5602, 128, 128, 8
        $region154: #{be_module_forward.5} parent=43 // pred_fallthru
          _
        // Predicated region
        $region155: #{be_module_forward.5} parent=43 // pred_check
          %p5629 = pneg %p222
        $region156: #{be_module_forward.5} parent=43 // pred_check_branch
          %5631 = sbr.rel (%p5629) target = $region158
        $region157: #{be_module_forward.5} parent=43 // pred_region
          %s5632 = smul.u32 2, %s31
          %s5634 = ssub.s32 512, 512
          %5635 = vsyncadd %s5607, %s5634
          %s5636 = smul.addr %s30, 4
          %s5637 = sadd.s32 %s5632, %s5636
          %s5638 = smul.addr %s5637, 128
          %s5639 = scalar_lea.hbm %s8, %s5638
          %s5640 = sshll.u32 %s5610, 4
          %s5641 = int_to_ptr.vmem [resolvable:$true] %s5640
          %5646 = dma.vmem_to_hbm [thread:$0]  %s5641, 512, %s5639, %s5607, 128, 128, 8
        $region158: #{be_module_forward.5} parent=43 // pred_fallthru
          _
      $region44: #{be_module_forward.5} parent=5 // pred_fallthru
        _
      %p5647 = scmp.le.s32.totalorder 2, %s21
      // Predicated region
      $region159: #{be_module_forward.5} parent=5 // pred_check
        %p5648 = pneg %p5647
      $region160: #{be_module_forward.5} parent=5 // pred_check_branch
        %5650 = sbr.rel (%p5648) target = $region162
      $region161: #{be_module_forward.5} parent=5 // pred_region
        %s5651 = ssub.s32 %s21, 2
        // Predicated region
        $region163: #{be_module_forward.5} parent=161 // pred_check
          %p5652 = pneg %p200
        $region164: #{be_module_forward.5} parent=161 // pred_check_branch
          %5654 = sbr.rel (%p5652) target = $region166
        $region165: #{be_module_forward.5} parent=161 // pred_region
          %s5655 = sand.u32 %s185, 1
          %s5656 = scalar_lea.sflag [#allocation5], %s5655
          %s5657 = sand.u32 %s185, 1
          %s5658 = smul.addr %s5657, 256
          %s5659 = scalar_lea.vmem [#allocation4], %s5658
          %5660 = dma.done %s5656, 4096
        $region166: #{be_module_forward.5} parent=161 // pred_fallthru
          _
        // Predicated region
        $region167: #{be_module_forward.5} parent=161 // pred_check
          %p5661 = pneg %p228
        $region168: #{be_module_forward.5} parent=161 // pred_check_branch
          %5663 = sbr.rel (%p5661) target = $region170
        $region169: #{be_module_forward.5} parent=161 // pred_region
          %s5664 = sand.u32 %s213, 1
          %s5665 = scalar_lea.sflag [#allocation7], %s5664
          %s5666 = sand.u32 %s213, 1
          %s5667 = smul.addr %s5666, 32
          %s5668 = scalar_lea.vmem [#allocation6], %s5667
          %5669 = dma.done %s5665, 512
        $region170: #{be_module_forward.5} parent=161 // pred_fallthru
          _
      $region162: #{be_module_forward.5} parent=5 // pred_fallthru
        _
    $region6: #{be_module_forward.5} parent=1 // loop_footer
      %s25 = sadd.s32 1, %s21
    $region7: #{be_module_forward.5} parent=1 // loop_footer_branch
      %20 = sbr.rel target = $region3
    $region8: #{be_module_forward.5} parent=1 // loop_exit
      _
    %5670 = vsyncpa [#allocation5], 1
    %s5671 = scalar_lea.sflag [#allocation5], 1
    %5672 = vsyncpa %s5671, 1
    %5673 = vsyncpa [#allocation7], 1
    %s5674 = scalar_lea.sflag [#allocation7], 1
    %5675 = vsyncpa %s5674, 1
  %5676 = vsyncmov [#allocation3]
  %s5677 = vpop.sfrf %5676
  %p5678 = scmp.eq.s32.totalorder %s5677, 0
  %p5679 = pneg %p5678
  %5681 = shalt.err (%p5679)
  %s5682 = scalar_lea.sflag [#allocation3], 1
  %5683 = vsyncmov %s5682
  %s5684 = vpop.sfrf %5683
  %p5685 = scmp.eq.s32.totalorder %s5684, 0
  %p5686 = pneg %p5685
  %5688 = shalt.err (%p5686)
  %s5689 = scalar_lea.sflag [#allocation3], 2
  %5690 = vsyncmov %s5689
  %s5691 = vpop.sfrf %5690
  %p5692 = scmp.eq.s32.totalorder %s5691, 0
  %p5693 = pneg %p5692
  %5695 = shalt.err (%p5693)

</llo_original>
